<compile_context>
chip_gen: v7x
topology: tpu7x:2x2x1
jax: 0.10.0
libtpu: 0.0.40
codegen_flags: <defaults>
</compile_context>

<pallas_src>
import jax
import jax.numpy as jnp
from jax import lax
from jax.experimental import pallas as pl
from jax.experimental.pallas import tpu as pltpu

# ------------------------- model hyper-parameters ---------------------------
BATCH = 2            # batch_size
MAX_SENT_LEN = 4     # max_sent_length (sentences per doc)
MAX_WORD_LEN = 8     # max_word_length (words per sentence)
VOCAB = 50
EMBED = 32           # word2vec embedding dim
WORD_H = 16          # word_hidden_size
SENT_H = 16          # sent_hidden_size
NUM_CLASSES = 5


# --------------------------- fused Pallas kernel ----------------------------
def make_han_call(S, W, B, V, Hw, Hs, C):
    """One gridless kernel: embedding + word BiGRU/attn (per sentence, serial
    hidden carry) + sentence BiGRU/attn + fc, fused fwd/bwd GRU directions."""
    N = S * W * B            # total (sentence, word, batch) rows
    H2w, H2s = 2 * Hw, 2 * Hs
    G6w, G6s = 6 * Hw, 6 * Hs

    def kernel(ids_ref, wiw_ref, whw_ref, watt_ref, wis_ref, whs_ref,
               satt_ref, fc_ref,
               logits_ref, walpha_ref, salpha_ref,
               gi_scr):
        f32 = jnp.float32

        # ---- hoisted weight loads (each ref read exactly once) -------------
        wiw = wiw_ref[...]                                  # (2V+1, 6Hw)
        whw = whw_ref[...]                                  # (2Hw+1, 6Hw)
        Whw, bhw = whw[0:H2w, :], whw[H2w:H2w + 1, :]
        watt = watt_ref[...]                                # (2Hw+2, 2Hw)
        Aw = watt[0:H2w, :]
        abw = watt[H2w:H2w + 1, :]
        cww = watt[H2w + 1:H2w + 2, :]                      # context vec as row
        wis = wis_ref[...]                                  # (2*2Hw+1, 6Hs)
        WisF = wis[0:H2w, :]
        WisB = wis[H2w:2 * H2w, :]
        bis = wis[2 * H2w:2 * H2w + 1, :]
        whs = whs_ref[...]                                  # (2Hs+1, 6Hs)
        Whs, bhs = whs[0:H2s, :], whs[H2s:H2s + 1, :]
        satt = satt_ref[...]                                # (2Hs+2, 2Hs)
        As_ = satt[0:H2s, :]
        abs_ = satt[H2s:H2s + 1, :]
        cws = satt[H2s + 1:H2s + 2, :]
        fcp = fc_ref[...]                                   # (2Hs+1, C)
        fcw, fcb = fcp[0:H2s, :], fcp[H2s:H2s + 1, :]

        # ---- embedding gather + ALL word-level GRU input projections -------
        # One matmul: one-hot over [fwd ids | reversed bwd ids | const-1] @
        # [emb@Wi_f scattered | emb@Wi_b scattered | bias row] -> gate-
        # interleaved, time-aligned projections for every fused step.
        ids2 = ids_ref[...]                                 # (N, 2) int32
        iota = lax.broadcasted_iota(jnp.int32, (N, 2 * V + 1), 1)
        oh = ((iota == ids2[:, 0:1]) | (iota == ids2[:, 1:2])
              | (iota == 2 * V)).astype(f32)                # (N, 2V+1)
        gi_scr[...] = jnp.dot(oh, wiw, preferred_element_type=f32)  # (N, 6Hw)

        def gru_step(h, gi, Wh, bh, H2):
            # Fused fwd+bwd PyTorch GRU cell on the interleaved gate layout
            # [r_f|r_b|z_f|z_b|n_f|n_b]; only the (B,2H)@(2H,6H) hidden
            # matmul is in the serial chain.
            gh = jnp.dot(h, Wh, preferred_element_type=f32) + bh
            r = jax.nn.sigmoid(gi[:, 0:H2] + gh[:, 0:H2])
            z = jax.nn.sigmoid(gi[:, H2:2 * H2] + gh[:, H2:2 * H2])
            n = jnp.tanh(gi[:, 2 * H2:3 * H2] + r * gh[:, 2 * H2:3 * H2])
            return (1.0 - z) * n + z * h

        def attention(h_steps, Tlen, A, ab, cw_row, Hdim):
            # Batched across timesteps: one A-projection matmul, one lane
            # reduce for the context scores, one exp, exact softmax.
            lane_f = lax.broadcasted_iota(jnp.int32, (B, 2 * Hdim), 1) < Hdim
            # time-align the fused states: h_time[t] = [h_f(t) | h_b(t)]
            h_time = [jnp.where(lane_f, h_steps[t], h_steps[Tlen - 1 - t])
                      for t in range(Tlen)]
            Hst = jnp.concatenate(h_time, axis=0)                   # (T*B, 2H)
            U = jnp.tanh(jnp.dot(Hst, A, preferred_element_type=f32) + ab)
            sc = jnp.tanh(jnp.sum(U * cw_row, axis=-1, keepdims=True))
            e = jnp.exp(sc)            # scores in [-1,1]: exp is safe, exact
            P = e * Hst                                             # (T*B, 2H)
            ctx_un = P[0:B, :]
            den = e[0:B, :]
            for t in range(1, Tlen):
                ctx_un = ctx_un + P[t * B:(t + 1) * B, :]
                den = den + e[t * B:(t + 1) * B, :]
            inv = 1.0 / den                                         # exact
            ctx = ctx_un * inv                                      # (B, 2H)
            alpha = jnp.concatenate(
                [e[t * B:(t + 1) * B, :] for t in range(Tlen)], axis=1) * inv
            return ctx, alpha                                       # , (B, T)

        # ---- word level: sentences serial (hidden carries across sentences
        # exactly like the reference); fwd/bwd fused in one (B, 2Hw) state ----
        h = jnp.zeros((B, H2w), f32)
        ctx_list = []
        for s in range(S):                                   # static unroll
            base = s * W * B
            h_steps = []
            for i in range(W):
                gi = gi_scr[pl.ds(base + i * B, B), :]       # one row load
                h = gru_step(h, gi, Whw, bhw, H2w)
                h_steps.append(h)
            ctx, alpha = attention(h_steps, W, Aw, abw, cww, Hw)
            ctx_list.append(ctx)                             # (B, 2Hw)
            walpha_ref[s] = alpha                            # (B, W)

        # ---- sentence level: BiGRU over the S sentence vectors -------------
        CTX = jnp.concatenate(ctx_list, axis=0)              # (S*B, 2Hw)
        PF = jnp.dot(CTX, WisF, preferred_element_type=f32)  # f-gate cols only
        PB = jnp.dot(CTX, WisB, preferred_element_type=f32)  # b-gate cols only
        hs = jnp.zeros((B, H2s), f32)
        hs_steps = []
        for i in range(S):
            gi = (PF[i * B:(i + 1) * B, :]
                  + PB[(S - 1 - i) * B:(S - i) * B, :] + bis)
            hs = gru_step(hs, gi, Whs, bhs, H2s)
            hs_steps.append(hs)

        ctx_s, alpha_s = attention(hs_steps, S, As_, abs_, cws, Hs)
        salpha_ref[...] = alpha_s                            # (B, S)
        logits_ref[...] = (jnp.dot(ctx_s, fcw, preferred_element_type=f32)
                           + fcb)                            # (B, C)

    return pl.pallas_call(
        kernel,
        out_shape=(
            jax.ShapeDtypeStruct((B, C), jnp.float32),       # logits
            jax.ShapeDtypeStruct((S, B, W), jnp.float32),    # word attention
            jax.ShapeDtypeStruct((B, S), jnp.float32),       # sentence attn
        ),
        in_specs=[pl.BlockSpec(memory_space=pltpu.MemorySpace.VMEM)] * 8,
        out_specs=tuple([pl.BlockSpec(memory_space=pltpu.MemorySpace.VMEM)] * 3),
        scratch_shapes=[
            pltpu.VMEM((N, G6w), jnp.float32),   # hoisted interleaved-gate gi
        ],
    )


# ------------------------------ parameters ----------------------------------
def init_params(key):
    ks = jax.random.split(key, 32)

    def norm(k, shape):
        return (0.05 * jax.random.normal(k, shape)).astype(jnp.float32)

    p = {}
    p["embedding"] = norm(ks[0], (VOCAB, EMBED))

    # word-level bidirectional GRU (weights stored pre-transposed: (in, 3H))
    p["w_wi_f"] = norm(ks[1], (EMBED, 3 * WORD_H))
    p["w_wh_f"] = norm(ks[2], (WORD_H, 3 * WORD_H))
    p["w_bi_f"] = norm(ks[3], (1, 3 * WORD_H))
    p["w_bh_f"] = norm(ks[4], (1, 3 * WORD_H))
    p["w_wi_b"] = norm(ks[5], (EMBED, 3 * WORD_H))
    p["w_wh_b"] = norm(ks[6], (WORD_H, 3 * WORD_H))
    p["w_bi_b"] = norm(ks[7], (1, 3 * WORD_H))
    p["w_bh_b"] = norm(ks[8], (1, 3 * WORD_H))
    # word attention
    p["w_att_w"] = norm(ks[9], (2 * WORD_H, 2 * WORD_H))
    p["w_att_b"] = norm(ks[10], (1, 2 * WORD_H))
    p["w_ctx_w"] = norm(ks[11], (2 * WORD_H, 1))

    # sentence-level bidirectional GRU
    p["s_wi_f"] = norm(ks[12], (2 * WORD_H, 3 * SENT_H))
    p["s_wh_f"] = norm(ks[13], (SENT_H, 3 * SENT_H))
    p["s_bi_f"] = norm(ks[14], (1, 3 * SENT_H))
    p["s_bh_f"] = norm(ks[15], (1, 3 * SENT_H))
    p["s_wi_b"] = norm(ks[16], (2 * WORD_H, 3 * SENT_H))
    p["s_wh_b"] = norm(ks[17], (SENT_H, 3 * SENT_H))
    p["s_bi_b"] = norm(ks[18], (1, 3 * SENT_H))
    p["s_bh_b"] = norm(ks[19], (1, 3 * SENT_H))
    # sentence attention + classifier
    p["s_att_w"] = norm(ks[20], (2 * SENT_H, 2 * SENT_H))
    p["s_att_b"] = norm(ks[21], (1, 2 * SENT_H))
    p["s_ctx_w"] = norm(ks[22], (2 * SENT_H, 1))
    p["fc_w"] = norm(ks[23], (2 * SENT_H, NUM_CLASSES))
    p["fc_b"] = norm(ks[24], (1, NUM_CLASSES))
    return p


# -------------------- host-side (param-only) weight packing ------------------
def _interleave_gates(f_part, b_part, H):
    """[r_f|z_f|n_f] and [r_b|z_b|n_b] columns -> [r_f|r_b|z_f|z_b|n_f|n_b]."""
    cols = []
    for g in range(3):
        cols.append(f_part[..., g * H:(g + 1) * H])
        cols.append(b_part[..., g * H:(g + 1) * H])
    return jnp.concatenate(cols, axis=-1)


def pack_params(p):
    """One-time packing of all parameters into 7 blobs (done once, not per
    forward): embedding folded into the word input projection, gate columns
    interleaved, fwd/bwd hidden weights block-diagonal, biases appended as
    extra rows so each blob is a single DMA."""
    Hw, Hs = WORD_H, SENT_H
    f32 = jnp.float32

    # word input blob (2V+1, 6Hw): [emb@Wi_f -> f cols ; emb@Wi_b -> b cols ;
    # interleaved input bias row]
    emb_wi_f = p["embedding"] @ p["w_wi_f"]
    emb_wi_b = p["embedding"] @ p["w_wi_b"]
    zV = jnp.zeros_like(emb_wi_f)
    wi_word = jnp.concatenate([
        _interleave_gates(emb_wi_f, zV, Hw),
        _interleave_gates(zV, emb_wi_b, Hw),
        _interleave_gates(p["w_bi_f"], p["w_bi_b"], Hw),
    ], axis=0).astype(f32)

    # word hidden blob (2Hw+1, 6Hw): block-diag(Wh_f, Wh_b) + hidden bias row
    zHw = jnp.zeros_like(p["w_wh_f"])
    wh_word = jnp.concatenate([
        _interleave_gates(p["w_wh_f"], zHw, Hw),
        _interleave_gates(zHw, p["w_wh_b"], Hw),
        _interleave_gates(p["w_bh_f"], p["w_bh_b"], Hw),
    ], axis=0).astype(f32)

    # word attention blob (2Hw+2, 2Hw): [A ; bias ; context^T]
    watt = jnp.concatenate(
        [p["w_att_w"], p["w_att_b"], p["w_ctx_w"].T], axis=0).astype(f32)

    # sentence input blob (2*2Hw+1, 6Hs): f-scatter ; b-scatter ; bias row
    zSi = jnp.zeros_like(p["s_wi_f"])
    wi_sent = jnp.concatenate([
        _interleave_gates(p["s_wi_f"], zSi, Hs),
        _interleave_gates(zSi, p["s_wi_b"], Hs),
        _interleave_gates(p["s_bi_f"], p["s_bi_b"], Hs),
    ], axis=0).astype(f32)

    # sentence hidden blob (2Hs+1, 6Hs)
    zSh = jnp.zeros_like(p["s_wh_f"])
    wh_sent = jnp.concatenate([
        _interleave_gates(p["s_wh_f"], zSh, Hs),
        _interleave_gates(zSh, p["s_wh_b"], Hs),
        _interleave_gates(p["s_bh_f"], p["s_bh_b"], Hs),
    ], axis=0).astype(f32)

    # sentence attention blob (2Hs+2, 2Hs) and classifier blob (2Hs+1, C)
    satt = jnp.concatenate(
        [p["s_att_w"], p["s_att_b"], p["s_ctx_w"].T], axis=0).astype(f32)
    fc = jnp.concatenate([p["fc_w"], p["fc_b"]], axis=0).astype(f32)

    return (wi_word, wh_word, watt, wi_sent, wh_sent, satt, fc)


# ------------------------------ forward pass --------------------------------
han_call = make_han_call(MAX_SENT_LEN, MAX_WORD_LEN, BATCH, VOCAB,
                         WORD_H, SENT_H, NUM_CLASSES)


@jax.jit
def hier_att_net_forward(input_ids, packed):
    """input_ids: (B, S, W) int32.  Returns (logits, word_alpha, sent_alpha).
    Initial hidden states are zeros (reference _init_hidden_state)."""
    # TODO(synk): the PyTorch module also mutates self.*_hidden_state across
    # calls; this wrapper models one forward from the freshly-initialized
    # (zero) hidden state, matching the reference right after construction.
    B, S, W = input_ids.shape
    ids_stb = jnp.transpose(input_ids, (1, 2, 0)).astype(jnp.int32)  # (S,W,B)
    ids_fwd = ids_stb.reshape(S * W * B, 1)
    ids_bwd = ids_stb[:, ::-1, :].reshape(S * W * B, 1) + VOCAB  # offset into
    ids2 = jnp.concatenate([ids_fwd, ids_bwd], axis=1)          # bwd half
    logits, word_alpha, sent_alpha = han_call(ids2, *packed)
    return logits, word_alpha, sent_alpha


# ---------------------------------- main -------------------------------------
if __name__ == "__main__":
    key = jax.random.PRNGKey(0)
    k_param, k_ids = jax.random.split(key)
    params = init_params(k_param)
    packed = pack_params(params)          # one-time, parameter-only packing

    input_ids = jax.random.randint(
        k_ids, (BATCH, MAX_SENT_LEN, MAX_WORD_LEN), 0, VOCAB, dtype=jnp.int32)

    logits, word_alpha, sent_alpha = hier_att_net_forward(input_ids, packed)
    jax.block_until_ready((logits, word_alpha, sent_alpha))

    assert logits.shape == (BATCH, NUM_CLASSES)
    assert word_alpha.shape == (MAX_SENT_LEN, BATCH, MAX_WORD_LEN)
    assert sent_alpha.shape == (BATCH, MAX_SENT_LEN)
    print("KERNEL_OK")
</pallas_src>

<mosaic_0001>
module attributes {stable_mosaic.version = 11 : i64} {
  func.func @kernel(%arg0: memref<64x2xi32, #tpu.memory_space<vmem>>, %arg1: memref<101x96xf32, #tpu.memory_space<vmem>>, %arg2: memref<33x96xf32, #tpu.memory_space<vmem>>, %arg3: memref<34x32xf32, #tpu.memory_space<vmem>>, %arg4: memref<65x96xf32, #tpu.memory_space<vmem>>, %arg5: memref<33x96xf32, #tpu.memory_space<vmem>>, %arg6: memref<34x32xf32, #tpu.memory_space<vmem>>, %arg7: memref<33x5xf32, #tpu.memory_space<vmem>>, %arg8: memref<2x5xf32, #tpu.memory_space<vmem>>, %arg9: memref<4x2x8xf32, #tpu.memory_space<vmem>>, %arg10: memref<2x4xf32, #tpu.memory_space<vmem>>, %arg11: memref<64x96xf32, #tpu.memory_space<vmem>>) attributes {dimension_semantics = [], scalar_prefetch = 0 : i64, scratch_operands = 1 : i64, tpu.core_type = #tpu.core_type<tc>} {
    %c0 = arith.constant 0 : index
    %c0_0 = arith.constant 0 : index
    %0 = vector.load %arg1[%c0, %c0_0] : memref<101x96xf32, #tpu.memory_space<vmem>>, vector<101x96xf32>
    %c0_1 = arith.constant 0 : index
    %c0_2 = arith.constant 0 : index
    %1 = vector.load %arg2[%c0_1, %c0_2] : memref<33x96xf32, #tpu.memory_space<vmem>>, vector<33x96xf32>
    %2 = vector.extract_strided_slice %1 {offsets = [0, 0], sizes = [32, 96], strides = [1, 1]} : vector<33x96xf32> to vector<32x96xf32>
    %3 = vector.extract_strided_slice %1 {offsets = [32, 0], sizes = [1, 96], strides = [1, 1]} : vector<33x96xf32> to vector<1x96xf32>
    %c0_3 = arith.constant 0 : index
    %c0_4 = arith.constant 0 : index
    %4 = vector.load %arg3[%c0_3, %c0_4] : memref<34x32xf32, #tpu.memory_space<vmem>>, vector<34x32xf32>
    %5 = vector.extract_strided_slice %4 {offsets = [0, 0], sizes = [32, 32], strides = [1, 1]} : vector<34x32xf32> to vector<32x32xf32>
    %6 = vector.extract_strided_slice %4 {offsets = [32, 0], sizes = [1, 32], strides = [1, 1]} : vector<34x32xf32> to vector<1x32xf32>
    %7 = vector.extract_strided_slice %4 {offsets = [33, 0], sizes = [1, 32], strides = [1, 1]} : vector<34x32xf32> to vector<1x32xf32>
    %c0_5 = arith.constant 0 : index
    %c0_6 = arith.constant 0 : index
    %8 = vector.load %arg4[%c0_5, %c0_6] : memref<65x96xf32, #tpu.memory_space<vmem>>, vector<65x96xf32>
    %9 = vector.extract_strided_slice %8 {offsets = [0, 0], sizes = [32, 96], strides = [1, 1]} : vector<65x96xf32> to vector<32x96xf32>
    %10 = vector.extract_strided_slice %8 {offsets = [32, 0], sizes = [32, 96], strides = [1, 1]} : vector<65x96xf32> to vector<32x96xf32>
    %11 = vector.extract_strided_slice %8 {offsets = [64, 0], sizes = [1, 96], strides = [1, 1]} : vector<65x96xf32> to vector<1x96xf32>
    %c0_7 = arith.constant 0 : index
    %c0_8 = arith.constant 0 : index
    %12 = vector.load %arg5[%c0_7, %c0_8] : memref<33x96xf32, #tpu.memory_space<vmem>>, vector<33x96xf32>
    %13 = vector.extract_strided_slice %12 {offsets = [0, 0], sizes = [32, 96], strides = [1, 1]} : vector<33x96xf32> to vector<32x96xf32>
    %14 = vector.extract_strided_slice %12 {offsets = [32, 0], sizes = [1, 96], strides = [1, 1]} : vector<33x96xf32> to vector<1x96xf32>
    %c0_9 = arith.constant 0 : index
    %c0_10 = arith.constant 0 : index
    %15 = vector.load %arg6[%c0_9, %c0_10] : memref<34x32xf32, #tpu.memory_space<vmem>>, vector<34x32xf32>
    %16 = vector.extract_strided_slice %15 {offsets = [0, 0], sizes = [32, 32], strides = [1, 1]} : vector<34x32xf32> to vector<32x32xf32>
    %17 = vector.extract_strided_slice %15 {offsets = [32, 0], sizes = [1, 32], strides = [1, 1]} : vector<34x32xf32> to vector<1x32xf32>
    %18 = vector.extract_strided_slice %15 {offsets = [33, 0], sizes = [1, 32], strides = [1, 1]} : vector<34x32xf32> to vector<1x32xf32>
    %c0_11 = arith.constant 0 : index
    %c0_12 = arith.constant 0 : index
    %19 = vector.load %arg7[%c0_11, %c0_12] : memref<33x5xf32, #tpu.memory_space<vmem>>, vector<33x5xf32>
    %20 = vector.extract_strided_slice %19 {offsets = [0, 0], sizes = [32, 5], strides = [1, 1]} : vector<33x5xf32> to vector<32x5xf32>
    %21 = vector.extract_strided_slice %19 {offsets = [32, 0], sizes = [1, 5], strides = [1, 1]} : vector<33x5xf32> to vector<1x5xf32>
    %c0_13 = arith.constant 0 : index
    %c0_14 = arith.constant 0 : index
    %22 = vector.load %arg0[%c0_13, %c0_14] : memref<64x2xi32, #tpu.memory_space<vmem>>, vector<64x2xi32>
    %23 = tpu.iota {dimensions = array<i32: 1>} : vector<64x101xi32>
    %24 = vector.extract_strided_slice %22 {offsets = [0, 0], sizes = [64, 1], strides = [1, 1]} : vector<64x2xi32> to vector<64x1xi32>
    %25 = vector.broadcast %24 : vector<64x1xi32> to vector<64x101xi32>
    %26 = arith.cmpi eq, %23, %25 : vector<64x101xi32>
    %27 = vector.extract_strided_slice %22 {offsets = [0, 1], sizes = [64, 1], strides = [1, 1]} : vector<64x2xi32> to vector<64x1xi32>
    %28 = vector.broadcast %27 : vector<64x1xi32> to vector<64x101xi32>
    %29 = arith.cmpi eq, %23, %28 : vector<64x101xi32>
    %30 = arith.ori %26, %29 : vector<64x101xi1>
    %c100_i32 = arith.constant 100 : i32
    %31 = vector.broadcast %c100_i32 : i32 to vector<64x101xi32>
    %32 = arith.cmpi eq, %23, %31 : vector<64x101xi32>
    %33 = arith.ori %30, %32 : vector<64x101xi1>
    %34 = arith.extui %33 : vector<64x101xi1> to vector<64x101xi32>
    %35 = arith.sitofp %34 : vector<64x101xi32> to vector<64x101xf32>
    %cst = arith.constant dense<0.000000e+00> : vector<64x96xf32>
    %36 = tpu.matmul %35, %0, %cst {dimension_numbers = #tpu.dot_dimension_numbers<[1], [0], [0], [1], [0, 0, 1, 1], [], []>} : vector<64x101xf32>, vector<101x96xf32>, vector<64x96xf32> -> vector<64x96xf32>
    %c0_15 = arith.constant 0 : index
    %c0_16 = arith.constant 0 : index
    %37 = vector.load %arg11[%c0_15, %c0_16] : memref<64x96xf32, #tpu.memory_space<vmem>>, vector<64x96xf32>
    tpu.vector_store %arg11[%c0_15, %c0_16], %36 {strides = array<i32>} : memref<64x96xf32, #tpu.memory_space<vmem>>, vector<64x96xf32>,
    %cst_17 = arith.constant 0.000000e+00 : f32
    %38 = vector.broadcast %cst_17 : f32 to vector<2x32xf32>
    %c0_18 = arith.constant 0 : index
    %c0_19 = arith.constant 0 : index
    %39 = vector.load %arg11[%c0_18, %c0_19] : memref<64x96xf32, #tpu.memory_space<vmem>>, vector<2x96xf32>
    %cst_20 = arith.constant dense<0.000000e+00> : vector<2x96xf32>
    %40 = tpu.matmul %38, %2, %cst_20 {dimension_numbers = #tpu.dot_dimension_numbers<[1], [0], [0], [1], [0, 0, 1, 1], [], []>} : vector<2x32xf32>, vector<32x96xf32>, vector<2x96xf32> -> vector<2x96xf32>
    %41 = vector.broadcast %3 : vector<1x96xf32> to vector<2x96xf32>
    %42 = arith.addf %40, %41 : vector<2x96xf32>
    %43 = vector.extract_strided_slice %39 {offsets = [0, 0], sizes = [2, 32], strides = [1, 1]} : vector<2x96xf32> to vector<2x32xf32>
    %44 = vector.extract_strided_slice %42 {offsets = [0, 0], sizes = [2, 32], strides = [1, 1]} : vector<2x96xf32> to vector<2x32xf32>
    %45 = arith.addf %43, %44 : vector<2x32xf32>
    %46 = arith.negf %45 : vector<2x32xf32>
    %47 = math.exp %46 : vector<2x32xf32>
    %cst_21 = arith.constant 1.000000e+00 : f32
    %48 = vector.broadcast %cst_21 : f32 to vector<2x32xf32>
    %49 = arith.addf %48, %47 : vector<2x32xf32>
    %50 = arith.divf %48, %49 : vector<2x32xf32>
    %51 = vector.extract_strided_slice %39 {offsets = [0, 32], sizes = [2, 32], strides = [1, 1]} : vector<2x96xf32> to vector<2x32xf32>
    %52 = vector.extract_strided_slice %42 {offsets = [0, 32], sizes = [2, 32], strides = [1, 1]} : vector<2x96xf32> to vector<2x32xf32>
    %53 = arith.addf %51, %52 : vector<2x32xf32>
    %54 = arith.negf %53 : vector<2x32xf32>
    %55 = math.exp %54 : vector<2x32xf32>
    %cst_22 = arith.constant 1.000000e+00 : f32
    %56 = vector.broadcast %cst_22 : f32 to vector<2x32xf32>
    %57 = arith.addf %56, %55 : vector<2x32xf32>
    %58 = arith.divf %56, %57 : vector<2x32xf32>
    %59 = vector.extract_strided_slice %39 {offsets = [0, 64], sizes = [2, 32], strides = [1, 1]} : vector<2x96xf32> to vector<2x32xf32>
    %60 = vector.extract_strided_slice %42 {offsets = [0, 64], sizes = [2, 32], strides = [1, 1]} : vector<2x96xf32> to vector<2x32xf32>
    %61 = arith.mulf %50, %60 : vector<2x32xf32>
    %62 = arith.addf %59, %61 : vector<2x32xf32>
    %63 = math.tanh %62 : vector<2x32xf32>
    %cst_23 = arith.constant 1.000000e+00 : f32
    %64 = vector.broadcast %cst_23 : f32 to vector<2x32xf32>
    %65 = arith.subf %64, %58 : vector<2x32xf32>
    %66 = arith.mulf %65, %63 : vector<2x32xf32>
    %67 = arith.mulf %58, %38 : vector<2x32xf32>
    %68 = arith.addf %66, %67 : vector<2x32xf32>
    %c2 = arith.constant 2 : index
    %c0_24 = arith.constant 0 : index
    %69 = vector.load %arg11[%c2, %c0_24] : memref<64x96xf32, #tpu.memory_space<vmem>>, vector<2x96xf32>
    %cst_25 = arith.constant dense<0.000000e+00> : vector<2x96xf32>
    %70 = tpu.matmul %68, %2, %cst_25 {dimension_numbers = #tpu.dot_dimension_numbers<[1], [0], [0], [1], [0, 0, 1, 1], [], []>} : vector<2x32xf32>, vector<32x96xf32>, vector<2x96xf32> -> vector<2x96xf32>
    %71 = vector.broadcast %3 : vector<1x96xf32> to vector<2x96xf32>
    %72 = arith.addf %70, %71 : vector<2x96xf32>
    %73 = vector.extract_strided_slice %69 {offsets = [0, 0], sizes = [2, 32], strides = [1, 1]} : vector<2x96xf32> to vector<2x32xf32>
    %74 = vector.extract_strided_slice %72 {offsets = [0, 0], sizes = [2, 32], strides = [1, 1]} : vector<2x96xf32> to vector<2x32xf32>
    %75 = arith.addf %73, %74 : vector<2x32xf32>
    %76 = arith.negf %75 : vector<2x32xf32>
    %77 = math.exp %76 : vector<2x32xf32>
    %cst_26 = arith.constant 1.000000e+00 : f32
    %78 = vector.broadcast %cst_26 : f32 to vector<2x32xf32>
    %79 = arith.addf %78, %77 : vector<2x32xf32>
    %80 = arith.divf %78, %79 : vector<2x32xf32>
    %81 = vector.extract_strided_slice %69 {offsets = [0, 32], sizes = [2, 32], strides = [1, 1]} : vector<2x96xf32> to vector<2x32xf32>
    %82 = vector.extract_strided_slice %72 {offsets = [0, 32], sizes = [2, 32], strides = [1, 1]} : vector<2x96xf32> to vector<2x32xf32>
    %83 = arith.addf %81, %82 : vector<2x32xf32>
    %84 = arith.negf %83 : vector<2x32xf32>
    %85 = math.exp %84 : vector<2x32xf32>
    %cst_27 = arith.constant 1.000000e+00 : f32
    %86 = vector.broadcast %cst_27 : f32 to vector<2x32xf32>
    %87 = arith.addf %86, %85 : vector<2x32xf32>
    %88 = arith.divf %86, %87 : vector<2x32xf32>
    %89 = vector.extract_strided_slice %69 {offsets = [0, 64], sizes = [2, 32], strides = [1, 1]} : vector<2x96xf32> to vector<2x32xf32>
    %90 = vector.extract_strided_slice %72 {offsets = [0, 64], sizes = [2, 32], strides = [1, 1]} : vector<2x96xf32> to vector<2x32xf32>
    %91 = arith.mulf %80, %90 : vector<2x32xf32>
    %92 = arith.addf %89, %91 : vector<2x32xf32>
    %93 = math.tanh %92 : vector<2x32xf32>
    %cst_28 = arith.constant 1.000000e+00 : f32
    %94 = vector.broadcast %cst_28 : f32 to vector<2x32xf32>
    %95 = arith.subf %94, %88 : vector<2x32xf32>
    %96 = arith.mulf %95, %93 : vector<2x32xf32>
    %97 = arith.mulf %88, %68 : vector<2x32xf32>
    %98 = arith.addf %96, %97 : vector<2x32xf32>
    %c4 = arith.constant 4 : index
    %c0_29 = arith.constant 0 : index
    %99 = vector.load %arg11[%c4, %c0_29] : memref<64x96xf32, #tpu.memory_space<vmem>>, vector<2x96xf32>
    %cst_30 = arith.constant dense<0.000000e+00> : vector<2x96xf32>
    %100 = tpu.matmul %98, %2, %cst_30 {dimension_numbers = #tpu.dot_dimension_numbers<[1], [0], [0], [1], [0, 0, 1, 1], [], []>} : vector<2x32xf32>, vector<32x96xf32>, vector<2x96xf32> -> vector<2x96xf32>
    %101 = vector.broadcast %3 : vector<1x96xf32> to vector<2x96xf32>
    %102 = arith.addf %100, %101 : vector<2x96xf32>
    %103 = vector.extract_strided_slice %99 {offsets = [0, 0], sizes = [2, 32], strides = [1, 1]} : vector<2x96xf32> to vector<2x32xf32>
    %104 = vector.extract_strided_slice %102 {offsets = [0, 0], sizes = [2, 32], strides = [1, 1]} : vector<2x96xf32> to vector<2x32xf32>
    %105 = arith.addf %103, %104 : vector<2x32xf32>
    %106 = arith.negf %105 : vector<2x32xf32>
    %107 = math.exp %106 : vector<2x32xf32>
    %cst_31 = arith.constant 1.000000e+00 : f32
    %108 = vector.broadcast %cst_31 : f32 to vector<2x32xf32>
    %109 = arith.addf %108, %107 : vector<2x32xf32>
    %110 = arith.divf %108, %109 : vector<2x32xf32>
    %111 = vector.extract_strided_slice %99 {offsets = [0, 32], sizes = [2, 32], strides = [1, 1]} : vector<2x96xf32> to vector<2x32xf32>
    %112 = vector.extract_strided_slice %102 {offsets = [0, 32], sizes = [2, 32], strides = [1, 1]} : vector<2x96xf32> to vector<2x32xf32>
    %113 = arith.addf %111, %112 : vector<2x32xf32>
    %114 = arith.negf %113 : vector<2x32xf32>
    %115 = math.exp %114 : vector<2x32xf32>
    %cst_32 = arith.constant 1.000000e+00 : f32
    %116 = vector.broadcast %cst_32 : f32 to vector<2x32xf32>
    %117 = arith.addf %116, %115 : vector<2x32xf32>
    %118 = arith.divf %116, %117 : vector<2x32xf32>
    %119 = vector.extract_strided_slice %99 {offsets = [0, 64], sizes = [2, 32], strides = [1, 1]} : vector<2x96xf32> to vector<2x32xf32>
    %120 = vector.extract_strided_slice %102 {offsets = [0, 64], sizes = [2, 32], strides = [1, 1]} : vector<2x96xf32> to vector<2x32xf32>
    %121 = arith.mulf %110, %120 : vector<2x32xf32>
    %122 = arith.addf %119, %121 : vector<2x32xf32>
    %123 = math.tanh %122 : vector<2x32xf32>
    %cst_33 = arith.constant 1.000000e+00 : f32
    %124 = vector.broadcast %cst_33 : f32 to vector<2x32xf32>
    %125 = arith.subf %124, %118 : vector<2x32xf32>
    %126 = arith.mulf %125, %123 : vector<2x32xf32>
    %127 = arith.mulf %118, %98 : vector<2x32xf32>
    %128 = arith.addf %126, %127 : vector<2x32xf32>
    %c6 = arith.constant 6 : index
    %c0_34 = arith.constant 0 : index
    %129 = vector.load %arg11[%c6, %c0_34] : memref<64x96xf32, #tpu.memory_space<vmem>>, vector<2x96xf32>
    %cst_35 = arith.constant dense<0.000000e+00> : vector<2x96xf32>
    %130 = tpu.matmul %128, %2, %cst_35 {dimension_numbers = #tpu.dot_dimension_numbers<[1], [0], [0], [1], [0, 0, 1, 1], [], []>} : vector<2x32xf32>, vector<32x96xf32>, vector<2x96xf32> -> vector<2x96xf32>
    %131 = vector.broadcast %3 : vector<1x96xf32> to vector<2x96xf32>
    %132 = arith.addf %130, %131 : vector<2x96xf32>
    %133 = vector.extract_strided_slice %129 {offsets = [0, 0], sizes = [2, 32], strides = [1, 1]} : vector<2x96xf32> to vector<2x32xf32>
    %134 = vector.extract_strided_slice %132 {offsets = [0, 0], sizes = [2, 32], strides = [1, 1]} : vector<2x96xf32> to vector<2x32xf32>
    %135 = arith.addf %133, %134 : vector<2x32xf32>
    %136 = arith.negf %135 : vector<2x32xf32>
    %137 = math.exp %136 : vector<2x32xf32>
    %cst_36 = arith.constant 1.000000e+00 : f32
    %138 = vector.broadcast %cst_36 : f32 to vector<2x32xf32>
    %139 = arith.addf %138, %137 : vector<2x32xf32>
    %140 = arith.divf %138, %139 : vector<2x32xf32>
    %141 = vector.extract_strided_slice %129 {offsets = [0, 32], sizes = [2, 32], strides = [1, 1]} : vector<2x96xf32> to vector<2x32xf32>
    %142 = vector.extract_strided_slice %132 {offsets = [0, 32], sizes = [2, 32], strides = [1, 1]} : vector<2x96xf32> to vector<2x32xf32>
    %143 = arith.addf %141, %142 : vector<2x32xf32>
    %144 = arith.negf %143 : vector<2x32xf32>
    %145 = math.exp %144 : vector<2x32xf32>
    %cst_37 = arith.constant 1.000000e+00 : f32
    %146 = vector.broadcast %cst_37 : f32 to vector<2x32xf32>
    %147 = arith.addf %146, %145 : vector<2x32xf32>
    %148 = arith.divf %146, %147 : vector<2x32xf32>
    %149 = vector.extract_strided_slice %129 {offsets = [0, 64], sizes = [2, 32], strides = [1, 1]} : vector<2x96xf32> to vector<2x32xf32>
    %150 = vector.extract_strided_slice %132 {offsets = [0, 64], sizes = [2, 32], strides = [1, 1]} : vector<2x96xf32> to vector<2x32xf32>
    %151 = arith.mulf %140, %150 : vector<2x32xf32>
    %152 = arith.addf %149, %151 : vector<2x32xf32>
    %153 = math.tanh %152 : vector<2x32xf32>
    %cst_38 = arith.constant 1.000000e+00 : f32
    %154 = vector.broadcast %cst_38 : f32 to vector<2x32xf32>
    %155 = arith.subf %154, %148 : vector<2x32xf32>
    %156 = arith.mulf %155, %153 : vector<2x32xf32>
    %157 = arith.mulf %148, %128 : vector<2x32xf32>
    %158 = arith.addf %156, %157 : vector<2x32xf32>
    %c8 = arith.constant 8 : index
    %c0_39 = arith.constant 0 : index
    %159 = vector.load %arg11[%c8, %c0_39] : memref<64x96xf32, #tpu.memory_space<vmem>>, vector<2x96xf32>
    %cst_40 = arith.constant dense<0.000000e+00> : vector<2x96xf32>
    %160 = tpu.matmul %158, %2, %cst_40 {dimension_numbers = #tpu.dot_dimension_numbers<[1], [0], [0], [1], [0, 0, 1, 1], [], []>} : vector<2x32xf32>, vector<32x96xf32>, vector<2x96xf32> -> vector<2x96xf32>
    %161 = vector.broadcast %3 : vector<1x96xf32> to vector<2x96xf32>
    %162 = arith.addf %160, %161 : vector<2x96xf32>
    %163 = vector.extract_strided_slice %159 {offsets = [0, 0], sizes = [2, 32], strides = [1, 1]} : vector<2x96xf32> to vector<2x32xf32>
    %164 = vector.extract_strided_slice %162 {offsets = [0, 0], sizes = [2, 32], strides = [1, 1]} : vector<2x96xf32> to vector<2x32xf32>
    %165 = arith.addf %163, %164 : vector<2x32xf32>
    %166 = arith.negf %165 : vector<2x32xf32>
    %167 = math.exp %166 : vector<2x32xf32>
    %cst_41 = arith.constant 1.000000e+00 : f32
    %168 = vector.broadcast %cst_41 : f32 to vector<2x32xf32>
    %169 = arith.addf %168, %167 : vector<2x32xf32>
    %170 = arith.divf %168, %169 : vector<2x32xf32>
    %171 = vector.extract_strided_slice %159 {offsets = [0, 32], sizes = [2, 32], strides = [1, 1]} : vector<2x96xf32> to vector<2x32xf32>
    %172 = vector.extract_strided_slice %162 {offsets = [0, 32], sizes = [2, 32], strides = [1, 1]} : vector<2x96xf32> to vector<2x32xf32>
    %173 = arith.addf %171, %172 : vector<2x32xf32>
    %174 = arith.negf %173 : vector<2x32xf32>
    %175 = math.exp %174 : vector<2x32xf32>
    %cst_42 = arith.constant 1.000000e+00 : f32
    %176 = vector.broadcast %cst_42 : f32 to vector<2x32xf32>
    %177 = arith.addf %176, %175 : vector<2x32xf32>
    %178 = arith.divf %176, %177 : vector<2x32xf32>
    %179 = vector.extract_strided_slice %159 {offsets = [0, 64], sizes = [2, 32], strides = [1, 1]} : vector<2x96xf32> to vector<2x32xf32>
    %180 = vector.extract_strided_slice %162 {offsets = [0, 64], sizes = [2, 32], strides = [1, 1]} : vector<2x96xf32> to vector<2x32xf32>
    %181 = arith.mulf %170, %180 : vector<2x32xf32>
    %182 = arith.addf %179, %181 : vector<2x32xf32>
    %183 = math.tanh %182 : vector<2x32xf32>
    %cst_43 = arith.constant 1.000000e+00 : f32
    %184 = vector.broadcast %cst_43 : f32 to vector<2x32xf32>
    %185 = arith.subf %184, %178 : vector<2x32xf32>
    %186 = arith.mulf %185, %183 : vector<2x32xf32>
    %187 = arith.mulf %178, %158 : vector<2x32xf32>
    %188 = arith.addf %186, %187 : vector<2x32xf32>
    %c10 = arith.constant 10 : index
    %c0_44 = arith.constant 0 : index
    %189 = vector.load %arg11[%c10, %c0_44] : memref<64x96xf32, #tpu.memory_space<vmem>>, vector<2x96xf32>
    %cst_45 = arith.constant dense<0.000000e+00> : vector<2x96xf32>
    %190 = tpu.matmul %188, %2, %cst_45 {dimension_numbers = #tpu.dot_dimension_numbers<[1], [0], [0], [1], [0, 0, 1, 1], [], []>} : vector<2x32xf32>, vector<32x96xf32>, vector<2x96xf32> -> vector<2x96xf32>
    %191 = vector.broadcast %3 : vector<1x96xf32> to vector<2x96xf32>
    %192 = arith.addf %190, %191 : vector<2x96xf32>
    %193 = vector.extract_strided_slice %189 {offsets = [0, 0], sizes = [2, 32], strides = [1, 1]} : vector<2x96xf32> to vector<2x32xf32>
    %194 = vector.extract_strided_slice %192 {offsets = [0, 0], sizes = [2, 32], strides = [1, 1]} : vector<2x96xf32> to vector<2x32xf32>
    %195 = arith.addf %193, %194 : vector<2x32xf32>
    %196 = arith.negf %195 : vector<2x32xf32>
    %197 = math.exp %196 : vector<2x32xf32>
    %cst_46 = arith.constant 1.000000e+00 : f32
    %198 = vector.broadcast %cst_46 : f32 to vector<2x32xf32>
    %199 = arith.addf %198, %197 : vector<2x32xf32>
    %200 = arith.divf %198, %199 : vector<2x32xf32>
    %201 = vector.extract_strided_slice %189 {offsets = [0, 32], sizes = [2, 32], strides = [1, 1]} : vector<2x96xf32> to vector<2x32xf32>
    %202 = vector.extract_strided_slice %192 {offsets = [0, 32], sizes = [2, 32], strides = [1, 1]} : vector<2x96xf32> to vector<2x32xf32>
    %203 = arith.addf %201, %202 : vector<2x32xf32>
    %204 = arith.negf %203 : vector<2x32xf32>
    %205 = math.exp %204 : vector<2x32xf32>
    %cst_47 = arith.constant 1.000000e+00 : f32
    %206 = vector.broadcast %cst_47 : f32 to vector<2x32xf32>
    %207 = arith.addf %206, %205 : vector<2x32xf32>
    %208 = arith.divf %206, %207 : vector<2x32xf32>
    %209 = vector.extract_strided_slice %189 {offsets = [0, 64], sizes = [2, 32], strides = [1, 1]} : vector<2x96xf32> to vector<2x32xf32>
    %210 = vector.extract_strided_slice %192 {offsets = [0, 64], sizes = [2, 32], strides = [1, 1]} : vector<2x96xf32> to vector<2x32xf32>
    %211 = arith.mulf %200, %210 : vector<2x32xf32>
    %212 = arith.addf %209, %211 : vector<2x32xf32>
    %213 = math.tanh %212 : vector<2x32xf32>
    %cst_48 = arith.constant 1.000000e+00 : f32
    %214 = vector.broadcast %cst_48 : f32 to vector<2x32xf32>
    %215 = arith.subf %214, %208 : vector<2x32xf32>
    %216 = arith.mulf %215, %213 : vector<2x32xf32>
    %217 = arith.mulf %208, %188 : vector<2x32xf32>
    %218 = arith.addf %216, %217 : vector<2x32xf32>
    %c12 = arith.constant 12 : index
    %c0_49 = arith.constant 0 : index
    %219 = vector.load %arg11[%c12, %c0_49] : memref<64x96xf32, #tpu.memory_space<vmem>>, vector<2x96xf32>
    %cst_50 = arith.constant dense<0.000000e+00> : vector<2x96xf32>
    %220 = tpu.matmul %218, %2, %cst_50 {dimension_numbers = #tpu.dot_dimension_numbers<[1], [0], [0], [1], [0, 0, 1, 1], [], []>} : vector<2x32xf32>, vector<32x96xf32>, vector<2x96xf32> -> vector<2x96xf32>
    %221 = vector.broadcast %3 : vector<1x96xf32> to vector<2x96xf32>
    %222 = arith.addf %220, %221 : vector<2x96xf32>
    %223 = vector.extract_strided_slice %219 {offsets = [0, 0], sizes = [2, 32], strides = [1, 1]} : vector<2x96xf32> to vector<2x32xf32>
    %224 = vector.extract_strided_slice %222 {offsets = [0, 0], sizes = [2, 32], strides = [1, 1]} : vector<2x96xf32> to vector<2x32xf32>
    %225 = arith.addf %223, %224 : vector<2x32xf32>
    %226 = arith.negf %225 : vector<2x32xf32>
    %227 = math.exp %226 : vector<2x32xf32>
    %cst_51 = arith.constant 1.000000e+00 : f32
    %228 = vector.broadcast %cst_51 : f32 to vector<2x32xf32>
    %229 = arith.addf %228, %227 : vector<2x32xf32>
    %230 = arith.divf %228, %229 : vector<2x32xf32>
    %231 = vector.extract_strided_slice %219 {offsets = [0, 32], sizes = [2, 32], strides = [1, 1]} : vector<2x96xf32> to vector<2x32xf32>
    %232 = vector.extract_strided_slice %222 {offsets = [0, 32], sizes = [2, 32], strides = [1, 1]} : vector<2x96xf32> to vector<2x32xf32>
    %233 = arith.addf %231, %232 : vector<2x32xf32>
    %234 = arith.negf %233 : vector<2x32xf32>
    %235 = math.exp %234 : vector<2x32xf32>
    %cst_52 = arith.constant 1.000000e+00 : f32
    %236 = vector.broadcast %cst_52 : f32 to vector<2x32xf32>
    %237 = arith.addf %236, %235 : vector<2x32xf32>
    %238 = arith.divf %236, %237 : vector<2x32xf32>
    %239 = vector.extract_strided_slice %219 {offsets = [0, 64], sizes = [2, 32], strides = [1, 1]} : vector<2x96xf32> to vector<2x32xf32>
    %240 = vector.extract_strided_slice %222 {offsets = [0, 64], sizes = [2, 32], strides = [1, 1]} : vector<2x96xf32> to vector<2x32xf32>
    %241 = arith.mulf %230, %240 : vector<2x32xf32>
    %242 = arith.addf %239, %241 : vector<2x32xf32>
    %243 = math.tanh %242 : vector<2x32xf32>
    %cst_53 = arith.constant 1.000000e+00 : f32
    %244 = vector.broadcast %cst_53 : f32 to vector<2x32xf32>
    %245 = arith.subf %244, %238 : vector<2x32xf32>
    %246 = arith.mulf %245, %243 : vector<2x32xf32>
    %247 = arith.mulf %238, %218 : vector<2x32xf32>
    %248 = arith.addf %246, %247 : vector<2x32xf32>
    %c14 = arith.constant 14 : index
    %c0_54 = arith.constant 0 : index
    %249 = vector.load %arg11[%c14, %c0_54] : memref<64x96xf32, #tpu.memory_space<vmem>>, vector<2x96xf32>
    %cst_55 = arith.constant dense<0.000000e+00> : vector<2x96xf32>
    %250 = tpu.matmul %248, %2, %cst_55 {dimension_numbers = #tpu.dot_dimension_numbers<[1], [0], [0], [1], [0, 0, 1, 1], [], []>} : vector<2x32xf32>, vector<32x96xf32>, vector<2x96xf32> -> vector<2x96xf32>
    %251 = vector.broadcast %3 : vector<1x96xf32> to vector<2x96xf32>
    %252 = arith.addf %250, %251 : vector<2x96xf32>
    %253 = vector.extract_strided_slice %249 {offsets = [0, 0], sizes = [2, 32], strides = [1, 1]} : vector<2x96xf32> to vector<2x32xf32>
    %254 = vector.extract_strided_slice %252 {offsets = [0, 0], sizes = [2, 32], strides = [1, 1]} : vector<2x96xf32> to vector<2x32xf32>
    %255 = arith.addf %253, %254 : vector<2x32xf32>
    %256 = arith.negf %255 : vector<2x32xf32>
    %257 = math.exp %256 : vector<2x32xf32>
    %cst_56 = arith.constant 1.000000e+00 : f32
    %258 = vector.broadcast %cst_56 : f32 to vector<2x32xf32>
    %259 = arith.addf %258, %257 : vector<2x32xf32>
    %260 = arith.divf %258, %259 : vector<2x32xf32>
    %261 = vector.extract_strided_slice %249 {offsets = [0, 32], sizes = [2, 32], strides = [1, 1]} : vector<2x96xf32> to vector<2x32xf32>
    %262 = vector.extract_strided_slice %252 {offsets = [0, 32], sizes = [2, 32], strides = [1, 1]} : vector<2x96xf32> to vector<2x32xf32>
    %263 = arith.addf %261, %262 : vector<2x32xf32>
    %264 = arith.negf %263 : vector<2x32xf32>
    %265 = math.exp %264 : vector<2x32xf32>
    %cst_57 = arith.constant 1.000000e+00 : f32
    %266 = vector.broadcast %cst_57 : f32 to vector<2x32xf32>
    %267 = arith.addf %266, %265 : vector<2x32xf32>
    %268 = arith.divf %266, %267 : vector<2x32xf32>
    %269 = vector.extract_strided_slice %249 {offsets = [0, 64], sizes = [2, 32], strides = [1, 1]} : vector<2x96xf32> to vector<2x32xf32>
    %270 = vector.extract_strided_slice %252 {offsets = [0, 64], sizes = [2, 32], strides = [1, 1]} : vector<2x96xf32> to vector<2x32xf32>
    %271 = arith.mulf %260, %270 : vector<2x32xf32>
    %272 = arith.addf %269, %271 : vector<2x32xf32>
    %273 = math.tanh %272 : vector<2x32xf32>
    %cst_58 = arith.constant 1.000000e+00 : f32
    %274 = vector.broadcast %cst_58 : f32 to vector<2x32xf32>
    %275 = arith.subf %274, %268 : vector<2x32xf32>
    %276 = arith.mulf %275, %273 : vector<2x32xf32>
    %277 = arith.mulf %268, %248 : vector<2x32xf32>
    %278 = arith.addf %276, %277 : vector<2x32xf32>
    %279 = tpu.iota {dimensions = array<i32: 1>} : vector<2x32xi32>
    %c16_i32 = arith.constant 16 : i32
    %280 = vector.broadcast %c16_i32 : i32 to vector<2x32xi32>
    %281 = arith.cmpi slt, %279, %280 : vector<2x32xi32>
    %282 = arith.select %281, %68, %278 : vector<2x32xi1>, vector<2x32xf32>
    %283 = arith.select %281, %98, %248 : vector<2x32xi1>, vector<2x32xf32>
    %284 = arith.select %281, %128, %218 : vector<2x32xi1>, vector<2x32xf32>
    %285 = arith.select %281, %158, %188 : vector<2x32xi1>, vector<2x32xf32>
    %286 = arith.select %281, %188, %158 : vector<2x32xi1>, vector<2x32xf32>
    %287 = arith.select %281, %218, %128 : vector<2x32xi1>, vector<2x32xf32>
    %288 = arith.select %281, %248, %98 : vector<2x32xi1>, vector<2x32xf32>
    %289 = arith.select %281, %278, %68 : vector<2x32xi1>, vector<2x32xf32>
    %290 = tpu.concatenate %282, %283, %284, %285, %286, %287, %288, %289 in 0 : vector<2x32xf32>, vector<2x32xf32>, vector<2x32xf32>, vector<2x32xf32>, vector<2x32xf32>, vector<2x32xf32>, vector<2x32xf32>, vector<2x32xf32> -> vector<16x32xf32>
    %cst_59 = arith.constant dense<0.000000e+00> : vector<16x32xf32>
    %291 = tpu.matmul %290, %5, %cst_59 {dimension_numbers = #tpu.dot_dimension_numbers<[1], [0], [0], [1], [0, 0, 1, 1], [], []>} : vector<16x32xf32>, vector<32x32xf32>, vector<16x32xf32> -> vector<16x32xf32>
    %292 = vector.broadcast %6 : vector<1x32xf32> to vector<16x32xf32>
    %293 = arith.addf %291, %292 : vector<16x32xf32>
    %294 = math.tanh %293 : vector<16x32xf32>
    %295 = vector.broadcast %7 : vector<1x32xf32> to vector<16x32xf32>
    %296 = arith.mulf %294, %295 : vector<16x32xf32>
    %cst_60 = arith.constant dense<0.000000e+00> : vector<16xf32>
    %297 = vector.multi_reduction <add>, %296, %cst_60 [1] : vector<16x32xf32> to vector<16xf32>
    %298 = vector.shape_cast %297 : vector<16xf32> to vector<16x1xf32>
    %299 = math.tanh %298 : vector<16x1xf32>
    %300 = math.exp %299 : vector<16x1xf32>
    %301 = vector.broadcast %300 : vector<16x1xf32> to vector<16x32xf32>
    %302 = arith.mulf %301, %290 : vector<16x32xf32>
    %303 = vector.extract_strided_slice %302 {offsets = [0, 0], sizes = [2, 32], strides = [1, 1]} : vector<16x32xf32> to vector<2x32xf32>
    %304 = vector.extract_strided_slice %300 {offsets = [0, 0], sizes = [2, 1], strides = [1, 1]} : vector<16x1xf32> to vector<2x1xf32>
    %305 = vector.extract_strided_slice %302 {offsets = [2, 0], sizes = [2, 32], strides = [1, 1]} : vector<16x32xf32> to vector<2x32xf32>
    %306 = arith.addf %303, %305 : vector<2x32xf32>
    %307 = vector.extract_strided_slice %300 {offsets = [2, 0], sizes = [2, 1], strides = [1, 1]} : vector<16x1xf32> to vector<2x1xf32>
    %308 = arith.addf %304, %307 : vector<2x1xf32>
    %309 = vector.extract_strided_slice %302 {offsets = [4, 0], sizes = [2, 32], strides = [1, 1]} : vector<16x32xf32> to vector<2x32xf32>
    %310 = arith.addf %306, %309 : vector<2x32xf32>
    %311 = vector.extract_strided_slice %300 {offsets = [4, 0], sizes = [2, 1], strides = [1, 1]} : vector<16x1xf32> to vector<2x1xf32>
    %312 = arith.addf %308, %311 : vector<2x1xf32>
    %313 = vector.extract_strided_slice %302 {offsets = [6, 0], sizes = [2, 32], strides = [1, 1]} : vector<16x32xf32> to vector<2x32xf32>
    %314 = arith.addf %310, %313 : vector<2x32xf32>
    %315 = vector.extract_strided_slice %300 {offsets = [6, 0], sizes = [2, 1], strides = [1, 1]} : vector<16x1xf32> to vector<2x1xf32>
    %316 = arith.addf %312, %315 : vector<2x1xf32>
    %317 = vector.extract_strided_slice %302 {offsets = [8, 0], sizes = [2, 32], strides = [1, 1]} : vector<16x32xf32> to vector<2x32xf32>
    %318 = arith.addf %314, %317 : vector<2x32xf32>
    %319 = vector.extract_strided_slice %300 {offsets = [8, 0], sizes = [2, 1], strides = [1, 1]} : vector<16x1xf32> to vector<2x1xf32>
    %320 = arith.addf %316, %319 : vector<2x1xf32>
    %321 = vector.extract_strided_slice %302 {offsets = [10, 0], sizes = [2, 32], strides = [1, 1]} : vector<16x32xf32> to vector<2x32xf32>
    %322 = arith.addf %318, %321 : vector<2x32xf32>
    %323 = vector.extract_strided_slice %300 {offsets = [10, 0], sizes = [2, 1], strides = [1, 1]} : vector<16x1xf32> to vector<2x1xf32>
    %324 = arith.addf %320, %323 : vector<2x1xf32>
    %325 = vector.extract_strided_slice %302 {offsets = [12, 0], sizes = [2, 32], strides = [1, 1]} : vector<16x32xf32> to vector<2x32xf32>
    %326 = arith.addf %322, %325 : vector<2x32xf32>
    %327 = vector.extract_strided_slice %300 {offsets = [12, 0], sizes = [2, 1], strides = [1, 1]} : vector<16x1xf32> to vector<2x1xf32>
    %328 = arith.addf %324, %327 : vector<2x1xf32>
    %329 = vector.extract_strided_slice %302 {offsets = [14, 0], sizes = [2, 32], strides = [1, 1]} : vector<16x32xf32> to vector<2x32xf32>
    %330 = arith.addf %326, %329 : vector<2x32xf32>
    %331 = vector.extract_strided_slice %300 {offsets = [14, 0], sizes = [2, 1], strides = [1, 1]} : vector<16x1xf32> to vector<2x1xf32>
    %332 = arith.addf %328, %331 : vector<2x1xf32>
    %cst_61 = arith.constant 1.000000e+00 : f32
    %333 = vector.broadcast %cst_61 : f32 to vector<2x1xf32>
    %334 = arith.divf %333, %332 : vector<2x1xf32>
    %335 = vector.broadcast %334 : vector<2x1xf32> to vector<2x32xf32>
    %336 = arith.mulf %330, %335 : vector<2x32xf32>
    %337 = vector.extract_strided_slice %300 {offsets = [0, 0], sizes = [2, 1], strides = [1, 1]} : vector<16x1xf32> to vector<2x1xf32>
    %338 = vector.extract_strided_slice %300 {offsets = [2, 0], sizes = [2, 1], strides = [1, 1]} : vector<16x1xf32> to vector<2x1xf32>
    %339 = vector.extract_strided_slice %300 {offsets = [4, 0], sizes = [2, 1], strides = [1, 1]} : vector<16x1xf32> to vector<2x1xf32>
    %340 = vector.extract_strided_slice %300 {offsets = [6, 0], sizes = [2, 1], strides = [1, 1]} : vector<16x1xf32> to vector<2x1xf32>
    %341 = vector.extract_strided_slice %300 {offsets = [8, 0], sizes = [2, 1], strides = [1, 1]} : vector<16x1xf32> to vector<2x1xf32>
    %342 = vector.extract_strided_slice %300 {offsets = [10, 0], sizes = [2, 1], strides = [1, 1]} : vector<16x1xf32> to vector<2x1xf32>
    %343 = vector.extract_strided_slice %300 {offsets = [12, 0], sizes = [2, 1], strides = [1, 1]} : vector<16x1xf32> to vector<2x1xf32>
    %344 = vector.extract_strided_slice %300 {offsets = [14, 0], sizes = [2, 1], strides = [1, 1]} : vector<16x1xf32> to vector<2x1xf32>
    %345 = tpu.concatenate %337, %338, %339, %340, %341, %342, %343, %344 in 1 : vector<2x1xf32>, vector<2x1xf32>, vector<2x1xf32>, vector<2x1xf32>, vector<2x1xf32>, vector<2x1xf32>, vector<2x1xf32>, vector<2x1xf32> -> vector<2x8xf32>
    %346 = vector.broadcast %334 : vector<2x1xf32> to vector<2x8xf32>
    %347 = arith.mulf %345, %346 : vector<2x8xf32>
    %c0_62 = arith.constant 0 : index
    %c0_63 = arith.constant 0 : index
    %c0_64 = arith.constant 0 : index
    %348 = vector.load %arg9[%c0_62, %c0_63, %c0_64] : memref<4x2x8xf32, #tpu.memory_space<vmem>>, vector<1x2x8xf32>
    %349 = vector.shape_cast %348 : vector<1x2x8xf32> to vector<2x8xf32>
    %350 = vector.shape_cast %347 : vector<2x8xf32> to vector<1x2x8xf32>
    tpu.vector_store %arg9[%c0_62, %c0_63, %c0_64], %350 {strides = array<i32>} : memref<4x2x8xf32, #tpu.memory_space<vmem>>, vector<1x2x8xf32>,
    %c16 = arith.constant 16 : index
    %c0_65 = arith.constant 0 : index
    %351 = vector.load %arg11[%c16, %c0_65] : memref<64x96xf32, #tpu.memory_space<vmem>>, vector<2x96xf32>
    %cst_66 = arith.constant dense<0.000000e+00> : vector<2x96xf32>
    %352 = tpu.matmul %278, %2, %cst_66 {dimension_numbers = #tpu.dot_dimension_numbers<[1], [0], [0], [1], [0, 0, 1, 1], [], []>} : vector<2x32xf32>, vector<32x96xf32>, vector<2x96xf32> -> vector<2x96xf32>
    %353 = vector.broadcast %3 : vector<1x96xf32> to vector<2x96xf32>
    %354 = arith.addf %352, %353 : vector<2x96xf32>
    %355 = vector.extract_strided_slice %351 {offsets = [0, 0], sizes = [2, 32], strides = [1, 1]} : vector<2x96xf32> to vector<2x32xf32>
    %356 = vector.extract_strided_slice %354 {offsets = [0, 0], sizes = [2, 32], strides = [1, 1]} : vector<2x96xf32> to vector<2x32xf32>
    %357 = arith.addf %355, %356 : vector<2x32xf32>
    %358 = arith.negf %357 : vector<2x32xf32>
    %359 = math.exp %358 : vector<2x32xf32>
    %cst_67 = arith.constant 1.000000e+00 : f32
    %360 = vector.broadcast %cst_67 : f32 to vector<2x32xf32>
    %361 = arith.addf %360, %359 : vector<2x32xf32>
    %362 = arith.divf %360, %361 : vector<2x32xf32>
    %363 = vector.extract_strided_slice %351 {offsets = [0, 32], sizes = [2, 32], strides = [1, 1]} : vector<2x96xf32> to vector<2x32xf32>
    %364 = vector.extract_strided_slice %354 {offsets = [0, 32], sizes = [2, 32], strides = [1, 1]} : vector<2x96xf32> to vector<2x32xf32>
    %365 = arith.addf %363, %364 : vector<2x32xf32>
    %366 = arith.negf %365 : vector<2x32xf32>
    %367 = math.exp %366 : vector<2x32xf32>
    %cst_68 = arith.constant 1.000000e+00 : f32
    %368 = vector.broadcast %cst_68 : f32 to vector<2x32xf32>
    %369 = arith.addf %368, %367 : vector<2x32xf32>
    %370 = arith.divf %368, %369 : vector<2x32xf32>
    %371 = vector.extract_strided_slice %351 {offsets = [0, 64], sizes = [2, 32], strides = [1, 1]} : vector<2x96xf32> to vector<2x32xf32>
    %372 = vector.extract_strided_slice %354 {offsets = [0, 64], sizes = [2, 32], strides = [1, 1]} : vector<2x96xf32> to vector<2x32xf32>
    %373 = arith.mulf %362, %372 : vector<2x32xf32>
    %374 = arith.addf %371, %373 : vector<2x32xf32>
    %375 = math.tanh %374 : vector<2x32xf32>
    %cst_69 = arith.constant 1.000000e+00 : f32
    %376 = vector.broadcast %cst_69 : f32 to vector<2x32xf32>
    %377 = arith.subf %376, %370 : vector<2x32xf32>
    %378 = arith.mulf %377, %375 : vector<2x32xf32>
    %379 = arith.mulf %370, %278 : vector<2x32xf32>
    %380 = arith.addf %378, %379 : vector<2x32xf32>
    %c18 = arith.constant 18 : index
    %c0_70 = arith.constant 0 : index
    %381 = vector.load %arg11[%c18, %c0_70] : memref<64x96xf32, #tpu.memory_space<vmem>>, vector<2x96xf32>
    %cst_71 = arith.constant dense<0.000000e+00> : vector<2x96xf32>
    %382 = tpu.matmul %380, %2, %cst_71 {dimension_numbers = #tpu.dot_dimension_numbers<[1], [0], [0], [1], [0, 0, 1, 1], [], []>} : vector<2x32xf32>, vector<32x96xf32>, vector<2x96xf32> -> vector<2x96xf32>
    %383 = vector.broadcast %3 : vector<1x96xf32> to vector<2x96xf32>
    %384 = arith.addf %382, %383 : vector<2x96xf32>
    %385 = vector.extract_strided_slice %381 {offsets = [0, 0], sizes = [2, 32], strides = [1, 1]} : vector<2x96xf32> to vector<2x32xf32>
    %386 = vector.extract_strided_slice %384 {offsets = [0, 0], sizes = [2, 32], strides = [1, 1]} : vector<2x96xf32> to vector<2x32xf32>
    %387 = arith.addf %385, %386 : vector<2x32xf32>
    %388 = arith.negf %387 : vector<2x32xf32>
    %389 = math.exp %388 : vector<2x32xf32>
    %cst_72 = arith.constant 1.000000e+00 : f32
    %390 = vector.broadcast %cst_72 : f32 to vector<2x32xf32>
    %391 = arith.addf %390, %389 : vector<2x32xf32>
    %392 = arith.divf %390, %391 : vector<2x32xf32>
    %393 = vector.extract_strided_slice %381 {offsets = [0, 32], sizes = [2, 32], strides = [1, 1]} : vector<2x96xf32> to vector<2x32xf32>
    %394 = vector.extract_strided_slice %384 {offsets = [0, 32], sizes = [2, 32], strides = [1, 1]} : vector<2x96xf32> to vector<2x32xf32>
    %395 = arith.addf %393, %394 : vector<2x32xf32>
    %396 = arith.negf %395 : vector<2x32xf32>
    %397 = math.exp %396 : vector<2x32xf32>
    %cst_73 = arith.constant 1.000000e+00 : f32
    %398 = vector.broadcast %cst_73 : f32 to vector<2x32xf32>
    %399 = arith.addf %398, %397 : vector<2x32xf32>
    %400 = arith.divf %398, %399 : vector<2x32xf32>
    %401 = vector.extract_strided_slice %381 {offsets = [0, 64], sizes = [2, 32], strides = [1, 1]} : vector<2x96xf32> to vector<2x32xf32>
    %402 = vector.extract_strided_slice %384 {offsets = [0, 64], sizes = [2, 32], strides = [1, 1]} : vector<2x96xf32> to vector<2x32xf32>
    %403 = arith.mulf %392, %402 : vector<2x32xf32>
    %404 = arith.addf %401, %403 : vector<2x32xf32>
    %405 = math.tanh %404 : vector<2x32xf32>
    %cst_74 = arith.constant 1.000000e+00 : f32
    %406 = vector.broadcast %cst_74 : f32 to vector<2x32xf32>
    %407 = arith.subf %406, %400 : vector<2x32xf32>
    %408 = arith.mulf %407, %405 : vector<2x32xf32>
    %409 = arith.mulf %400, %380 : vector<2x32xf32>
    %410 = arith.addf %408, %409 : vector<2x32xf32>
    %c20 = arith.constant 20 : index
    %c0_75 = arith.constant 0 : index
    %411 = vector.load %arg11[%c20, %c0_75] : memref<64x96xf32, #tpu.memory_space<vmem>>, vector<2x96xf32>
    %cst_76 = arith.constant dense<0.000000e+00> : vector<2x96xf32>
    %412 = tpu.matmul %410, %2, %cst_76 {dimension_numbers = #tpu.dot_dimension_numbers<[1], [0], [0], [1], [0, 0, 1, 1], [], []>} : vector<2x32xf32>, vector<32x96xf32>, vector<2x96xf32> -> vector<2x96xf32>
    %413 = vector.broadcast %3 : vector<1x96xf32> to vector<2x96xf32>
    %414 = arith.addf %412, %413 : vector<2x96xf32>
    %415 = vector.extract_strided_slice %411 {offsets = [0, 0], sizes = [2, 32], strides = [1, 1]} : vector<2x96xf32> to vector<2x32xf32>
    %416 = vector.extract_strided_slice %414 {offsets = [0, 0], sizes = [2, 32], strides = [1, 1]} : vector<2x96xf32> to vector<2x32xf32>
    %417 = arith.addf %415, %416 : vector<2x32xf32>
    %418 = arith.negf %417 : vector<2x32xf32>
    %419 = math.exp %418 : vector<2x32xf32>
    %cst_77 = arith.constant 1.000000e+00 : f32
    %420 = vector.broadcast %cst_77 : f32 to vector<2x32xf32>
    %421 = arith.addf %420, %419 : vector<2x32xf32>
    %422 = arith.divf %420, %421 : vector<2x32xf32>
    %423 = vector.extract_strided_slice %411 {offsets = [0, 32], sizes = [2, 32], strides = [1, 1]} : vector<2x96xf32> to vector<2x32xf32>
    %424 = vector.extract_strided_slice %414 {offsets = [0, 32], sizes = [2, 32], strides = [1, 1]} : vector<2x96xf32> to vector<2x32xf32>
    %425 = arith.addf %423, %424 : vector<2x32xf32>
    %426 = arith.negf %425 : vector<2x32xf32>
    %427 = math.exp %426 : vector<2x32xf32>
    %cst_78 = arith.constant 1.000000e+00 : f32
    %428 = vector.broadcast %cst_78 : f32 to vector<2x32xf32>
    %429 = arith.addf %428, %427 : vector<2x32xf32>
    %430 = arith.divf %428, %429 : vector<2x32xf32>
    %431 = vector.extract_strided_slice %411 {offsets = [0, 64], sizes = [2, 32], strides = [1, 1]} : vector<2x96xf32> to vector<2x32xf32>
    %432 = vector.extract_strided_slice %414 {offsets = [0, 64], sizes = [2, 32], strides = [1, 1]} : vector<2x96xf32> to vector<2x32xf32>
    %433 = arith.mulf %422, %432 : vector<2x32xf32>
    %434 = arith.addf %431, %433 : vector<2x32xf32>
    %435 = math.tanh %434 : vector<2x32xf32>
    %cst_79 = arith.constant 1.000000e+00 : f32
    %436 = vector.broadcast %cst_79 : f32 to vector<2x32xf32>
    %437 = arith.subf %436, %430 : vector<2x32xf32>
    %438 = arith.mulf %437, %435 : vector<2x32xf32>
    %439 = arith.mulf %430, %410 : vector<2x32xf32>
    %440 = arith.addf %438, %439 : vector<2x32xf32>
    %c22 = arith.constant 22 : index
    %c0_80 = arith.constant 0 : index
    %441 = vector.load %arg11[%c22, %c0_80] : memref<64x96xf32, #tpu.memory_space<vmem>>, vector<2x96xf32>
    %cst_81 = arith.constant dense<0.000000e+00> : vector<2x96xf32>
    %442 = tpu.matmul %440, %2, %cst_81 {dimension_numbers = #tpu.dot_dimension_numbers<[1], [0], [0], [1], [0, 0, 1, 1], [], []>} : vector<2x32xf32>, vector<32x96xf32>, vector<2x96xf32> -> vector<2x96xf32>
    %443 = vector.broadcast %3 : vector<1x96xf32> to vector<2x96xf32>
    %444 = arith.addf %442, %443 : vector<2x96xf32>
    %445 = vector.extract_strided_slice %441 {offsets = [0, 0], sizes = [2, 32], strides = [1, 1]} : vector<2x96xf32> to vector<2x32xf32>
    %446 = vector.extract_strided_slice %444 {offsets = [0, 0], sizes = [2, 32], strides = [1, 1]} : vector<2x96xf32> to vector<2x32xf32>
    %447 = arith.addf %445, %446 : vector<2x32xf32>
    %448 = arith.negf %447 : vector<2x32xf32>
    %449 = math.exp %448 : vector<2x32xf32>
    %cst_82 = arith.constant 1.000000e+00 : f32
    %450 = vector.broadcast %cst_82 : f32 to vector<2x32xf32>
    %451 = arith.addf %450, %449 : vector<2x32xf32>
    %452 = arith.divf %450, %451 : vector<2x32xf32>
    %453 = vector.extract_strided_slice %441 {offsets = [0, 32], sizes = [2, 32], strides = [1, 1]} : vector<2x96xf32> to vector<2x32xf32>
    %454 = vector.extract_strided_slice %444 {offsets = [0, 32], sizes = [2, 32], strides = [1, 1]} : vector<2x96xf32> to vector<2x32xf32>
    %455 = arith.addf %453, %454 : vector<2x32xf32>
    %456 = arith.negf %455 : vector<2x32xf32>
    %457 = math.exp %456 : vector<2x32xf32>
    %cst_83 = arith.constant 1.000000e+00 : f32
    %458 = vector.broadcast %cst_83 : f32 to vector<2x32xf32>
    %459 = arith.addf %458, %457 : vector<2x32xf32>
    %460 = arith.divf %458, %459 : vector<2x32xf32>
    %461 = vector.extract_strided_slice %441 {offsets = [0, 64], sizes = [2, 32], strides = [1, 1]} : vector<2x96xf32> to vector<2x32xf32>
    %462 = vector.extract_strided_slice %444 {offsets = [0, 64], sizes = [2, 32], strides = [1, 1]} : vector<2x96xf32> to vector<2x32xf32>
    %463 = arith.mulf %452, %462 : vector<2x32xf32>
    %464 = arith.addf %461, %463 : vector<2x32xf32>
    %465 = math.tanh %464 : vector<2x32xf32>
    %cst_84 = arith.constant 1.000000e+00 : f32
    %466 = vector.broadcast %cst_84 : f32 to vector<2x32xf32>
    %467 = arith.subf %466, %460 : vector<2x32xf32>
    %468 = arith.mulf %467, %465 : vector<2x32xf32>
    %469 = arith.mulf %460, %440 : vector<2x32xf32>
    %470 = arith.addf %468, %469 : vector<2x32xf32>
    %c24 = arith.constant 24 : index
    %c0_85 = arith.constant 0 : index
    %471 = vector.load %arg11[%c24, %c0_85] : memref<64x96xf32, #tpu.memory_space<vmem>>, vector<2x96xf32>
    %cst_86 = arith.constant dense<0.000000e+00> : vector<2x96xf32>
    %472 = tpu.matmul %470, %2, %cst_86 {dimension_numbers = #tpu.dot_dimension_numbers<[1], [0], [0], [1], [0, 0, 1, 1], [], []>} : vector<2x32xf32>, vector<32x96xf32>, vector<2x96xf32> -> vector<2x96xf32>
    %473 = vector.broadcast %3 : vector<1x96xf32> to vector<2x96xf32>
    %474 = arith.addf %472, %473 : vector<2x96xf32>
    %475 = vector.extract_strided_slice %471 {offsets = [0, 0], sizes = [2, 32], strides = [1, 1]} : vector<2x96xf32> to vector<2x32xf32>
    %476 = vector.extract_strided_slice %474 {offsets = [0, 0], sizes = [2, 32], strides = [1, 1]} : vector<2x96xf32> to vector<2x32xf32>
    %477 = arith.addf %475, %476 : vector<2x32xf32>
    %478 = arith.negf %477 : vector<2x32xf32>
    %479 = math.exp %478 : vector<2x32xf32>
    %cst_87 = arith.constant 1.000000e+00 : f32
    %480 = vector.broadcast %cst_87 : f32 to vector<2x32xf32>
    %481 = arith.addf %480, %479 : vector<2x32xf32>
    %482 = arith.divf %480, %481 : vector<2x32xf32>
    %483 = vector.extract_strided_slice %471 {offsets = [0, 32], sizes = [2, 32], strides = [1, 1]} : vector<2x96xf32> to vector<2x32xf32>
    %484 = vector.extract_strided_slice %474 {offsets = [0, 32], sizes = [2, 32], strides = [1, 1]} : vector<2x96xf32> to vector<2x32xf32>
    %485 = arith.addf %483, %484 : vector<2x32xf32>
    %486 = arith.negf %485 : vector<2x32xf32>
    %487 = math.exp %486 : vector<2x32xf32>
    %cst_88 = arith.constant 1.000000e+00 : f32
    %488 = vector.broadcast %cst_88 : f32 to vector<2x32xf32>
    %489 = arith.addf %488, %487 : vector<2x32xf32>
    %490 = arith.divf %488, %489 : vector<2x32xf32>
    %491 = vector.extract_strided_slice %471 {offsets = [0, 64], sizes = [2, 32], strides = [1, 1]} : vector<2x96xf32> to vector<2x32xf32>
    %492 = vector.extract_strided_slice %474 {offsets = [0, 64], sizes = [2, 32], strides = [1, 1]} : vector<2x96xf32> to vector<2x32xf32>
    %493 = arith.mulf %482, %492 : vector<2x32xf32>
    %494 = arith.addf %491, %493 : vector<2x32xf32>
    %495 = math.tanh %494 : vector<2x32xf32>
    %cst_89 = arith.constant 1.000000e+00 : f32
    %496 = vector.broadcast %cst_89 : f32 to vector<2x32xf32>
    %497 = arith.subf %496, %490 : vector<2x32xf32>
    %498 = arith.mulf %497, %495 : vector<2x32xf32>
    %499 = arith.mulf %490, %470 : vector<2x32xf32>
    %500 = arith.addf %498, %499 : vector<2x32xf32>
    %c26 = arith.constant 26 : index
    %c0_90 = arith.constant 0 : index
    %501 = vector.load %arg11[%c26, %c0_90] : memref<64x96xf32, #tpu.memory_space<vmem>>, vector<2x96xf32>
    %cst_91 = arith.constant dense<0.000000e+00> : vector<2x96xf32>
    %502 = tpu.matmul %500, %2, %cst_91 {dimension_numbers = #tpu.dot_dimension_numbers<[1], [0], [0], [1], [0, 0, 1, 1], [], []>} : vector<2x32xf32>, vector<32x96xf32>, vector<2x96xf32> -> vector<2x96xf32>
    %503 = vector.broadcast %3 : vector<1x96xf32> to vector<2x96xf32>
    %504 = arith.addf %502, %503 : vector<2x96xf32>
    %505 = vector.extract_strided_slice %501 {offsets = [0, 0], sizes = [2, 32], strides = [1, 1]} : vector<2x96xf32> to vector<2x32xf32>
    %506 = vector.extract_strided_slice %504 {offsets = [0, 0], sizes = [2, 32], strides = [1, 1]} : vector<2x96xf32> to vector<2x32xf32>
    %507 = arith.addf %505, %506 : vector<2x32xf32>
    %508 = arith.negf %507 : vector<2x32xf32>
    %509 = math.exp %508 : vector<2x32xf32>
    %cst_92 = arith.constant 1.000000e+00 : f32
    %510 = vector.broadcast %cst_92 : f32 to vector<2x32xf32>
    %511 = arith.addf %510, %509 : vector<2x32xf32>
    %512 = arith.divf %510, %511 : vector<2x32xf32>
    %513 = vector.extract_strided_slice %501 {offsets = [0, 32], sizes = [2, 32], strides = [1, 1]} : vector<2x96xf32> to vector<2x32xf32>
    %514 = vector.extract_strided_slice %504 {offsets = [0, 32], sizes = [2, 32], strides = [1, 1]} : vector<2x96xf32> to vector<2x32xf32>
    %515 = arith.addf %513, %514 : vector<2x32xf32>
    %516 = arith.negf %515 : vector<2x32xf32>
    %517 = math.exp %516 : vector<2x32xf32>
    %cst_93 = arith.constant 1.000000e+00 : f32
    %518 = vector.broadcast %cst_93 : f32 to vector<2x32xf32>
    %519 = arith.addf %518, %517 : vector<2x32xf32>
    %520 = arith.divf %518, %519 : vector<2x32xf32>
    %521 = vector.extract_strided_slice %501 {offsets = [0, 64], sizes = [2, 32], strides = [1, 1]} : vector<2x96xf32> to vector<2x32xf32>
    %522 = vector.extract_strided_slice %504 {offsets = [0, 64], sizes = [2, 32], strides = [1, 1]} : vector<2x96xf32> to vector<2x32xf32>
    %523 = arith.mulf %512, %522 : vector<2x32xf32>
    %524 = arith.addf %521, %523 : vector<2x32xf32>
    %525 = math.tanh %524 : vector<2x32xf32>
    %cst_94 = arith.constant 1.000000e+00 : f32
    %526 = vector.broadcast %cst_94 : f32 to vector<2x32xf32>
    %527 = arith.subf %526, %520 : vector<2x32xf32>
    %528 = arith.mulf %527, %525 : vector<2x32xf32>
    %529 = arith.mulf %520, %500 : vector<2x32xf32>
    %530 = arith.addf %528, %529 : vector<2x32xf32>
    %c28 = arith.constant 28 : index
    %c0_95 = arith.constant 0 : index
    %531 = vector.load %arg11[%c28, %c0_95] : memref<64x96xf32, #tpu.memory_space<vmem>>, vector<2x96xf32>
    %cst_96 = arith.constant dense<0.000000e+00> : vector<2x96xf32>
    %532 = tpu.matmul %530, %2, %cst_96 {dimension_numbers = #tpu.dot_dimension_numbers<[1], [0], [0], [1], [0, 0, 1, 1], [], []>} : vector<2x32xf32>, vector<32x96xf32>, vector<2x96xf32> -> vector<2x96xf32>
    %533 = vector.broadcast %3 : vector<1x96xf32> to vector<2x96xf32>
    %534 = arith.addf %532, %533 : vector<2x96xf32>
    %535 = vector.extract_strided_slice %531 {offsets = [0, 0], sizes = [2, 32], strides = [1, 1]} : vector<2x96xf32> to vector<2x32xf32>
    %536 = vector.extract_strided_slice %534 {offsets = [0, 0], sizes = [2, 32], strides = [1, 1]} : vector<2x96xf32> to vector<2x32xf32>
    %537 = arith.addf %535, %536 : vector<2x32xf32>
    %538 = arith.negf %537 : vector<2x32xf32>
    %539 = math.exp %538 : vector<2x32xf32>
    %cst_97 = arith.constant 1.000000e+00 : f32
    %540 = vector.broadcast %cst_97 : f32 to vector<2x32xf32>
    %541 = arith.addf %540, %539 : vector<2x32xf32>
    %542 = arith.divf %540, %541 : vector<2x32xf32>
    %543 = vector.extract_strided_slice %531 {offsets = [0, 32], sizes = [2, 32], strides = [1, 1]} : vector<2x96xf32> to vector<2x32xf32>
    %544 = vector.extract_strided_slice %534 {offsets = [0, 32], sizes = [2, 32], strides = [1, 1]} : vector<2x96xf32> to vector<2x32xf32>
    %545 = arith.addf %543, %544 : vector<2x32xf32>
    %546 = arith.negf %545 : vector<2x32xf32>
    %547 = math.exp %546 : vector<2x32xf32>
    %cst_98 = arith.constant 1.000000e+00 : f32
    %548 = vector.broadcast %cst_98 : f32 to vector<2x32xf32>
    %549 = arith.addf %548, %547 : vector<2x32xf32>
    %550 = arith.divf %548, %549 : vector<2x32xf32>
    %551 = vector.extract_strided_slice %531 {offsets = [0, 64], sizes = [2, 32], strides = [1, 1]} : vector<2x96xf32> to vector<2x32xf32>
    %552 = vector.extract_strided_slice %534 {offsets = [0, 64], sizes = [2, 32], strides = [1, 1]} : vector<2x96xf32> to vector<2x32xf32>
    %553 = arith.mulf %542, %552 : vector<2x32xf32>
    %554 = arith.addf %551, %553 : vector<2x32xf32>
    %555 = math.tanh %554 : vector<2x32xf32>
    %cst_99 = arith.constant 1.000000e+00 : f32
    %556 = vector.broadcast %cst_99 : f32 to vector<2x32xf32>
    %557 = arith.subf %556, %550 : vector<2x32xf32>
    %558 = arith.mulf %557, %555 : vector<2x32xf32>
    %559 = arith.mulf %550, %530 : vector<2x32xf32>
    %560 = arith.addf %558, %559 : vector<2x32xf32>
    %c30 = arith.constant 30 : index
    %c0_100 = arith.constant 0 : index
    %561 = vector.load %arg11[%c30, %c0_100] : memref<64x96xf32, #tpu.memory_space<vmem>>, vector<2x96xf32>
    %cst_101 = arith.constant dense<0.000000e+00> : vector<2x96xf32>
    %562 = tpu.matmul %560, %2, %cst_101 {dimension_numbers = #tpu.dot_dimension_numbers<[1], [0], [0], [1], [0, 0, 1, 1], [], []>} : vector<2x32xf32>, vector<32x96xf32>, vector<2x96xf32> -> vector<2x96xf32>
    %563 = vector.broadcast %3 : vector<1x96xf32> to vector<2x96xf32>
    %564 = arith.addf %562, %563 : vector<2x96xf32>
    %565 = vector.extract_strided_slice %561 {offsets = [0, 0], sizes = [2, 32], strides = [1, 1]} : vector<2x96xf32> to vector<2x32xf32>
    %566 = vector.extract_strided_slice %564 {offsets = [0, 0], sizes = [2, 32], strides = [1, 1]} : vector<2x96xf32> to vector<2x32xf32>
    %567 = arith.addf %565, %566 : vector<2x32xf32>
    %568 = arith.negf %567 : vector<2x32xf32>
    %569 = math.exp %568 : vector<2x32xf32>
    %cst_102 = arith.constant 1.000000e+00 : f32
    %570 = vector.broadcast %cst_102 : f32 to vector<2x32xf32>
    %571 = arith.addf %570, %569 : vector<2x32xf32>
    %572 = arith.divf %570, %571 : vector<2x32xf32>
    %573 = vector.extract_strided_slice %561 {offsets = [0, 32], sizes = [2, 32], strides = [1, 1]} : vector<2x96xf32> to vector<2x32xf32>
    %574 = vector.extract_strided_slice %564 {offsets = [0, 32], sizes = [2, 32], strides = [1, 1]} : vector<2x96xf32> to vector<2x32xf32>
    %575 = arith.addf %573, %574 : vector<2x32xf32>
    %576 = arith.negf %575 : vector<2x32xf32>
    %577 = math.exp %576 : vector<2x32xf32>
    %cst_103 = arith.constant 1.000000e+00 : f32
    %578 = vector.broadcast %cst_103 : f32 to vector<2x32xf32>
    %579 = arith.addf %578, %577 : vector<2x32xf32>
    %580 = arith.divf %578, %579 : vector<2x32xf32>
    %581 = vector.extract_strided_slice %561 {offsets = [0, 64], sizes = [2, 32], strides = [1, 1]} : vector<2x96xf32> to vector<2x32xf32>
    %582 = vector.extract_strided_slice %564 {offsets = [0, 64], sizes = [2, 32], strides = [1, 1]} : vector<2x96xf32> to vector<2x32xf32>
    %583 = arith.mulf %572, %582 : vector<2x32xf32>
    %584 = arith.addf %581, %583 : vector<2x32xf32>
    %585 = math.tanh %584 : vector<2x32xf32>
    %cst_104 = arith.constant 1.000000e+00 : f32
    %586 = vector.broadcast %cst_104 : f32 to vector<2x32xf32>
    %587 = arith.subf %586, %580 : vector<2x32xf32>
    %588 = arith.mulf %587, %585 : vector<2x32xf32>
    %589 = arith.mulf %580, %560 : vector<2x32xf32>
    %590 = arith.addf %588, %589 : vector<2x32xf32>
    %591 = tpu.iota {dimensions = array<i32: 1>} : vector<2x32xi32>
    %c16_i32_105 = arith.constant 16 : i32
    %592 = vector.broadcast %c16_i32_105 : i32 to vector<2x32xi32>
    %593 = arith.cmpi slt, %591, %592 : vector<2x32xi32>
    %594 = arith.select %593, %380, %590 : vector<2x32xi1>, vector<2x32xf32>
    %595 = arith.select %593, %410, %560 : vector<2x32xi1>, vector<2x32xf32>
    %596 = arith.select %593, %440, %530 : vector<2x32xi1>, vector<2x32xf32>
    %597 = arith.select %593, %470, %500 : vector<2x32xi1>, vector<2x32xf32>
    %598 = arith.select %593, %500, %470 : vector<2x32xi1>, vector<2x32xf32>
    %599 = arith.select %593, %530, %440 : vector<2x32xi1>, vector<2x32xf32>
    %600 = arith.select %593, %560, %410 : vector<2x32xi1>, vector<2x32xf32>
    %601 = arith.select %593, %590, %380 : vector<2x32xi1>, vector<2x32xf32>
    %602 = tpu.concatenate %594, %595, %596, %597, %598, %599, %600, %601 in 0 : vector<2x32xf32>, vector<2x32xf32>, vector<2x32xf32>, vector<2x32xf32>, vector<2x32xf32>, vector<2x32xf32>, vector<2x32xf32>, vector<2x32xf32> -> vector<16x32xf32>
    %cst_106 = arith.constant dense<0.000000e+00> : vector<16x32xf32>
    %603 = tpu.matmul %602, %5, %cst_106 {dimension_numbers = #tpu.dot_dimension_numbers<[1], [0], [0], [1], [0, 0, 1, 1], [], []>} : vector<16x32xf32>, vector<32x32xf32>, vector<16x32xf32> -> vector<16x32xf32>
    %604 = vector.broadcast %6 : vector<1x32xf32> to vector<16x32xf32>
    %605 = arith.addf %603, %604 : vector<16x32xf32>
    %606 = math.tanh %605 : vector<16x32xf32>
    %607 = vector.broadcast %7 : vector<1x32xf32> to vector<16x32xf32>
    %608 = arith.mulf %606, %607 : vector<16x32xf32>
    %cst_107 = arith.constant dense<0.000000e+00> : vector<16xf32>
    %609 = vector.multi_reduction <add>, %608, %cst_107 [1] : vector<16x32xf32> to vector<16xf32>
    %610 = vector.shape_cast %609 : vector<16xf32> to vector<16x1xf32>
    %611 = math.tanh %610 : vector<16x1xf32>
    %612 = math.exp %611 : vector<16x1xf32>
    %613 = vector.broadcast %612 : vector<16x1xf32> to vector<16x32xf32>
    %614 = arith.mulf %613, %602 : vector<16x32xf32>
    %615 = vector.extract_strided_slice %614 {offsets = [0, 0], sizes = [2, 32], strides = [1, 1]} : vector<16x32xf32> to vector<2x32xf32>
    %616 = vector.extract_strided_slice %612 {offsets = [0, 0], sizes = [2, 1], strides = [1, 1]} : vector<16x1xf32> to vector<2x1xf32>
    %617 = vector.extract_strided_slice %614 {offsets = [2, 0], sizes = [2, 32], strides = [1, 1]} : vector<16x32xf32> to vector<2x32xf32>
    %618 = arith.addf %615, %617 : vector<2x32xf32>
    %619 = vector.extract_strided_slice %612 {offsets = [2, 0], sizes = [2, 1], strides = [1, 1]} : vector<16x1xf32> to vector<2x1xf32>
    %620 = arith.addf %616, %619 : vector<2x1xf32>
    %621 = vector.extract_strided_slice %614 {offsets = [4, 0], sizes = [2, 32], strides = [1, 1]} : vector<16x32xf32> to vector<2x32xf32>
    %622 = arith.addf %618, %621 : vector<2x32xf32>
    %623 = vector.extract_strided_slice %612 {offsets = [4, 0], sizes = [2, 1], strides = [1, 1]} : vector<16x1xf32> to vector<2x1xf32>
    %624 = arith.addf %620, %623 : vector<2x1xf32>
    %625 = vector.extract_strided_slice %614 {offsets = [6, 0], sizes = [2, 32], strides = [1, 1]} : vector<16x32xf32> to vector<2x32xf32>
    %626 = arith.addf %622, %625 : vector<2x32xf32>
    %627 = vector.extract_strided_slice %612 {offsets = [6, 0], sizes = [2, 1], strides = [1, 1]} : vector<16x1xf32> to vector<2x1xf32>
    %628 = arith.addf %624, %627 : vector<2x1xf32>
    %629 = vector.extract_strided_slice %614 {offsets = [8, 0], sizes = [2, 32], strides = [1, 1]} : vector<16x32xf32> to vector<2x32xf32>
    %630 = arith.addf %626, %629 : vector<2x32xf32>
    %631 = vector.extract_strided_slice %612 {offsets = [8, 0], sizes = [2, 1], strides = [1, 1]} : vector<16x1xf32> to vector<2x1xf32>
    %632 = arith.addf %628, %631 : vector<2x1xf32>
    %633 = vector.extract_strided_slice %614 {offsets = [10, 0], sizes = [2, 32], strides = [1, 1]} : vector<16x32xf32> to vector<2x32xf32>
    %634 = arith.addf %630, %633 : vector<2x32xf32>
    %635 = vector.extract_strided_slice %612 {offsets = [10, 0], sizes = [2, 1], strides = [1, 1]} : vector<16x1xf32> to vector<2x1xf32>
    %636 = arith.addf %632, %635 : vector<2x1xf32>
    %637 = vector.extract_strided_slice %614 {offsets = [12, 0], sizes = [2, 32], strides = [1, 1]} : vector<16x32xf32> to vector<2x32xf32>
    %638 = arith.addf %634, %637 : vector<2x32xf32>
    %639 = vector.extract_strided_slice %612 {offsets = [12, 0], sizes = [2, 1], strides = [1, 1]} : vector<16x1xf32> to vector<2x1xf32>
    %640 = arith.addf %636, %639 : vector<2x1xf32>
    %641 = vector.extract_strided_slice %614 {offsets = [14, 0], sizes = [2, 32], strides = [1, 1]} : vector<16x32xf32> to vector<2x32xf32>
    %642 = arith.addf %638, %641 : vector<2x32xf32>
    %643 = vector.extract_strided_slice %612 {offsets = [14, 0], sizes = [2, 1], strides = [1, 1]} : vector<16x1xf32> to vector<2x1xf32>
    %644 = arith.addf %640, %643 : vector<2x1xf32>
    %cst_108 = arith.constant 1.000000e+00 : f32
    %645 = vector.broadcast %cst_108 : f32 to vector<2x1xf32>
    %646 = arith.divf %645, %644 : vector<2x1xf32>
    %647 = vector.broadcast %646 : vector<2x1xf32> to vector<2x32xf32>
    %648 = arith.mulf %642, %647 : vector<2x32xf32>
    %649 = vector.extract_strided_slice %612 {offsets = [0, 0], sizes = [2, 1], strides = [1, 1]} : vector<16x1xf32> to vector<2x1xf32>
    %650 = vector.extract_strided_slice %612 {offsets = [2, 0], sizes = [2, 1], strides = [1, 1]} : vector<16x1xf32> to vector<2x1xf32>
    %651 = vector.extract_strided_slice %612 {offsets = [4, 0], sizes = [2, 1], strides = [1, 1]} : vector<16x1xf32> to vector<2x1xf32>
    %652 = vector.extract_strided_slice %612 {offsets = [6, 0], sizes = [2, 1], strides = [1, 1]} : vector<16x1xf32> to vector<2x1xf32>
    %653 = vector.extract_strided_slice %612 {offsets = [8, 0], sizes = [2, 1], strides = [1, 1]} : vector<16x1xf32> to vector<2x1xf32>
    %654 = vector.extract_strided_slice %612 {offsets = [10, 0], sizes = [2, 1], strides = [1, 1]} : vector<16x1xf32> to vector<2x1xf32>
    %655 = vector.extract_strided_slice %612 {offsets = [12, 0], sizes = [2, 1], strides = [1, 1]} : vector<16x1xf32> to vector<2x1xf32>
    %656 = vector.extract_strided_slice %612 {offsets = [14, 0], sizes = [2, 1], strides = [1, 1]} : vector<16x1xf32> to vector<2x1xf32>
    %657 = tpu.concatenate %649, %650, %651, %652, %653, %654, %655, %656 in 1 : vector<2x1xf32>, vector<2x1xf32>, vector<2x1xf32>, vector<2x1xf32>, vector<2x1xf32>, vector<2x1xf32>, vector<2x1xf32>, vector<2x1xf32> -> vector<2x8xf32>
    %658 = vector.broadcast %646 : vector<2x1xf32> to vector<2x8xf32>
    %659 = arith.mulf %657, %658 : vector<2x8xf32>
    %c1 = arith.constant 1 : index
    %c0_109 = arith.constant 0 : index
    %c0_110 = arith.constant 0 : index
    %660 = vector.load %arg9[%c1, %c0_109, %c0_110] : memref<4x2x8xf32, #tpu.memory_space<vmem>>, vector<1x2x8xf32>
    %661 = vector.shape_cast %660 : vector<1x2x8xf32> to vector<2x8xf32>
    %662 = vector.shape_cast %659 : vector<2x8xf32> to vector<1x2x8xf32>
    tpu.vector_store %arg9[%c1, %c0_109, %c0_110], %662 {strides = array<i32>} : memref<4x2x8xf32, #tpu.memory_space<vmem>>, vector<1x2x8xf32>,
    %c32 = arith.constant 32 : index
    %c0_111 = arith.constant 0 : index
    %663 = vector.load %arg11[%c32, %c0_111] : memref<64x96xf32, #tpu.memory_space<vmem>>, vector<2x96xf32>
    %cst_112 = arith.constant dense<0.000000e+00> : vector<2x96xf32>
    %664 = tpu.matmul %590, %2, %cst_112 {dimension_numbers = #tpu.dot_dimension_numbers<[1], [0], [0], [1], [0, 0, 1, 1], [], []>} : vector<2x32xf32>, vector<32x96xf32>, vector<2x96xf32> -> vector<2x96xf32>
    %665 = vector.broadcast %3 : vector<1x96xf32> to vector<2x96xf32>
    %666 = arith.addf %664, %665 : vector<2x96xf32>
    %667 = vector.extract_strided_slice %663 {offsets = [0, 0], sizes = [2, 32], strides = [1, 1]} : vector<2x96xf32> to vector<2x32xf32>
    %668 = vector.extract_strided_slice %666 {offsets = [0, 0], sizes = [2, 32], strides = [1, 1]} : vector<2x96xf32> to vector<2x32xf32>
    %669 = arith.addf %667, %668 : vector<2x32xf32>
    %670 = arith.negf %669 : vector<2x32xf32>
    %671 = math.exp %670 : vector<2x32xf32>
    %cst_113 = arith.constant 1.000000e+00 : f32
    %672 = vector.broadcast %cst_113 : f32 to vector<2x32xf32>
    %673 = arith.addf %672, %671 : vector<2x32xf32>
    %674 = arith.divf %672, %673 : vector<2x32xf32>
    %675 = vector.extract_strided_slice %663 {offsets = [0, 32], sizes = [2, 32], strides = [1, 1]} : vector<2x96xf32> to vector<2x32xf32>
    %676 = vector.extract_strided_slice %666 {offsets = [0, 32], sizes = [2, 32], strides = [1, 1]} : vector<2x96xf32> to vector<2x32xf32>
    %677 = arith.addf %675, %676 : vector<2x32xf32>
    %678 = arith.negf %677 : vector<2x32xf32>
    %679 = math.exp %678 : vector<2x32xf32>
    %cst_114 = arith.constant 1.000000e+00 : f32
    %680 = vector.broadcast %cst_114 : f32 to vector<2x32xf32>
    %681 = arith.addf %680, %679 : vector<2x32xf32>
    %682 = arith.divf %680, %681 : vector<2x32xf32>
    %683 = vector.extract_strided_slice %663 {offsets = [0, 64], sizes = [2, 32], strides = [1, 1]} : vector<2x96xf32> to vector<2x32xf32>
    %684 = vector.extract_strided_slice %666 {offsets = [0, 64], sizes = [2, 32], strides = [1, 1]} : vector<2x96xf32> to vector<2x32xf32>
    %685 = arith.mulf %674, %684 : vector<2x32xf32>
    %686 = arith.addf %683, %685 : vector<2x32xf32>
    %687 = math.tanh %686 : vector<2x32xf32>
    %cst_115 = arith.constant 1.000000e+00 : f32
    %688 = vector.broadcast %cst_115 : f32 to vector<2x32xf32>
    %689 = arith.subf %688, %682 : vector<2x32xf32>
    %690 = arith.mulf %689, %687 : vector<2x32xf32>
    %691 = arith.mulf %682, %590 : vector<2x32xf32>
    %692 = arith.addf %690, %691 : vector<2x32xf32>
    %c34 = arith.constant 34 : index
    %c0_116 = arith.constant 0 : index
    %693 = vector.load %arg11[%c34, %c0_116] : memref<64x96xf32, #tpu.memory_space<vmem>>, vector<2x96xf32>
    %cst_117 = arith.constant dense<0.000000e+00> : vector<2x96xf32>
    %694 = tpu.matmul %692, %2, %cst_117 {dimension_numbers = #tpu.dot_dimension_numbers<[1], [0], [0], [1], [0, 0, 1, 1], [], []>} : vector<2x32xf32>, vector<32x96xf32>, vector<2x96xf32> -> vector<2x96xf32>
    %695 = vector.broadcast %3 : vector<1x96xf32> to vector<2x96xf32>
    %696 = arith.addf %694, %695 : vector<2x96xf32>
    %697 = vector.extract_strided_slice %693 {offsets = [0, 0], sizes = [2, 32], strides = [1, 1]} : vector<2x96xf32> to vector<2x32xf32>
    %698 = vector.extract_strided_slice %696 {offsets = [0, 0], sizes = [2, 32], strides = [1, 1]} : vector<2x96xf32> to vector<2x32xf32>
    %699 = arith.addf %697, %698 : vector<2x32xf32>
    %700 = arith.negf %699 : vector<2x32xf32>
    %701 = math.exp %700 : vector<2x32xf32>
    %cst_118 = arith.constant 1.000000e+00 : f32
    %702 = vector.broadcast %cst_118 : f32 to vector<2x32xf32>
    %703 = arith.addf %702, %701 : vector<2x32xf32>
    %704 = arith.divf %702, %703 : vector<2x32xf32>
    %705 = vector.extract_strided_slice %693 {offsets = [0, 32], sizes = [2, 32], strides = [1, 1]} : vector<2x96xf32> to vector<2x32xf32>
    %706 = vector.extract_strided_slice %696 {offsets = [0, 32], sizes = [2, 32], strides = [1, 1]} : vector<2x96xf32> to vector<2x32xf32>
    %707 = arith.addf %705, %706 : vector<2x32xf32>
    %708 = arith.negf %707 : vector<2x32xf32>
    %709 = math.exp %708 : vector<2x32xf32>
    %cst_119 = arith.constant 1.000000e+00 : f32
    %710 = vector.broadcast %cst_119 : f32 to vector<2x32xf32>
    %711 = arith.addf %710, %709 : vector<2x32xf32>
    %712 = arith.divf %710, %711 : vector<2x32xf32>
    %713 = vector.extract_strided_slice %693 {offsets = [0, 64], sizes = [2, 32], strides = [1, 1]} : vector<2x96xf32> to vector<2x32xf32>
    %714 = vector.extract_strided_slice %696 {offsets = [0, 64], sizes = [2, 32], strides = [1, 1]} : vector<2x96xf32> to vector<2x32xf32>
    %715 = arith.mulf %704, %714 : vector<2x32xf32>
    %716 = arith.addf %713, %715 : vector<2x32xf32>
    %717 = math.tanh %716 : vector<2x32xf32>
    %cst_120 = arith.constant 1.000000e+00 : f32
    %718 = vector.broadcast %cst_120 : f32 to vector<2x32xf32>
    %719 = arith.subf %718, %712 : vector<2x32xf32>
    %720 = arith.mulf %719, %717 : vector<2x32xf32>
    %721 = arith.mulf %712, %692 : vector<2x32xf32>
    %722 = arith.addf %720, %721 : vector<2x32xf32>
    %c36 = arith.constant 36 : index
    %c0_121 = arith.constant 0 : index
    %723 = vector.load %arg11[%c36, %c0_121] : memref<64x96xf32, #tpu.memory_space<vmem>>, vector<2x96xf32>
    %cst_122 = arith.constant dense<0.000000e+00> : vector<2x96xf32>
    %724 = tpu.matmul %722, %2, %cst_122 {dimension_numbers = #tpu.dot_dimension_numbers<[1], [0], [0], [1], [0, 0, 1, 1], [], []>} : vector<2x32xf32>, vector<32x96xf32>, vector<2x96xf32> -> vector<2x96xf32>
    %725 = vector.broadcast %3 : vector<1x96xf32> to vector<2x96xf32>
    %726 = arith.addf %724, %725 : vector<2x96xf32>
    %727 = vector.extract_strided_slice %723 {offsets = [0, 0], sizes = [2, 32], strides = [1, 1]} : vector<2x96xf32> to vector<2x32xf32>
    %728 = vector.extract_strided_slice %726 {offsets = [0, 0], sizes = [2, 32], strides = [1, 1]} : vector<2x96xf32> to vector<2x32xf32>
    %729 = arith.addf %727, %728 : vector<2x32xf32>
    %730 = arith.negf %729 : vector<2x32xf32>
    %731 = math.exp %730 : vector<2x32xf32>
    %cst_123 = arith.constant 1.000000e+00 : f32
    %732 = vector.broadcast %cst_123 : f32 to vector<2x32xf32>
    %733 = arith.addf %732, %731 : vector<2x32xf32>
    %734 = arith.divf %732, %733 : vector<2x32xf32>
    %735 = vector.extract_strided_slice %723 {offsets = [0, 32], sizes = [2, 32], strides = [1, 1]} : vector<2x96xf32> to vector<2x32xf32>
    %736 = vector.extract_strided_slice %726 {offsets = [0, 32], sizes = [2, 32], strides = [1, 1]} : vector<2x96xf32> to vector<2x32xf32>
    %737 = arith.addf %735, %736 : vector<2x32xf32>
    %738 = arith.negf %737 : vector<2x32xf32>
    %739 = math.exp %738 : vector<2x32xf32>
    %cst_124 = arith.constant 1.000000e+00 : f32
    %740 = vector.broadcast %cst_124 : f32 to vector<2x32xf32>
    %741 = arith.addf %740, %739 : vector<2x32xf32>
    %742 = arith.divf %740, %741 : vector<2x32xf32>
    %743 = vector.extract_strided_slice %723 {offsets = [0, 64], sizes = [2, 32], strides = [1, 1]} : vector<2x96xf32> to vector<2x32xf32>
    %744 = vector.extract_strided_slice %726 {offsets = [0, 64], sizes = [2, 32], strides = [1, 1]} : vector<2x96xf32> to vector<2x32xf32>
    %745 = arith.mulf %734, %744 : vector<2x32xf32>
    %746 = arith.addf %743, %745 : vector<2x32xf32>
    %747 = math.tanh %746 : vector<2x32xf32>
    %cst_125 = arith.constant 1.000000e+00 : f32
    %748 = vector.broadcast %cst_125 : f32 to vector<2x32xf32>
    %749 = arith.subf %748, %742 : vector<2x32xf32>
    %750 = arith.mulf %749, %747 : vector<2x32xf32>
    %751 = arith.mulf %742, %722 : vector<2x32xf32>
    %752 = arith.addf %750, %751 : vector<2x32xf32>
    %c38 = arith.constant 38 : index
    %c0_126 = arith.constant 0 : index
    %753 = vector.load %arg11[%c38, %c0_126] : memref<64x96xf32, #tpu.memory_space<vmem>>, vector<2x96xf32>
    %cst_127 = arith.constant dense<0.000000e+00> : vector<2x96xf32>
    %754 = tpu.matmul %752, %2, %cst_127 {dimension_numbers = #tpu.dot_dimension_numbers<[1], [0], [0], [1], [0, 0, 1, 1], [], []>} : vector<2x32xf32>, vector<32x96xf32>, vector<2x96xf32> -> vector<2x96xf32>
    %755 = vector.broadcast %3 : vector<1x96xf32> to vector<2x96xf32>
    %756 = arith.addf %754, %755 : vector<2x96xf32>
    %757 = vector.extract_strided_slice %753 {offsets = [0, 0], sizes = [2, 32], strides = [1, 1]} : vector<2x96xf32> to vector<2x32xf32>
    %758 = vector.extract_strided_slice %756 {offsets = [0, 0], sizes = [2, 32], strides = [1, 1]} : vector<2x96xf32> to vector<2x32xf32>
    %759 = arith.addf %757, %758 : vector<2x32xf32>
    %760 = arith.negf %759 : vector<2x32xf32>
    %761 = math.exp %760 : vector<2x32xf32>
    %cst_128 = arith.constant 1.000000e+00 : f32
    %762 = vector.broadcast %cst_128 : f32 to vector<2x32xf32>
    %763 = arith.addf %762, %761 : vector<2x32xf32>
    %764 = arith.divf %762, %763 : vector<2x32xf32>
    %765 = vector.extract_strided_slice %753 {offsets = [0, 32], sizes = [2, 32], strides = [1, 1]} : vector<2x96xf32> to vector<2x32xf32>
    %766 = vector.extract_strided_slice %756 {offsets = [0, 32], sizes = [2, 32], strides = [1, 1]} : vector<2x96xf32> to vector<2x32xf32>
    %767 = arith.addf %765, %766 : vector<2x32xf32>
    %768 = arith.negf %767 : vector<2x32xf32>
    %769 = math.exp %768 : vector<2x32xf32>
    %cst_129 = arith.constant 1.000000e+00 : f32
    %770 = vector.broadcast %cst_129 : f32 to vector<2x32xf32>
    %771 = arith.addf %770, %769 : vector<2x32xf32>
    %772 = arith.divf %770, %771 : vector<2x32xf32>
    %773 = vector.extract_strided_slice %753 {offsets = [0, 64], sizes = [2, 32], strides = [1, 1]} : vector<2x96xf32> to vector<2x32xf32>
    %774 = vector.extract_strided_slice %756 {offsets = [0, 64], sizes = [2, 32], strides = [1, 1]} : vector<2x96xf32> to vector<2x32xf32>
    %775 = arith.mulf %764, %774 : vector<2x32xf32>
    %776 = arith.addf %773, %775 : vector<2x32xf32>
    %777 = math.tanh %776 : vector<2x32xf32>
    %cst_130 = arith.constant 1.000000e+00 : f32
    %778 = vector.broadcast %cst_130 : f32 to vector<2x32xf32>
    %779 = arith.subf %778, %772 : vector<2x32xf32>
    %780 = arith.mulf %779, %777 : vector<2x32xf32>
    %781 = arith.mulf %772, %752 : vector<2x32xf32>
    %782 = arith.addf %780, %781 : vector<2x32xf32>
    %c40 = arith.constant 40 : index
    %c0_131 = arith.constant 0 : index
    %783 = vector.load %arg11[%c40, %c0_131] : memref<64x96xf32, #tpu.memory_space<vmem>>, vector<2x96xf32>
    %cst_132 = arith.constant dense<0.000000e+00> : vector<2x96xf32>
    %784 = tpu.matmul %782, %2, %cst_132 {dimension_numbers = #tpu.dot_dimension_numbers<[1], [0], [0], [1], [0, 0, 1, 1], [], []>} : vector<2x32xf32>, vector<32x96xf32>, vector<2x96xf32> -> vector<2x96xf32>
    %785 = vector.broadcast %3 : vector<1x96xf32> to vector<2x96xf32>
    %786 = arith.addf %784, %785 : vector<2x96xf32>
    %787 = vector.extract_strided_slice %783 {offsets = [0, 0], sizes = [2, 32], strides = [1, 1]} : vector<2x96xf32> to vector<2x32xf32>
    %788 = vector.extract_strided_slice %786 {offsets = [0, 0], sizes = [2, 32], strides = [1, 1]} : vector<2x96xf32> to vector<2x32xf32>
    %789 = arith.addf %787, %788 : vector<2x32xf32>
    %790 = arith.negf %789 : vector<2x32xf32>
    %791 = math.exp %790 : vector<2x32xf32>
    %cst_133 = arith.constant 1.000000e+00 : f32
    %792 = vector.broadcast %cst_133 : f32 to vector<2x32xf32>
    %793 = arith.addf %792, %791 : vector<2x32xf32>
    %794 = arith.divf %792, %793 : vector<2x32xf32>
    %795 = vector.extract_strided_slice %783 {offsets = [0, 32], sizes = [2, 32], strides = [1, 1]} : vector<2x96xf32> to vector<2x32xf32>
    %796 = vector.extract_strided_slice %786 {offsets = [0, 32], sizes = [2, 32], strides = [1, 1]} : vector<2x96xf32> to vector<2x32xf32>
    %797 = arith.addf %795, %796 : vector<2x32xf32>
    %798 = arith.negf %797 : vector<2x32xf32>
    %799 = math.exp %798 : vector<2x32xf32>
    %cst_134 = arith.constant 1.000000e+00 : f32
    %800 = vector.broadcast %cst_134 : f32 to vector<2x32xf32>
    %801 = arith.addf %800, %799 : vector<2x32xf32>
    %802 = arith.divf %800, %801 : vector<2x32xf32>
    %803 = vector.extract_strided_slice %783 {offsets = [0, 64], sizes = [2, 32], strides = [1, 1]} : vector<2x96xf32> to vector<2x32xf32>
    %804 = vector.extract_strided_slice %786 {offsets = [0, 64], sizes = [2, 32], strides = [1, 1]} : vector<2x96xf32> to vector<2x32xf32>
    %805 = arith.mulf %794, %804 : vector<2x32xf32>
    %806 = arith.addf %803, %805 : vector<2x32xf32>
    %807 = math.tanh %806 : vector<2x32xf32>
    %cst_135 = arith.constant 1.000000e+00 : f32
    %808 = vector.broadcast %cst_135 : f32 to vector<2x32xf32>
    %809 = arith.subf %808, %802 : vector<2x32xf32>
    %810 = arith.mulf %809, %807 : vector<2x32xf32>
    %811 = arith.mulf %802, %782 : vector<2x32xf32>
    %812 = arith.addf %810, %811 : vector<2x32xf32>
    %c42 = arith.constant 42 : index
    %c0_136 = arith.constant 0 : index
    %813 = vector.load %arg11[%c42, %c0_136] : memref<64x96xf32, #tpu.memory_space<vmem>>, vector<2x96xf32>
    %cst_137 = arith.constant dense<0.000000e+00> : vector<2x96xf32>
    %814 = tpu.matmul %812, %2, %cst_137 {dimension_numbers = #tpu.dot_dimension_numbers<[1], [0], [0], [1], [0, 0, 1, 1], [], []>} : vector<2x32xf32>, vector<32x96xf32>, vector<2x96xf32> -> vector<2x96xf32>
    %815 = vector.broadcast %3 : vector<1x96xf32> to vector<2x96xf32>
    %816 = arith.addf %814, %815 : vector<2x96xf32>
    %817 = vector.extract_strided_slice %813 {offsets = [0, 0], sizes = [2, 32], strides = [1, 1]} : vector<2x96xf32> to vector<2x32xf32>
    %818 = vector.extract_strided_slice %816 {offsets = [0, 0], sizes = [2, 32], strides = [1, 1]} : vector<2x96xf32> to vector<2x32xf32>
    %819 = arith.addf %817, %818 : vector<2x32xf32>
    %820 = arith.negf %819 : vector<2x32xf32>
    %821 = math.exp %820 : vector<2x32xf32>
    %cst_138 = arith.constant 1.000000e+00 : f32
    %822 = vector.broadcast %cst_138 : f32 to vector<2x32xf32>
    %823 = arith.addf %822, %821 : vector<2x32xf32>
    %824 = arith.divf %822, %823 : vector<2x32xf32>
    %825 = vector.extract_strided_slice %813 {offsets = [0, 32], sizes = [2, 32], strides = [1, 1]} : vector<2x96xf32> to vector<2x32xf32>
    %826 = vector.extract_strided_slice %816 {offsets = [0, 32], sizes = [2, 32], strides = [1, 1]} : vector<2x96xf32> to vector<2x32xf32>
    %827 = arith.addf %825, %826 : vector<2x32xf32>
    %828 = arith.negf %827 : vector<2x32xf32>
    %829 = math.exp %828 : vector<2x32xf32>
    %cst_139 = arith.constant 1.000000e+00 : f32
    %830 = vector.broadcast %cst_139 : f32 to vector<2x32xf32>
    %831 = arith.addf %830, %829 : vector<2x32xf32>
    %832 = arith.divf %830, %831 : vector<2x32xf32>
    %833 = vector.extract_strided_slice %813 {offsets = [0, 64], sizes = [2, 32], strides = [1, 1]} : vector<2x96xf32> to vector<2x32xf32>
    %834 = vector.extract_strided_slice %816 {offsets = [0, 64], sizes = [2, 32], strides = [1, 1]} : vector<2x96xf32> to vector<2x32xf32>
    %835 = arith.mulf %824, %834 : vector<2x32xf32>
    %836 = arith.addf %833, %835 : vector<2x32xf32>
    %837 = math.tanh %836 : vector<2x32xf32>
    %cst_140 = arith.constant 1.000000e+00 : f32
    %838 = vector.broadcast %cst_140 : f32 to vector<2x32xf32>
    %839 = arith.subf %838, %832 : vector<2x32xf32>
    %840 = arith.mulf %839, %837 : vector<2x32xf32>
    %841 = arith.mulf %832, %812 : vector<2x32xf32>
    %842 = arith.addf %840, %841 : vector<2x32xf32>
    %c44 = arith.constant 44 : index
    %c0_141 = arith.constant 0 : index
    %843 = vector.load %arg11[%c44, %c0_141] : memref<64x96xf32, #tpu.memory_space<vmem>>, vector<2x96xf32>
    %cst_142 = arith.constant dense<0.000000e+00> : vector<2x96xf32>
    %844 = tpu.matmul %842, %2, %cst_142 {dimension_numbers = #tpu.dot_dimension_numbers<[1], [0], [0], [1], [0, 0, 1, 1], [], []>} : vector<2x32xf32>, vector<32x96xf32>, vector<2x96xf32> -> vector<2x96xf32>
    %845 = vector.broadcast %3 : vector<1x96xf32> to vector<2x96xf32>
    %846 = arith.addf %844, %845 : vector<2x96xf32>
    %847 = vector.extract_strided_slice %843 {offsets = [0, 0], sizes = [2, 32], strides = [1, 1]} : vector<2x96xf32> to vector<2x32xf32>
    %848 = vector.extract_strided_slice %846 {offsets = [0, 0], sizes = [2, 32], strides = [1, 1]} : vector<2x96xf32> to vector<2x32xf32>
    %849 = arith.addf %847, %848 : vector<2x32xf32>
    %850 = arith.negf %849 : vector<2x32xf32>
    %851 = math.exp %850 : vector<2x32xf32>
    %cst_143 = arith.constant 1.000000e+00 : f32
    %852 = vector.broadcast %cst_143 : f32 to vector<2x32xf32>
    %853 = arith.addf %852, %851 : vector<2x32xf32>
    %854 = arith.divf %852, %853 : vector<2x32xf32>
    %855 = vector.extract_strided_slice %843 {offsets = [0, 32], sizes = [2, 32], strides = [1, 1]} : vector<2x96xf32> to vector<2x32xf32>
    %856 = vector.extract_strided_slice %846 {offsets = [0, 32], sizes = [2, 32], strides = [1, 1]} : vector<2x96xf32> to vector<2x32xf32>
    %857 = arith.addf %855, %856 : vector<2x32xf32>
    %858 = arith.negf %857 : vector<2x32xf32>
    %859 = math.exp %858 : vector<2x32xf32>
    %cst_144 = arith.constant 1.000000e+00 : f32
    %860 = vector.broadcast %cst_144 : f32 to vector<2x32xf32>
    %861 = arith.addf %860, %859 : vector<2x32xf32>
    %862 = arith.divf %860, %861 : vector<2x32xf32>
    %863 = vector.extract_strided_slice %843 {offsets = [0, 64], sizes = [2, 32], strides = [1, 1]} : vector<2x96xf32> to vector<2x32xf32>
    %864 = vector.extract_strided_slice %846 {offsets = [0, 64], sizes = [2, 32], strides = [1, 1]} : vector<2x96xf32> to vector<2x32xf32>
    %865 = arith.mulf %854, %864 : vector<2x32xf32>
    %866 = arith.addf %863, %865 : vector<2x32xf32>
    %867 = math.tanh %866 : vector<2x32xf32>
    %cst_145 = arith.constant 1.000000e+00 : f32
    %868 = vector.broadcast %cst_145 : f32 to vector<2x32xf32>
    %869 = arith.subf %868, %862 : vector<2x32xf32>
    %870 = arith.mulf %869, %867 : vector<2x32xf32>
    %871 = arith.mulf %862, %842 : vector<2x32xf32>
    %872 = arith.addf %870, %871 : vector<2x32xf32>
    %c46 = arith.constant 46 : index
    %c0_146 = arith.constant 0 : index
    %873 = vector.load %arg11[%c46, %c0_146] : memref<64x96xf32, #tpu.memory_space<vmem>>, vector<2x96xf32>
    %cst_147 = arith.constant dense<0.000000e+00> : vector<2x96xf32>
    %874 = tpu.matmul %872, %2, %cst_147 {dimension_numbers = #tpu.dot_dimension_numbers<[1], [0], [0], [1], [0, 0, 1, 1], [], []>} : vector<2x32xf32>, vector<32x96xf32>, vector<2x96xf32> -> vector<2x96xf32>
    %875 = vector.broadcast %3 : vector<1x96xf32> to vector<2x96xf32>
    %876 = arith.addf %874, %875 : vector<2x96xf32>
    %877 = vector.extract_strided_slice %873 {offsets = [0, 0], sizes = [2, 32], strides = [1, 1]} : vector<2x96xf32> to vector<2x32xf32>
    %878 = vector.extract_strided_slice %876 {offsets = [0, 0], sizes = [2, 32], strides = [1, 1]} : vector<2x96xf32> to vector<2x32xf32>
    %879 = arith.addf %877, %878 : vector<2x32xf32>
    %880 = arith.negf %879 : vector<2x32xf32>
    %881 = math.exp %880 : vector<2x32xf32>
    %cst_148 = arith.constant 1.000000e+00 : f32
    %882 = vector.broadcast %cst_148 : f32 to vector<2x32xf32>
    %883 = arith.addf %882, %881 : vector<2x32xf32>
    %884 = arith.divf %882, %883 : vector<2x32xf32>
    %885 = vector.extract_strided_slice %873 {offsets = [0, 32], sizes = [2, 32], strides = [1, 1]} : vector<2x96xf32> to vector<2x32xf32>
    %886 = vector.extract_strided_slice %876 {offsets = [0, 32], sizes = [2, 32], strides = [1, 1]} : vector<2x96xf32> to vector<2x32xf32>
    %887 = arith.addf %885, %886 : vector<2x32xf32>
    %888 = arith.negf %887 : vector<2x32xf32>
    %889 = math.exp %888 : vector<2x32xf32>
    %cst_149 = arith.constant 1.000000e+00 : f32
    %890 = vector.broadcast %cst_149 : f32 to vector<2x32xf32>
    %891 = arith.addf %890, %889 : vector<2x32xf32>
    %892 = arith.divf %890, %891 : vector<2x32xf32>
    %893 = vector.extract_strided_slice %873 {offsets = [0, 64], sizes = [2, 32], strides = [1, 1]} : vector<2x96xf32> to vector<2x32xf32>
    %894 = vector.extract_strided_slice %876 {offsets = [0, 64], sizes = [2, 32], strides = [1, 1]} : vector<2x96xf32> to vector<2x32xf32>
    %895 = arith.mulf %884, %894 : vector<2x32xf32>
    %896 = arith.addf %893, %895 : vector<2x32xf32>
    %897 = math.tanh %896 : vector<2x32xf32>
    %cst_150 = arith.constant 1.000000e+00 : f32
    %898 = vector.broadcast %cst_150 : f32 to vector<2x32xf32>
    %899 = arith.subf %898, %892 : vector<2x32xf32>
    %900 = arith.mulf %899, %897 : vector<2x32xf32>
    %901 = arith.mulf %892, %872 : vector<2x32xf32>
    %902 = arith.addf %900, %901 : vector<2x32xf32>
    %903 = tpu.iota {dimensions = array<i32: 1>} : vector<2x32xi32>
    %c16_i32_151 = arith.constant 16 : i32
    %904 = vector.broadcast %c16_i32_151 : i32 to vector<2x32xi32>
    %905 = arith.cmpi slt, %903, %904 : vector<2x32xi32>
    %906 = arith.select %905, %692, %902 : vector<2x32xi1>, vector<2x32xf32>
    %907 = arith.select %905, %722, %872 : vector<2x32xi1>, vector<2x32xf32>
    %908 = arith.select %905, %752, %842 : vector<2x32xi1>, vector<2x32xf32>
    %909 = arith.select %905, %782, %812 : vector<2x32xi1>, vector<2x32xf32>
    %910 = arith.select %905, %812, %782 : vector<2x32xi1>, vector<2x32xf32>
    %911 = arith.select %905, %842, %752 : vector<2x32xi1>, vector<2x32xf32>
    %912 = arith.select %905, %872, %722 : vector<2x32xi1>, vector<2x32xf32>
    %913 = arith.select %905, %902, %692 : vector<2x32xi1>, vector<2x32xf32>
    %914 = tpu.concatenate %906, %907, %908, %909, %910, %911, %912, %913 in 0 : vector<2x32xf32>, vector<2x32xf32>, vector<2x32xf32>, vector<2x32xf32>, vector<2x32xf32>, vector<2x32xf32>, vector<2x32xf32>, vector<2x32xf32> -> vector<16x32xf32>
    %cst_152 = arith.constant dense<0.000000e+00> : vector<16x32xf32>
    %915 = tpu.matmul %914, %5, %cst_152 {dimension_numbers = #tpu.dot_dimension_numbers<[1], [0], [0], [1], [0, 0, 1, 1], [], []>} : vector<16x32xf32>, vector<32x32xf32>, vector<16x32xf32> -> vector<16x32xf32>
    %916 = vector.broadcast %6 : vector<1x32xf32> to vector<16x32xf32>
    %917 = arith.addf %915, %916 : vector<16x32xf32>
    %918 = math.tanh %917 : vector<16x32xf32>
    %919 = vector.broadcast %7 : vector<1x32xf32> to vector<16x32xf32>
    %920 = arith.mulf %918, %919 : vector<16x32xf32>
    %cst_153 = arith.constant dense<0.000000e+00> : vector<16xf32>
    %921 = vector.multi_reduction <add>, %920, %cst_153 [1] : vector<16x32xf32> to vector<16xf32>
    %922 = vector.shape_cast %921 : vector<16xf32> to vector<16x1xf32>
    %923 = math.tanh %922 : vector<16x1xf32>
    %924 = math.exp %923 : vector<16x1xf32>
    %925 = vector.broadcast %924 : vector<16x1xf32> to vector<16x32xf32>
    %926 = arith.mulf %925, %914 : vector<16x32xf32>
    %927 = vector.extract_strided_slice %926 {offsets = [0, 0], sizes = [2, 32], strides = [1, 1]} : vector<16x32xf32> to vector<2x32xf32>
    %928 = vector.extract_strided_slice %924 {offsets = [0, 0], sizes = [2, 1], strides = [1, 1]} : vector<16x1xf32> to vector<2x1xf32>
    %929 = vector.extract_strided_slice %926 {offsets = [2, 0], sizes = [2, 32], strides = [1, 1]} : vector<16x32xf32> to vector<2x32xf32>
    %930 = arith.addf %927, %929 : vector<2x32xf32>
    %931 = vector.extract_strided_slice %924 {offsets = [2, 0], sizes = [2, 1], strides = [1, 1]} : vector<16x1xf32> to vector<2x1xf32>
    %932 = arith.addf %928, %931 : vector<2x1xf32>
    %933 = vector.extract_strided_slice %926 {offsets = [4, 0], sizes = [2, 32], strides = [1, 1]} : vector<16x32xf32> to vector<2x32xf32>
    %934 = arith.addf %930, %933 : vector<2x32xf32>
    %935 = vector.extract_strided_slice %924 {offsets = [4, 0], sizes = [2, 1], strides = [1, 1]} : vector<16x1xf32> to vector<2x1xf32>
    %936 = arith.addf %932, %935 : vector<2x1xf32>
    %937 = vector.extract_strided_slice %926 {offsets = [6, 0], sizes = [2, 32], strides = [1, 1]} : vector<16x32xf32> to vector<2x32xf32>
    %938 = arith.addf %934, %937 : vector<2x32xf32>
    %939 = vector.extract_strided_slice %924 {offsets = [6, 0], sizes = [2, 1], strides = [1, 1]} : vector<16x1xf32> to vector<2x1xf32>
    %940 = arith.addf %936, %939 : vector<2x1xf32>
    %941 = vector.extract_strided_slice %926 {offsets = [8, 0], sizes = [2, 32], strides = [1, 1]} : vector<16x32xf32> to vector<2x32xf32>
    %942 = arith.addf %938, %941 : vector<2x32xf32>
    %943 = vector.extract_strided_slice %924 {offsets = [8, 0], sizes = [2, 1], strides = [1, 1]} : vector<16x1xf32> to vector<2x1xf32>
    %944 = arith.addf %940, %943 : vector<2x1xf32>
    %945 = vector.extract_strided_slice %926 {offsets = [10, 0], sizes = [2, 32], strides = [1, 1]} : vector<16x32xf32> to vector<2x32xf32>
    %946 = arith.addf %942, %945 : vector<2x32xf32>
    %947 = vector.extract_strided_slice %924 {offsets = [10, 0], sizes = [2, 1], strides = [1, 1]} : vector<16x1xf32> to vector<2x1xf32>
    %948 = arith.addf %944, %947 : vector<2x1xf32>
    %949 = vector.extract_strided_slice %926 {offsets = [12, 0], sizes = [2, 32], strides = [1, 1]} : vector<16x32xf32> to vector<2x32xf32>
    %950 = arith.addf %946, %949 : vector<2x32xf32>
    %951 = vector.extract_strided_slice %924 {offsets = [12, 0], sizes = [2, 1], strides = [1, 1]} : vector<16x1xf32> to vector<2x1xf32>
    %952 = arith.addf %948, %951 : vector<2x1xf32>
    %953 = vector.extract_strided_slice %926 {offsets = [14, 0], sizes = [2, 32], strides = [1, 1]} : vector<16x32xf32> to vector<2x32xf32>
    %954 = arith.addf %950, %953 : vector<2x32xf32>
    %955 = vector.extract_strided_slice %924 {offsets = [14, 0], sizes = [2, 1], strides = [1, 1]} : vector<16x1xf32> to vector<2x1xf32>
    %956 = arith.addf %952, %955 : vector<2x1xf32>
    %cst_154 = arith.constant 1.000000e+00 : f32
    %957 = vector.broadcast %cst_154 : f32 to vector<2x1xf32>
    %958 = arith.divf %957, %956 : vector<2x1xf32>
    %959 = vector.broadcast %958 : vector<2x1xf32> to vector<2x32xf32>
    %960 = arith.mulf %954, %959 : vector<2x32xf32>
    %961 = vector.extract_strided_slice %924 {offsets = [0, 0], sizes = [2, 1], strides = [1, 1]} : vector<16x1xf32> to vector<2x1xf32>
    %962 = vector.extract_strided_slice %924 {offsets = [2, 0], sizes = [2, 1], strides = [1, 1]} : vector<16x1xf32> to vector<2x1xf32>
    %963 = vector.extract_strided_slice %924 {offsets = [4, 0], sizes = [2, 1], strides = [1, 1]} : vector<16x1xf32> to vector<2x1xf32>
    %964 = vector.extract_strided_slice %924 {offsets = [6, 0], sizes = [2, 1], strides = [1, 1]} : vector<16x1xf32> to vector<2x1xf32>
    %965 = vector.extract_strided_slice %924 {offsets = [8, 0], sizes = [2, 1], strides = [1, 1]} : vector<16x1xf32> to vector<2x1xf32>
    %966 = vector.extract_strided_slice %924 {offsets = [10, 0], sizes = [2, 1], strides = [1, 1]} : vector<16x1xf32> to vector<2x1xf32>
    %967 = vector.extract_strided_slice %924 {offsets = [12, 0], sizes = [2, 1], strides = [1, 1]} : vector<16x1xf32> to vector<2x1xf32>
    %968 = vector.extract_strided_slice %924 {offsets = [14, 0], sizes = [2, 1], strides = [1, 1]} : vector<16x1xf32> to vector<2x1xf32>
    %969 = tpu.concatenate %961, %962, %963, %964, %965, %966, %967, %968 in 1 : vector<2x1xf32>, vector<2x1xf32>, vector<2x1xf32>, vector<2x1xf32>, vector<2x1xf32>, vector<2x1xf32>, vector<2x1xf32>, vector<2x1xf32> -> vector<2x8xf32>
    %970 = vector.broadcast %958 : vector<2x1xf32> to vector<2x8xf32>
    %971 = arith.mulf %969, %970 : vector<2x8xf32>
    %c2_155 = arith.constant 2 : index
    %c0_156 = arith.constant 0 : index
    %c0_157 = arith.constant 0 : index
    %972 = vector.load %arg9[%c2_155, %c0_156, %c0_157] : memref<4x2x8xf32, #tpu.memory_space<vmem>>, vector<1x2x8xf32>
    %973 = vector.shape_cast %972 : vector<1x2x8xf32> to vector<2x8xf32>
    %974 = vector.shape_cast %971 : vector<2x8xf32> to vector<1x2x8xf32>
    tpu.vector_store %arg9[%c2_155, %c0_156, %c0_157], %974 {strides = array<i32>} : memref<4x2x8xf32, #tpu.memory_space<vmem>>, vector<1x2x8xf32>,
    %c48 = arith.constant 48 : index
    %c0_158 = arith.constant 0 : index
    %975 = vector.load %arg11[%c48, %c0_158] : memref<64x96xf32, #tpu.memory_space<vmem>>, vector<2x96xf32>
    %cst_159 = arith.constant dense<0.000000e+00> : vector<2x96xf32>
    %976 = tpu.matmul %902, %2, %cst_159 {dimension_numbers = #tpu.dot_dimension_numbers<[1], [0], [0], [1], [0, 0, 1, 1], [], []>} : vector<2x32xf32>, vector<32x96xf32>, vector<2x96xf32> -> vector<2x96xf32>
    %977 = vector.broadcast %3 : vector<1x96xf32> to vector<2x96xf32>
    %978 = arith.addf %976, %977 : vector<2x96xf32>
    %979 = vector.extract_strided_slice %975 {offsets = [0, 0], sizes = [2, 32], strides = [1, 1]} : vector<2x96xf32> to vector<2x32xf32>
    %980 = vector.extract_strided_slice %978 {offsets = [0, 0], sizes = [2, 32], strides = [1, 1]} : vector<2x96xf32> to vector<2x32xf32>
    %981 = arith.addf %979, %980 : vector<2x32xf32>
    %982 = arith.negf %981 : vector<2x32xf32>
    %983 = math.exp %982 : vector<2x32xf32>
    %cst_160 = arith.constant 1.000000e+00 : f32
    %984 = vector.broadcast %cst_160 : f32 to vector<2x32xf32>
    %985 = arith.addf %984, %983 : vector<2x32xf32>
    %986 = arith.divf %984, %985 : vector<2x32xf32>
    %987 = vector.extract_strided_slice %975 {offsets = [0, 32], sizes = [2, 32], strides = [1, 1]} : vector<2x96xf32> to vector<2x32xf32>
    %988 = vector.extract_strided_slice %978 {offsets = [0, 32], sizes = [2, 32], strides = [1, 1]} : vector<2x96xf32> to vector<2x32xf32>
    %989 = arith.addf %987, %988 : vector<2x32xf32>
    %990 = arith.negf %989 : vector<2x32xf32>
    %991 = math.exp %990 : vector<2x32xf32>
    %cst_161 = arith.constant 1.000000e+00 : f32
    %992 = vector.broadcast %cst_161 : f32 to vector<2x32xf32>
    %993 = arith.addf %992, %991 : vector<2x32xf32>
    %994 = arith.divf %992, %993 : vector<2x32xf32>
    %995 = vector.extract_strided_slice %975 {offsets = [0, 64], sizes = [2, 32], strides = [1, 1]} : vector<2x96xf32> to vector<2x32xf32>
    %996 = vector.extract_strided_slice %978 {offsets = [0, 64], sizes = [2, 32], strides = [1, 1]} : vector<2x96xf32> to vector<2x32xf32>
    %997 = arith.mulf %986, %996 : vector<2x32xf32>
    %998 = arith.addf %995, %997 : vector<2x32xf32>
    %999 = math.tanh %998 : vector<2x32xf32>
    %cst_162 = arith.constant 1.000000e+00 : f32
    %1000 = vector.broadcast %cst_162 : f32 to vector<2x32xf32>
    %1001 = arith.subf %1000, %994 : vector<2x32xf32>
    %1002 = arith.mulf %1001, %999 : vector<2x32xf32>
    %1003 = arith.mulf %994, %902 : vector<2x32xf32>
    %1004 = arith.addf %1002, %1003 : vector<2x32xf32>
    %c50 = arith.constant 50 : index
    %c0_163 = arith.constant 0 : index
    %1005 = vector.load %arg11[%c50, %c0_163] : memref<64x96xf32, #tpu.memory_space<vmem>>, vector<2x96xf32>
    %cst_164 = arith.constant dense<0.000000e+00> : vector<2x96xf32>
    %1006 = tpu.matmul %1004, %2, %cst_164 {dimension_numbers = #tpu.dot_dimension_numbers<[1], [0], [0], [1], [0, 0, 1, 1], [], []>} : vector<2x32xf32>, vector<32x96xf32>, vector<2x96xf32> -> vector<2x96xf32>
    %1007 = vector.broadcast %3 : vector<1x96xf32> to vector<2x96xf32>
    %1008 = arith.addf %1006, %1007 : vector<2x96xf32>
    %1009 = vector.extract_strided_slice %1005 {offsets = [0, 0], sizes = [2, 32], strides = [1, 1]} : vector<2x96xf32> to vector<2x32xf32>
    %1010 = vector.extract_strided_slice %1008 {offsets = [0, 0], sizes = [2, 32], strides = [1, 1]} : vector<2x96xf32> to vector<2x32xf32>
    %1011 = arith.addf %1009, %1010 : vector<2x32xf32>
    %1012 = arith.negf %1011 : vector<2x32xf32>
    %1013 = math.exp %1012 : vector<2x32xf32>
    %cst_165 = arith.constant 1.000000e+00 : f32
    %1014 = vector.broadcast %cst_165 : f32 to vector<2x32xf32>
    %1015 = arith.addf %1014, %1013 : vector<2x32xf32>
    %1016 = arith.divf %1014, %1015 : vector<2x32xf32>
    %1017 = vector.extract_strided_slice %1005 {offsets = [0, 32], sizes = [2, 32], strides = [1, 1]} : vector<2x96xf32> to vector<2x32xf32>
    %1018 = vector.extract_strided_slice %1008 {offsets = [0, 32], sizes = [2, 32], strides = [1, 1]} : vector<2x96xf32> to vector<2x32xf32>
    %1019 = arith.addf %1017, %1018 : vector<2x32xf32>
    %1020 = arith.negf %1019 : vector<2x32xf32>
    %1021 = math.exp %1020 : vector<2x32xf32>
    %cst_166 = arith.constant 1.000000e+00 : f32
    %1022 = vector.broadcast %cst_166 : f32 to vector<2x32xf32>
    %1023 = arith.addf %1022, %1021 : vector<2x32xf32>
    %1024 = arith.divf %1022, %1023 : vector<2x32xf32>
    %1025 = vector.extract_strided_slice %1005 {offsets = [0, 64], sizes = [2, 32], strides = [1, 1]} : vector<2x96xf32> to vector<2x32xf32>
    %1026 = vector.extract_strided_slice %1008 {offsets = [0, 64], sizes = [2, 32], strides = [1, 1]} : vector<2x96xf32> to vector<2x32xf32>
    %1027 = arith.mulf %1016, %1026 : vector<2x32xf32>
    %1028 = arith.addf %1025, %1027 : vector<2x32xf32>
    %1029 = math.tanh %1028 : vector<2x32xf32>
    %cst_167 = arith.constant 1.000000e+00 : f32
    %1030 = vector.broadcast %cst_167 : f32 to vector<2x32xf32>
    %1031 = arith.subf %1030, %1024 : vector<2x32xf32>
    %1032 = arith.mulf %1031, %1029 : vector<2x32xf32>
    %1033 = arith.mulf %1024, %1004 : vector<2x32xf32>
    %1034 = arith.addf %1032, %1033 : vector<2x32xf32>
    %c52 = arith.constant 52 : index
    %c0_168 = arith.constant 0 : index
    %1035 = vector.load %arg11[%c52, %c0_168] : memref<64x96xf32, #tpu.memory_space<vmem>>, vector<2x96xf32>
    %cst_169 = arith.constant dense<0.000000e+00> : vector<2x96xf32>
    %1036 = tpu.matmul %1034, %2, %cst_169 {dimension_numbers = #tpu.dot_dimension_numbers<[1], [0], [0], [1], [0, 0, 1, 1], [], []>} : vector<2x32xf32>, vector<32x96xf32>, vector<2x96xf32> -> vector<2x96xf32>
    %1037 = vector.broadcast %3 : vector<1x96xf32> to vector<2x96xf32>
    %1038 = arith.addf %1036, %1037 : vector<2x96xf32>
    %1039 = vector.extract_strided_slice %1035 {offsets = [0, 0], sizes = [2, 32], strides = [1, 1]} : vector<2x96xf32> to vector<2x32xf32>
    %1040 = vector.extract_strided_slice %1038 {offsets = [0, 0], sizes = [2, 32], strides = [1, 1]} : vector<2x96xf32> to vector<2x32xf32>
    %1041 = arith.addf %1039, %1040 : vector<2x32xf32>
    %1042 = arith.negf %1041 : vector<2x32xf32>
    %1043 = math.exp %1042 : vector<2x32xf32>
    %cst_170 = arith.constant 1.000000e+00 : f32
    %1044 = vector.broadcast %cst_170 : f32 to vector<2x32xf32>
    %1045 = arith.addf %1044, %1043 : vector<2x32xf32>
    %1046 = arith.divf %1044, %1045 : vector<2x32xf32>
    %1047 = vector.extract_strided_slice %1035 {offsets = [0, 32], sizes = [2, 32], strides = [1, 1]} : vector<2x96xf32> to vector<2x32xf32>
    %1048 = vector.extract_strided_slice %1038 {offsets = [0, 32], sizes = [2, 32], strides = [1, 1]} : vector<2x96xf32> to vector<2x32xf32>
    %1049 = arith.addf %1047, %1048 : vector<2x32xf32>
    %1050 = arith.negf %1049 : vector<2x32xf32>
    %1051 = math.exp %1050 : vector<2x32xf32>
    %cst_171 = arith.constant 1.000000e+00 : f32
    %1052 = vector.broadcast %cst_171 : f32 to vector<2x32xf32>
    %1053 = arith.addf %1052, %1051 : vector<2x32xf32>
    %1054 = arith.divf %1052, %1053 : vector<2x32xf32>
    %1055 = vector.extract_strided_slice %1035 {offsets = [0, 64], sizes = [2, 32], strides = [1, 1]} : vector<2x96xf32> to vector<2x32xf32>
    %1056 = vector.extract_strided_slice %1038 {offsets = [0, 64], sizes = [2, 32], strides = [1, 1]} : vector<2x96xf32> to vector<2x32xf32>
    %1057 = arith.mulf %1046, %1056 : vector<2x32xf32>
    %1058 = arith.addf %1055, %1057 : vector<2x32xf32>
    %1059 = math.tanh %1058 : vector<2x32xf32>
    %cst_172 = arith.constant 1.000000e+00 : f32
    %1060 = vector.broadcast %cst_172 : f32 to vector<2x32xf32>
    %1061 = arith.subf %1060, %1054 : vector<2x32xf32>
    %1062 = arith.mulf %1061, %1059 : vector<2x32xf32>
    %1063 = arith.mulf %1054, %1034 : vector<2x32xf32>
    %1064 = arith.addf %1062, %1063 : vector<2x32xf32>
    %c54 = arith.constant 54 : index
    %c0_173 = arith.constant 0 : index
    %1065 = vector.load %arg11[%c54, %c0_173] : memref<64x96xf32, #tpu.memory_space<vmem>>, vector<2x96xf32>
    %cst_174 = arith.constant dense<0.000000e+00> : vector<2x96xf32>
    %1066 = tpu.matmul %1064, %2, %cst_174 {dimension_numbers = #tpu.dot_dimension_numbers<[1], [0], [0], [1], [0, 0, 1, 1], [], []>} : vector<2x32xf32>, vector<32x96xf32>, vector<2x96xf32> -> vector<2x96xf32>
    %1067 = vector.broadcast %3 : vector<1x96xf32> to vector<2x96xf32>
    %1068 = arith.addf %1066, %1067 : vector<2x96xf32>
    %1069 = vector.extract_strided_slice %1065 {offsets = [0, 0], sizes = [2, 32], strides = [1, 1]} : vector<2x96xf32> to vector<2x32xf32>
    %1070 = vector.extract_strided_slice %1068 {offsets = [0, 0], sizes = [2, 32], strides = [1, 1]} : vector<2x96xf32> to vector<2x32xf32>
    %1071 = arith.addf %1069, %1070 : vector<2x32xf32>
    %1072 = arith.negf %1071 : vector<2x32xf32>
    %1073 = math.exp %1072 : vector<2x32xf32>
    %cst_175 = arith.constant 1.000000e+00 : f32
    %1074 = vector.broadcast %cst_175 : f32 to vector<2x32xf32>
    %1075 = arith.addf %1074, %1073 : vector<2x32xf32>
    %1076 = arith.divf %1074, %1075 : vector<2x32xf32>
    %1077 = vector.extract_strided_slice %1065 {offsets = [0, 32], sizes = [2, 32], strides = [1, 1]} : vector<2x96xf32> to vector<2x32xf32>
    %1078 = vector.extract_strided_slice %1068 {offsets = [0, 32], sizes = [2, 32], strides = [1, 1]} : vector<2x96xf32> to vector<2x32xf32>
    %1079 = arith.addf %1077, %1078 : vector<2x32xf32>
    %1080 = arith.negf %1079 : vector<2x32xf32>
    %1081 = math.exp %1080 : vector<2x32xf32>
    %cst_176 = arith.constant 1.000000e+00 : f32
    %1082 = vector.broadcast %cst_176 : f32 to vector<2x32xf32>
    %1083 = arith.addf %1082, %1081 : vector<2x32xf32>
    %1084 = arith.divf %1082, %1083 : vector<2x32xf32>
    %1085 = vector.extract_strided_slice %1065 {offsets = [0, 64], sizes = [2, 32], strides = [1, 1]} : vector<2x96xf32> to vector<2x32xf32>
    %1086 = vector.extract_strided_slice %1068 {offsets = [0, 64], sizes = [2, 32], strides = [1, 1]} : vector<2x96xf32> to vector<2x32xf32>
    %1087 = arith.mulf %1076, %1086 : vector<2x32xf32>
    %1088 = arith.addf %1085, %1087 : vector<2x32xf32>
    %1089 = math.tanh %1088 : vector<2x32xf32>
    %cst_177 = arith.constant 1.000000e+00 : f32
    %1090 = vector.broadcast %cst_177 : f32 to vector<2x32xf32>
    %1091 = arith.subf %1090, %1084 : vector<2x32xf32>
    %1092 = arith.mulf %1091, %1089 : vector<2x32xf32>
    %1093 = arith.mulf %1084, %1064 : vector<2x32xf32>
    %1094 = arith.addf %1092, %1093 : vector<2x32xf32>
    %c56 = arith.constant 56 : index
    %c0_178 = arith.constant 0 : index
    %1095 = vector.load %arg11[%c56, %c0_178] : memref<64x96xf32, #tpu.memory_space<vmem>>, vector<2x96xf32>
    %cst_179 = arith.constant dense<0.000000e+00> : vector<2x96xf32>
    %1096 = tpu.matmul %1094, %2, %cst_179 {dimension_numbers = #tpu.dot_dimension_numbers<[1], [0], [0], [1], [0, 0, 1, 1], [], []>} : vector<2x32xf32>, vector<32x96xf32>, vector<2x96xf32> -> vector<2x96xf32>
    %1097 = vector.broadcast %3 : vector<1x96xf32> to vector<2x96xf32>
    %1098 = arith.addf %1096, %1097 : vector<2x96xf32>
    %1099 = vector.extract_strided_slice %1095 {offsets = [0, 0], sizes = [2, 32], strides = [1, 1]} : vector<2x96xf32> to vector<2x32xf32>
    %1100 = vector.extract_strided_slice %1098 {offsets = [0, 0], sizes = [2, 32], strides = [1, 1]} : vector<2x96xf32> to vector<2x32xf32>
    %1101 = arith.addf %1099, %1100 : vector<2x32xf32>
    %1102 = arith.negf %1101 : vector<2x32xf32>
    %1103 = math.exp %1102 : vector<2x32xf32>
    %cst_180 = arith.constant 1.000000e+00 : f32
    %1104 = vector.broadcast %cst_180 : f32 to vector<2x32xf32>
    %1105 = arith.addf %1104, %1103 : vector<2x32xf32>
    %1106 = arith.divf %1104, %1105 : vector<2x32xf32>
    %1107 = vector.extract_strided_slice %1095 {offsets = [0, 32], sizes = [2, 32], strides = [1, 1]} : vector<2x96xf32> to vector<2x32xf32>
    %1108 = vector.extract_strided_slice %1098 {offsets = [0, 32], sizes = [2, 32], strides = [1, 1]} : vector<2x96xf32> to vector<2x32xf32>
    %1109 = arith.addf %1107, %1108 : vector<2x32xf32>
    %1110 = arith.negf %1109 : vector<2x32xf32>
    %1111 = math.exp %1110 : vector<2x32xf32>
    %cst_181 = arith.constant 1.000000e+00 : f32
    %1112 = vector.broadcast %cst_181 : f32 to vector<2x32xf32>
    %1113 = arith.addf %1112, %1111 : vector<2x32xf32>
    %1114 = arith.divf %1112, %1113 : vector<2x32xf32>
    %1115 = vector.extract_strided_slice %1095 {offsets = [0, 64], sizes = [2, 32], strides = [1, 1]} : vector<2x96xf32> to vector<2x32xf32>
    %1116 = vector.extract_strided_slice %1098 {offsets = [0, 64], sizes = [2, 32], strides = [1, 1]} : vector<2x96xf32> to vector<2x32xf32>
    %1117 = arith.mulf %1106, %1116 : vector<2x32xf32>
    %1118 = arith.addf %1115, %1117 : vector<2x32xf32>
    %1119 = math.tanh %1118 : vector<2x32xf32>
    %cst_182 = arith.constant 1.000000e+00 : f32
    %1120 = vector.broadcast %cst_182 : f32 to vector<2x32xf32>
    %1121 = arith.subf %1120, %1114 : vector<2x32xf32>
    %1122 = arith.mulf %1121, %1119 : vector<2x32xf32>
    %1123 = arith.mulf %1114, %1094 : vector<2x32xf32>
    %1124 = arith.addf %1122, %1123 : vector<2x32xf32>
    %c58 = arith.constant 58 : index
    %c0_183 = arith.constant 0 : index
    %1125 = vector.load %arg11[%c58, %c0_183] : memref<64x96xf32, #tpu.memory_space<vmem>>, vector<2x96xf32>
    %cst_184 = arith.constant dense<0.000000e+00> : vector<2x96xf32>
    %1126 = tpu.matmul %1124, %2, %cst_184 {dimension_numbers = #tpu.dot_dimension_numbers<[1], [0], [0], [1], [0, 0, 1, 1], [], []>} : vector<2x32xf32>, vector<32x96xf32>, vector<2x96xf32> -> vector<2x96xf32>
    %1127 = vector.broadcast %3 : vector<1x96xf32> to vector<2x96xf32>
    %1128 = arith.addf %1126, %1127 : vector<2x96xf32>
    %1129 = vector.extract_strided_slice %1125 {offsets = [0, 0], sizes = [2, 32], strides = [1, 1]} : vector<2x96xf32> to vector<2x32xf32>
    %1130 = vector.extract_strided_slice %1128 {offsets = [0, 0], sizes = [2, 32], strides = [1, 1]} : vector<2x96xf32> to vector<2x32xf32>
    %1131 = arith.addf %1129, %1130 : vector<2x32xf32>
    %1132 = arith.negf %1131 : vector<2x32xf32>
    %1133 = math.exp %1132 : vector<2x32xf32>
    %cst_185 = arith.constant 1.000000e+00 : f32
    %1134 = vector.broadcast %cst_185 : f32 to vector<2x32xf32>
    %1135 = arith.addf %1134, %1133 : vector<2x32xf32>
    %1136 = arith.divf %1134, %1135 : vector<2x32xf32>
    %1137 = vector.extract_strided_slice %1125 {offsets = [0, 32], sizes = [2, 32], strides = [1, 1]} : vector<2x96xf32> to vector<2x32xf32>
    %1138 = vector.extract_strided_slice %1128 {offsets = [0, 32], sizes = [2, 32], strides = [1, 1]} : vector<2x96xf32> to vector<2x32xf32>
    %1139 = arith.addf %1137, %1138 : vector<2x32xf32>
    %1140 = arith.negf %1139 : vector<2x32xf32>
    %1141 = math.exp %1140 : vector<2x32xf32>
    %cst_186 = arith.constant 1.000000e+00 : f32
    %1142 = vector.broadcast %cst_186 : f32 to vector<2x32xf32>
    %1143 = arith.addf %1142, %1141 : vector<2x32xf32>
    %1144 = arith.divf %1142, %1143 : vector<2x32xf32>
    %1145 = vector.extract_strided_slice %1125 {offsets = [0, 64], sizes = [2, 32], strides = [1, 1]} : vector<2x96xf32> to vector<2x32xf32>
    %1146 = vector.extract_strided_slice %1128 {offsets = [0, 64], sizes = [2, 32], strides = [1, 1]} : vector<2x96xf32> to vector<2x32xf32>
    %1147 = arith.mulf %1136, %1146 : vector<2x32xf32>
    %1148 = arith.addf %1145, %1147 : vector<2x32xf32>
    %1149 = math.tanh %1148 : vector<2x32xf32>
    %cst_187 = arith.constant 1.000000e+00 : f32
    %1150 = vector.broadcast %cst_187 : f32 to vector<2x32xf32>
    %1151 = arith.subf %1150, %1144 : vector<2x32xf32>
    %1152 = arith.mulf %1151, %1149 : vector<2x32xf32>
    %1153 = arith.mulf %1144, %1124 : vector<2x32xf32>
    %1154 = arith.addf %1152, %1153 : vector<2x32xf32>
    %c60 = arith.constant 60 : index
    %c0_188 = arith.constant 0 : index
    %1155 = vector.load %arg11[%c60, %c0_188] : memref<64x96xf32, #tpu.memory_space<vmem>>, vector<2x96xf32>
    %cst_189 = arith.constant dense<0.000000e+00> : vector<2x96xf32>
    %1156 = tpu.matmul %1154, %2, %cst_189 {dimension_numbers = #tpu.dot_dimension_numbers<[1], [0], [0], [1], [0, 0, 1, 1], [], []>} : vector<2x32xf32>, vector<32x96xf32>, vector<2x96xf32> -> vector<2x96xf32>
    %1157 = vector.broadcast %3 : vector<1x96xf32> to vector<2x96xf32>
    %1158 = arith.addf %1156, %1157 : vector<2x96xf32>
    %1159 = vector.extract_strided_slice %1155 {offsets = [0, 0], sizes = [2, 32], strides = [1, 1]} : vector<2x96xf32> to vector<2x32xf32>
    %1160 = vector.extract_strided_slice %1158 {offsets = [0, 0], sizes = [2, 32], strides = [1, 1]} : vector<2x96xf32> to vector<2x32xf32>
    %1161 = arith.addf %1159, %1160 : vector<2x32xf32>
    %1162 = arith.negf %1161 : vector<2x32xf32>
    %1163 = math.exp %1162 : vector<2x32xf32>
    %cst_190 = arith.constant 1.000000e+00 : f32
    %1164 = vector.broadcast %cst_190 : f32 to vector<2x32xf32>
    %1165 = arith.addf %1164, %1163 : vector<2x32xf32>
    %1166 = arith.divf %1164, %1165 : vector<2x32xf32>
    %1167 = vector.extract_strided_slice %1155 {offsets = [0, 32], sizes = [2, 32], strides = [1, 1]} : vector<2x96xf32> to vector<2x32xf32>
    %1168 = vector.extract_strided_slice %1158 {offsets = [0, 32], sizes = [2, 32], strides = [1, 1]} : vector<2x96xf32> to vector<2x32xf32>
    %1169 = arith.addf %1167, %1168 : vector<2x32xf32>
    %1170 = arith.negf %1169 : vector<2x32xf32>
    %1171 = math.exp %1170 : vector<2x32xf32>
    %cst_191 = arith.constant 1.000000e+00 : f32
    %1172 = vector.broadcast %cst_191 : f32 to vector<2x32xf32>
    %1173 = arith.addf %1172, %1171 : vector<2x32xf32>
    %1174 = arith.divf %1172, %1173 : vector<2x32xf32>
    %1175 = vector.extract_strided_slice %1155 {offsets = [0, 64], sizes = [2, 32], strides = [1, 1]} : vector<2x96xf32> to vector<2x32xf32>
    %1176 = vector.extract_strided_slice %1158 {offsets = [0, 64], sizes = [2, 32], strides = [1, 1]} : vector<2x96xf32> to vector<2x32xf32>
    %1177 = arith.mulf %1166, %1176 : vector<2x32xf32>
    %1178 = arith.addf %1175, %1177 : vector<2x32xf32>
    %1179 = math.tanh %1178 : vector<2x32xf32>
    %cst_192 = arith.constant 1.000000e+00 : f32
    %1180 = vector.broadcast %cst_192 : f32 to vector<2x32xf32>
    %1181 = arith.subf %1180, %1174 : vector<2x32xf32>
    %1182 = arith.mulf %1181, %1179 : vector<2x32xf32>
    %1183 = arith.mulf %1174, %1154 : vector<2x32xf32>
    %1184 = arith.addf %1182, %1183 : vector<2x32xf32>
    %c62 = arith.constant 62 : index
    %c0_193 = arith.constant 0 : index
    %1185 = vector.load %arg11[%c62, %c0_193] : memref<64x96xf32, #tpu.memory_space<vmem>>, vector<2x96xf32>
    %cst_194 = arith.constant dense<0.000000e+00> : vector<2x96xf32>
    %1186 = tpu.matmul %1184, %2, %cst_194 {dimension_numbers = #tpu.dot_dimension_numbers<[1], [0], [0], [1], [0, 0, 1, 1], [], []>} : vector<2x32xf32>, vector<32x96xf32>, vector<2x96xf32> -> vector<2x96xf32>
    %1187 = vector.broadcast %3 : vector<1x96xf32> to vector<2x96xf32>
    %1188 = arith.addf %1186, %1187 : vector<2x96xf32>
    %1189 = vector.extract_strided_slice %1185 {offsets = [0, 0], sizes = [2, 32], strides = [1, 1]} : vector<2x96xf32> to vector<2x32xf32>
    %1190 = vector.extract_strided_slice %1188 {offsets = [0, 0], sizes = [2, 32], strides = [1, 1]} : vector<2x96xf32> to vector<2x32xf32>
    %1191 = arith.addf %1189, %1190 : vector<2x32xf32>
    %1192 = arith.negf %1191 : vector<2x32xf32>
    %1193 = math.exp %1192 : vector<2x32xf32>
    %cst_195 = arith.constant 1.000000e+00 : f32
    %1194 = vector.broadcast %cst_195 : f32 to vector<2x32xf32>
    %1195 = arith.addf %1194, %1193 : vector<2x32xf32>
    %1196 = arith.divf %1194, %1195 : vector<2x32xf32>
    %1197 = vector.extract_strided_slice %1185 {offsets = [0, 32], sizes = [2, 32], strides = [1, 1]} : vector<2x96xf32> to vector<2x32xf32>
    %1198 = vector.extract_strided_slice %1188 {offsets = [0, 32], sizes = [2, 32], strides = [1, 1]} : vector<2x96xf32> to vector<2x32xf32>
    %1199 = arith.addf %1197, %1198 : vector<2x32xf32>
    %1200 = arith.negf %1199 : vector<2x32xf32>
    %1201 = math.exp %1200 : vector<2x32xf32>
    %cst_196 = arith.constant 1.000000e+00 : f32
    %1202 = vector.broadcast %cst_196 : f32 to vector<2x32xf32>
    %1203 = arith.addf %1202, %1201 : vector<2x32xf32>
    %1204 = arith.divf %1202, %1203 : vector<2x32xf32>
    %1205 = vector.extract_strided_slice %1185 {offsets = [0, 64], sizes = [2, 32], strides = [1, 1]} : vector<2x96xf32> to vector<2x32xf32>
    %1206 = vector.extract_strided_slice %1188 {offsets = [0, 64], sizes = [2, 32], strides = [1, 1]} : vector<2x96xf32> to vector<2x32xf32>
    %1207 = arith.mulf %1196, %1206 : vector<2x32xf32>
    %1208 = arith.addf %1205, %1207 : vector<2x32xf32>
    %1209 = math.tanh %1208 : vector<2x32xf32>
    %cst_197 = arith.constant 1.000000e+00 : f32
    %1210 = vector.broadcast %cst_197 : f32 to vector<2x32xf32>
    %1211 = arith.subf %1210, %1204 : vector<2x32xf32>
    %1212 = arith.mulf %1211, %1209 : vector<2x32xf32>
    %1213 = arith.mulf %1204, %1184 : vector<2x32xf32>
    %1214 = arith.addf %1212, %1213 : vector<2x32xf32>
    %1215 = tpu.iota {dimensions = array<i32: 1>} : vector<2x32xi32>
    %c16_i32_198 = arith.constant 16 : i32
    %1216 = vector.broadcast %c16_i32_198 : i32 to vector<2x32xi32>
    %1217 = arith.cmpi slt, %1215, %1216 : vector<2x32xi32>
    %1218 = arith.select %1217, %1004, %1214 : vector<2x32xi1>, vector<2x32xf32>
    %1219 = arith.select %1217, %1034, %1184 : vector<2x32xi1>, vector<2x32xf32>
    %1220 = arith.select %1217, %1064, %1154 : vector<2x32xi1>, vector<2x32xf32>
    %1221 = arith.select %1217, %1094, %1124 : vector<2x32xi1>, vector<2x32xf32>
    %1222 = arith.select %1217, %1124, %1094 : vector<2x32xi1>, vector<2x32xf32>
    %1223 = arith.select %1217, %1154, %1064 : vector<2x32xi1>, vector<2x32xf32>
    %1224 = arith.select %1217, %1184, %1034 : vector<2x32xi1>, vector<2x32xf32>
    %1225 = arith.select %1217, %1214, %1004 : vector<2x32xi1>, vector<2x32xf32>
    %1226 = tpu.concatenate %1218, %1219, %1220, %1221, %1222, %1223, %1224, %1225 in 0 : vector<2x32xf32>, vector<2x32xf32>, vector<2x32xf32>, vector<2x32xf32>, vector<2x32xf32>, vector<2x32xf32>, vector<2x32xf32>, vector<2x32xf32> -> vector<16x32xf32>
    %cst_199 = arith.constant dense<0.000000e+00> : vector<16x32xf32>
    %1227 = tpu.matmul %1226, %5, %cst_199 {dimension_numbers = #tpu.dot_dimension_numbers<[1], [0], [0], [1], [0, 0, 1, 1], [], []>} : vector<16x32xf32>, vector<32x32xf32>, vector<16x32xf32> -> vector<16x32xf32>
    %1228 = vector.broadcast %6 : vector<1x32xf32> to vector<16x32xf32>
    %1229 = arith.addf %1227, %1228 : vector<16x32xf32>
    %1230 = math.tanh %1229 : vector<16x32xf32>
    %1231 = vector.broadcast %7 : vector<1x32xf32> to vector<16x32xf32>
    %1232 = arith.mulf %1230, %1231 : vector<16x32xf32>
    %cst_200 = arith.constant dense<0.000000e+00> : vector<16xf32>
    %1233 = vector.multi_reduction <add>, %1232, %cst_200 [1] : vector<16x32xf32> to vector<16xf32>
    %1234 = vector.shape_cast %1233 : vector<16xf32> to vector<16x1xf32>
    %1235 = math.tanh %1234 : vector<16x1xf32>
    %1236 = math.exp %1235 : vector<16x1xf32>
    %1237 = vector.broadcast %1236 : vector<16x1xf32> to vector<16x32xf32>
    %1238 = arith.mulf %1237, %1226 : vector<16x32xf32>
    %1239 = vector.extract_strided_slice %1238 {offsets = [0, 0], sizes = [2, 32], strides = [1, 1]} : vector<16x32xf32> to vector<2x32xf32>
    %1240 = vector.extract_strided_slice %1236 {offsets = [0, 0], sizes = [2, 1], strides = [1, 1]} : vector<16x1xf32> to vector<2x1xf32>
    %1241 = vector.extract_strided_slice %1238 {offsets = [2, 0], sizes = [2, 32], strides = [1, 1]} : vector<16x32xf32> to vector<2x32xf32>
    %1242 = arith.addf %1239, %1241 : vector<2x32xf32>
    %1243 = vector.extract_strided_slice %1236 {offsets = [2, 0], sizes = [2, 1], strides = [1, 1]} : vector<16x1xf32> to vector<2x1xf32>
    %1244 = arith.addf %1240, %1243 : vector<2x1xf32>
    %1245 = vector.extract_strided_slice %1238 {offsets = [4, 0], sizes = [2, 32], strides = [1, 1]} : vector<16x32xf32> to vector<2x32xf32>
    %1246 = arith.addf %1242, %1245 : vector<2x32xf32>
    %1247 = vector.extract_strided_slice %1236 {offsets = [4, 0], sizes = [2, 1], strides = [1, 1]} : vector<16x1xf32> to vector<2x1xf32>
    %1248 = arith.addf %1244, %1247 : vector<2x1xf32>
    %1249 = vector.extract_strided_slice %1238 {offsets = [6, 0], sizes = [2, 32], strides = [1, 1]} : vector<16x32xf32> to vector<2x32xf32>
    %1250 = arith.addf %1246, %1249 : vector<2x32xf32>
    %1251 = vector.extract_strided_slice %1236 {offsets = [6, 0], sizes = [2, 1], strides = [1, 1]} : vector<16x1xf32> to vector<2x1xf32>
    %1252 = arith.addf %1248, %1251 : vector<2x1xf32>
    %1253 = vector.extract_strided_slice %1238 {offsets = [8, 0], sizes = [2, 32], strides = [1, 1]} : vector<16x32xf32> to vector<2x32xf32>
    %1254 = arith.addf %1250, %1253 : vector<2x32xf32>
    %1255 = vector.extract_strided_slice %1236 {offsets = [8, 0], sizes = [2, 1], strides = [1, 1]} : vector<16x1xf32> to vector<2x1xf32>
    %1256 = arith.addf %1252, %1255 : vector<2x1xf32>
    %1257 = vector.extract_strided_slice %1238 {offsets = [10, 0], sizes = [2, 32], strides = [1, 1]} : vector<16x32xf32> to vector<2x32xf32>
    %1258 = arith.addf %1254, %1257 : vector<2x32xf32>
    %1259 = vector.extract_strided_slice %1236 {offsets = [10, 0], sizes = [2, 1], strides = [1, 1]} : vector<16x1xf32> to vector<2x1xf32>
    %1260 = arith.addf %1256, %1259 : vector<2x1xf32>
    %1261 = vector.extract_strided_slice %1238 {offsets = [12, 0], sizes = [2, 32], strides = [1, 1]} : vector<16x32xf32> to vector<2x32xf32>
    %1262 = arith.addf %1258, %1261 : vector<2x32xf32>
    %1263 = vector.extract_strided_slice %1236 {offsets = [12, 0], sizes = [2, 1], strides = [1, 1]} : vector<16x1xf32> to vector<2x1xf32>
    %1264 = arith.addf %1260, %1263 : vector<2x1xf32>
    %1265 = vector.extract_strided_slice %1238 {offsets = [14, 0], sizes = [2, 32], strides = [1, 1]} : vector<16x32xf32> to vector<2x32xf32>
    %1266 = arith.addf %1262, %1265 : vector<2x32xf32>
    %1267 = vector.extract_strided_slice %1236 {offsets = [14, 0], sizes = [2, 1], strides = [1, 1]} : vector<16x1xf32> to vector<2x1xf32>
    %1268 = arith.addf %1264, %1267 : vector<2x1xf32>
    %cst_201 = arith.constant 1.000000e+00 : f32
    %1269 = vector.broadcast %cst_201 : f32 to vector<2x1xf32>
    %1270 = arith.divf %1269, %1268 : vector<2x1xf32>
    %1271 = vector.broadcast %1270 : vector<2x1xf32> to vector<2x32xf32>
    %1272 = arith.mulf %1266, %1271 : vector<2x32xf32>
    %1273 = vector.extract_strided_slice %1236 {offsets = [0, 0], sizes = [2, 1], strides = [1, 1]} : vector<16x1xf32> to vector<2x1xf32>
    %1274 = vector.extract_strided_slice %1236 {offsets = [2, 0], sizes = [2, 1], strides = [1, 1]} : vector<16x1xf32> to vector<2x1xf32>
    %1275 = vector.extract_strided_slice %1236 {offsets = [4, 0], sizes = [2, 1], strides = [1, 1]} : vector<16x1xf32> to vector<2x1xf32>
    %1276 = vector.extract_strided_slice %1236 {offsets = [6, 0], sizes = [2, 1], strides = [1, 1]} : vector<16x1xf32> to vector<2x1xf32>
    %1277 = vector.extract_strided_slice %1236 {offsets = [8, 0], sizes = [2, 1], strides = [1, 1]} : vector<16x1xf32> to vector<2x1xf32>
    %1278 = vector.extract_strided_slice %1236 {offsets = [10, 0], sizes = [2, 1], strides = [1, 1]} : vector<16x1xf32> to vector<2x1xf32>
    %1279 = vector.extract_strided_slice %1236 {offsets = [12, 0], sizes = [2, 1], strides = [1, 1]} : vector<16x1xf32> to vector<2x1xf32>
    %1280 = vector.extract_strided_slice %1236 {offsets = [14, 0], sizes = [2, 1], strides = [1, 1]} : vector<16x1xf32> to vector<2x1xf32>
    %1281 = tpu.concatenate %1273, %1274, %1275, %1276, %1277, %1278, %1279, %1280 in 1 : vector<2x1xf32>, vector<2x1xf32>, vector<2x1xf32>, vector<2x1xf32>, vector<2x1xf32>, vector<2x1xf32>, vector<2x1xf32>, vector<2x1xf32> -> vector<2x8xf32>
    %1282 = vector.broadcast %1270 : vector<2x1xf32> to vector<2x8xf32>
    %1283 = arith.mulf %1281, %1282 : vector<2x8xf32>
    %c3 = arith.constant 3 : index
    %c0_202 = arith.constant 0 : index
    %c0_203 = arith.constant 0 : index
    %1284 = vector.load %arg9[%c3, %c0_202, %c0_203] : memref<4x2x8xf32, #tpu.memory_space<vmem>>, vector<1x2x8xf32>
    %1285 = vector.shape_cast %1284 : vector<1x2x8xf32> to vector<2x8xf32>
    %1286 = vector.shape_cast %1283 : vector<2x8xf32> to vector<1x2x8xf32>
    tpu.vector_store %arg9[%c3, %c0_202, %c0_203], %1286 {strides = array<i32>} : memref<4x2x8xf32, #tpu.memory_space<vmem>>, vector<1x2x8xf32>,
    %1287 = tpu.concatenate %336, %648, %960, %1272 in 0 : vector<2x32xf32>, vector<2x32xf32>, vector<2x32xf32>, vector<2x32xf32> -> vector<8x32xf32>
    %cst_204 = arith.constant dense<0.000000e+00> : vector<8x96xf32>
    %1288 = tpu.matmul %1287, %9, %cst_204 {dimension_numbers = #tpu.dot_dimension_numbers<[1], [0], [0], [1], [0, 0, 1, 1], [], []>} : vector<8x32xf32>, vector<32x96xf32>, vector<8x96xf32> -> vector<8x96xf32>
    %cst_205 = arith.constant dense<0.000000e+00> : vector<8x96xf32>
    %1289 = tpu.matmul %1287, %10, %cst_205 {dimension_numbers = #tpu.dot_dimension_numbers<[1], [0], [0], [1], [0, 0, 1, 1], [], []>} : vector<8x32xf32>, vector<32x96xf32>, vector<8x96xf32> -> vector<8x96xf32>
    %cst_206 = arith.constant 0.000000e+00 : f32
    %1290 = vector.broadcast %cst_206 : f32 to vector<2x32xf32>
    %1291 = vector.extract_strided_slice %1288 {offsets = [0, 0], sizes = [2, 96], strides = [1, 1]} : vector<8x96xf32> to vector<2x96xf32>
    %1292 = vector.extract_strided_slice %1289 {offsets = [6, 0], sizes = [2, 96], strides = [1, 1]} : vector<8x96xf32> to vector<2x96xf32>
    %1293 = arith.addf %1291, %1292 : vector<2x96xf32>
    %1294 = vector.broadcast %11 : vector<1x96xf32> to vector<2x96xf32>
    %1295 = arith.addf %1293, %1294 : vector<2x96xf32>
    %cst_207 = arith.constant dense<0.000000e+00> : vector<2x96xf32>
    %1296 = tpu.matmul %1290, %13, %cst_207 {dimension_numbers = #tpu.dot_dimension_numbers<[1], [0], [0], [1], [0, 0, 1, 1], [], []>} : vector<2x32xf32>, vector<32x96xf32>, vector<2x96xf32> -> vector<2x96xf32>
    %1297 = vector.broadcast %14 : vector<1x96xf32> to vector<2x96xf32>
    %1298 = arith.addf %1296, %1297 : vector<2x96xf32>
    %1299 = vector.extract_strided_slice %1295 {offsets = [0, 0], sizes = [2, 32], strides = [1, 1]} : vector<2x96xf32> to vector<2x32xf32>
    %1300 = vector.extract_strided_slice %1298 {offsets = [0, 0], sizes = [2, 32], strides = [1, 1]} : vector<2x96xf32> to vector<2x32xf32>
    %1301 = arith.addf %1299, %1300 : vector<2x32xf32>
    %1302 = arith.negf %1301 : vector<2x32xf32>
    %1303 = math.exp %1302 : vector<2x32xf32>
    %cst_208 = arith.constant 1.000000e+00 : f32
    %1304 = vector.broadcast %cst_208 : f32 to vector<2x32xf32>
    %1305 = arith.addf %1304, %1303 : vector<2x32xf32>
    %1306 = arith.divf %1304, %1305 : vector<2x32xf32>
    %1307 = vector.extract_strided_slice %1295 {offsets = [0, 32], sizes = [2, 32], strides = [1, 1]} : vector<2x96xf32> to vector<2x32xf32>
    %1308 = vector.extract_strided_slice %1298 {offsets = [0, 32], sizes = [2, 32], strides = [1, 1]} : vector<2x96xf32> to vector<2x32xf32>
    %1309 = arith.addf %1307, %1308 : vector<2x32xf32>
    %1310 = arith.negf %1309 : vector<2x32xf32>
    %1311 = math.exp %1310 : vector<2x32xf32>
    %cst_209 = arith.constant 1.000000e+00 : f32
    %1312 = vector.broadcast %cst_209 : f32 to vector<2x32xf32>
    %1313 = arith.addf %1312, %1311 : vector<2x32xf32>
    %1314 = arith.divf %1312, %1313 : vector<2x32xf32>
    %1315 = vector.extract_strided_slice %1295 {offsets = [0, 64], sizes = [2, 32], strides = [1, 1]} : vector<2x96xf32> to vector<2x32xf32>
    %1316 = vector.extract_strided_slice %1298 {offsets = [0, 64], sizes = [2, 32], strides = [1, 1]} : vector<2x96xf32> to vector<2x32xf32>
    %1317 = arith.mulf %1306, %1316 : vector<2x32xf32>
    %1318 = arith.addf %1315, %1317 : vector<2x32xf32>
    %1319 = math.tanh %1318 : vector<2x32xf32>
    %cst_210 = arith.constant 1.000000e+00 : f32
    %1320 = vector.broadcast %cst_210 : f32 to vector<2x32xf32>
    %1321 = arith.subf %1320, %1314 : vector<2x32xf32>
    %1322 = arith.mulf %1321, %1319 : vector<2x32xf32>
    %1323 = arith.mulf %1314, %1290 : vector<2x32xf32>
    %1324 = arith.addf %1322, %1323 : vector<2x32xf32>
    %1325 = vector.extract_strided_slice %1288 {offsets = [2, 0], sizes = [2, 96], strides = [1, 1]} : vector<8x96xf32> to vector<2x96xf32>
    %1326 = vector.extract_strided_slice %1289 {offsets = [4, 0], sizes = [2, 96], strides = [1, 1]} : vector<8x96xf32> to vector<2x96xf32>
    %1327 = arith.addf %1325, %1326 : vector<2x96xf32>
    %1328 = vector.broadcast %11 : vector<1x96xf32> to vector<2x96xf32>
    %1329 = arith.addf %1327, %1328 : vector<2x96xf32>
    %cst_211 = arith.constant dense<0.000000e+00> : vector<2x96xf32>
    %1330 = tpu.matmul %1324, %13, %cst_211 {dimension_numbers = #tpu.dot_dimension_numbers<[1], [0], [0], [1], [0, 0, 1, 1], [], []>} : vector<2x32xf32>, vector<32x96xf32>, vector<2x96xf32> -> vector<2x96xf32>
    %1331 = vector.broadcast %14 : vector<1x96xf32> to vector<2x96xf32>
    %1332 = arith.addf %1330, %1331 : vector<2x96xf32>
    %1333 = vector.extract_strided_slice %1329 {offsets = [0, 0], sizes = [2, 32], strides = [1, 1]} : vector<2x96xf32> to vector<2x32xf32>
    %1334 = vector.extract_strided_slice %1332 {offsets = [0, 0], sizes = [2, 32], strides = [1, 1]} : vector<2x96xf32> to vector<2x32xf32>
    %1335 = arith.addf %1333, %1334 : vector<2x32xf32>
    %1336 = arith.negf %1335 : vector<2x32xf32>
    %1337 = math.exp %1336 : vector<2x32xf32>
    %cst_212 = arith.constant 1.000000e+00 : f32
    %1338 = vector.broadcast %cst_212 : f32 to vector<2x32xf32>
    %1339 = arith.addf %1338, %1337 : vector<2x32xf32>
    %1340 = arith.divf %1338, %1339 : vector<2x32xf32>
    %1341 = vector.extract_strided_slice %1329 {offsets = [0, 32], sizes = [2, 32], strides = [1, 1]} : vector<2x96xf32> to vector<2x32xf32>
    %1342 = vector.extract_strided_slice %1332 {offsets = [0, 32], sizes = [2, 32], strides = [1, 1]} : vector<2x96xf32> to vector<2x32xf32>
    %1343 = arith.addf %1341, %1342 : vector<2x32xf32>
    %1344 = arith.negf %1343 : vector<2x32xf32>
    %1345 = math.exp %1344 : vector<2x32xf32>
    %cst_213 = arith.constant 1.000000e+00 : f32
    %1346 = vector.broadcast %cst_213 : f32 to vector<2x32xf32>
    %1347 = arith.addf %1346, %1345 : vector<2x32xf32>
    %1348 = arith.divf %1346, %1347 : vector<2x32xf32>
    %1349 = vector.extract_strided_slice %1329 {offsets = [0, 64], sizes = [2, 32], strides = [1, 1]} : vector<2x96xf32> to vector<2x32xf32>
    %1350 = vector.extract_strided_slice %1332 {offsets = [0, 64], sizes = [2, 32], strides = [1, 1]} : vector<2x96xf32> to vector<2x32xf32>
    %1351 = arith.mulf %1340, %1350 : vector<2x32xf32>
    %1352 = arith.addf %1349, %1351 : vector<2x32xf32>
    %1353 = math.tanh %1352 : vector<2x32xf32>
    %cst_214 = arith.constant 1.000000e+00 : f32
    %1354 = vector.broadcast %cst_214 : f32 to vector<2x32xf32>
    %1355 = arith.subf %1354, %1348 : vector<2x32xf32>
    %1356 = arith.mulf %1355, %1353 : vector<2x32xf32>
    %1357 = arith.mulf %1348, %1324 : vector<2x32xf32>
    %1358 = arith.addf %1356, %1357 : vector<2x32xf32>
    %1359 = vector.extract_strided_slice %1288 {offsets = [4, 0], sizes = [2, 96], strides = [1, 1]} : vector<8x96xf32> to vector<2x96xf32>
    %1360 = vector.extract_strided_slice %1289 {offsets = [2, 0], sizes = [2, 96], strides = [1, 1]} : vector<8x96xf32> to vector<2x96xf32>
    %1361 = arith.addf %1359, %1360 : vector<2x96xf32>
    %1362 = vector.broadcast %11 : vector<1x96xf32> to vector<2x96xf32>
    %1363 = arith.addf %1361, %1362 : vector<2x96xf32>
    %cst_215 = arith.constant dense<0.000000e+00> : vector<2x96xf32>
    %1364 = tpu.matmul %1358, %13, %cst_215 {dimension_numbers = #tpu.dot_dimension_numbers<[1], [0], [0], [1], [0, 0, 1, 1], [], []>} : vector<2x32xf32>, vector<32x96xf32>, vector<2x96xf32> -> vector<2x96xf32>
    %1365 = vector.broadcast %14 : vector<1x96xf32> to vector<2x96xf32>
    %1366 = arith.addf %1364, %1365 : vector<2x96xf32>
    %1367 = vector.extract_strided_slice %1363 {offsets = [0, 0], sizes = [2, 32], strides = [1, 1]} : vector<2x96xf32> to vector<2x32xf32>
    %1368 = vector.extract_strided_slice %1366 {offsets = [0, 0], sizes = [2, 32], strides = [1, 1]} : vector<2x96xf32> to vector<2x32xf32>
    %1369 = arith.addf %1367, %1368 : vector<2x32xf32>
    %1370 = arith.negf %1369 : vector<2x32xf32>
    %1371 = math.exp %1370 : vector<2x32xf32>
    %cst_216 = arith.constant 1.000000e+00 : f32
    %1372 = vector.broadcast %cst_216 : f32 to vector<2x32xf32>
    %1373 = arith.addf %1372, %1371 : vector<2x32xf32>
    %1374 = arith.divf %1372, %1373 : vector<2x32xf32>
    %1375 = vector.extract_strided_slice %1363 {offsets = [0, 32], sizes = [2, 32], strides = [1, 1]} : vector<2x96xf32> to vector<2x32xf32>
    %1376 = vector.extract_strided_slice %1366 {offsets = [0, 32], sizes = [2, 32], strides = [1, 1]} : vector<2x96xf32> to vector<2x32xf32>
    %1377 = arith.addf %1375, %1376 : vector<2x32xf32>
    %1378 = arith.negf %1377 : vector<2x32xf32>
    %1379 = math.exp %1378 : vector<2x32xf32>
    %cst_217 = arith.constant 1.000000e+00 : f32
    %1380 = vector.broadcast %cst_217 : f32 to vector<2x32xf32>
    %1381 = arith.addf %1380, %1379 : vector<2x32xf32>
    %1382 = arith.divf %1380, %1381 : vector<2x32xf32>
    %1383 = vector.extract_strided_slice %1363 {offsets = [0, 64], sizes = [2, 32], strides = [1, 1]} : vector<2x96xf32> to vector<2x32xf32>
    %1384 = vector.extract_strided_slice %1366 {offsets = [0, 64], sizes = [2, 32], strides = [1, 1]} : vector<2x96xf32> to vector<2x32xf32>
    %1385 = arith.mulf %1374, %1384 : vector<2x32xf32>
    %1386 = arith.addf %1383, %1385 : vector<2x32xf32>
    %1387 = math.tanh %1386 : vector<2x32xf32>
    %cst_218 = arith.constant 1.000000e+00 : f32
    %1388 = vector.broadcast %cst_218 : f32 to vector<2x32xf32>
    %1389 = arith.subf %1388, %1382 : vector<2x32xf32>
    %1390 = arith.mulf %1389, %1387 : vector<2x32xf32>
    %1391 = arith.mulf %1382, %1358 : vector<2x32xf32>
    %1392 = arith.addf %1390, %1391 : vector<2x32xf32>
    %1393 = vector.extract_strided_slice %1288 {offsets = [6, 0], sizes = [2, 96], strides = [1, 1]} : vector<8x96xf32> to vector<2x96xf32>
    %1394 = vector.extract_strided_slice %1289 {offsets = [0, 0], sizes = [2, 96], strides = [1, 1]} : vector<8x96xf32> to vector<2x96xf32>
    %1395 = arith.addf %1393, %1394 : vector<2x96xf32>
    %1396 = vector.broadcast %11 : vector<1x96xf32> to vector<2x96xf32>
    %1397 = arith.addf %1395, %1396 : vector<2x96xf32>
    %cst_219 = arith.constant dense<0.000000e+00> : vector<2x96xf32>
    %1398 = tpu.matmul %1392, %13, %cst_219 {dimension_numbers = #tpu.dot_dimension_numbers<[1], [0], [0], [1], [0, 0, 1, 1], [], []>} : vector<2x32xf32>, vector<32x96xf32>, vector<2x96xf32> -> vector<2x96xf32>
    %1399 = vector.broadcast %14 : vector<1x96xf32> to vector<2x96xf32>
    %1400 = arith.addf %1398, %1399 : vector<2x96xf32>
    %1401 = vector.extract_strided_slice %1397 {offsets = [0, 0], sizes = [2, 32], strides = [1, 1]} : vector<2x96xf32> to vector<2x32xf32>
    %1402 = vector.extract_strided_slice %1400 {offsets = [0, 0], sizes = [2, 32], strides = [1, 1]} : vector<2x96xf32> to vector<2x32xf32>
    %1403 = arith.addf %1401, %1402 : vector<2x32xf32>
    %1404 = arith.negf %1403 : vector<2x32xf32>
    %1405 = math.exp %1404 : vector<2x32xf32>
    %cst_220 = arith.constant 1.000000e+00 : f32
    %1406 = vector.broadcast %cst_220 : f32 to vector<2x32xf32>
    %1407 = arith.addf %1406, %1405 : vector<2x32xf32>
    %1408 = arith.divf %1406, %1407 : vector<2x32xf32>
    %1409 = vector.extract_strided_slice %1397 {offsets = [0, 32], sizes = [2, 32], strides = [1, 1]} : vector<2x96xf32> to vector<2x32xf32>
    %1410 = vector.extract_strided_slice %1400 {offsets = [0, 32], sizes = [2, 32], strides = [1, 1]} : vector<2x96xf32> to vector<2x32xf32>
    %1411 = arith.addf %1409, %1410 : vector<2x32xf32>
    %1412 = arith.negf %1411 : vector<2x32xf32>
    %1413 = math.exp %1412 : vector<2x32xf32>
    %cst_221 = arith.constant 1.000000e+00 : f32
    %1414 = vector.broadcast %cst_221 : f32 to vector<2x32xf32>
    %1415 = arith.addf %1414, %1413 : vector<2x32xf32>
    %1416 = arith.divf %1414, %1415 : vector<2x32xf32>
    %1417 = vector.extract_strided_slice %1397 {offsets = [0, 64], sizes = [2, 32], strides = [1, 1]} : vector<2x96xf32> to vector<2x32xf32>
    %1418 = vector.extract_strided_slice %1400 {offsets = [0, 64], sizes = [2, 32], strides = [1, 1]} : vector<2x96xf32> to vector<2x32xf32>
    %1419 = arith.mulf %1408, %1418 : vector<2x32xf32>
    %1420 = arith.addf %1417, %1419 : vector<2x32xf32>
    %1421 = math.tanh %1420 : vector<2x32xf32>
    %cst_222 = arith.constant 1.000000e+00 : f32
    %1422 = vector.broadcast %cst_222 : f32 to vector<2x32xf32>
    %1423 = arith.subf %1422, %1416 : vector<2x32xf32>
    %1424 = arith.mulf %1423, %1421 : vector<2x32xf32>
    %1425 = arith.mulf %1416, %1392 : vector<2x32xf32>
    %1426 = arith.addf %1424, %1425 : vector<2x32xf32>
    %1427 = tpu.iota {dimensions = array<i32: 1>} : vector<2x32xi32>
    %c16_i32_223 = arith.constant 16 : i32
    %1428 = vector.broadcast %c16_i32_223 : i32 to vector<2x32xi32>
    %1429 = arith.cmpi slt, %1427, %1428 : vector<2x32xi32>
    %1430 = arith.select %1429, %1324, %1426 : vector<2x32xi1>, vector<2x32xf32>
    %1431 = arith.select %1429, %1358, %1392 : vector<2x32xi1>, vector<2x32xf32>
    %1432 = arith.select %1429, %1392, %1358 : vector<2x32xi1>, vector<2x32xf32>
    %1433 = arith.select %1429, %1426, %1324 : vector<2x32xi1>, vector<2x32xf32>
    %1434 = tpu.concatenate %1430, %1431, %1432, %1433 in 0 : vector<2x32xf32>, vector<2x32xf32>, vector<2x32xf32>, vector<2x32xf32> -> vector<8x32xf32>
    %cst_224 = arith.constant dense<0.000000e+00> : vector<8x32xf32>
    %1435 = tpu.matmul %1434, %16, %cst_224 {dimension_numbers = #tpu.dot_dimension_numbers<[1], [0], [0], [1], [0, 0, 1, 1], [], []>} : vector<8x32xf32>, vector<32x32xf32>, vector<8x32xf32> -> vector<8x32xf32>
    %1436 = vector.broadcast %17 : vector<1x32xf32> to vector<8x32xf32>
    %1437 = arith.addf %1435, %1436 : vector<8x32xf32>
    %1438 = math.tanh %1437 : vector<8x32xf32>
    %1439 = vector.broadcast %18 : vector<1x32xf32> to vector<8x32xf32>
    %1440 = arith.mulf %1438, %1439 : vector<8x32xf32>
    %cst_225 = arith.constant dense<0.000000e+00> : vector<8xf32>
    %1441 = vector.multi_reduction <add>, %1440, %cst_225 [1] : vector<8x32xf32> to vector<8xf32>
    %1442 = vector.shape_cast %1441 : vector<8xf32> to vector<8x1xf32>
    %1443 = math.tanh %1442 : vector<8x1xf32>
    %1444 = math.exp %1443 : vector<8x1xf32>
    %1445 = vector.broadcast %1444 : vector<8x1xf32> to vector<8x32xf32>
    %1446 = arith.mulf %1445, %1434 : vector<8x32xf32>
    %1447 = vector.extract_strided_slice %1446 {offsets = [0, 0], sizes = [2, 32], strides = [1, 1]} : vector<8x32xf32> to vector<2x32xf32>
    %1448 = vector.extract_strided_slice %1444 {offsets = [0, 0], sizes = [2, 1], strides = [1, 1]} : vector<8x1xf32> to vector<2x1xf32>
    %1449 = vector.extract_strided_slice %1446 {offsets = [2, 0], sizes = [2, 32], strides = [1, 1]} : vector<8x32xf32> to vector<2x32xf32>
    %1450 = arith.addf %1447, %1449 : vector<2x32xf32>
    %1451 = vector.extract_strided_slice %1444 {offsets = [2, 0], sizes = [2, 1], strides = [1, 1]} : vector<8x1xf32> to vector<2x1xf32>
    %1452 = arith.addf %1448, %1451 : vector<2x1xf32>
    %1453 = vector.extract_strided_slice %1446 {offsets = [4, 0], sizes = [2, 32], strides = [1, 1]} : vector<8x32xf32> to vector<2x32xf32>
    %1454 = arith.addf %1450, %1453 : vector<2x32xf32>
    %1455 = vector.extract_strided_slice %1444 {offsets = [4, 0], sizes = [2, 1], strides = [1, 1]} : vector<8x1xf32> to vector<2x1xf32>
    %1456 = arith.addf %1452, %1455 : vector<2x1xf32>
    %1457 = vector.extract_strided_slice %1446 {offsets = [6, 0], sizes = [2, 32], strides = [1, 1]} : vector<8x32xf32> to vector<2x32xf32>
    %1458 = arith.addf %1454, %1457 : vector<2x32xf32>
    %1459 = vector.extract_strided_slice %1444 {offsets = [6, 0], sizes = [2, 1], strides = [1, 1]} : vector<8x1xf32> to vector<2x1xf32>
    %1460 = arith.addf %1456, %1459 : vector<2x1xf32>
    %cst_226 = arith.constant 1.000000e+00 : f32
    %1461 = vector.broadcast %cst_226 : f32 to vector<2x1xf32>
    %1462 = arith.divf %1461, %1460 : vector<2x1xf32>
    %1463 = vector.broadcast %1462 : vector<2x1xf32> to vector<2x32xf32>
    %1464 = arith.mulf %1458, %1463 : vector<2x32xf32>
    %1465 = vector.extract_strided_slice %1444 {offsets = [0, 0], sizes = [2, 1], strides = [1, 1]} : vector<8x1xf32> to vector<2x1xf32>
    %1466 = vector.extract_strided_slice %1444 {offsets = [2, 0], sizes = [2, 1], strides = [1, 1]} : vector<8x1xf32> to vector<2x1xf32>
    %1467 = vector.extract_strided_slice %1444 {offsets = [4, 0], sizes = [2, 1], strides = [1, 1]} : vector<8x1xf32> to vector<2x1xf32>
    %1468 = vector.extract_strided_slice %1444 {offsets = [6, 0], sizes = [2, 1], strides = [1, 1]} : vector<8x1xf32> to vector<2x1xf32>
    %1469 = tpu.concatenate %1465, %1466, %1467, %1468 in 1 : vector<2x1xf32>, vector<2x1xf32>, vector<2x1xf32>, vector<2x1xf32> -> vector<2x4xf32>
    %1470 = vector.broadcast %1462 : vector<2x1xf32> to vector<2x4xf32>
    %1471 = arith.mulf %1469, %1470 : vector<2x4xf32>
    %c0_227 = arith.constant 0 : index
    %c0_228 = arith.constant 0 : index
    %1472 = vector.load %arg10[%c0_227, %c0_228] : memref<2x4xf32, #tpu.memory_space<vmem>>, vector<2x4xf32>
    tpu.vector_store %arg10[%c0_227, %c0_228], %1471 {strides = array<i32>} : memref<2x4xf32, #tpu.memory_space<vmem>>, vector<2x4xf32>,
    %cst_229 = arith.constant dense<0.000000e+00> : vector<2x5xf32>
    %1473 = tpu.matmul %1464, %20, %cst_229 {dimension_numbers = #tpu.dot_dimension_numbers<[1], [0], [0], [1], [0, 0, 1, 1], [], []>} : vector<2x32xf32>, vector<32x5xf32>, vector<2x5xf32> -> vector<2x5xf32>
    %1474 = vector.broadcast %21 : vector<1x5xf32> to vector<2x5xf32>
    %1475 = arith.addf %1473, %1474 : vector<2x5xf32>
    %c0_230 = arith.constant 0 : index
    %c0_231 = arith.constant 0 : index
    %1476 = vector.load %arg8[%c0_230, %c0_231] : memref<2x5xf32, #tpu.memory_space<vmem>>, vector<2x5xf32>
    tpu.vector_store %arg8[%c0_230, %c0_231], %1475 {strides = array<i32>} : memref<2x5xf32, #tpu.memory_space<vmem>>, vector<2x5xf32>,
    return
  }
}

</mosaic_0001>

<llo_original>
// kernel: hier_att_net_forward.1
$region0: #{hier_att_net_forward.1}
  #allocation0 [shape = 'u32[]', space=smem, size = 0x4, offset = 0x4, fixed_abs, tag = 'smem constant byte address 0x4 - core index']
  #allocation1 [shape = 'u32[144,128]{1,0:T(1,128)}', space=vmem, size = 0x12000, scoped, tag = 'internal scratch']
  #allocation2 [shape = 'f32[64,96]{1,0:T(8,128)}', space=vmem, size = 0x8000, scoped, tag = 'scratch operand']
  %s0 = inlined_call_operand.vmem [shape: s32[64,2], index: 0, kind: input, shape index: {}]
  %s1 = inlined_call_operand.vmem [shape: f32[101,96], index: 1, kind: input, shape index: {}]
  %s2 = inlined_call_operand.vmem [shape: f32[33,96], index: 2, kind: input, shape index: {}]
  %s3 = inlined_call_operand.vmem [shape: f32[34,32], index: 3, kind: input, shape index: {}]
  %s4 = inlined_call_operand.vmem [shape: f32[65,96], index: 4, kind: input, shape index: {}]
  %s5 = inlined_call_operand.vmem [shape: f32[33,96], index: 5, kind: input, shape index: {}]
  %s6 = inlined_call_operand.vmem [shape: f32[34,32], index: 6, kind: input, shape index: {}]
  %s7 = inlined_call_operand.vmem [shape: f32[33,5], index: 7, kind: input, shape index: {}]
  %s8 = inlined_call_operand.hbm [shape: f32[2,5], index: 8, kind: output, shape index: {0}]
  %s9 = inlined_call_operand.hbm [shape: f32[4,2,8], index: 9, kind: output, shape index: {1}]
  %s10 = inlined_call_operand.hbm [shape: f32[2,4], index: 10, kind: output, shape index: {2}]
  %11 = xla_tuple %s8, %s9, %s10
  %s12 = sld [smem:[#allocation0]]
  $region58: #{hier_att_net_forward.1} parent=0
    _
  %s14 = ssub.s32 1, %s12
  %s15 = scalar_select 0, %s14, %s12
  $region1: #{hier_att_net_forward.1} parent=0
    #allocation3 [shape = 'u8[1024]{0}', space=vmem, size = 0x400, scoped, tag = 'output window, operand 0, single buffered']
    #allocation4 [shape = 's32[1]{0}', space=sflag, size = 0x4, scoped, tag = 'scoped memory for hier_att_net_forward.1']
    #allocation5 [shape = 'u8[4096]{0}', space=vmem, size = 0x1000, scoped, tag = 'output window, operand 1, single buffered']
    #allocation6 [shape = 's32[1]{0}', space=sflag, size = 0x4, scoped, tag = 'scoped memory for hier_att_net_forward.1']
    #allocation7 [shape = 'u8[1024]{0}', space=vmem, size = 0x400, scoped, tag = 'output window, operand 2, single buffered']
    %16 = vsyncpa [#allocation4], 0
    %17 = vsyncpa [#allocation6], 0
    // Predicated region
    $region2: #{hier_att_net_forward.1} parent=1 // pred_check
      _
    $region3: #{hier_att_net_forward.1} parent=1 // pred_check_branch
      %19 = sbr.rel (0) target = $region5
    $region4: #{hier_att_net_forward.1} parent=1 // pred_region
      _
    $region5: #{hier_att_net_forward.1} parent=1 // pred_fallthru
      _
    // Predicated region
    $region6: #{hier_att_net_forward.1} parent=1 // pred_check
      _
    $region7: #{hier_att_net_forward.1} parent=1 // pred_check_branch
      %21 = sbr.rel (0) target = $region9
    $region8: #{hier_att_net_forward.1} parent=1 // pred_region
      _
    $region9: #{hier_att_net_forward.1} parent=1 // pred_fallthru
      _
    // Predicated region
    $region10: #{hier_att_net_forward.1} parent=1 // pred_check
      _
    $region11: #{hier_att_net_forward.1} parent=1 // pred_check_branch
      %23 = sbr.rel (0) target = $region13
    $region12: #{hier_att_net_forward.1} parent=1 // pred_region
      _
    $region13: #{hier_att_net_forward.1} parent=1 // pred_fallthru
      _
    // Predicated region
    $region14: #{hier_att_net_forward.1} parent=1 // pred_check
      _
    $region15: #{hier_att_net_forward.1} parent=1 // pred_check_branch
      %25 = sbr.rel (0) target = $region17
    $region16: #{hier_att_net_forward.1} parent=1 // pred_region
      _
    $region17: #{hier_att_net_forward.1} parent=1 // pred_fallthru
      _
    // Predicated region
    $region18: #{hier_att_net_forward.1} parent=1 // pred_check
      _
    $region19: #{hier_att_net_forward.1} parent=1 // pred_check_branch
      %27 = sbr.rel (0) target = $region21
    $region20: #{hier_att_net_forward.1} parent=1 // pred_region
      _
    $region21: #{hier_att_net_forward.1} parent=1 // pred_fallthru
      _
    // Predicated region
    $region22: #{hier_att_net_forward.1} parent=1 // pred_check
      _
    $region23: #{hier_att_net_forward.1} parent=1 // pred_check_branch
      %29 = sbr.rel (0) target = $region25
    $region24: #{hier_att_net_forward.1} parent=1 // pred_region
      _
    $region25: #{hier_att_net_forward.1} parent=1 // pred_fallthru
      _
    // Predicated region
    $region26: #{hier_att_net_forward.1} parent=1 // pred_check
      _
    $region27: #{hier_att_net_forward.1} parent=1 // pred_check_branch
      %31 = sbr.rel (0) target = $region29
    $region28: #{hier_att_net_forward.1} parent=1 // pred_region
      _
    $region29: #{hier_att_net_forward.1} parent=1 // pred_fallthru
      _
    // Predicated region
    $region30: #{hier_att_net_forward.1} parent=1 // pred_check
      _
    $region31: #{hier_att_net_forward.1} parent=1 // pred_check_branch
      %33 = sbr.rel (0) target = $region33
    $region32: #{hier_att_net_forward.1} parent=1 // pred_region
      _
    $region33: #{hier_att_net_forward.1} parent=1 // pred_fallthru
      _
    %v34 = vld [vmem:[%s1] sm:$0xff]
    %v35 = vld [vmem:[%s1 + $0x8] sm:$0xff]
    %v36 = vld [vmem:[%s1 + $0x10] sm:$0xff]
    %v37 = vld [vmem:[%s1 + $0x18] sm:$0xff]
    %v38 = vld [vmem:[%s1 + $0x20] sm:$0xff]
    %v39 = vld [vmem:[%s1 + $0x28] sm:$0xff]
    %v40 = vld [vmem:[%s1 + $0x30] sm:$0xff]
    %v41 = vld [vmem:[%s1 + $0x38] sm:$0xff]
    %v42 = vld [vmem:[%s1 + $0x40] sm:$0xff]
    %v43 = vld [vmem:[%s1 + $0x48] sm:$0xff]
    %v44 = vld [vmem:[%s1 + $0x50] sm:$0xff]
    %v45 = vld [vmem:[%s1 + $0x58] sm:$0xff]
    %v46 = vld [vmem:[%s1 + $0x60] sm:$0x1f]
    %v47 = vld [vmem:[%s2] sm:$0xff]
    %v48 = vld [vmem:[%s2 + $0x8] sm:$0xff]
    %v49 = vld [vmem:[%s2 + $0x10] sm:$0xff]
    %v50 = vld [vmem:[%s2 + $0x18] sm:$0xff]
    %v51 = vld [vmem:[%s2 + $0x20] sm:$0x1]
    %v52 = vld [vmem:[%s3] sm:$0xff]
    %v53 = vld [vmem:[%s3 + $0x8] sm:$0xff]
    %v54 = vld [vmem:[%s3 + $0x10] sm:$0xff]
    %v55 = vld [vmem:[%s3 + $0x18] sm:$0xff]
    %v56 = vld [vmem:[%s3 + $0x20] sm:$0x3]
    %v57 = vld [vmem:[%s4] sm:$0xff]
    %v58 = vld [vmem:[%s4 + $0x8] sm:$0xff]
    %v59 = vld [vmem:[%s4 + $0x10] sm:$0xff]
    %v60 = vld [vmem:[%s4 + $0x18] sm:$0xff]
    %v61 = vld [vmem:[%s4 + $0x20] sm:$0xff]
    %v62 = vld [vmem:[%s4 + $0x28] sm:$0xff]
    %v63 = vld [vmem:[%s4 + $0x30] sm:$0xff]
    %v64 = vld [vmem:[%s4 + $0x38] sm:$0xff]
    %v65 = vld [vmem:[%s4 + $0x40] sm:$0x1]
    %v66 = vld [vmem:[%s5] sm:$0xff]
    %v67 = vld [vmem:[%s5 + $0x8] sm:$0xff]
    %v68 = vld [vmem:[%s5 + $0x10] sm:$0xff]
    %v69 = vld [vmem:[%s5 + $0x18] sm:$0xff]
    %v70 = vld [vmem:[%s5 + $0x20] sm:$0x1]
    %v71 = vld [vmem:[%s6] sm:$0xff]
    %v72 = vld [vmem:[%s6 + $0x8] sm:$0xff]
    %v73 = vld [vmem:[%s6 + $0x10] sm:$0xff]
    %v74 = vld [vmem:[%s6 + $0x18] sm:$0xff]
    %v75 = vld [vmem:[%s6 + $0x20] sm:$0x3]
    %v76 = vld [vmem:[%s7] sm:$0xff]
    %v77 = vld [vmem:[%s7 + $0x8] sm:$0xff]
    %v78 = vld [vmem:[%s7 + $0x10] sm:$0xff]
    %v79 = vld [vmem:[%s7 + $0x18] sm:$0xff]
    %v80 = vld [vmem:[%s7 + $0x20] sm:$0x1]
    %v81 = vld [vmem:[%s0] sm:$0xff]
    %v82 = vld [vmem:[%s0 + $0x8] sm:$0xff]
    %v83 = vld [vmem:[%s0 + $0x10] sm:$0xff]
    %v84 = vld [vmem:[%s0 + $0x18] sm:$0xff]
    %v85 = vld [vmem:[%s0 + $0x20] sm:$0xff]
    %v86 = vld [vmem:[%s0 + $0x28] sm:$0xff]
    %v87 = vld [vmem:[%s0 + $0x30] sm:$0xff]
    %v88 = vld [vmem:[%s0 + $0x38] sm:$0xff]
    %v89 = vlaneseq
    %v90 = vand.u32 %v89, 127
    %91 = vset.pattern.permute.xlu0 0
    %92 = vperm.xlu0 %91, %v81
    %v93 = vpop.permute.xlu0 %92
    %94 = vset.pattern.permute.xlu0 0
    %95 = vperm.xlu0 %94, %v82
    %v96 = vpop.permute.xlu0 %95
    %97 = vset.pattern.permute.xlu0 0
    %98 = vperm.xlu0 %97, %v83
    %v99 = vpop.permute.xlu0 %98
    %100 = vset.pattern.permute.xlu0 0
    %101 = vperm.xlu0 %100, %v84
    %v102 = vpop.permute.xlu0 %101
    %103 = vset.pattern.permute.xlu0 0
    %104 = vperm.xlu0 %103, %v85
    %v105 = vpop.permute.xlu0 %104
    %106 = vset.pattern.permute.xlu0 0
    %107 = vperm.xlu0 %106, %v86
    %v108 = vpop.permute.xlu0 %107
    %109 = vset.pattern.permute.xlu0 0
    %110 = vperm.xlu0 %109, %v87
    %v111 = vpop.permute.xlu0 %110
    %112 = vset.pattern.permute.xlu0 0
    %113 = vperm.xlu0 %112, %v88
    %v114 = vpop.permute.xlu0 %113
    %vm115 = vcmp.eq.s32.totalorder %v90, %v93
    %vm116 = vcmp.eq.s32.totalorder %v90, %v96
    %vm117 = vcmp.eq.s32.totalorder %v90, %v99
    %vm118 = vcmp.eq.s32.totalorder %v90, %v102
    %vm119 = vcmp.eq.s32.totalorder %v90, %v105
    %vm120 = vcmp.eq.s32.totalorder %v90, %v108
    %vm121 = vcmp.eq.s32.totalorder %v90, %v111
    %vm122 = vcmp.eq.s32.totalorder %v90, %v114
    %123 = vset.pattern.permute.xlu0 1
    %124 = vperm.xlu0 %123, %v81
    %v125 = vpop.permute.xlu0 %124
    %126 = vset.pattern.permute.xlu0 1
    %127 = vperm.xlu0 %126, %v82
    %v128 = vpop.permute.xlu0 %127
    %129 = vset.pattern.permute.xlu0 1
    %130 = vperm.xlu0 %129, %v83
    %v131 = vpop.permute.xlu0 %130
    %132 = vset.pattern.permute.xlu0 1
    %133 = vperm.xlu0 %132, %v84
    %v134 = vpop.permute.xlu0 %133
    %135 = vset.pattern.permute.xlu0 1
    %136 = vperm.xlu0 %135, %v85
    %v137 = vpop.permute.xlu0 %136
    %138 = vset.pattern.permute.xlu0 1
    %139 = vperm.xlu0 %138, %v86
    %v140 = vpop.permute.xlu0 %139
    %141 = vset.pattern.permute.xlu0 1
    %142 = vperm.xlu0 %141, %v87
    %v143 = vpop.permute.xlu0 %142
    %144 = vset.pattern.permute.xlu0 1
    %145 = vperm.xlu0 %144, %v88
    %v146 = vpop.permute.xlu0 %145
    %vm147 = vcmp.eq.s32.totalorder %v90, %v125
    %vm148 = vcmp.eq.s32.totalorder %v90, %v128
    %vm149 = vcmp.eq.s32.totalorder %v90, %v131
    %vm150 = vcmp.eq.s32.totalorder %v90, %v134
    %vm151 = vcmp.eq.s32.totalorder %v90, %v137
    %vm152 = vcmp.eq.s32.totalorder %v90, %v140
    %vm153 = vcmp.eq.s32.totalorder %v90, %v143
    %vm154 = vcmp.eq.s32.totalorder %v90, %v146
    %vm155 = vmor %vm115, %vm147
    %vm156 = vmor %vm116, %vm148
    %vm157 = vmor %vm117, %vm149
    %vm158 = vmor %vm118, %vm150
    %vm159 = vmor %vm119, %vm151
    %vm160 = vmor %vm120, %vm152
    %vm161 = vmor %vm121, %vm153
    %vm162 = vmor %vm122, %vm154
    %vm163 = vcmp.eq.s32.totalorder %v90, 100
    %vm164 = vmor %vm155, %vm163
    %vm165 = vmor %vm156, %vm163
    %vm166 = vmor %vm157, %vm163
    %vm167 = vmor %vm158, %vm163
    %vm168 = vmor %vm159, %vm163
    %vm169 = vmor %vm160, %vm163
    %vm170 = vmor %vm161, %vm163
    %vm171 = vmor %vm162, %vm163
    %v172 = vsel %vm164, 1, 0
    %v173 = vsel %vm165, 1, 0
    %v174 = vsel %vm166, 1, 0
    %v175 = vsel %vm167, 1, 0
    %v176 = vsel %vm168, 1, 0
    %v177 = vsel %vm169, 1, 0
    %v178 = vsel %vm170, 1, 0
    %v179 = vsel %vm171, 1, 0
    %v180 = vcvt.s32.f32 %v172
    %v181 = vcvt.s32.f32 %v173
    %v182 = vcvt.s32.f32 %v174
    %v183 = vcvt.s32.f32 %v175
    %v184 = vcvt.s32.f32 %v176
    %v185 = vcvt.s32.f32 %v177
    %v186 = vcvt.s32.f32 %v178
    %v187 = vcvt.s32.f32 %v179
    %vm188 = vcmask 826368
    %v190 = vsel %vm188, %v180, 0
    %v193 = vsel %vm188, %v181, 0
    %v196 = vsel %vm188, %v182, 0
    %v199 = vsel %vm188, %v183, 0
    %v202 = vsel %vm188, %v184, 0
    %v205 = vsel %vm188, %v185, 0
    %v208 = vsel %vm188, %v186, 0
    %v211 = vsel %vm188, %v187, 0
    %vm213 = vcmask 1044480
    %v215 = vsel %vm213, %v46, 0
    %217 = vmatprep.subr.mxu0 0.0
    %218 = vmatpush1.msra.mxu0 %v34
    %219 = vmatprep.subr.mxu0 0.0
    %220 = vmatpush1.msra.mxu0 %v35
    %221 = vmatprep.subr.mxu0 0.0
    %222 = vmatpush1.msra.mxu0 %v36
    %223 = vmatprep.subr.mxu0 0.0
    %224 = vmatpush1.msra.mxu0 %v37
    %225 = vmatprep.subr.mxu0 0.0
    %226 = vmatpush1.msra.mxu0 %v38
    %227 = vmatprep.subr.mxu0 0.0
    %228 = vmatpush1.msra.mxu0 %v39
    %229 = vmatprep.subr.mxu0 0.0
    %230 = vmatpush1.msra.mxu0 %v40
    %231 = vmatprep.subr.mxu0 0.0
    %232 = vmatpush1.msra.mxu0 %v41
    %233 = vmatprep.subr.mxu0 0.0
    %234 = vmatpush1.msra.mxu0 %v42
    %235 = vmatprep.subr.mxu0 0.0
    %236 = vmatpush1.msra.mxu0 %v43
    %237 = vmatprep.subr.mxu0 0.0
    %238 = vmatpush1.msra.mxu0 %v44
    %239 = vmatprep.subr.mxu0 0.0
    %240 = vmatpush1.msra.mxu0 %v45
    %241 = vmatprep.subr.mxu0 0.0
    %242 = vmatpush1.msra.mxu0 %v215
    %243 = vmatprep.subr.mxu0 0.0
    %244 = vmatpush1.msra.mxu0 0.0
    %245 = vmatprep.subr.mxu0 0.0
    %246 = vmatpush1.msra.mxu0 0.0
    %247 = vmatprep.subr.mxu0 0.0
    %248 = vmatpush1.msra.mxu0 0.0
    %249 = vmatprep.subr.mxu0 0.0
    %250 = vmatpush1.msra.mxu0 0.0
    %251 = vmatprep.subr.mxu0 0.0
    %252 = vmatpush1.msra.mxu0 0.0
    %253 = vmatprep.subr.mxu0 0.0
    %254 = vmatpush1.msra.mxu0 0.0
    %255 = vmatprep.subr.mxu0 0.0
    %256 = vmatpush1.msra.mxu0 0.0
    %257 = vmatprep.subr.mxu0 0.0
    %258 = vmatpush1.msra.mxu0 0.0
    %259 = vmatprep.subr.mxu0 0.0
    %260 = vmatpush1.msra.mxu0 0.0
    %261 = vmatprep.subr.mxu0 0.0
    %262 = vmatpush1.msra.mxu0 0.0
    %263 = vmatprep.subr.mxu0 0.0
    %264 = vmatpush1.msra.mxu0 0.0
    %265 = vmatprep.subr.mxu0 0.0
    %266 = vmatpush1.msra.mxu0 0.0
    %267 = vmatprep.subr.mxu0 0.0
    %268 = vmatpush1.msra.mxu0 0.0
    %269 = vmatprep.subr.mxu0 0.0
    %270 = vmatpush1.msra.mxu0 0.0
    %271 = vmatprep.subr.mxu0 0.0
    %272 = vmatpush1.msra.mxu0 0.0
    %273 = vmatprep.subr.mxu0 0.0
    %274 = vmatpush1.msra.mxu0 0.0
    %275 = vmatprep.subr.mxu0 0.0
    %276 = vmatpush1.msra.mxu0 0.0
    %277 = vmatprep.subr.mxu0 0.0
    %278 = vmatpush1.msra.mxu0 0.0
    %279 = vmatprep.subr.mxu0 0.0
    %280 = vmatpush1.msra.mxu0 0.0
    %281 = vmatprep.mubr.f32.mxu0 0.0
    %282 = vmatmul.mubr.f32.gmra.mrb[0].mxu0 %v190
    %v283 = vpop.f32.mrb[0].mxu0
    %v284 = vadd.f32 0.0, %v283
    %v285 = vpop.f32.mrb[0].mxu0
    %286 = vmatprep.mubr.f32.mxu0 0.0
    %287 = vmatmul.mubr.f32.gmra.mrb[0].mxu0 %v193
    %v288 = vpop.f32.mrb[0].mxu0
    %v289 = vadd.f32 0.0, %v288
    %v290 = vpop.f32.mrb[0].mxu0
    %291 = vmatprep.mubr.f32.mxu0 0.0
    %292 = vmatmul.mubr.f32.gmra.mrb[0].mxu0 %v196
    %v293 = vpop.f32.mrb[0].mxu0
    %v294 = vadd.f32 0.0, %v293
    %v295 = vpop.f32.mrb[0].mxu0
    %296 = vmatprep.mubr.f32.mxu0 0.0
    %297 = vmatmul.mubr.f32.gmra.mrb[0].mxu0 %v199
    %v298 = vpop.f32.mrb[0].mxu0
    %v299 = vadd.f32 0.0, %v298
    %v300 = vpop.f32.mrb[0].mxu0
    %301 = vmatprep.mubr.f32.mxu0 0.0
    %302 = vmatmul.mubr.f32.gmra.mrb[0].mxu0 %v202
    %v303 = vpop.f32.mrb[0].mxu0
    %v304 = vadd.f32 0.0, %v303
    %v305 = vpop.f32.mrb[0].mxu0
    %306 = vmatprep.mubr.f32.mxu0 0.0
    %307 = vmatmul.mubr.f32.gmra.mrb[0].mxu0 %v205
    %v308 = vpop.f32.mrb[0].mxu0
    %v309 = vadd.f32 0.0, %v308
    %v310 = vpop.f32.mrb[0].mxu0
    %311 = vmatprep.mubr.f32.mxu0 0.0
    %312 = vmatmul.mubr.f32.gmra.mrb[0].mxu0 %v208
    %v313 = vpop.f32.mrb[0].mxu0
    %v314 = vadd.f32 0.0, %v313
    %v315 = vpop.f32.mrb[0].mxu0
    %316 = vmatprep.mubr.f32.mxu0 0.0
    %317 = vmatmul.mubr.f32.gmra.mrb[0].mxu0 %v211
    %v318 = vpop.f32.mrb[0].mxu0
    %v319 = vadd.f32 0.0, %v318
    %v320 = vpop.f32.mrb[0].mxu0
    %321 = vdwg.mxu0
    %vm322 = vcmask 785408
    %323 = vst.msk [vmem:[#allocation2] sm:$0xff] %vm322, %v284
    %324 = vst.msk [vmem:[#allocation2 + $0x8] sm:$0xff] %vm322, %v289
    %325 = vst.msk [vmem:[#allocation2 + $0x10] sm:$0xff] %vm322, %v294
    %326 = vst.msk [vmem:[#allocation2 + $0x18] sm:$0xff] %vm322, %v299
    %327 = vst.msk [vmem:[#allocation2 + $0x20] sm:$0xff] %vm322, %v304
    %328 = vst.msk [vmem:[#allocation2 + $0x28] sm:$0xff] %vm322, %v309
    %329 = vst.msk [vmem:[#allocation2 + $0x30] sm:$0xff] %vm322, %v314
    %330 = vst.msk [vmem:[#allocation2 + $0x38] sm:$0xff] %vm322, %v319
    %v331 = vld [vmem:[#allocation2] sm:$0x3]
    %v332 = vlaneseq
    %v333 = vshrl.u32 %v332, 7
    %v334 = vsub.s32 0, %v333
    %v335 = vrot.slane %v51, %v334
    %vm336 = vcmask 261120
    %v338 = vsel %vm336, 0.0, 0
    %340 = vmatprep.subr.mxu0 0.0
    %341 = vmatpush1.msra.mxu0 %v47
    %342 = vmatprep.subr.mxu0 0.0
    %343 = vmatpush1.msra.mxu0 %v48
    %344 = vmatprep.subr.mxu0 0.0
    %345 = vmatpush1.msra.mxu0 %v49
    %346 = vmatprep.subr.mxu0 0.0
    %347 = vmatpush1.msra.mxu0 %v50
    %348 = vmatprep.subr.mxu0 0.0
    %349 = vmatpush1.msra.mxu0 0.0
    %350 = vmatprep.subr.mxu0 0.0
    %351 = vmatpush1.msra.mxu0 0.0
    %352 = vmatprep.subr.mxu0 0.0
    %353 = vmatpush1.msra.mxu0 0.0
    %354 = vmatprep.subr.mxu0 0.0
    %355 = vmatpush1.msra.mxu0 0.0
    %356 = vmatprep.subr.mxu0 0.0
    %357 = vmatpush1.msra.mxu0 0.0
    %358 = vmatprep.subr.mxu0 0.0
    %359 = vmatpush1.msra.mxu0 0.0
    %360 = vmatprep.subr.mxu0 0.0
    %361 = vmatpush1.msra.mxu0 0.0
    %362 = vmatprep.subr.mxu0 0.0
    %363 = vmatpush1.msra.mxu0 0.0
    %364 = vmatprep.subr.mxu0 0.0
    %365 = vmatpush1.msra.mxu0 0.0
    %366 = vmatprep.subr.mxu0 0.0
    %367 = vmatpush1.msra.mxu0 0.0
    %368 = vmatprep.subr.mxu0 0.0
    %369 = vmatpush1.msra.mxu0 0.0
    %370 = vmatprep.subr.mxu0 0.0
    %371 = vmatpush1.msra.mxu0 0.0
    %372 = vmatprep.subr.mxu0 0.0
    %373 = vmatpush1.msra.mxu0 0.0
    %374 = vmatprep.subr.mxu0 0.0
    %375 = vmatpush1.msra.mxu0 0.0
    %376 = vmatprep.subr.mxu0 0.0
    %377 = vmatpush1.msra.mxu0 0.0
    %378 = vmatprep.subr.mxu0 0.0
    %379 = vmatpush1.msra.mxu0 0.0
    %380 = vmatprep.subr.mxu0 0.0
    %381 = vmatpush1.msra.mxu0 0.0
    %382 = vmatprep.subr.mxu0 0.0
    %383 = vmatpush1.msra.mxu0 0.0
    %384 = vmatprep.subr.mxu0 0.0
    %385 = vmatpush1.msra.mxu0 0.0
    %386 = vmatprep.subr.mxu0 0.0
    %387 = vmatpush1.msra.mxu0 0.0
    %388 = vmatprep.subr.mxu0 0.0
    %389 = vmatpush1.msra.mxu0 0.0
    %390 = vmatprep.subr.mxu0 0.0
    %391 = vmatpush1.msra.mxu0 0.0
    %392 = vmatprep.subr.mxu0 0.0
    %393 = vmatpush1.msra.mxu0 0.0
    %394 = vmatprep.subr.mxu0 0.0
    %395 = vmatpush1.msra.mxu0 0.0
    %396 = vmatprep.subr.mxu0 0.0
    %397 = vmatpush1.msra.mxu0 0.0
    %398 = vmatprep.subr.mxu0 0.0
    %399 = vmatpush1.msra.mxu0 0.0
    %400 = vmatprep.subr.mxu0 0.0
    %401 = vmatpush1.msra.mxu0 0.0
    %402 = vmatprep.subr.mxu0 0.0
    %403 = vmatpush1.msra.mxu0 0.0
    %404 = vmatprep.mubr.f32.mxu0 0.0
    %405 = vmatmul.mubr.f32.gmra.mrb[0].mxu0 %v338
    %v406 = vpop.f32.mrb[0].mxu0
    %v407 = vadd.f32 %v335, %v406
    %v408 = vpop.f32.mrb[0].mxu0
    %409 = vdwg.mxu0
    %v410 = vadd.f32 %v331, %v407
    %v411 = vxor.u32 %v410, 2147483648
    %v412 = vmul.f32 %v411, 1.442695
    %v413 = vpow.pop %v412
    %v414 = vadd.f32 %v413, 1.0
    %v415 = vrcp.pop %v414
    %v416 = vmul.f32 1.0, %v415
    %418 = vrot.lane.b32.xlu0 %v407, 64
    %v419 = vpop.permute.xlu0 %418
    %v421 = vmul.f32 %v416, %v419
    %423 = vrot.lane.b32.xlu0 %v421, 64
    %v424 = vpop.permute.xlu0 %423
    %v426 = vadd.f32 %v331, %v424
    %v427 = vtanh.pop %v426
    %v428 = vsub.f32 1.0, %v416
    %430 = vrot.lane.b32.xlu0 %v427, 96
    %v431 = vpop.permute.xlu0 %430
    %v433 = vmul.f32 %v428, %v431
    %v434 = vmul.f32 %v416, 0.0
    %v435 = vadd.f32 %v433, %v434
    %v436 = vld [vmem:[#allocation2 + $0x2] sm:$0x3]
    %438 = vrot.lane.b32.xlu0 %v435, 96
    %v439 = vpop.permute.xlu0 %438
    %v440 = vsel %vm336, %v439, 0
    %442 = vmatprep.subr.mxu0 0.0
    %443 = vmatpush1.msra.mxu0 %v47
    %444 = vmatprep.subr.mxu0 0.0
    %445 = vmatpush1.msra.mxu0 %v48
    %446 = vmatprep.subr.mxu0 0.0
    %447 = vmatpush1.msra.mxu0 %v49
    %448 = vmatprep.subr.mxu0 0.0
    %449 = vmatpush1.msra.mxu0 %v50
    %450 = vmatprep.subr.mxu0 0.0
    %451 = vmatpush1.msra.mxu0 0.0
    %452 = vmatprep.subr.mxu0 0.0
    %453 = vmatpush1.msra.mxu0 0.0
    %454 = vmatprep.subr.mxu0 0.0
    %455 = vmatpush1.msra.mxu0 0.0
    %456 = vmatprep.subr.mxu0 0.0
    %457 = vmatpush1.msra.mxu0 0.0
    %458 = vmatprep.subr.mxu0 0.0
    %459 = vmatpush1.msra.mxu0 0.0
    %460 = vmatprep.subr.mxu0 0.0
    %461 = vmatpush1.msra.mxu0 0.0
    %462 = vmatprep.subr.mxu0 0.0
    %463 = vmatpush1.msra.mxu0 0.0
    %464 = vmatprep.subr.mxu0 0.0
    %465 = vmatpush1.msra.mxu0 0.0
    %466 = vmatprep.subr.mxu0 0.0
    %467 = vmatpush1.msra.mxu0 0.0
    %468 = vmatprep.subr.mxu0 0.0
    %469 = vmatpush1.msra.mxu0 0.0
    %470 = vmatprep.subr.mxu0 0.0
    %471 = vmatpush1.msra.mxu0 0.0
    %472 = vmatprep.subr.mxu0 0.0
    %473 = vmatpush1.msra.mxu0 0.0
    %474 = vmatprep.subr.mxu0 0.0
    %475 = vmatpush1.msra.mxu0 0.0
    %476 = vmatprep.subr.mxu0 0.0
    %477 = vmatpush1.msra.mxu0 0.0
    %478 = vmatprep.subr.mxu0 0.0
    %479 = vmatpush1.msra.mxu0 0.0
    %480 = vmatprep.subr.mxu0 0.0
    %481 = vmatpush1.msra.mxu0 0.0
    %482 = vmatprep.subr.mxu0 0.0
    %483 = vmatpush1.msra.mxu0 0.0
    %484 = vmatprep.subr.mxu0 0.0
    %485 = vmatpush1.msra.mxu0 0.0
    %486 = vmatprep.subr.mxu0 0.0
    %487 = vmatpush1.msra.mxu0 0.0
    %488 = vmatprep.subr.mxu0 0.0
    %489 = vmatpush1.msra.mxu0 0.0
    %490 = vmatprep.subr.mxu0 0.0
    %491 = vmatpush1.msra.mxu0 0.0
    %492 = vmatprep.subr.mxu0 0.0
    %493 = vmatpush1.msra.mxu0 0.0
    %494 = vmatprep.subr.mxu0 0.0
    %495 = vmatpush1.msra.mxu0 0.0
    %496 = vmatprep.subr.mxu0 0.0
    %497 = vmatpush1.msra.mxu0 0.0
    %498 = vmatprep.subr.mxu0 0.0
    %499 = vmatpush1.msra.mxu0 0.0
    %500 = vmatprep.subr.mxu0 0.0
    %501 = vmatpush1.msra.mxu0 0.0
    %502 = vmatprep.subr.mxu0 0.0
    %503 = vmatpush1.msra.mxu0 0.0
    %504 = vmatprep.subr.mxu0 0.0
    %505 = vmatpush1.msra.mxu0 0.0
    %506 = vmatprep.mubr.f32.mxu0 0.0
    %507 = vmatmul.mubr.f32.gmra.mrb[0].mxu0 %v440
    %v508 = vpop.f32.mrb[0].mxu0
    %v509 = vadd.f32 %v335, %v508
    %v510 = vpop.f32.mrb[0].mxu0
    %511 = vdwg.mxu0
    %v512 = vadd.f32 %v436, %v509
    %v513 = vxor.u32 %v512, 2147483648
    %v514 = vmul.f32 %v513, 1.442695
    %v515 = vpow.pop %v514
    %v516 = vadd.f32 %v515, 1.0
    %v517 = vrcp.pop %v516
    %v518 = vmul.f32 1.0, %v517
    %520 = vrot.lane.b32.xlu0 %v509, 64
    %v521 = vpop.permute.xlu0 %520
    %v523 = vmul.f32 %v518, %v521
    %525 = vrot.lane.b32.xlu0 %v523, 64
    %v526 = vpop.permute.xlu0 %525
    %v528 = vadd.f32 %v436, %v526
    %v529 = vtanh.pop %v528
    %v530 = vsub.f32 1.0, %v518
    %532 = vrot.lane.b32.xlu0 %v529, 96
    %v533 = vpop.permute.xlu0 %532
    %v535 = vmul.f32 %v530, %v533
    %v536 = vmul.f32 %v518, %v435
    %v537 = vadd.f32 %v535, %v536
    %v538 = vld [vmem:[#allocation2 + $0x4] sm:$0x3]
    %540 = vrot.lane.b32.xlu0 %v537, 96
    %v541 = vpop.permute.xlu0 %540
    %v542 = vsel %vm336, %v541, 0
    %544 = vmatprep.subr.mxu0 0.0
    %545 = vmatpush1.msra.mxu0 %v47
    %546 = vmatprep.subr.mxu0 0.0
    %547 = vmatpush1.msra.mxu0 %v48
    %548 = vmatprep.subr.mxu0 0.0
    %549 = vmatpush1.msra.mxu0 %v49
    %550 = vmatprep.subr.mxu0 0.0
    %551 = vmatpush1.msra.mxu0 %v50
    %552 = vmatprep.subr.mxu0 0.0
    %553 = vmatpush1.msra.mxu0 0.0
    %554 = vmatprep.subr.mxu0 0.0
    %555 = vmatpush1.msra.mxu0 0.0
    %556 = vmatprep.subr.mxu0 0.0
    %557 = vmatpush1.msra.mxu0 0.0
    %558 = vmatprep.subr.mxu0 0.0
    %559 = vmatpush1.msra.mxu0 0.0
    %560 = vmatprep.subr.mxu0 0.0
    %561 = vmatpush1.msra.mxu0 0.0
    %562 = vmatprep.subr.mxu0 0.0
    %563 = vmatpush1.msra.mxu0 0.0
    %564 = vmatprep.subr.mxu0 0.0
    %565 = vmatpush1.msra.mxu0 0.0
    %566 = vmatprep.subr.mxu0 0.0
    %567 = vmatpush1.msra.mxu0 0.0
    %568 = vmatprep.subr.mxu0 0.0
    %569 = vmatpush1.msra.mxu0 0.0
    %570 = vmatprep.subr.mxu0 0.0
    %571 = vmatpush1.msra.mxu0 0.0
    %572 = vmatprep.subr.mxu0 0.0
    %573 = vmatpush1.msra.mxu0 0.0
    %574 = vmatprep.subr.mxu0 0.0
    %575 = vmatpush1.msra.mxu0 0.0
    %576 = vmatprep.subr.mxu0 0.0
    %577 = vmatpush1.msra.mxu0 0.0
    %578 = vmatprep.subr.mxu0 0.0
    %579 = vmatpush1.msra.mxu0 0.0
    %580 = vmatprep.subr.mxu0 0.0
    %581 = vmatpush1.msra.mxu0 0.0
    %582 = vmatprep.subr.mxu0 0.0
    %583 = vmatpush1.msra.mxu0 0.0
    %584 = vmatprep.subr.mxu0 0.0
    %585 = vmatpush1.msra.mxu0 0.0
    %586 = vmatprep.subr.mxu0 0.0
    %587 = vmatpush1.msra.mxu0 0.0
    %588 = vmatprep.subr.mxu0 0.0
    %589 = vmatpush1.msra.mxu0 0.0
    %590 = vmatprep.subr.mxu0 0.0
    %591 = vmatpush1.msra.mxu0 0.0
    %592 = vmatprep.subr.mxu0 0.0
    %593 = vmatpush1.msra.mxu0 0.0
    %594 = vmatprep.subr.mxu0 0.0
    %595 = vmatpush1.msra.mxu0 0.0
    %596 = vmatprep.subr.mxu0 0.0
    %597 = vmatpush1.msra.mxu0 0.0
    %598 = vmatprep.subr.mxu0 0.0
    %599 = vmatpush1.msra.mxu0 0.0
    %600 = vmatprep.subr.mxu0 0.0
    %601 = vmatpush1.msra.mxu0 0.0
    %602 = vmatprep.subr.mxu0 0.0
    %603 = vmatpush1.msra.mxu0 0.0
    %604 = vmatprep.subr.mxu0 0.0
    %605 = vmatpush1.msra.mxu0 0.0
    %606 = vmatprep.subr.mxu0 0.0
    %607 = vmatpush1.msra.mxu0 0.0
    %608 = vmatprep.mubr.f32.mxu0 0.0
    %609 = vmatmul.mubr.f32.gmra.mrb[0].mxu0 %v542
    %v610 = vpop.f32.mrb[0].mxu0
    %v611 = vadd.f32 %v335, %v610
    %v612 = vpop.f32.mrb[0].mxu0
    %613 = vdwg.mxu0
    %v614 = vadd.f32 %v538, %v611
    %v615 = vxor.u32 %v614, 2147483648
    %v616 = vmul.f32 %v615, 1.442695
    %v617 = vpow.pop %v616
    %v618 = vadd.f32 %v617, 1.0
    %v619 = vrcp.pop %v618
    %v620 = vmul.f32 1.0, %v619
    %622 = vrot.lane.b32.xlu0 %v611, 64
    %v623 = vpop.permute.xlu0 %622
    %v625 = vmul.f32 %v620, %v623
    %627 = vrot.lane.b32.xlu0 %v625, 64
    %v628 = vpop.permute.xlu0 %627
    %v630 = vadd.f32 %v538, %v628
    %v631 = vtanh.pop %v630
    %v632 = vsub.f32 1.0, %v620
    %634 = vrot.lane.b32.xlu0 %v631, 96
    %v635 = vpop.permute.xlu0 %634
    %v637 = vmul.f32 %v632, %v635
    %v638 = vmul.f32 %v620, %v537
    %v639 = vadd.f32 %v637, %v638
    %v640 = vld [vmem:[#allocation2 + $0x6] sm:$0x3]
    %642 = vrot.lane.b32.xlu0 %v639, 96
    %v643 = vpop.permute.xlu0 %642
    %v644 = vsel %vm336, %v643, 0
    %646 = vmatprep.subr.mxu0 0.0
    %647 = vmatpush1.msra.mxu0 %v47
    %648 = vmatprep.subr.mxu0 0.0
    %649 = vmatpush1.msra.mxu0 %v48
    %650 = vmatprep.subr.mxu0 0.0
    %651 = vmatpush1.msra.mxu0 %v49
    %652 = vmatprep.subr.mxu0 0.0
    %653 = vmatpush1.msra.mxu0 %v50
    %654 = vmatprep.subr.mxu0 0.0
    %655 = vmatpush1.msra.mxu0 0.0
    %656 = vmatprep.subr.mxu0 0.0
    %657 = vmatpush1.msra.mxu0 0.0
    %658 = vmatprep.subr.mxu0 0.0
    %659 = vmatpush1.msra.mxu0 0.0
    %660 = vmatprep.subr.mxu0 0.0
    %661 = vmatpush1.msra.mxu0 0.0
    %662 = vmatprep.subr.mxu0 0.0
    %663 = vmatpush1.msra.mxu0 0.0
    %664 = vmatprep.subr.mxu0 0.0
    %665 = vmatpush1.msra.mxu0 0.0
    %666 = vmatprep.subr.mxu0 0.0
    %667 = vmatpush1.msra.mxu0 0.0
    %668 = vmatprep.subr.mxu0 0.0
    %669 = vmatpush1.msra.mxu0 0.0
    %670 = vmatprep.subr.mxu0 0.0
    %671 = vmatpush1.msra.mxu0 0.0
    %672 = vmatprep.subr.mxu0 0.0
    %673 = vmatpush1.msra.mxu0 0.0
    %674 = vmatprep.subr.mxu0 0.0
    %675 = vmatpush1.msra.mxu0 0.0
    %676 = vmatprep.subr.mxu0 0.0
    %677 = vmatpush1.msra.mxu0 0.0
    %678 = vmatprep.subr.mxu0 0.0
    %679 = vmatpush1.msra.mxu0 0.0
    %680 = vmatprep.subr.mxu0 0.0
    %681 = vmatpush1.msra.mxu0 0.0
    %682 = vmatprep.subr.mxu0 0.0
    %683 = vmatpush1.msra.mxu0 0.0
    %684 = vmatprep.subr.mxu0 0.0
    %685 = vmatpush1.msra.mxu0 0.0
    %686 = vmatprep.subr.mxu0 0.0
    %687 = vmatpush1.msra.mxu0 0.0
    %688 = vmatprep.subr.mxu0 0.0
    %689 = vmatpush1.msra.mxu0 0.0
    %690 = vmatprep.subr.mxu0 0.0
    %691 = vmatpush1.msra.mxu0 0.0
    %692 = vmatprep.subr.mxu0 0.0
    %693 = vmatpush1.msra.mxu0 0.0
    %694 = vmatprep.subr.mxu0 0.0
    %695 = vmatpush1.msra.mxu0 0.0
    %696 = vmatprep.subr.mxu0 0.0
    %697 = vmatpush1.msra.mxu0 0.0
    %698 = vmatprep.subr.mxu0 0.0
    %699 = vmatpush1.msra.mxu0 0.0
    %700 = vmatprep.subr.mxu0 0.0
    %701 = vmatpush1.msra.mxu0 0.0
    %702 = vmatprep.subr.mxu0 0.0
    %703 = vmatpush1.msra.mxu0 0.0
    %704 = vmatprep.subr.mxu0 0.0
    %705 = vmatpush1.msra.mxu0 0.0
    %706 = vmatprep.subr.mxu0 0.0
    %707 = vmatpush1.msra.mxu0 0.0
    %708 = vmatprep.subr.mxu0 0.0
    %709 = vmatpush1.msra.mxu0 0.0
    %710 = vmatprep.mubr.f32.mxu0 0.0
    %711 = vmatmul.mubr.f32.gmra.mrb[0].mxu0 %v644
    %v712 = vpop.f32.mrb[0].mxu0
    %v713 = vadd.f32 %v335, %v712
    %v714 = vpop.f32.mrb[0].mxu0
    %715 = vdwg.mxu0
    %v716 = vadd.f32 %v640, %v713
    %v717 = vxor.u32 %v716, 2147483648
    %v718 = vmul.f32 %v717, 1.442695
    %v719 = vpow.pop %v718
    %v720 = vadd.f32 %v719, 1.0
    %v721 = vrcp.pop %v720
    %v722 = vmul.f32 1.0, %v721
    %724 = vrot.lane.b32.xlu0 %v713, 64
    %v725 = vpop.permute.xlu0 %724
    %v727 = vmul.f32 %v722, %v725
    %729 = vrot.lane.b32.xlu0 %v727, 64
    %v730 = vpop.permute.xlu0 %729
    %v732 = vadd.f32 %v640, %v730
    %v733 = vtanh.pop %v732
    %v734 = vsub.f32 1.0, %v722
    %736 = vrot.lane.b32.xlu0 %v733, 96
    %v737 = vpop.permute.xlu0 %736
    %v739 = vmul.f32 %v734, %v737
    %v740 = vmul.f32 %v722, %v639
    %v741 = vadd.f32 %v739, %v740
    %v742 = vld [vmem:[#allocation2 + $0x8] sm:$0x3]
    %744 = vrot.lane.b32.xlu0 %v741, 96
    %v745 = vpop.permute.xlu0 %744
    %v746 = vsel %vm336, %v745, 0
    %748 = vmatprep.subr.mxu0 0.0
    %749 = vmatpush1.msra.mxu0 %v47
    %750 = vmatprep.subr.mxu0 0.0
    %751 = vmatpush1.msra.mxu0 %v48
    %752 = vmatprep.subr.mxu0 0.0
    %753 = vmatpush1.msra.mxu0 %v49
    %754 = vmatprep.subr.mxu0 0.0
    %755 = vmatpush1.msra.mxu0 %v50
    %756 = vmatprep.subr.mxu0 0.0
    %757 = vmatpush1.msra.mxu0 0.0
    %758 = vmatprep.subr.mxu0 0.0
    %759 = vmatpush1.msra.mxu0 0.0
    %760 = vmatprep.subr.mxu0 0.0
    %761 = vmatpush1.msra.mxu0 0.0
    %762 = vmatprep.subr.mxu0 0.0
    %763 = vmatpush1.msra.mxu0 0.0
    %764 = vmatprep.subr.mxu0 0.0
    %765 = vmatpush1.msra.mxu0 0.0
    %766 = vmatprep.subr.mxu0 0.0
    %767 = vmatpush1.msra.mxu0 0.0
    %768 = vmatprep.subr.mxu0 0.0
    %769 = vmatpush1.msra.mxu0 0.0
    %770 = vmatprep.subr.mxu0 0.0
    %771 = vmatpush1.msra.mxu0 0.0
    %772 = vmatprep.subr.mxu0 0.0
    %773 = vmatpush1.msra.mxu0 0.0
    %774 = vmatprep.subr.mxu0 0.0
    %775 = vmatpush1.msra.mxu0 0.0
    %776 = vmatprep.subr.mxu0 0.0
    %777 = vmatpush1.msra.mxu0 0.0
    %778 = vmatprep.subr.mxu0 0.0
    %779 = vmatpush1.msra.mxu0 0.0
    %780 = vmatprep.subr.mxu0 0.0
    %781 = vmatpush1.msra.mxu0 0.0
    %782 = vmatprep.subr.mxu0 0.0
    %783 = vmatpush1.msra.mxu0 0.0
    %784 = vmatprep.subr.mxu0 0.0
    %785 = vmatpush1.msra.mxu0 0.0
    %786 = vmatprep.subr.mxu0 0.0
    %787 = vmatpush1.msra.mxu0 0.0
    %788 = vmatprep.subr.mxu0 0.0
    %789 = vmatpush1.msra.mxu0 0.0
    %790 = vmatprep.subr.mxu0 0.0
    %791 = vmatpush1.msra.mxu0 0.0
    %792 = vmatprep.subr.mxu0 0.0
    %793 = vmatpush1.msra.mxu0 0.0
    %794 = vmatprep.subr.mxu0 0.0
    %795 = vmatpush1.msra.mxu0 0.0
    %796 = vmatprep.subr.mxu0 0.0
    %797 = vmatpush1.msra.mxu0 0.0
    %798 = vmatprep.subr.mxu0 0.0
    %799 = vmatpush1.msra.mxu0 0.0
    %800 = vmatprep.subr.mxu0 0.0
    %801 = vmatpush1.msra.mxu0 0.0
    %802 = vmatprep.subr.mxu0 0.0
    %803 = vmatpush1.msra.mxu0 0.0
    %804 = vmatprep.subr.mxu0 0.0
    %805 = vmatpush1.msra.mxu0 0.0
    %806 = vmatprep.subr.mxu0 0.0
    %807 = vmatpush1.msra.mxu0 0.0
    %808 = vmatprep.subr.mxu0 0.0
    %809 = vmatpush1.msra.mxu0 0.0
    %810 = vmatprep.subr.mxu0 0.0
    %811 = vmatpush1.msra.mxu0 0.0
    %812 = vmatprep.mubr.f32.mxu0 0.0
    %813 = vmatmul.mubr.f32.gmra.mrb[0].mxu0 %v746
    %v814 = vpop.f32.mrb[0].mxu0
    %v815 = vadd.f32 %v335, %v814
    %v816 = vpop.f32.mrb[0].mxu0
    %817 = vdwg.mxu0
    %v818 = vadd.f32 %v742, %v815
    %v819 = vxor.u32 %v818, 2147483648
    %v820 = vmul.f32 %v819, 1.442695
    %v821 = vpow.pop %v820
    %v822 = vadd.f32 %v821, 1.0
    %v823 = vrcp.pop %v822
    %v824 = vmul.f32 1.0, %v823
    %826 = vrot.lane.b32.xlu0 %v815, 64
    %v827 = vpop.permute.xlu0 %826
    %v829 = vmul.f32 %v824, %v827
    %831 = vrot.lane.b32.xlu0 %v829, 64
    %v832 = vpop.permute.xlu0 %831
    %v834 = vadd.f32 %v742, %v832
    %v835 = vtanh.pop %v834
    %v836 = vsub.f32 1.0, %v824
    %838 = vrot.lane.b32.xlu0 %v835, 96
    %v839 = vpop.permute.xlu0 %838
    %v841 = vmul.f32 %v836, %v839
    %v842 = vmul.f32 %v824, %v741
    %v843 = vadd.f32 %v841, %v842
    %v844 = vld [vmem:[#allocation2 + $0xa] sm:$0x3]
    %846 = vrot.lane.b32.xlu0 %v843, 96
    %v847 = vpop.permute.xlu0 %846
    %v848 = vsel %vm336, %v847, 0
    %850 = vmatprep.subr.mxu0 0.0
    %851 = vmatpush1.msra.mxu0 %v47
    %852 = vmatprep.subr.mxu0 0.0
    %853 = vmatpush1.msra.mxu0 %v48
    %854 = vmatprep.subr.mxu0 0.0
    %855 = vmatpush1.msra.mxu0 %v49
    %856 = vmatprep.subr.mxu0 0.0
    %857 = vmatpush1.msra.mxu0 %v50
    %858 = vmatprep.subr.mxu0 0.0
    %859 = vmatpush1.msra.mxu0 0.0
    %860 = vmatprep.subr.mxu0 0.0
    %861 = vmatpush1.msra.mxu0 0.0
    %862 = vmatprep.subr.mxu0 0.0
    %863 = vmatpush1.msra.mxu0 0.0
    %864 = vmatprep.subr.mxu0 0.0
    %865 = vmatpush1.msra.mxu0 0.0
    %866 = vmatprep.subr.mxu0 0.0
    %867 = vmatpush1.msra.mxu0 0.0
    %868 = vmatprep.subr.mxu0 0.0
    %869 = vmatpush1.msra.mxu0 0.0
    %870 = vmatprep.subr.mxu0 0.0
    %871 = vmatpush1.msra.mxu0 0.0
    %872 = vmatprep.subr.mxu0 0.0
    %873 = vmatpush1.msra.mxu0 0.0
    %874 = vmatprep.subr.mxu0 0.0
    %875 = vmatpush1.msra.mxu0 0.0
    %876 = vmatprep.subr.mxu0 0.0
    %877 = vmatpush1.msra.mxu0 0.0
    %878 = vmatprep.subr.mxu0 0.0
    %879 = vmatpush1.msra.mxu0 0.0
    %880 = vmatprep.subr.mxu0 0.0
    %881 = vmatpush1.msra.mxu0 0.0
    %882 = vmatprep.subr.mxu0 0.0
    %883 = vmatpush1.msra.mxu0 0.0
    %884 = vmatprep.subr.mxu0 0.0
    %885 = vmatpush1.msra.mxu0 0.0
    %886 = vmatprep.subr.mxu0 0.0
    %887 = vmatpush1.msra.mxu0 0.0
    %888 = vmatprep.subr.mxu0 0.0
    %889 = vmatpush1.msra.mxu0 0.0
    %890 = vmatprep.subr.mxu0 0.0
    %891 = vmatpush1.msra.mxu0 0.0
    %892 = vmatprep.subr.mxu0 0.0
    %893 = vmatpush1.msra.mxu0 0.0
    %894 = vmatprep.subr.mxu0 0.0
    %895 = vmatpush1.msra.mxu0 0.0
    %896 = vmatprep.subr.mxu0 0.0
    %897 = vmatpush1.msra.mxu0 0.0
    %898 = vmatprep.subr.mxu0 0.0
    %899 = vmatpush1.msra.mxu0 0.0
    %900 = vmatprep.subr.mxu0 0.0
    %901 = vmatpush1.msra.mxu0 0.0
    %902 = vmatprep.subr.mxu0 0.0
    %903 = vmatpush1.msra.mxu0 0.0
    %904 = vmatprep.subr.mxu0 0.0
    %905 = vmatpush1.msra.mxu0 0.0
    %906 = vmatprep.subr.mxu0 0.0
    %907 = vmatpush1.msra.mxu0 0.0
    %908 = vmatprep.subr.mxu0 0.0
    %909 = vmatpush1.msra.mxu0 0.0
    %910 = vmatprep.subr.mxu0 0.0
    %911 = vmatpush1.msra.mxu0 0.0
    %912 = vmatprep.subr.mxu0 0.0
    %913 = vmatpush1.msra.mxu0 0.0
    %914 = vmatprep.mubr.f32.mxu0 0.0
    %915 = vmatmul.mubr.f32.gmra.mrb[0].mxu0 %v848
    %v916 = vpop.f32.mrb[0].mxu0
    %v917 = vadd.f32 %v335, %v916
    %v918 = vpop.f32.mrb[0].mxu0
    %919 = vdwg.mxu0
    %v920 = vadd.f32 %v844, %v917
    %v921 = vxor.u32 %v920, 2147483648
    %v922 = vmul.f32 %v921, 1.442695
    %v923 = vpow.pop %v922
    %v924 = vadd.f32 %v923, 1.0
    %v925 = vrcp.pop %v924
    %v926 = vmul.f32 1.0, %v925
    %928 = vrot.lane.b32.xlu0 %v917, 64
    %v929 = vpop.permute.xlu0 %928
    %v931 = vmul.f32 %v926, %v929
    %933 = vrot.lane.b32.xlu0 %v931, 64
    %v934 = vpop.permute.xlu0 %933
    %v936 = vadd.f32 %v844, %v934
    %v937 = vtanh.pop %v936
    %v938 = vsub.f32 1.0, %v926
    %940 = vrot.lane.b32.xlu0 %v937, 96
    %v941 = vpop.permute.xlu0 %940
    %v943 = vmul.f32 %v938, %v941
    %v944 = vmul.f32 %v926, %v843
    %v945 = vadd.f32 %v943, %v944
    %v946 = vld [vmem:[#allocation2 + $0xc] sm:$0x3]
    %948 = vrot.lane.b32.xlu0 %v945, 96
    %v949 = vpop.permute.xlu0 %948
    %v950 = vsel %vm336, %v949, 0
    %952 = vmatprep.subr.mxu0 0.0
    %953 = vmatpush1.msra.mxu0 %v47
    %954 = vmatprep.subr.mxu0 0.0
    %955 = vmatpush1.msra.mxu0 %v48
    %956 = vmatprep.subr.mxu0 0.0
    %957 = vmatpush1.msra.mxu0 %v49
    %958 = vmatprep.subr.mxu0 0.0
    %959 = vmatpush1.msra.mxu0 %v50
    %960 = vmatprep.subr.mxu0 0.0
    %961 = vmatpush1.msra.mxu0 0.0
    %962 = vmatprep.subr.mxu0 0.0
    %963 = vmatpush1.msra.mxu0 0.0
    %964 = vmatprep.subr.mxu0 0.0
    %965 = vmatpush1.msra.mxu0 0.0
    %966 = vmatprep.subr.mxu0 0.0
    %967 = vmatpush1.msra.mxu0 0.0
    %968 = vmatprep.subr.mxu0 0.0
    %969 = vmatpush1.msra.mxu0 0.0
    %970 = vmatprep.subr.mxu0 0.0
    %971 = vmatpush1.msra.mxu0 0.0
    %972 = vmatprep.subr.mxu0 0.0
    %973 = vmatpush1.msra.mxu0 0.0
    %974 = vmatprep.subr.mxu0 0.0
    %975 = vmatpush1.msra.mxu0 0.0
    %976 = vmatprep.subr.mxu0 0.0
    %977 = vmatpush1.msra.mxu0 0.0
    %978 = vmatprep.subr.mxu0 0.0
    %979 = vmatpush1.msra.mxu0 0.0
    %980 = vmatprep.subr.mxu0 0.0
    %981 = vmatpush1.msra.mxu0 0.0
    %982 = vmatprep.subr.mxu0 0.0
    %983 = vmatpush1.msra.mxu0 0.0
    %984 = vmatprep.subr.mxu0 0.0
    %985 = vmatpush1.msra.mxu0 0.0
    %986 = vmatprep.subr.mxu0 0.0
    %987 = vmatpush1.msra.mxu0 0.0
    %988 = vmatprep.subr.mxu0 0.0
    %989 = vmatpush1.msra.mxu0 0.0
    %990 = vmatprep.subr.mxu0 0.0
    %991 = vmatpush1.msra.mxu0 0.0
    %992 = vmatprep.subr.mxu0 0.0
    %993 = vmatpush1.msra.mxu0 0.0
    %994 = vmatprep.subr.mxu0 0.0
    %995 = vmatpush1.msra.mxu0 0.0
    %996 = vmatprep.subr.mxu0 0.0
    %997 = vmatpush1.msra.mxu0 0.0
    %998 = vmatprep.subr.mxu0 0.0
    %999 = vmatpush1.msra.mxu0 0.0
    %1000 = vmatprep.subr.mxu0 0.0
    %1001 = vmatpush1.msra.mxu0 0.0
    %1002 = vmatprep.subr.mxu0 0.0
    %1003 = vmatpush1.msra.mxu0 0.0
    %1004 = vmatprep.subr.mxu0 0.0
    %1005 = vmatpush1.msra.mxu0 0.0
    %1006 = vmatprep.subr.mxu0 0.0
    %1007 = vmatpush1.msra.mxu0 0.0
    %1008 = vmatprep.subr.mxu0 0.0
    %1009 = vmatpush1.msra.mxu0 0.0
    %1010 = vmatprep.subr.mxu0 0.0
    %1011 = vmatpush1.msra.mxu0 0.0
    %1012 = vmatprep.subr.mxu0 0.0
    %1013 = vmatpush1.msra.mxu0 0.0
    %1014 = vmatprep.subr.mxu0 0.0
    %1015 = vmatpush1.msra.mxu0 0.0
    %1016 = vmatprep.mubr.f32.mxu0 0.0
    %1017 = vmatmul.mubr.f32.gmra.mrb[0].mxu0 %v950
    %v1018 = vpop.f32.mrb[0].mxu0
    %v1019 = vadd.f32 %v335, %v1018
    %v1020 = vpop.f32.mrb[0].mxu0
    %1021 = vdwg.mxu0
    %v1022 = vadd.f32 %v946, %v1019
    %v1023 = vxor.u32 %v1022, 2147483648
    %v1024 = vmul.f32 %v1023, 1.442695
    %v1025 = vpow.pop %v1024
    %v1026 = vadd.f32 %v1025, 1.0
    %v1027 = vrcp.pop %v1026
    %v1028 = vmul.f32 1.0, %v1027
    %1030 = vrot.lane.b32.xlu0 %v1019, 64
    %v1031 = vpop.permute.xlu0 %1030
    %v1033 = vmul.f32 %v1028, %v1031
    %1035 = vrot.lane.b32.xlu0 %v1033, 64
    %v1036 = vpop.permute.xlu0 %1035
    %v1038 = vadd.f32 %v946, %v1036
    %v1039 = vtanh.pop %v1038
    %v1040 = vsub.f32 1.0, %v1028
    %1042 = vrot.lane.b32.xlu0 %v1039, 96
    %v1043 = vpop.permute.xlu0 %1042
    %v1045 = vmul.f32 %v1040, %v1043
    %v1046 = vmul.f32 %v1028, %v945
    %v1047 = vadd.f32 %v1045, %v1046
    %v1048 = vld [vmem:[#allocation2 + $0xe] sm:$0x3]
    %1050 = vrot.lane.b32.xlu0 %v1047, 96
    %v1051 = vpop.permute.xlu0 %1050
    %v1052 = vsel %vm336, %v1051, 0
    %1054 = vmatprep.subr.mxu0 0.0
    %1055 = vmatpush1.msra.mxu0 %v47
    %1056 = vmatprep.subr.mxu0 0.0
    %1057 = vmatpush1.msra.mxu0 %v48
    %1058 = vmatprep.subr.mxu0 0.0
    %1059 = vmatpush1.msra.mxu0 %v49
    %1060 = vmatprep.subr.mxu0 0.0
    %1061 = vmatpush1.msra.mxu0 %v50
    %1062 = vmatprep.subr.mxu0 0.0
    %1063 = vmatpush1.msra.mxu0 0.0
    %1064 = vmatprep.subr.mxu0 0.0
    %1065 = vmatpush1.msra.mxu0 0.0
    %1066 = vmatprep.subr.mxu0 0.0
    %1067 = vmatpush1.msra.mxu0 0.0
    %1068 = vmatprep.subr.mxu0 0.0
    %1069 = vmatpush1.msra.mxu0 0.0
    %1070 = vmatprep.subr.mxu0 0.0
    %1071 = vmatpush1.msra.mxu0 0.0
    %1072 = vmatprep.subr.mxu0 0.0
    %1073 = vmatpush1.msra.mxu0 0.0
    %1074 = vmatprep.subr.mxu0 0.0
    %1075 = vmatpush1.msra.mxu0 0.0
    %1076 = vmatprep.subr.mxu0 0.0
    %1077 = vmatpush1.msra.mxu0 0.0
    %1078 = vmatprep.subr.mxu0 0.0
    %1079 = vmatpush1.msra.mxu0 0.0
    %1080 = vmatprep.subr.mxu0 0.0
    %1081 = vmatpush1.msra.mxu0 0.0
    %1082 = vmatprep.subr.mxu0 0.0
    %1083 = vmatpush1.msra.mxu0 0.0
    %1084 = vmatprep.subr.mxu0 0.0
    %1085 = vmatpush1.msra.mxu0 0.0
    %1086 = vmatprep.subr.mxu0 0.0
    %1087 = vmatpush1.msra.mxu0 0.0
    %1088 = vmatprep.subr.mxu0 0.0
    %1089 = vmatpush1.msra.mxu0 0.0
    %1090 = vmatprep.subr.mxu0 0.0
    %1091 = vmatpush1.msra.mxu0 0.0
    %1092 = vmatprep.subr.mxu0 0.0
    %1093 = vmatpush1.msra.mxu0 0.0
    %1094 = vmatprep.subr.mxu0 0.0
    %1095 = vmatpush1.msra.mxu0 0.0
    %1096 = vmatprep.subr.mxu0 0.0
    %1097 = vmatpush1.msra.mxu0 0.0
    %1098 = vmatprep.subr.mxu0 0.0
    %1099 = vmatpush1.msra.mxu0 0.0
    %1100 = vmatprep.subr.mxu0 0.0
    %1101 = vmatpush1.msra.mxu0 0.0
    %1102 = vmatprep.subr.mxu0 0.0
    %1103 = vmatpush1.msra.mxu0 0.0
    %1104 = vmatprep.subr.mxu0 0.0
    %1105 = vmatpush1.msra.mxu0 0.0
    %1106 = vmatprep.subr.mxu0 0.0
    %1107 = vmatpush1.msra.mxu0 0.0
    %1108 = vmatprep.subr.mxu0 0.0
    %1109 = vmatpush1.msra.mxu0 0.0
    %1110 = vmatprep.subr.mxu0 0.0
    %1111 = vmatpush1.msra.mxu0 0.0
    %1112 = vmatprep.subr.mxu0 0.0
    %1113 = vmatpush1.msra.mxu0 0.0
    %1114 = vmatprep.subr.mxu0 0.0
    %1115 = vmatpush1.msra.mxu0 0.0
    %1116 = vmatprep.subr.mxu0 0.0
    %1117 = vmatpush1.msra.mxu0 0.0
    %1118 = vmatprep.mubr.f32.mxu0 0.0
    %1119 = vmatmul.mubr.f32.gmra.mrb[0].mxu0 %v1052
    %v1120 = vpop.f32.mrb[0].mxu0
    %v1121 = vadd.f32 %v335, %v1120
    %v1122 = vpop.f32.mrb[0].mxu0
    %1123 = vdwg.mxu0
    %v1124 = vadd.f32 %v1048, %v1121
    %v1125 = vxor.u32 %v1124, 2147483648
    %v1126 = vmul.f32 %v1125, 1.442695
    %v1127 = vpow.pop %v1126
    %v1128 = vadd.f32 %v1127, 1.0
    %v1129 = vrcp.pop %v1128
    %v1130 = vmul.f32 1.0, %v1129
    %1132 = vrot.lane.b32.xlu0 %v1121, 64
    %v1133 = vpop.permute.xlu0 %1132
    %v1135 = vmul.f32 %v1130, %v1133
    %1137 = vrot.lane.b32.xlu0 %v1135, 64
    %v1138 = vpop.permute.xlu0 %1137
    %v1140 = vadd.f32 %v1048, %v1138
    %v1141 = vtanh.pop %v1140
    %v1142 = vsub.f32 1.0, %v1130
    %1144 = vrot.lane.b32.xlu0 %v1141, 96
    %v1145 = vpop.permute.xlu0 %1144
    %v1147 = vmul.f32 %v1142, %v1145
    %v1148 = vmul.f32 %v1130, %v1047
    %v1149 = vadd.f32 %v1147, %v1148
    %vm1150 = vcmp.lt.s32.totalorder %v90, 16
    %1153 = vrot.lane.b32.xlu0 %v1149, 96
    %v1154 = vpop.permute.xlu0 %1153
    %v1156 = vsel %vm1150, %v439, %v1154
    %v1159 = vsel %vm1150, %v541, %v1051
    %v1162 = vsel %vm1150, %v643, %v949
    %v1165 = vsel %vm1150, %v745, %v847
    %v1166 = vsel %vm1150, %v847, %v745
    %v1167 = vsel %vm1150, %v949, %v643
    %v1168 = vsel %vm1150, %v1051, %v541
    %v1169 = vsel %vm1150, %v1154, %v439
    %v1171 = vrot.slane %v1159, 6
    %v1174 = vrot.slane %v1162, 4
    %v1177 = vrot.slane %v1165, 2
    %v1180 = vrot.slane %v1167, 6
    %v1183 = vrot.slane %v1168, 4
    %v1186 = vrot.slane %v1169, 2
    %vm1188 = vcmask 1041408
    %v1189 = vsel %vm1188, %v1156, %v1171
    %vm1190 = vcmask 1043456
    %v1191 = vsel %vm1190, %v1189, %v1174
    %vm1192 = vcmask 1045504
    %v1193 = vsel %vm1192, %v1191, %v1177
    %v1194 = vsel %vm1188, %v1166, %v1180
    %v1195 = vsel %vm1190, %v1194, %v1183
    %v1196 = vsel %vm1192, %v1195, %v1186
    %v1197 = vlaneseq
    %v1198 = vshrl.u32 %v1197, 7
    %v1199 = vsub.s32 0, %v1198
    %v1200 = vrot.slane %v56, %v1199
    %v1202 = vsel %vm336, %v1193, 0
    %v1205 = vsel %vm336, %v1196, 0
    %1207 = vmatprep.subr.mxu0 0.0
    %1208 = vmatpush1.msra.mxu0 %v52
    %1209 = vmatprep.subr.mxu0 0.0
    %1210 = vmatpush1.msra.mxu0 %v53
    %1211 = vmatprep.subr.mxu0 0.0
    %1212 = vmatpush1.msra.mxu0 %v54
    %1213 = vmatprep.subr.mxu0 0.0
    %1214 = vmatpush1.msra.mxu0 %v55
    %1215 = vmatprep.subr.mxu0 0.0
    %1216 = vmatpush1.msra.mxu0 0.0
    %1217 = vmatprep.subr.mxu0 0.0
    %1218 = vmatpush1.msra.mxu0 0.0
    %1219 = vmatprep.subr.mxu0 0.0
    %1220 = vmatpush1.msra.mxu0 0.0
    %1221 = vmatprep.subr.mxu0 0.0
    %1222 = vmatpush1.msra.mxu0 0.0
    %1223 = vmatprep.subr.mxu0 0.0
    %1224 = vmatpush1.msra.mxu0 0.0
    %1225 = vmatprep.subr.mxu0 0.0
    %1226 = vmatpush1.msra.mxu0 0.0
    %1227 = vmatprep.subr.mxu0 0.0
    %1228 = vmatpush1.msra.mxu0 0.0
    %1229 = vmatprep.subr.mxu0 0.0
    %1230 = vmatpush1.msra.mxu0 0.0
    %1231 = vmatprep.subr.mxu0 0.0
    %1232 = vmatpush1.msra.mxu0 0.0
    %1233 = vmatprep.subr.mxu0 0.0
    %1234 = vmatpush1.msra.mxu0 0.0
    %1235 = vmatprep.subr.mxu0 0.0
    %1236 = vmatpush1.msra.mxu0 0.0
    %1237 = vmatprep.subr.mxu0 0.0
    %1238 = vmatpush1.msra.mxu0 0.0
    %1239 = vmatprep.subr.mxu0 0.0
    %1240 = vmatpush1.msra.mxu0 0.0
    %1241 = vmatprep.subr.mxu0 0.0
    %1242 = vmatpush1.msra.mxu0 0.0
    %1243 = vmatprep.subr.mxu0 0.0
    %1244 = vmatpush1.msra.mxu0 0.0
    %1245 = vmatprep.subr.mxu0 0.0
    %1246 = vmatpush1.msra.mxu0 0.0
    %1247 = vmatprep.subr.mxu0 0.0
    %1248 = vmatpush1.msra.mxu0 0.0
    %1249 = vmatprep.subr.mxu0 0.0
    %1250 = vmatpush1.msra.mxu0 0.0
    %1251 = vmatprep.subr.mxu0 0.0
    %1252 = vmatpush1.msra.mxu0 0.0
    %1253 = vmatprep.subr.mxu0 0.0
    %1254 = vmatpush1.msra.mxu0 0.0
    %1255 = vmatprep.subr.mxu0 0.0
    %1256 = vmatpush1.msra.mxu0 0.0
    %1257 = vmatprep.subr.mxu0 0.0
    %1258 = vmatpush1.msra.mxu0 0.0
    %1259 = vmatprep.subr.mxu0 0.0
    %1260 = vmatpush1.msra.mxu0 0.0
    %1261 = vmatprep.subr.mxu0 0.0
    %1262 = vmatpush1.msra.mxu0 0.0
    %1263 = vmatprep.subr.mxu0 0.0
    %1264 = vmatpush1.msra.mxu0 0.0
    %1265 = vmatprep.subr.mxu0 0.0
    %1266 = vmatpush1.msra.mxu0 0.0
    %1267 = vmatprep.subr.mxu0 0.0
    %1268 = vmatpush1.msra.mxu0 0.0
    %1269 = vmatprep.subr.mxu0 0.0
    %1270 = vmatpush1.msra.mxu0 0.0
    %1271 = vmatprep.mubr.f32.mxu0 0.0
    %1272 = vmatmul.mubr.f32.gmra.mrb[0].mxu0 %v1202
    %v1273 = vpop.f32.mrb[0].mxu0
    %v1274 = vadd.f32 %v1200, %v1273
    %v1275 = vpop.f32.mrb[0].mxu0
    %1276 = vmatprep.mubr.f32.mxu0 0.0
    %1277 = vmatmul.mubr.f32.gmra.mrb[0].mxu0 %v1205
    %v1278 = vpop.f32.mrb[0].mxu0
    %v1279 = vadd.f32 %v1200, %v1278
    %v1280 = vpop.f32.mrb[0].mxu0
    %1281 = vdwg.mxu0
    %v1282 = vtanh.pop %v1274
    %v1283 = vtanh.pop %v1279
    %v1284 = vlaneseq
    %v1285 = vshrl.u32 %v1284, 7
    %v1286 = vsub.s32 1, %v1285
    %v1287 = vrot.slane %v56, %v1286
    %v1288 = vmul.f32 %v1282, %v1287
    %v1289 = vmul.f32 %v1283, %v1287
    %v1290 = vsel %vm336, %v1288, 0.0
    %1291 = vadd.xlane.f32.xlu0 %v1290
    %v1292 = vpop.xlane.xlu0 %1291
    %v1293 = vsel %vm336, %v1289, 0.0
    %1294 = vadd.xlane.f32.xlu0 %v1293
    %v1295 = vpop.xlane.xlu0 %1294
    %v1296 = vtanh.pop %v1292
    %v1297 = vtanh.pop %v1295
    %v1298 = vmul.f32 %v1296, 1.442695
    %v1299 = vpow.pop %v1298
    %v1300 = vmul.f32 %v1297, 1.442695
    %v1301 = vpow.pop %v1300
    %v1302 = vmul.f32 %v1299, %v1193
    %v1303 = vmul.f32 %v1301, %v1196
    %v1305 = vrot.slane %v1302, 2
    %v1307 = vadd.f32 %v1302, %v1305
    %v1309 = vrot.slane %v1299, 2
    %v1311 = vadd.f32 %v1299, %v1309
    %v1312 = vrot.slane %v1302, 4
    %v1314 = vadd.f32 %v1307, %v1312
    %v1315 = vrot.slane %v1299, 4
    %v1317 = vadd.f32 %v1311, %v1315
    %v1318 = vrot.slane %v1302, 6
    %v1320 = vadd.f32 %v1314, %v1318
    %v1321 = vrot.slane %v1299, 6
    %v1323 = vadd.f32 %v1317, %v1321
    %v1324 = vadd.f32 %v1320, %v1303
    %v1325 = vadd.f32 %v1323, %v1301
    %v1327 = vrot.slane %v1303, 2
    %v1329 = vadd.f32 %v1324, %v1327
    %v1331 = vrot.slane %v1301, 2
    %v1333 = vadd.f32 %v1325, %v1331
    %v1334 = vrot.slane %v1303, 4
    %v1336 = vadd.f32 %v1329, %v1334
    %v1337 = vrot.slane %v1301, 4
    %v1339 = vadd.f32 %v1333, %v1337
    %v1340 = vrot.slane %v1303, 6
    %v1342 = vadd.f32 %v1336, %v1340
    %v1343 = vrot.slane %v1301, 6
    %v1345 = vadd.f32 %v1339, %v1343
    %v1346 = vrcp.pop %v1345
    %v1347 = vmul.f32 1.0, %v1346
    %1349 = vset.pattern.permute.xlu0 0
    %1350 = vperm.xlu0 %1349, %v1347
    %v1351 = vpop.permute.xlu0 %1350
    %v1353 = vmul.f32 %v1342, %v1351
    %vm1354 = vcmask 7168
    %v1355 = vsel %vm1354, %v1299, %v1309
    %vm1356 = vcmask 15360
    %v1357 = vsel %vm1356, %v1355, %v1315
    %vm1358 = vcmask 23552
    %v1359 = vsel %vm1358, %v1357, %v1321
    %vm1360 = vcmask 31744
    %v1361 = vsel %vm1360, %v1359, %v1301
    %vm1362 = vcmask 39936
    %v1363 = vsel %vm1362, %v1361, %v1331
    %vm1364 = vcmask 48128
    %v1365 = vsel %vm1364, %v1363, %v1337
    %vm1366 = vcmask 56320
    %v1367 = vsel %vm1366, %v1365, %v1343
    %v1368 = vmul.f32 %v1367, %v1351
    %vm1369 = vcmask 58368
    %1370 = vst.msk [vmem:[#allocation5] sm:$0x3] %vm1369, %v1368
    %v1371 = vld [vmem:[#allocation2 + $0x10] sm:$0x3]
    %v1372 = vsel %vm336, %v1154, 0
    %1374 = vmatprep.subr.mxu0 0.0
    %1375 = vmatpush1.msra.mxu0 %v47
    %1376 = vmatprep.subr.mxu0 0.0
    %1377 = vmatpush1.msra.mxu0 %v48
    %1378 = vmatprep.subr.mxu0 0.0
    %1379 = vmatpush1.msra.mxu0 %v49
    %1380 = vmatprep.subr.mxu0 0.0
    %1381 = vmatpush1.msra.mxu0 %v50
    %1382 = vmatprep.subr.mxu0 0.0
    %1383 = vmatpush1.msra.mxu0 0.0
    %1384 = vmatprep.subr.mxu0 0.0
    %1385 = vmatpush1.msra.mxu0 0.0
    %1386 = vmatprep.subr.mxu0 0.0
    %1387 = vmatpush1.msra.mxu0 0.0
    %1388 = vmatprep.subr.mxu0 0.0
    %1389 = vmatpush1.msra.mxu0 0.0
    %1390 = vmatprep.subr.mxu0 0.0
    %1391 = vmatpush1.msra.mxu0 0.0
    %1392 = vmatprep.subr.mxu0 0.0
    %1393 = vmatpush1.msra.mxu0 0.0
    %1394 = vmatprep.subr.mxu0 0.0
    %1395 = vmatpush1.msra.mxu0 0.0
    %1396 = vmatprep.subr.mxu0 0.0
    %1397 = vmatpush1.msra.mxu0 0.0
    %1398 = vmatprep.subr.mxu0 0.0
    %1399 = vmatpush1.msra.mxu0 0.0
    %1400 = vmatprep.subr.mxu0 0.0
    %1401 = vmatpush1.msra.mxu0 0.0
    %1402 = vmatprep.subr.mxu0 0.0
    %1403 = vmatpush1.msra.mxu0 0.0
    %1404 = vmatprep.subr.mxu0 0.0
    %1405 = vmatpush1.msra.mxu0 0.0
    %1406 = vmatprep.subr.mxu0 0.0
    %1407 = vmatpush1.msra.mxu0 0.0
    %1408 = vmatprep.subr.mxu0 0.0
    %1409 = vmatpush1.msra.mxu0 0.0
    %1410 = vmatprep.subr.mxu0 0.0
    %1411 = vmatpush1.msra.mxu0 0.0
    %1412 = vmatprep.subr.mxu0 0.0
    %1413 = vmatpush1.msra.mxu0 0.0
    %1414 = vmatprep.subr.mxu0 0.0
    %1415 = vmatpush1.msra.mxu0 0.0
    %1416 = vmatprep.subr.mxu0 0.0
    %1417 = vmatpush1.msra.mxu0 0.0
    %1418 = vmatprep.subr.mxu0 0.0
    %1419 = vmatpush1.msra.mxu0 0.0
    %1420 = vmatprep.subr.mxu0 0.0
    %1421 = vmatpush1.msra.mxu0 0.0
    %1422 = vmatprep.subr.mxu0 0.0
    %1423 = vmatpush1.msra.mxu0 0.0
    %1424 = vmatprep.subr.mxu0 0.0
    %1425 = vmatpush1.msra.mxu0 0.0
    %1426 = vmatprep.subr.mxu0 0.0
    %1427 = vmatpush1.msra.mxu0 0.0
    %1428 = vmatprep.subr.mxu0 0.0
    %1429 = vmatpush1.msra.mxu0 0.0
    %1430 = vmatprep.subr.mxu0 0.0
    %1431 = vmatpush1.msra.mxu0 0.0
    %1432 = vmatprep.subr.mxu0 0.0
    %1433 = vmatpush1.msra.mxu0 0.0
    %1434 = vmatprep.subr.mxu0 0.0
    %1435 = vmatpush1.msra.mxu0 0.0
    %1436 = vmatprep.subr.mxu0 0.0
    %1437 = vmatpush1.msra.mxu0 0.0
    %1438 = vmatprep.mubr.f32.mxu0 0.0
    %1439 = vmatmul.mubr.f32.gmra.mrb[0].mxu0 %v1372
    %v1440 = vpop.f32.mrb[0].mxu0
    %v1441 = vadd.f32 %v335, %v1440
    %v1442 = vpop.f32.mrb[0].mxu0
    %1443 = vdwg.mxu0
    %v1444 = vadd.f32 %v1371, %v1441
    %v1445 = vxor.u32 %v1444, 2147483648
    %v1446 = vmul.f32 %v1445, 1.442695
    %v1447 = vpow.pop %v1446
    %v1448 = vadd.f32 %v1447, 1.0
    %v1449 = vrcp.pop %v1448
    %v1450 = vmul.f32 1.0, %v1449
    %1452 = vrot.lane.b32.xlu0 %v1441, 64
    %v1453 = vpop.permute.xlu0 %1452
    %v1455 = vmul.f32 %v1450, %v1453
    %1457 = vrot.lane.b32.xlu0 %v1455, 64
    %v1458 = vpop.permute.xlu0 %1457
    %v1460 = vadd.f32 %v1371, %v1458
    %v1461 = vtanh.pop %v1460
    %v1462 = vsub.f32 1.0, %v1450
    %1464 = vrot.lane.b32.xlu0 %v1461, 96
    %v1465 = vpop.permute.xlu0 %1464
    %v1467 = vmul.f32 %v1462, %v1465
    %v1468 = vmul.f32 %v1450, %v1149
    %v1469 = vadd.f32 %v1467, %v1468
    %v1470 = vld [vmem:[#allocation2 + $0x12] sm:$0x3]
    %1472 = vrot.lane.b32.xlu0 %v1469, 96
    %v1473 = vpop.permute.xlu0 %1472
    %v1474 = vsel %vm336, %v1473, 0
    %1476 = vmatprep.subr.mxu0 0.0
    %1477 = vmatpush1.msra.mxu0 %v47
    %1478 = vmatprep.subr.mxu0 0.0
    %1479 = vmatpush1.msra.mxu0 %v48
    %1480 = vmatprep.subr.mxu0 0.0
    %1481 = vmatpush1.msra.mxu0 %v49
    %1482 = vmatprep.subr.mxu0 0.0
    %1483 = vmatpush1.msra.mxu0 %v50
    %1484 = vmatprep.subr.mxu0 0.0
    %1485 = vmatpush1.msra.mxu0 0.0
    %1486 = vmatprep.subr.mxu0 0.0
    %1487 = vmatpush1.msra.mxu0 0.0
    %1488 = vmatprep.subr.mxu0 0.0
    %1489 = vmatpush1.msra.mxu0 0.0
    %1490 = vmatprep.subr.mxu0 0.0
    %1491 = vmatpush1.msra.mxu0 0.0
    %1492 = vmatprep.subr.mxu0 0.0
    %1493 = vmatpush1.msra.mxu0 0.0
    %1494 = vmatprep.subr.mxu0 0.0
    %1495 = vmatpush1.msra.mxu0 0.0
    %1496 = vmatprep.subr.mxu0 0.0
    %1497 = vmatpush1.msra.mxu0 0.0
    %1498 = vmatprep.subr.mxu0 0.0
    %1499 = vmatpush1.msra.mxu0 0.0
    %1500 = vmatprep.subr.mxu0 0.0
    %1501 = vmatpush1.msra.mxu0 0.0
    %1502 = vmatprep.subr.mxu0 0.0
    %1503 = vmatpush1.msra.mxu0 0.0
    %1504 = vmatprep.subr.mxu0 0.0
    %1505 = vmatpush1.msra.mxu0 0.0
    %1506 = vmatprep.subr.mxu0 0.0
    %1507 = vmatpush1.msra.mxu0 0.0
    %1508 = vmatprep.subr.mxu0 0.0
    %1509 = vmatpush1.msra.mxu0 0.0
    %1510 = vmatprep.subr.mxu0 0.0
    %1511 = vmatpush1.msra.mxu0 0.0
    %1512 = vmatprep.subr.mxu0 0.0
    %1513 = vmatpush1.msra.mxu0 0.0
    %1514 = vmatprep.subr.mxu0 0.0
    %1515 = vmatpush1.msra.mxu0 0.0
    %1516 = vmatprep.subr.mxu0 0.0
    %1517 = vmatpush1.msra.mxu0 0.0
    %1518 = vmatprep.subr.mxu0 0.0
    %1519 = vmatpush1.msra.mxu0 0.0
    %1520 = vmatprep.subr.mxu0 0.0
    %1521 = vmatpush1.msra.mxu0 0.0
    %1522 = vmatprep.subr.mxu0 0.0
    %1523 = vmatpush1.msra.mxu0 0.0
    %1524 = vmatprep.subr.mxu0 0.0
    %1525 = vmatpush1.msra.mxu0 0.0
    %1526 = vmatprep.subr.mxu0 0.0
    %1527 = vmatpush1.msra.mxu0 0.0
    %1528 = vmatprep.subr.mxu0 0.0
    %1529 = vmatpush1.msra.mxu0 0.0
    %1530 = vmatprep.subr.mxu0 0.0
    %1531 = vmatpush1.msra.mxu0 0.0
    %1532 = vmatprep.subr.mxu0 0.0
    %1533 = vmatpush1.msra.mxu0 0.0
    %1534 = vmatprep.subr.mxu0 0.0
    %1535 = vmatpush1.msra.mxu0 0.0
    %1536 = vmatprep.subr.mxu0 0.0
    %1537 = vmatpush1.msra.mxu0 0.0
    %1538 = vmatprep.subr.mxu0 0.0
    %1539 = vmatpush1.msra.mxu0 0.0
    %1540 = vmatprep.mubr.f32.mxu0 0.0
    %1541 = vmatmul.mubr.f32.gmra.mrb[0].mxu0 %v1474
    %v1542 = vpop.f32.mrb[0].mxu0
    %v1543 = vadd.f32 %v335, %v1542
    %v1544 = vpop.f32.mrb[0].mxu0
    %1545 = vdwg.mxu0
    %v1546 = vadd.f32 %v1470, %v1543
    %v1547 = vxor.u32 %v1546, 2147483648
    %v1548 = vmul.f32 %v1547, 1.442695
    %v1549 = vpow.pop %v1548
    %v1550 = vadd.f32 %v1549, 1.0
    %v1551 = vrcp.pop %v1550
    %v1552 = vmul.f32 1.0, %v1551
    %1554 = vrot.lane.b32.xlu0 %v1543, 64
    %v1555 = vpop.permute.xlu0 %1554
    %v1557 = vmul.f32 %v1552, %v1555
    %1559 = vrot.lane.b32.xlu0 %v1557, 64
    %v1560 = vpop.permute.xlu0 %1559
    %v1562 = vadd.f32 %v1470, %v1560
    %v1563 = vtanh.pop %v1562
    %v1564 = vsub.f32 1.0, %v1552
    %1566 = vrot.lane.b32.xlu0 %v1563, 96
    %v1567 = vpop.permute.xlu0 %1566
    %v1569 = vmul.f32 %v1564, %v1567
    %v1570 = vmul.f32 %v1552, %v1469
    %v1571 = vadd.f32 %v1569, %v1570
    %v1572 = vld [vmem:[#allocation2 + $0x14] sm:$0x3]
    %1574 = vrot.lane.b32.xlu0 %v1571, 96
    %v1575 = vpop.permute.xlu0 %1574
    %v1576 = vsel %vm336, %v1575, 0
    %1578 = vmatprep.subr.mxu0 0.0
    %1579 = vmatpush1.msra.mxu0 %v47
    %1580 = vmatprep.subr.mxu0 0.0
    %1581 = vmatpush1.msra.mxu0 %v48
    %1582 = vmatprep.subr.mxu0 0.0
    %1583 = vmatpush1.msra.mxu0 %v49
    %1584 = vmatprep.subr.mxu0 0.0
    %1585 = vmatpush1.msra.mxu0 %v50
    %1586 = vmatprep.subr.mxu0 0.0
    %1587 = vmatpush1.msra.mxu0 0.0
    %1588 = vmatprep.subr.mxu0 0.0
    %1589 = vmatpush1.msra.mxu0 0.0
    %1590 = vmatprep.subr.mxu0 0.0
    %1591 = vmatpush1.msra.mxu0 0.0
    %1592 = vmatprep.subr.mxu0 0.0
    %1593 = vmatpush1.msra.mxu0 0.0
    %1594 = vmatprep.subr.mxu0 0.0
    %1595 = vmatpush1.msra.mxu0 0.0
    %1596 = vmatprep.subr.mxu0 0.0
    %1597 = vmatpush1.msra.mxu0 0.0
    %1598 = vmatprep.subr.mxu0 0.0
    %1599 = vmatpush1.msra.mxu0 0.0
    %1600 = vmatprep.subr.mxu0 0.0
    %1601 = vmatpush1.msra.mxu0 0.0
    %1602 = vmatprep.subr.mxu0 0.0
    %1603 = vmatpush1.msra.mxu0 0.0
    %1604 = vmatprep.subr.mxu0 0.0
    %1605 = vmatpush1.msra.mxu0 0.0
    %1606 = vmatprep.subr.mxu0 0.0
    %1607 = vmatpush1.msra.mxu0 0.0
    %1608 = vmatprep.subr.mxu0 0.0
    %1609 = vmatpush1.msra.mxu0 0.0
    %1610 = vmatprep.subr.mxu0 0.0
    %1611 = vmatpush1.msra.mxu0 0.0
    %1612 = vmatprep.subr.mxu0 0.0
    %1613 = vmatpush1.msra.mxu0 0.0
    %1614 = vmatprep.subr.mxu0 0.0
    %1615 = vmatpush1.msra.mxu0 0.0
    %1616 = vmatprep.subr.mxu0 0.0
    %1617 = vmatpush1.msra.mxu0 0.0
    %1618 = vmatprep.subr.mxu0 0.0
    %1619 = vmatpush1.msra.mxu0 0.0
    %1620 = vmatprep.subr.mxu0 0.0
    %1621 = vmatpush1.msra.mxu0 0.0
    %1622 = vmatprep.subr.mxu0 0.0
    %1623 = vmatpush1.msra.mxu0 0.0
    %1624 = vmatprep.subr.mxu0 0.0
    %1625 = vmatpush1.msra.mxu0 0.0
    %1626 = vmatprep.subr.mxu0 0.0
    %1627 = vmatpush1.msra.mxu0 0.0
    %1628 = vmatprep.subr.mxu0 0.0
    %1629 = vmatpush1.msra.mxu0 0.0
    %1630 = vmatprep.subr.mxu0 0.0
    %1631 = vmatpush1.msra.mxu0 0.0
    %1632 = vmatprep.subr.mxu0 0.0
    %1633 = vmatpush1.msra.mxu0 0.0
    %1634 = vmatprep.subr.mxu0 0.0
    %1635 = vmatpush1.msra.mxu0 0.0
    %1636 = vmatprep.subr.mxu0 0.0
    %1637 = vmatpush1.msra.mxu0 0.0
    %1638 = vmatprep.subr.mxu0 0.0
    %1639 = vmatpush1.msra.mxu0 0.0
    %1640 = vmatprep.subr.mxu0 0.0
    %1641 = vmatpush1.msra.mxu0 0.0
    %1642 = vmatprep.mubr.f32.mxu0 0.0
    %1643 = vmatmul.mubr.f32.gmra.mrb[0].mxu0 %v1576
    %v1644 = vpop.f32.mrb[0].mxu0
    %v1645 = vadd.f32 %v335, %v1644
    %v1646 = vpop.f32.mrb[0].mxu0
    %1647 = vdwg.mxu0
    %v1648 = vadd.f32 %v1572, %v1645
    %v1649 = vxor.u32 %v1648, 2147483648
    %v1650 = vmul.f32 %v1649, 1.442695
    %v1651 = vpow.pop %v1650
    %v1652 = vadd.f32 %v1651, 1.0
    %v1653 = vrcp.pop %v1652
    %v1654 = vmul.f32 1.0, %v1653
    %1656 = vrot.lane.b32.xlu0 %v1645, 64
    %v1657 = vpop.permute.xlu0 %1656
    %v1659 = vmul.f32 %v1654, %v1657
    %1661 = vrot.lane.b32.xlu0 %v1659, 64
    %v1662 = vpop.permute.xlu0 %1661
    %v1664 = vadd.f32 %v1572, %v1662
    %v1665 = vtanh.pop %v1664
    %v1666 = vsub.f32 1.0, %v1654
    %1668 = vrot.lane.b32.xlu0 %v1665, 96
    %v1669 = vpop.permute.xlu0 %1668
    %v1671 = vmul.f32 %v1666, %v1669
    %v1672 = vmul.f32 %v1654, %v1571
    %v1673 = vadd.f32 %v1671, %v1672
    %v1674 = vld [vmem:[#allocation2 + $0x16] sm:$0x3]
    %1676 = vrot.lane.b32.xlu0 %v1673, 96
    %v1677 = vpop.permute.xlu0 %1676
    %v1678 = vsel %vm336, %v1677, 0
    %1680 = vmatprep.subr.mxu0 0.0
    %1681 = vmatpush1.msra.mxu0 %v47
    %1682 = vmatprep.subr.mxu0 0.0
    %1683 = vmatpush1.msra.mxu0 %v48
    %1684 = vmatprep.subr.mxu0 0.0
    %1685 = vmatpush1.msra.mxu0 %v49
    %1686 = vmatprep.subr.mxu0 0.0
    %1687 = vmatpush1.msra.mxu0 %v50
    %1688 = vmatprep.subr.mxu0 0.0
    %1689 = vmatpush1.msra.mxu0 0.0
    %1690 = vmatprep.subr.mxu0 0.0
    %1691 = vmatpush1.msra.mxu0 0.0
    %1692 = vmatprep.subr.mxu0 0.0
    %1693 = vmatpush1.msra.mxu0 0.0
    %1694 = vmatprep.subr.mxu0 0.0
    %1695 = vmatpush1.msra.mxu0 0.0
    %1696 = vmatprep.subr.mxu0 0.0
    %1697 = vmatpush1.msra.mxu0 0.0
    %1698 = vmatprep.subr.mxu0 0.0
    %1699 = vmatpush1.msra.mxu0 0.0
    %1700 = vmatprep.subr.mxu0 0.0
    %1701 = vmatpush1.msra.mxu0 0.0
    %1702 = vmatprep.subr.mxu0 0.0
    %1703 = vmatpush1.msra.mxu0 0.0
    %1704 = vmatprep.subr.mxu0 0.0
    %1705 = vmatpush1.msra.mxu0 0.0
    %1706 = vmatprep.subr.mxu0 0.0
    %1707 = vmatpush1.msra.mxu0 0.0
    %1708 = vmatprep.subr.mxu0 0.0
    %1709 = vmatpush1.msra.mxu0 0.0
    %1710 = vmatprep.subr.mxu0 0.0
    %1711 = vmatpush1.msra.mxu0 0.0
    %1712 = vmatprep.subr.mxu0 0.0
    %1713 = vmatpush1.msra.mxu0 0.0
    %1714 = vmatprep.subr.mxu0 0.0
    %1715 = vmatpush1.msra.mxu0 0.0
    %1716 = vmatprep.subr.mxu0 0.0
    %1717 = vmatpush1.msra.mxu0 0.0
    %1718 = vmatprep.subr.mxu0 0.0
    %1719 = vmatpush1.msra.mxu0 0.0
    %1720 = vmatprep.subr.mxu0 0.0
    %1721 = vmatpush1.msra.mxu0 0.0
    %1722 = vmatprep.subr.mxu0 0.0
    %1723 = vmatpush1.msra.mxu0 0.0
    %1724 = vmatprep.subr.mxu0 0.0
    %1725 = vmatpush1.msra.mxu0 0.0
    %1726 = vmatprep.subr.mxu0 0.0
    %1727 = vmatpush1.msra.mxu0 0.0
    %1728 = vmatprep.subr.mxu0 0.0
    %1729 = vmatpush1.msra.mxu0 0.0
    %1730 = vmatprep.subr.mxu0 0.0
    %1731 = vmatpush1.msra.mxu0 0.0
    %1732 = vmatprep.subr.mxu0 0.0
    %1733 = vmatpush1.msra.mxu0 0.0
    %1734 = vmatprep.subr.mxu0 0.0
    %1735 = vmatpush1.msra.mxu0 0.0
    %1736 = vmatprep.subr.mxu0 0.0
    %1737 = vmatpush1.msra.mxu0 0.0
    %1738 = vmatprep.subr.mxu0 0.0
    %1739 = vmatpush1.msra.mxu0 0.0
    %1740 = vmatprep.subr.mxu0 0.0
    %1741 = vmatpush1.msra.mxu0 0.0
    %1742 = vmatprep.subr.mxu0 0.0
    %1743 = vmatpush1.msra.mxu0 0.0
    %1744 = vmatprep.mubr.f32.mxu0 0.0
    %1745 = vmatmul.mubr.f32.gmra.mrb[0].mxu0 %v1678
    %v1746 = vpop.f32.mrb[0].mxu0
    %v1747 = vadd.f32 %v335, %v1746
    %v1748 = vpop.f32.mrb[0].mxu0
    %1749 = vdwg.mxu0
    %v1750 = vadd.f32 %v1674, %v1747
    %v1751 = vxor.u32 %v1750, 2147483648
    %v1752 = vmul.f32 %v1751, 1.442695
    %v1753 = vpow.pop %v1752
    %v1754 = vadd.f32 %v1753, 1.0
    %v1755 = vrcp.pop %v1754
    %v1756 = vmul.f32 1.0, %v1755
    %1758 = vrot.lane.b32.xlu0 %v1747, 64
    %v1759 = vpop.permute.xlu0 %1758
    %v1761 = vmul.f32 %v1756, %v1759
    %1763 = vrot.lane.b32.xlu0 %v1761, 64
    %v1764 = vpop.permute.xlu0 %1763
    %v1766 = vadd.f32 %v1674, %v1764
    %v1767 = vtanh.pop %v1766
    %v1768 = vsub.f32 1.0, %v1756
    %1770 = vrot.lane.b32.xlu0 %v1767, 96
    %v1771 = vpop.permute.xlu0 %1770
    %v1773 = vmul.f32 %v1768, %v1771
    %v1774 = vmul.f32 %v1756, %v1673
    %v1775 = vadd.f32 %v1773, %v1774
    %v1776 = vld [vmem:[#allocation2 + $0x18] sm:$0x3]
    %1778 = vrot.lane.b32.xlu0 %v1775, 96
    %v1779 = vpop.permute.xlu0 %1778
    %v1780 = vsel %vm336, %v1779, 0
    %1782 = vmatprep.subr.mxu0 0.0
    %1783 = vmatpush1.msra.mxu0 %v47
    %1784 = vmatprep.subr.mxu0 0.0
    %1785 = vmatpush1.msra.mxu0 %v48
    %1786 = vmatprep.subr.mxu0 0.0
    %1787 = vmatpush1.msra.mxu0 %v49
    %1788 = vmatprep.subr.mxu0 0.0
    %1789 = vmatpush1.msra.mxu0 %v50
    %1790 = vmatprep.subr.mxu0 0.0
    %1791 = vmatpush1.msra.mxu0 0.0
    %1792 = vmatprep.subr.mxu0 0.0
    %1793 = vmatpush1.msra.mxu0 0.0
    %1794 = vmatprep.subr.mxu0 0.0
    %1795 = vmatpush1.msra.mxu0 0.0
    %1796 = vmatprep.subr.mxu0 0.0
    %1797 = vmatpush1.msra.mxu0 0.0
    %1798 = vmatprep.subr.mxu0 0.0
    %1799 = vmatpush1.msra.mxu0 0.0
    %1800 = vmatprep.subr.mxu0 0.0
    %1801 = vmatpush1.msra.mxu0 0.0
    %1802 = vmatprep.subr.mxu0 0.0
    %1803 = vmatpush1.msra.mxu0 0.0
    %1804 = vmatprep.subr.mxu0 0.0
    %1805 = vmatpush1.msra.mxu0 0.0
    %1806 = vmatprep.subr.mxu0 0.0
    %1807 = vmatpush1.msra.mxu0 0.0
    %1808 = vmatprep.subr.mxu0 0.0
    %1809 = vmatpush1.msra.mxu0 0.0
    %1810 = vmatprep.subr.mxu0 0.0
    %1811 = vmatpush1.msra.mxu0 0.0
    %1812 = vmatprep.subr.mxu0 0.0
    %1813 = vmatpush1.msra.mxu0 0.0
    %1814 = vmatprep.subr.mxu0 0.0
    %1815 = vmatpush1.msra.mxu0 0.0
    %1816 = vmatprep.subr.mxu0 0.0
    %1817 = vmatpush1.msra.mxu0 0.0
    %1818 = vmatprep.subr.mxu0 0.0
    %1819 = vmatpush1.msra.mxu0 0.0
    %1820 = vmatprep.subr.mxu0 0.0
    %1821 = vmatpush1.msra.mxu0 0.0
    %1822 = vmatprep.subr.mxu0 0.0
    %1823 = vmatpush1.msra.mxu0 0.0
    %1824 = vmatprep.subr.mxu0 0.0
    %1825 = vmatpush1.msra.mxu0 0.0
    %1826 = vmatprep.subr.mxu0 0.0
    %1827 = vmatpush1.msra.mxu0 0.0
    %1828 = vmatprep.subr.mxu0 0.0
    %1829 = vmatpush1.msra.mxu0 0.0
    %1830 = vmatprep.subr.mxu0 0.0
    %1831 = vmatpush1.msra.mxu0 0.0
    %1832 = vmatprep.subr.mxu0 0.0
    %1833 = vmatpush1.msra.mxu0 0.0
    %1834 = vmatprep.subr.mxu0 0.0
    %1835 = vmatpush1.msra.mxu0 0.0
    %1836 = vmatprep.subr.mxu0 0.0
    %1837 = vmatpush1.msra.mxu0 0.0
    %1838 = vmatprep.subr.mxu0 0.0
    %1839 = vmatpush1.msra.mxu0 0.0
    %1840 = vmatprep.subr.mxu0 0.0
    %1841 = vmatpush1.msra.mxu0 0.0
    %1842 = vmatprep.subr.mxu0 0.0
    %1843 = vmatpush1.msra.mxu0 0.0
    %1844 = vmatprep.subr.mxu0 0.0
    %1845 = vmatpush1.msra.mxu0 0.0
    %1846 = vmatprep.mubr.f32.mxu0 0.0
    %1847 = vmatmul.mubr.f32.gmra.mrb[0].mxu0 %v1780
    %v1848 = vpop.f32.mrb[0].mxu0
    %v1849 = vadd.f32 %v335, %v1848
    %v1850 = vpop.f32.mrb[0].mxu0
    %1851 = vdwg.mxu0
    %v1852 = vadd.f32 %v1776, %v1849
    %v1853 = vxor.u32 %v1852, 2147483648
    %v1854 = vmul.f32 %v1853, 1.442695
    %v1855 = vpow.pop %v1854
    %v1856 = vadd.f32 %v1855, 1.0
    %v1857 = vrcp.pop %v1856
    %v1858 = vmul.f32 1.0, %v1857
    %1860 = vrot.lane.b32.xlu0 %v1849, 64
    %v1861 = vpop.permute.xlu0 %1860
    %v1863 = vmul.f32 %v1858, %v1861
    %1865 = vrot.lane.b32.xlu0 %v1863, 64
    %v1866 = vpop.permute.xlu0 %1865
    %v1868 = vadd.f32 %v1776, %v1866
    %v1869 = vtanh.pop %v1868
    %v1870 = vsub.f32 1.0, %v1858
    %1872 = vrot.lane.b32.xlu0 %v1869, 96
    %v1873 = vpop.permute.xlu0 %1872
    %v1875 = vmul.f32 %v1870, %v1873
    %v1876 = vmul.f32 %v1858, %v1775
    %v1877 = vadd.f32 %v1875, %v1876
    %v1878 = vld [vmem:[#allocation2 + $0x1a] sm:$0x3]
    %1880 = vrot.lane.b32.xlu0 %v1877, 96
    %v1881 = vpop.permute.xlu0 %1880
    %v1882 = vsel %vm336, %v1881, 0
    %1884 = vmatprep.subr.mxu0 0.0
    %1885 = vmatpush1.msra.mxu0 %v47
    %1886 = vmatprep.subr.mxu0 0.0
    %1887 = vmatpush1.msra.mxu0 %v48
    %1888 = vmatprep.subr.mxu0 0.0
    %1889 = vmatpush1.msra.mxu0 %v49
    %1890 = vmatprep.subr.mxu0 0.0
    %1891 = vmatpush1.msra.mxu0 %v50
    %1892 = vmatprep.subr.mxu0 0.0
    %1893 = vmatpush1.msra.mxu0 0.0
    %1894 = vmatprep.subr.mxu0 0.0
    %1895 = vmatpush1.msra.mxu0 0.0
    %1896 = vmatprep.subr.mxu0 0.0
    %1897 = vmatpush1.msra.mxu0 0.0
    %1898 = vmatprep.subr.mxu0 0.0
    %1899 = vmatpush1.msra.mxu0 0.0
    %1900 = vmatprep.subr.mxu0 0.0
    %1901 = vmatpush1.msra.mxu0 0.0
    %1902 = vmatprep.subr.mxu0 0.0
    %1903 = vmatpush1.msra.mxu0 0.0
    %1904 = vmatprep.subr.mxu0 0.0
    %1905 = vmatpush1.msra.mxu0 0.0
    %1906 = vmatprep.subr.mxu0 0.0
    %1907 = vmatpush1.msra.mxu0 0.0
    %1908 = vmatprep.subr.mxu0 0.0
    %1909 = vmatpush1.msra.mxu0 0.0
    %1910 = vmatprep.subr.mxu0 0.0
    %1911 = vmatpush1.msra.mxu0 0.0
    %1912 = vmatprep.subr.mxu0 0.0
    %1913 = vmatpush1.msra.mxu0 0.0
    %1914 = vmatprep.subr.mxu0 0.0
    %1915 = vmatpush1.msra.mxu0 0.0
    %1916 = vmatprep.subr.mxu0 0.0
    %1917 = vmatpush1.msra.mxu0 0.0
    %1918 = vmatprep.subr.mxu0 0.0
    %1919 = vmatpush1.msra.mxu0 0.0
    %1920 = vmatprep.subr.mxu0 0.0
    %1921 = vmatpush1.msra.mxu0 0.0
    %1922 = vmatprep.subr.mxu0 0.0
    %1923 = vmatpush1.msra.mxu0 0.0
    %1924 = vmatprep.subr.mxu0 0.0
    %1925 = vmatpush1.msra.mxu0 0.0
    %1926 = vmatprep.subr.mxu0 0.0
    %1927 = vmatpush1.msra.mxu0 0.0
    %1928 = vmatprep.subr.mxu0 0.0
    %1929 = vmatpush1.msra.mxu0 0.0
    %1930 = vmatprep.subr.mxu0 0.0
    %1931 = vmatpush1.msra.mxu0 0.0
    %1932 = vmatprep.subr.mxu0 0.0
    %1933 = vmatpush1.msra.mxu0 0.0
    %1934 = vmatprep.subr.mxu0 0.0
    %1935 = vmatpush1.msra.mxu0 0.0
    %1936 = vmatprep.subr.mxu0 0.0
    %1937 = vmatpush1.msra.mxu0 0.0
    %1938 = vmatprep.subr.mxu0 0.0
    %1939 = vmatpush1.msra.mxu0 0.0
    %1940 = vmatprep.subr.mxu0 0.0
    %1941 = vmatpush1.msra.mxu0 0.0
    %1942 = vmatprep.subr.mxu0 0.0
    %1943 = vmatpush1.msra.mxu0 0.0
    %1944 = vmatprep.subr.mxu0 0.0
    %1945 = vmatpush1.msra.mxu0 0.0
    %1946 = vmatprep.subr.mxu0 0.0
    %1947 = vmatpush1.msra.mxu0 0.0
    %1948 = vmatprep.mubr.f32.mxu0 0.0
    %1949 = vmatmul.mubr.f32.gmra.mrb[0].mxu0 %v1882
    %v1950 = vpop.f32.mrb[0].mxu0
    %v1951 = vadd.f32 %v335, %v1950
    %v1952 = vpop.f32.mrb[0].mxu0
    %1953 = vdwg.mxu0
    %v1954 = vadd.f32 %v1878, %v1951
    %v1955 = vxor.u32 %v1954, 2147483648
    %v1956 = vmul.f32 %v1955, 1.442695
    %v1957 = vpow.pop %v1956
    %v1958 = vadd.f32 %v1957, 1.0
    %v1959 = vrcp.pop %v1958
    %v1960 = vmul.f32 1.0, %v1959
    %1962 = vrot.lane.b32.xlu0 %v1951, 64
    %v1963 = vpop.permute.xlu0 %1962
    %v1965 = vmul.f32 %v1960, %v1963
    %1967 = vrot.lane.b32.xlu0 %v1965, 64
    %v1968 = vpop.permute.xlu0 %1967
    %v1970 = vadd.f32 %v1878, %v1968
    %v1971 = vtanh.pop %v1970
    %v1972 = vsub.f32 1.0, %v1960
    %1974 = vrot.lane.b32.xlu0 %v1971, 96
    %v1975 = vpop.permute.xlu0 %1974
    %v1977 = vmul.f32 %v1972, %v1975
    %v1978 = vmul.f32 %v1960, %v1877
    %v1979 = vadd.f32 %v1977, %v1978
    %v1980 = vld [vmem:[#allocation2 + $0x1c] sm:$0x3]
    %1982 = vrot.lane.b32.xlu0 %v1979, 96
    %v1983 = vpop.permute.xlu0 %1982
    %v1984 = vsel %vm336, %v1983, 0
    %1986 = vmatprep.subr.mxu0 0.0
    %1987 = vmatpush1.msra.mxu0 %v47
    %1988 = vmatprep.subr.mxu0 0.0
    %1989 = vmatpush1.msra.mxu0 %v48
    %1990 = vmatprep.subr.mxu0 0.0
    %1991 = vmatpush1.msra.mxu0 %v49
    %1992 = vmatprep.subr.mxu0 0.0
    %1993 = vmatpush1.msra.mxu0 %v50
    %1994 = vmatprep.subr.mxu0 0.0
    %1995 = vmatpush1.msra.mxu0 0.0
    %1996 = vmatprep.subr.mxu0 0.0
    %1997 = vmatpush1.msra.mxu0 0.0
    %1998 = vmatprep.subr.mxu0 0.0
    %1999 = vmatpush1.msra.mxu0 0.0
    %2000 = vmatprep.subr.mxu0 0.0
    %2001 = vmatpush1.msra.mxu0 0.0
    %2002 = vmatprep.subr.mxu0 0.0
    %2003 = vmatpush1.msra.mxu0 0.0
    %2004 = vmatprep.subr.mxu0 0.0
    %2005 = vmatpush1.msra.mxu0 0.0
    %2006 = vmatprep.subr.mxu0 0.0
    %2007 = vmatpush1.msra.mxu0 0.0
    %2008 = vmatprep.subr.mxu0 0.0
    %2009 = vmatpush1.msra.mxu0 0.0
    %2010 = vmatprep.subr.mxu0 0.0
    %2011 = vmatpush1.msra.mxu0 0.0
    %2012 = vmatprep.subr.mxu0 0.0
    %2013 = vmatpush1.msra.mxu0 0.0
    %2014 = vmatprep.subr.mxu0 0.0
    %2015 = vmatpush1.msra.mxu0 0.0
    %2016 = vmatprep.subr.mxu0 0.0
    %2017 = vmatpush1.msra.mxu0 0.0
    %2018 = vmatprep.subr.mxu0 0.0
    %2019 = vmatpush1.msra.mxu0 0.0
    %2020 = vmatprep.subr.mxu0 0.0
    %2021 = vmatpush1.msra.mxu0 0.0
    %2022 = vmatprep.subr.mxu0 0.0
    %2023 = vmatpush1.msra.mxu0 0.0
    %2024 = vmatprep.subr.mxu0 0.0
    %2025 = vmatpush1.msra.mxu0 0.0
    %2026 = vmatprep.subr.mxu0 0.0
    %2027 = vmatpush1.msra.mxu0 0.0
    %2028 = vmatprep.subr.mxu0 0.0
    %2029 = vmatpush1.msra.mxu0 0.0
    %2030 = vmatprep.subr.mxu0 0.0
    %2031 = vmatpush1.msra.mxu0 0.0
    %2032 = vmatprep.subr.mxu0 0.0
    %2033 = vmatpush1.msra.mxu0 0.0
    %2034 = vmatprep.subr.mxu0 0.0
    %2035 = vmatpush1.msra.mxu0 0.0
    %2036 = vmatprep.subr.mxu0 0.0
    %2037 = vmatpush1.msra.mxu0 0.0
    %2038 = vmatprep.subr.mxu0 0.0
    %2039 = vmatpush1.msra.mxu0 0.0
    %2040 = vmatprep.subr.mxu0 0.0
    %2041 = vmatpush1.msra.mxu0 0.0
    %2042 = vmatprep.subr.mxu0 0.0
    %2043 = vmatpush1.msra.mxu0 0.0
    %2044 = vmatprep.subr.mxu0 0.0
    %2045 = vmatpush1.msra.mxu0 0.0
    %2046 = vmatprep.subr.mxu0 0.0
    %2047 = vmatpush1.msra.mxu0 0.0
    %2048 = vmatprep.subr.mxu0 0.0
    %2049 = vmatpush1.msra.mxu0 0.0
    %2050 = vmatprep.mubr.f32.mxu0 0.0
    %2051 = vmatmul.mubr.f32.gmra.mrb[0].mxu0 %v1984
    %v2052 = vpop.f32.mrb[0].mxu0
    %v2053 = vadd.f32 %v335, %v2052
    %v2054 = vpop.f32.mrb[0].mxu0
    %2055 = vdwg.mxu0
    %v2056 = vadd.f32 %v1980, %v2053
    %v2057 = vxor.u32 %v2056, 2147483648
    %v2058 = vmul.f32 %v2057, 1.442695
    %v2059 = vpow.pop %v2058
    %v2060 = vadd.f32 %v2059, 1.0
    %v2061 = vrcp.pop %v2060
    %v2062 = vmul.f32 1.0, %v2061
    %2064 = vrot.lane.b32.xlu0 %v2053, 64
    %v2065 = vpop.permute.xlu0 %2064
    %v2067 = vmul.f32 %v2062, %v2065
    %2069 = vrot.lane.b32.xlu0 %v2067, 64
    %v2070 = vpop.permute.xlu0 %2069
    %v2072 = vadd.f32 %v1980, %v2070
    %v2073 = vtanh.pop %v2072
    %v2074 = vsub.f32 1.0, %v2062
    %2076 = vrot.lane.b32.xlu0 %v2073, 96
    %v2077 = vpop.permute.xlu0 %2076
    %v2079 = vmul.f32 %v2074, %v2077
    %v2080 = vmul.f32 %v2062, %v1979
    %v2081 = vadd.f32 %v2079, %v2080
    %v2082 = vld [vmem:[#allocation2 + $0x1e] sm:$0x3]
    %2084 = vrot.lane.b32.xlu0 %v2081, 96
    %v2085 = vpop.permute.xlu0 %2084
    %v2086 = vsel %vm336, %v2085, 0
    %2088 = vmatprep.subr.mxu0 0.0
    %2089 = vmatpush1.msra.mxu0 %v47
    %2090 = vmatprep.subr.mxu0 0.0
    %2091 = vmatpush1.msra.mxu0 %v48
    %2092 = vmatprep.subr.mxu0 0.0
    %2093 = vmatpush1.msra.mxu0 %v49
    %2094 = vmatprep.subr.mxu0 0.0
    %2095 = vmatpush1.msra.mxu0 %v50
    %2096 = vmatprep.subr.mxu0 0.0
    %2097 = vmatpush1.msra.mxu0 0.0
    %2098 = vmatprep.subr.mxu0 0.0
    %2099 = vmatpush1.msra.mxu0 0.0
    %2100 = vmatprep.subr.mxu0 0.0
    %2101 = vmatpush1.msra.mxu0 0.0
    %2102 = vmatprep.subr.mxu0 0.0
    %2103 = vmatpush1.msra.mxu0 0.0
    %2104 = vmatprep.subr.mxu0 0.0
    %2105 = vmatpush1.msra.mxu0 0.0
    %2106 = vmatprep.subr.mxu0 0.0
    %2107 = vmatpush1.msra.mxu0 0.0
    %2108 = vmatprep.subr.mxu0 0.0
    %2109 = vmatpush1.msra.mxu0 0.0
    %2110 = vmatprep.subr.mxu0 0.0
    %2111 = vmatpush1.msra.mxu0 0.0
    %2112 = vmatprep.subr.mxu0 0.0
    %2113 = vmatpush1.msra.mxu0 0.0
    %2114 = vmatprep.subr.mxu0 0.0
    %2115 = vmatpush1.msra.mxu0 0.0
    %2116 = vmatprep.subr.mxu0 0.0
    %2117 = vmatpush1.msra.mxu0 0.0
    %2118 = vmatprep.subr.mxu0 0.0
    %2119 = vmatpush1.msra.mxu0 0.0
    %2120 = vmatprep.subr.mxu0 0.0
    %2121 = vmatpush1.msra.mxu0 0.0
    %2122 = vmatprep.subr.mxu0 0.0
    %2123 = vmatpush1.msra.mxu0 0.0
    %2124 = vmatprep.subr.mxu0 0.0
    %2125 = vmatpush1.msra.mxu0 0.0
    %2126 = vmatprep.subr.mxu0 0.0
    %2127 = vmatpush1.msra.mxu0 0.0
    %2128 = vmatprep.subr.mxu0 0.0
    %2129 = vmatpush1.msra.mxu0 0.0
    %2130 = vmatprep.subr.mxu0 0.0
    %2131 = vmatpush1.msra.mxu0 0.0
    %2132 = vmatprep.subr.mxu0 0.0
    %2133 = vmatpush1.msra.mxu0 0.0
    %2134 = vmatprep.subr.mxu0 0.0
    %2135 = vmatpush1.msra.mxu0 0.0
    %2136 = vmatprep.subr.mxu0 0.0
    %2137 = vmatpush1.msra.mxu0 0.0
    %2138 = vmatprep.subr.mxu0 0.0
    %2139 = vmatpush1.msra.mxu0 0.0
    %2140 = vmatprep.subr.mxu0 0.0
    %2141 = vmatpush1.msra.mxu0 0.0
    %2142 = vmatprep.subr.mxu0 0.0
    %2143 = vmatpush1.msra.mxu0 0.0
    %2144 = vmatprep.subr.mxu0 0.0
    %2145 = vmatpush1.msra.mxu0 0.0
    %2146 = vmatprep.subr.mxu0 0.0
    %2147 = vmatpush1.msra.mxu0 0.0
    %2148 = vmatprep.subr.mxu0 0.0
    %2149 = vmatpush1.msra.mxu0 0.0
    %2150 = vmatprep.subr.mxu0 0.0
    %2151 = vmatpush1.msra.mxu0 0.0
    %2152 = vmatprep.mubr.f32.mxu0 0.0
    %2153 = vmatmul.mubr.f32.gmra.mrb[0].mxu0 %v2086
    %v2154 = vpop.f32.mrb[0].mxu0
    %v2155 = vadd.f32 %v335, %v2154
    %v2156 = vpop.f32.mrb[0].mxu0
    %2157 = vdwg.mxu0
    %v2158 = vadd.f32 %v2082, %v2155
    %v2159 = vxor.u32 %v2158, 2147483648
    %v2160 = vmul.f32 %v2159, 1.442695
    %v2161 = vpow.pop %v2160
    %v2162 = vadd.f32 %v2161, 1.0
    %v2163 = vrcp.pop %v2162
    %v2164 = vmul.f32 1.0, %v2163
    %2166 = vrot.lane.b32.xlu0 %v2155, 64
    %v2167 = vpop.permute.xlu0 %2166
    %v2169 = vmul.f32 %v2164, %v2167
    %2171 = vrot.lane.b32.xlu0 %v2169, 64
    %v2172 = vpop.permute.xlu0 %2171
    %v2174 = vadd.f32 %v2082, %v2172
    %v2175 = vtanh.pop %v2174
    %v2176 = vsub.f32 1.0, %v2164
    %2178 = vrot.lane.b32.xlu0 %v2175, 96
    %v2179 = vpop.permute.xlu0 %2178
    %v2181 = vmul.f32 %v2176, %v2179
    %v2182 = vmul.f32 %v2164, %v2081
    %v2183 = vadd.f32 %v2181, %v2182
    %2186 = vrot.lane.b32.xlu0 %v2183, 96
    %v2187 = vpop.permute.xlu0 %2186
    %v2189 = vsel %vm1150, %v1473, %v2187
    %v2192 = vsel %vm1150, %v1575, %v2085
    %v2195 = vsel %vm1150, %v1677, %v1983
    %v2198 = vsel %vm1150, %v1779, %v1881
    %v2199 = vsel %vm1150, %v1881, %v1779
    %v2200 = vsel %vm1150, %v1983, %v1677
    %v2201 = vsel %vm1150, %v2085, %v1575
    %v2202 = vsel %vm1150, %v2187, %v1473
    %v2204 = vrot.slane %v2192, 6
    %v2207 = vrot.slane %v2195, 4
    %v2210 = vrot.slane %v2198, 2
    %v2213 = vrot.slane %v2200, 6
    %v2216 = vrot.slane %v2201, 4
    %v2219 = vrot.slane %v2202, 2
    %v2221 = vsel %vm1188, %v2189, %v2204
    %v2222 = vsel %vm1190, %v2221, %v2207
    %v2223 = vsel %vm1192, %v2222, %v2210
    %v2224 = vsel %vm1188, %v2199, %v2213
    %v2225 = vsel %vm1190, %v2224, %v2216
    %v2226 = vsel %vm1192, %v2225, %v2219
    %v2228 = vsel %vm336, %v2223, 0
    %v2231 = vsel %vm336, %v2226, 0
    %2233 = vmatprep.subr.mxu0 0.0
    %2234 = vmatpush1.msra.mxu0 %v52
    %2235 = vmatprep.subr.mxu0 0.0
    %2236 = vmatpush1.msra.mxu0 %v53
    %2237 = vmatprep.subr.mxu0 0.0
    %2238 = vmatpush1.msra.mxu0 %v54
    %2239 = vmatprep.subr.mxu0 0.0
    %2240 = vmatpush1.msra.mxu0 %v55
    %2241 = vmatprep.subr.mxu0 0.0
    %2242 = vmatpush1.msra.mxu0 0.0
    %2243 = vmatprep.subr.mxu0 0.0
    %2244 = vmatpush1.msra.mxu0 0.0
    %2245 = vmatprep.subr.mxu0 0.0
    %2246 = vmatpush1.msra.mxu0 0.0
    %2247 = vmatprep.subr.mxu0 0.0
    %2248 = vmatpush1.msra.mxu0 0.0
    %2249 = vmatprep.subr.mxu0 0.0
    %2250 = vmatpush1.msra.mxu0 0.0
    %2251 = vmatprep.subr.mxu0 0.0
    %2252 = vmatpush1.msra.mxu0 0.0
    %2253 = vmatprep.subr.mxu0 0.0
    %2254 = vmatpush1.msra.mxu0 0.0
    %2255 = vmatprep.subr.mxu0 0.0
    %2256 = vmatpush1.msra.mxu0 0.0
    %2257 = vmatprep.subr.mxu0 0.0
    %2258 = vmatpush1.msra.mxu0 0.0
    %2259 = vmatprep.subr.mxu0 0.0
    %2260 = vmatpush1.msra.mxu0 0.0
    %2261 = vmatprep.subr.mxu0 0.0
    %2262 = vmatpush1.msra.mxu0 0.0
    %2263 = vmatprep.subr.mxu0 0.0
    %2264 = vmatpush1.msra.mxu0 0.0
    %2265 = vmatprep.subr.mxu0 0.0
    %2266 = vmatpush1.msra.mxu0 0.0
    %2267 = vmatprep.subr.mxu0 0.0
    %2268 = vmatpush1.msra.mxu0 0.0
    %2269 = vmatprep.subr.mxu0 0.0
    %2270 = vmatpush1.msra.mxu0 0.0
    %2271 = vmatprep.subr.mxu0 0.0
    %2272 = vmatpush1.msra.mxu0 0.0
    %2273 = vmatprep.subr.mxu0 0.0
    %2274 = vmatpush1.msra.mxu0 0.0
    %2275 = vmatprep.subr.mxu0 0.0
    %2276 = vmatpush1.msra.mxu0 0.0
    %2277 = vmatprep.subr.mxu0 0.0
    %2278 = vmatpush1.msra.mxu0 0.0
    %2279 = vmatprep.subr.mxu0 0.0
    %2280 = vmatpush1.msra.mxu0 0.0
    %2281 = vmatprep.subr.mxu0 0.0
    %2282 = vmatpush1.msra.mxu0 0.0
    %2283 = vmatprep.subr.mxu0 0.0
    %2284 = vmatpush1.msra.mxu0 0.0
    %2285 = vmatprep.subr.mxu0 0.0
    %2286 = vmatpush1.msra.mxu0 0.0
    %2287 = vmatprep.subr.mxu0 0.0
    %2288 = vmatpush1.msra.mxu0 0.0
    %2289 = vmatprep.subr.mxu0 0.0
    %2290 = vmatpush1.msra.mxu0 0.0
    %2291 = vmatprep.subr.mxu0 0.0
    %2292 = vmatpush1.msra.mxu0 0.0
    %2293 = vmatprep.subr.mxu0 0.0
    %2294 = vmatpush1.msra.mxu0 0.0
    %2295 = vmatprep.subr.mxu0 0.0
    %2296 = vmatpush1.msra.mxu0 0.0
    %2297 = vmatprep.mubr.f32.mxu0 0.0
    %2298 = vmatmul.mubr.f32.gmra.mrb[0].mxu0 %v2228
    %v2299 = vpop.f32.mrb[0].mxu0
    %v2300 = vadd.f32 %v1200, %v2299
    %v2301 = vpop.f32.mrb[0].mxu0
    %2302 = vmatprep.mubr.f32.mxu0 0.0
    %2303 = vmatmul.mubr.f32.gmra.mrb[0].mxu0 %v2231
    %v2304 = vpop.f32.mrb[0].mxu0
    %v2305 = vadd.f32 %v1200, %v2304
    %v2306 = vpop.f32.mrb[0].mxu0
    %2307 = vdwg.mxu0
    %v2308 = vtanh.pop %v2300
    %v2309 = vtanh.pop %v2305
    %v2310 = vmul.f32 %v2308, %v1287
    %v2311 = vmul.f32 %v2309, %v1287
    %v2312 = vsel %vm336, %v2310, 0.0
    %2313 = vadd.xlane.f32.xlu0 %v2312
    %v2314 = vpop.xlane.xlu0 %2313
    %v2315 = vsel %vm336, %v2311, 0.0
    %2316 = vadd.xlane.f32.xlu0 %v2315
    %v2317 = vpop.xlane.xlu0 %2316
    %v2318 = vtanh.pop %v2314
    %v2319 = vtanh.pop %v2317
    %v2320 = vmul.f32 %v2318, 1.442695
    %v2321 = vpow.pop %v2320
    %v2322 = vmul.f32 %v2319, 1.442695
    %v2323 = vpow.pop %v2322
    %v2324 = vmul.f32 %v2321, %v2223
    %v2325 = vmul.f32 %v2323, %v2226
    %v2327 = vrot.slane %v2324, 2
    %v2329 = vadd.f32 %v2324, %v2327
    %v2331 = vrot.slane %v2321, 2
    %v2333 = vadd.f32 %v2321, %v2331
    %v2334 = vrot.slane %v2324, 4
    %v2336 = vadd.f32 %v2329, %v2334
    %v2337 = vrot.slane %v2321, 4
    %v2339 = vadd.f32 %v2333, %v2337
    %v2340 = vrot.slane %v2324, 6
    %v2342 = vadd.f32 %v2336, %v2340
    %v2343 = vrot.slane %v2321, 6
    %v2345 = vadd.f32 %v2339, %v2343
    %v2346 = vadd.f32 %v2342, %v2325
    %v2347 = vadd.f32 %v2345, %v2323
    %v2349 = vrot.slane %v2325, 2
    %v2351 = vadd.f32 %v2346, %v2349
    %v2353 = vrot.slane %v2323, 2
    %v2355 = vadd.f32 %v2347, %v2353
    %v2356 = vrot.slane %v2325, 4
    %v2358 = vadd.f32 %v2351, %v2356
    %v2359 = vrot.slane %v2323, 4
    %v2361 = vadd.f32 %v2355, %v2359
    %v2362 = vrot.slane %v2325, 6
    %v2364 = vadd.f32 %v2358, %v2362
    %v2365 = vrot.slane %v2323, 6
    %v2367 = vadd.f32 %v2361, %v2365
    %v2368 = vrcp.pop %v2367
    %v2369 = vmul.f32 1.0, %v2368
    %2371 = vset.pattern.permute.xlu0 0
    %2372 = vperm.xlu0 %2371, %v2369
    %v2373 = vpop.permute.xlu0 %2372
    %v2375 = vmul.f32 %v2364, %v2373
    %v2376 = vsel %vm1354, %v2321, %v2331
    %v2377 = vsel %vm1356, %v2376, %v2337
    %v2378 = vsel %vm1358, %v2377, %v2343
    %v2379 = vsel %vm1360, %v2378, %v2323
    %v2380 = vsel %vm1362, %v2379, %v2353
    %v2381 = vsel %vm1364, %v2380, %v2359
    %v2382 = vsel %vm1366, %v2381, %v2365
    %v2383 = vmul.f32 %v2382, %v2373
    %s2384 = scalar_lea.vmem [#allocation5], 2
    %2385 = vst.msk [vmem:[%s2384] sm:$0x3] %vm1369, %v2383
    %v2386 = vld [vmem:[#allocation2 + $0x20] sm:$0x3]
    %v2387 = vsel %vm336, %v2187, 0
    %2389 = vmatprep.subr.mxu0 0.0
    %2390 = vmatpush1.msra.mxu0 %v47
    %2391 = vmatprep.subr.mxu0 0.0
    %2392 = vmatpush1.msra.mxu0 %v48
    %2393 = vmatprep.subr.mxu0 0.0
    %2394 = vmatpush1.msra.mxu0 %v49
    %2395 = vmatprep.subr.mxu0 0.0
    %2396 = vmatpush1.msra.mxu0 %v50
    %2397 = vmatprep.subr.mxu0 0.0
    %2398 = vmatpush1.msra.mxu0 0.0
    %2399 = vmatprep.subr.mxu0 0.0
    %2400 = vmatpush1.msra.mxu0 0.0
    %2401 = vmatprep.subr.mxu0 0.0
    %2402 = vmatpush1.msra.mxu0 0.0
    %2403 = vmatprep.subr.mxu0 0.0
    %2404 = vmatpush1.msra.mxu0 0.0
    %2405 = vmatprep.subr.mxu0 0.0
    %2406 = vmatpush1.msra.mxu0 0.0
    %2407 = vmatprep.subr.mxu0 0.0
    %2408 = vmatpush1.msra.mxu0 0.0
    %2409 = vmatprep.subr.mxu0 0.0
    %2410 = vmatpush1.msra.mxu0 0.0
    %2411 = vmatprep.subr.mxu0 0.0
    %2412 = vmatpush1.msra.mxu0 0.0
    %2413 = vmatprep.subr.mxu0 0.0
    %2414 = vmatpush1.msra.mxu0 0.0
    %2415 = vmatprep.subr.mxu0 0.0
    %2416 = vmatpush1.msra.mxu0 0.0
    %2417 = vmatprep.subr.mxu0 0.0
    %2418 = vmatpush1.msra.mxu0 0.0
    %2419 = vmatprep.subr.mxu0 0.0
    %2420 = vmatpush1.msra.mxu0 0.0
    %2421 = vmatprep.subr.mxu0 0.0
    %2422 = vmatpush1.msra.mxu0 0.0
    %2423 = vmatprep.subr.mxu0 0.0
    %2424 = vmatpush1.msra.mxu0 0.0
    %2425 = vmatprep.subr.mxu0 0.0
    %2426 = vmatpush1.msra.mxu0 0.0
    %2427 = vmatprep.subr.mxu0 0.0
    %2428 = vmatpush1.msra.mxu0 0.0
    %2429 = vmatprep.subr.mxu0 0.0
    %2430 = vmatpush1.msra.mxu0 0.0
    %2431 = vmatprep.subr.mxu0 0.0
    %2432 = vmatpush1.msra.mxu0 0.0
    %2433 = vmatprep.subr.mxu0 0.0
    %2434 = vmatpush1.msra.mxu0 0.0
    %2435 = vmatprep.subr.mxu0 0.0
    %2436 = vmatpush1.msra.mxu0 0.0
    %2437 = vmatprep.subr.mxu0 0.0
    %2438 = vmatpush1.msra.mxu0 0.0
    %2439 = vmatprep.subr.mxu0 0.0
    %2440 = vmatpush1.msra.mxu0 0.0
    %2441 = vmatprep.subr.mxu0 0.0
    %2442 = vmatpush1.msra.mxu0 0.0
    %2443 = vmatprep.subr.mxu0 0.0
    %2444 = vmatpush1.msra.mxu0 0.0
    %2445 = vmatprep.subr.mxu0 0.0
    %2446 = vmatpush1.msra.mxu0 0.0
    %2447 = vmatprep.subr.mxu0 0.0
    %2448 = vmatpush1.msra.mxu0 0.0
    %2449 = vmatprep.subr.mxu0 0.0
    %2450 = vmatpush1.msra.mxu0 0.0
    %2451 = vmatprep.subr.mxu0 0.0
    %2452 = vmatpush1.msra.mxu0 0.0
    %2453 = vmatprep.mubr.f32.mxu0 0.0
    %2454 = vmatmul.mubr.f32.gmra.mrb[0].mxu0 %v2387
    %v2455 = vpop.f32.mrb[0].mxu0
    %v2456 = vadd.f32 %v335, %v2455
    %v2457 = vpop.f32.mrb[0].mxu0
    %2458 = vdwg.mxu0
    %v2459 = vadd.f32 %v2386, %v2456
    %v2460 = vxor.u32 %v2459, 2147483648
    %v2461 = vmul.f32 %v2460, 1.442695
    %v2462 = vpow.pop %v2461
    %v2463 = vadd.f32 %v2462, 1.0
    %v2464 = vrcp.pop %v2463
    %v2465 = vmul.f32 1.0, %v2464
    %2467 = vrot.lane.b32.xlu0 %v2456, 64
    %v2468 = vpop.permute.xlu0 %2467
    %v2470 = vmul.f32 %v2465, %v2468
    %2472 = vrot.lane.b32.xlu0 %v2470, 64
    %v2473 = vpop.permute.xlu0 %2472
    %v2475 = vadd.f32 %v2386, %v2473
    %v2476 = vtanh.pop %v2475
    %v2477 = vsub.f32 1.0, %v2465
    %2479 = vrot.lane.b32.xlu0 %v2476, 96
    %v2480 = vpop.permute.xlu0 %2479
    %v2482 = vmul.f32 %v2477, %v2480
    %v2483 = vmul.f32 %v2465, %v2183
    %v2484 = vadd.f32 %v2482, %v2483
    %v2485 = vld [vmem:[#allocation2 + $0x22] sm:$0x3]
    %2487 = vrot.lane.b32.xlu0 %v2484, 96
    %v2488 = vpop.permute.xlu0 %2487
    %v2489 = vsel %vm336, %v2488, 0
    %2491 = vmatprep.subr.mxu0 0.0
    %2492 = vmatpush1.msra.mxu0 %v47
    %2493 = vmatprep.subr.mxu0 0.0
    %2494 = vmatpush1.msra.mxu0 %v48
    %2495 = vmatprep.subr.mxu0 0.0
    %2496 = vmatpush1.msra.mxu0 %v49
    %2497 = vmatprep.subr.mxu0 0.0
    %2498 = vmatpush1.msra.mxu0 %v50
    %2499 = vmatprep.subr.mxu0 0.0
    %2500 = vmatpush1.msra.mxu0 0.0
    %2501 = vmatprep.subr.mxu0 0.0
    %2502 = vmatpush1.msra.mxu0 0.0
    %2503 = vmatprep.subr.mxu0 0.0
    %2504 = vmatpush1.msra.mxu0 0.0
    %2505 = vmatprep.subr.mxu0 0.0
    %2506 = vmatpush1.msra.mxu0 0.0
    %2507 = vmatprep.subr.mxu0 0.0
    %2508 = vmatpush1.msra.mxu0 0.0
    %2509 = vmatprep.subr.mxu0 0.0
    %2510 = vmatpush1.msra.mxu0 0.0
    %2511 = vmatprep.subr.mxu0 0.0
    %2512 = vmatpush1.msra.mxu0 0.0
    %2513 = vmatprep.subr.mxu0 0.0
    %2514 = vmatpush1.msra.mxu0 0.0
    %2515 = vmatprep.subr.mxu0 0.0
    %2516 = vmatpush1.msra.mxu0 0.0
    %2517 = vmatprep.subr.mxu0 0.0
    %2518 = vmatpush1.msra.mxu0 0.0
    %2519 = vmatprep.subr.mxu0 0.0
    %2520 = vmatpush1.msra.mxu0 0.0
    %2521 = vmatprep.subr.mxu0 0.0
    %2522 = vmatpush1.msra.mxu0 0.0
    %2523 = vmatprep.subr.mxu0 0.0
    %2524 = vmatpush1.msra.mxu0 0.0
    %2525 = vmatprep.subr.mxu0 0.0
    %2526 = vmatpush1.msra.mxu0 0.0
    %2527 = vmatprep.subr.mxu0 0.0
    %2528 = vmatpush1.msra.mxu0 0.0
    %2529 = vmatprep.subr.mxu0 0.0
    %2530 = vmatpush1.msra.mxu0 0.0
    %2531 = vmatprep.subr.mxu0 0.0
    %2532 = vmatpush1.msra.mxu0 0.0
    %2533 = vmatprep.subr.mxu0 0.0
    %2534 = vmatpush1.msra.mxu0 0.0
    %2535 = vmatprep.subr.mxu0 0.0
    %2536 = vmatpush1.msra.mxu0 0.0
    %2537 = vmatprep.subr.mxu0 0.0
    %2538 = vmatpush1.msra.mxu0 0.0
    %2539 = vmatprep.subr.mxu0 0.0
    %2540 = vmatpush1.msra.mxu0 0.0
    %2541 = vmatprep.subr.mxu0 0.0
    %2542 = vmatpush1.msra.mxu0 0.0
    %2543 = vmatprep.subr.mxu0 0.0
    %2544 = vmatpush1.msra.mxu0 0.0
    %2545 = vmatprep.subr.mxu0 0.0
    %2546 = vmatpush1.msra.mxu0 0.0
    %2547 = vmatprep.subr.mxu0 0.0
    %2548 = vmatpush1.msra.mxu0 0.0
    %2549 = vmatprep.subr.mxu0 0.0
    %2550 = vmatpush1.msra.mxu0 0.0
    %2551 = vmatprep.subr.mxu0 0.0
    %2552 = vmatpush1.msra.mxu0 0.0
    %2553 = vmatprep.subr.mxu0 0.0
    %2554 = vmatpush1.msra.mxu0 0.0
    %2555 = vmatprep.mubr.f32.mxu0 0.0
    %2556 = vmatmul.mubr.f32.gmra.mrb[0].mxu0 %v2489
    %v2557 = vpop.f32.mrb[0].mxu0
    %v2558 = vadd.f32 %v335, %v2557
    %v2559 = vpop.f32.mrb[0].mxu0
    %2560 = vdwg.mxu0
    %v2561 = vadd.f32 %v2485, %v2558
    %v2562 = vxor.u32 %v2561, 2147483648
    %v2563 = vmul.f32 %v2562, 1.442695
    %v2564 = vpow.pop %v2563
    %v2565 = vadd.f32 %v2564, 1.0
    %v2566 = vrcp.pop %v2565
    %v2567 = vmul.f32 1.0, %v2566
    %2569 = vrot.lane.b32.xlu0 %v2558, 64
    %v2570 = vpop.permute.xlu0 %2569
    %v2572 = vmul.f32 %v2567, %v2570
    %2574 = vrot.lane.b32.xlu0 %v2572, 64
    %v2575 = vpop.permute.xlu0 %2574
    %v2577 = vadd.f32 %v2485, %v2575
    %v2578 = vtanh.pop %v2577
    %v2579 = vsub.f32 1.0, %v2567
    %2581 = vrot.lane.b32.xlu0 %v2578, 96
    %v2582 = vpop.permute.xlu0 %2581
    %v2584 = vmul.f32 %v2579, %v2582
    %v2585 = vmul.f32 %v2567, %v2484
    %v2586 = vadd.f32 %v2584, %v2585
    %v2587 = vld [vmem:[#allocation2 + $0x24] sm:$0x3]
    %2589 = vrot.lane.b32.xlu0 %v2586, 96
    %v2590 = vpop.permute.xlu0 %2589
    %v2591 = vsel %vm336, %v2590, 0
    %2593 = vmatprep.subr.mxu0 0.0
    %2594 = vmatpush1.msra.mxu0 %v47
    %2595 = vmatprep.subr.mxu0 0.0
    %2596 = vmatpush1.msra.mxu0 %v48
    %2597 = vmatprep.subr.mxu0 0.0
    %2598 = vmatpush1.msra.mxu0 %v49
    %2599 = vmatprep.subr.mxu0 0.0
    %2600 = vmatpush1.msra.mxu0 %v50
    %2601 = vmatprep.subr.mxu0 0.0
    %2602 = vmatpush1.msra.mxu0 0.0
    %2603 = vmatprep.subr.mxu0 0.0
    %2604 = vmatpush1.msra.mxu0 0.0
    %2605 = vmatprep.subr.mxu0 0.0
    %2606 = vmatpush1.msra.mxu0 0.0
    %2607 = vmatprep.subr.mxu0 0.0
    %2608 = vmatpush1.msra.mxu0 0.0
    %2609 = vmatprep.subr.mxu0 0.0
    %2610 = vmatpush1.msra.mxu0 0.0
    %2611 = vmatprep.subr.mxu0 0.0
    %2612 = vmatpush1.msra.mxu0 0.0
    %2613 = vmatprep.subr.mxu0 0.0
    %2614 = vmatpush1.msra.mxu0 0.0
    %2615 = vmatprep.subr.mxu0 0.0
    %2616 = vmatpush1.msra.mxu0 0.0
    %2617 = vmatprep.subr.mxu0 0.0
    %2618 = vmatpush1.msra.mxu0 0.0
    %2619 = vmatprep.subr.mxu0 0.0
    %2620 = vmatpush1.msra.mxu0 0.0
    %2621 = vmatprep.subr.mxu0 0.0
    %2622 = vmatpush1.msra.mxu0 0.0
    %2623 = vmatprep.subr.mxu0 0.0
    %2624 = vmatpush1.msra.mxu0 0.0
    %2625 = vmatprep.subr.mxu0 0.0
    %2626 = vmatpush1.msra.mxu0 0.0
    %2627 = vmatprep.subr.mxu0 0.0
    %2628 = vmatpush1.msra.mxu0 0.0
    %2629 = vmatprep.subr.mxu0 0.0
    %2630 = vmatpush1.msra.mxu0 0.0
    %2631 = vmatprep.subr.mxu0 0.0
    %2632 = vmatpush1.msra.mxu0 0.0
    %2633 = vmatprep.subr.mxu0 0.0
    %2634 = vmatpush1.msra.mxu0 0.0
    %2635 = vmatprep.subr.mxu0 0.0
    %2636 = vmatpush1.msra.mxu0 0.0
    %2637 = vmatprep.subr.mxu0 0.0
    %2638 = vmatpush1.msra.mxu0 0.0
    %2639 = vmatprep.subr.mxu0 0.0
    %2640 = vmatpush1.msra.mxu0 0.0
    %2641 = vmatprep.subr.mxu0 0.0
    %2642 = vmatpush1.msra.mxu0 0.0
    %2643 = vmatprep.subr.mxu0 0.0
    %2644 = vmatpush1.msra.mxu0 0.0
    %2645 = vmatprep.subr.mxu0 0.0
    %2646 = vmatpush1.msra.mxu0 0.0
    %2647 = vmatprep.subr.mxu0 0.0
    %2648 = vmatpush1.msra.mxu0 0.0
    %2649 = vmatprep.subr.mxu0 0.0
    %2650 = vmatpush1.msra.mxu0 0.0
    %2651 = vmatprep.subr.mxu0 0.0
    %2652 = vmatpush1.msra.mxu0 0.0
    %2653 = vmatprep.subr.mxu0 0.0
    %2654 = vmatpush1.msra.mxu0 0.0
    %2655 = vmatprep.subr.mxu0 0.0
    %2656 = vmatpush1.msra.mxu0 0.0
    %2657 = vmatprep.mubr.f32.mxu0 0.0
    %2658 = vmatmul.mubr.f32.gmra.mrb[0].mxu0 %v2591
    %v2659 = vpop.f32.mrb[0].mxu0
    %v2660 = vadd.f32 %v335, %v2659
    %v2661 = vpop.f32.mrb[0].mxu0
    %2662 = vdwg.mxu0
    %v2663 = vadd.f32 %v2587, %v2660
    %v2664 = vxor.u32 %v2663, 2147483648
    %v2665 = vmul.f32 %v2664, 1.442695
    %v2666 = vpow.pop %v2665
    %v2667 = vadd.f32 %v2666, 1.0
    %v2668 = vrcp.pop %v2667
    %v2669 = vmul.f32 1.0, %v2668
    %2671 = vrot.lane.b32.xlu0 %v2660, 64
    %v2672 = vpop.permute.xlu0 %2671
    %v2674 = vmul.f32 %v2669, %v2672
    %2676 = vrot.lane.b32.xlu0 %v2674, 64
    %v2677 = vpop.permute.xlu0 %2676
    %v2679 = vadd.f32 %v2587, %v2677
    %v2680 = vtanh.pop %v2679
    %v2681 = vsub.f32 1.0, %v2669
    %2683 = vrot.lane.b32.xlu0 %v2680, 96
    %v2684 = vpop.permute.xlu0 %2683
    %v2686 = vmul.f32 %v2681, %v2684
    %v2687 = vmul.f32 %v2669, %v2586
    %v2688 = vadd.f32 %v2686, %v2687
    %v2689 = vld [vmem:[#allocation2 + $0x26] sm:$0x3]
    %2691 = vrot.lane.b32.xlu0 %v2688, 96
    %v2692 = vpop.permute.xlu0 %2691
    %v2693 = vsel %vm336, %v2692, 0
    %2695 = vmatprep.subr.mxu0 0.0
    %2696 = vmatpush1.msra.mxu0 %v47
    %2697 = vmatprep.subr.mxu0 0.0
    %2698 = vmatpush1.msra.mxu0 %v48
    %2699 = vmatprep.subr.mxu0 0.0
    %2700 = vmatpush1.msra.mxu0 %v49
    %2701 = vmatprep.subr.mxu0 0.0
    %2702 = vmatpush1.msra.mxu0 %v50
    %2703 = vmatprep.subr.mxu0 0.0
    %2704 = vmatpush1.msra.mxu0 0.0
    %2705 = vmatprep.subr.mxu0 0.0
    %2706 = vmatpush1.msra.mxu0 0.0
    %2707 = vmatprep.subr.mxu0 0.0
    %2708 = vmatpush1.msra.mxu0 0.0
    %2709 = vmatprep.subr.mxu0 0.0
    %2710 = vmatpush1.msra.mxu0 0.0
    %2711 = vmatprep.subr.mxu0 0.0
    %2712 = vmatpush1.msra.mxu0 0.0
    %2713 = vmatprep.subr.mxu0 0.0
    %2714 = vmatpush1.msra.mxu0 0.0
    %2715 = vmatprep.subr.mxu0 0.0
    %2716 = vmatpush1.msra.mxu0 0.0
    %2717 = vmatprep.subr.mxu0 0.0
    %2718 = vmatpush1.msra.mxu0 0.0
    %2719 = vmatprep.subr.mxu0 0.0
    %2720 = vmatpush1.msra.mxu0 0.0
    %2721 = vmatprep.subr.mxu0 0.0
    %2722 = vmatpush1.msra.mxu0 0.0
    %2723 = vmatprep.subr.mxu0 0.0
    %2724 = vmatpush1.msra.mxu0 0.0
    %2725 = vmatprep.subr.mxu0 0.0
    %2726 = vmatpush1.msra.mxu0 0.0
    %2727 = vmatprep.subr.mxu0 0.0
    %2728 = vmatpush1.msra.mxu0 0.0
    %2729 = vmatprep.subr.mxu0 0.0
    %2730 = vmatpush1.msra.mxu0 0.0
    %2731 = vmatprep.subr.mxu0 0.0
    %2732 = vmatpush1.msra.mxu0 0.0
    %2733 = vmatprep.subr.mxu0 0.0
    %2734 = vmatpush1.msra.mxu0 0.0
    %2735 = vmatprep.subr.mxu0 0.0
    %2736 = vmatpush1.msra.mxu0 0.0
    %2737 = vmatprep.subr.mxu0 0.0
    %2738 = vmatpush1.msra.mxu0 0.0
    %2739 = vmatprep.subr.mxu0 0.0
    %2740 = vmatpush1.msra.mxu0 0.0
    %2741 = vmatprep.subr.mxu0 0.0
    %2742 = vmatpush1.msra.mxu0 0.0
    %2743 = vmatprep.subr.mxu0 0.0
    %2744 = vmatpush1.msra.mxu0 0.0
    %2745 = vmatprep.subr.mxu0 0.0
    %2746 = vmatpush1.msra.mxu0 0.0
    %2747 = vmatprep.subr.mxu0 0.0
    %2748 = vmatpush1.msra.mxu0 0.0
    %2749 = vmatprep.subr.mxu0 0.0
    %2750 = vmatpush1.msra.mxu0 0.0
    %2751 = vmatprep.subr.mxu0 0.0
    %2752 = vmatpush1.msra.mxu0 0.0
    %2753 = vmatprep.subr.mxu0 0.0
    %2754 = vmatpush1.msra.mxu0 0.0
    %2755 = vmatprep.subr.mxu0 0.0
    %2756 = vmatpush1.msra.mxu0 0.0
    %2757 = vmatprep.subr.mxu0 0.0
    %2758 = vmatpush1.msra.mxu0 0.0
    %2759 = vmatprep.mubr.f32.mxu0 0.0
    %2760 = vmatmul.mubr.f32.gmra.mrb[0].mxu0 %v2693
    %v2761 = vpop.f32.mrb[0].mxu0
    %v2762 = vadd.f32 %v335, %v2761
    %v2763 = vpop.f32.mrb[0].mxu0
    %2764 = vdwg.mxu0
    %v2765 = vadd.f32 %v2689, %v2762
    %v2766 = vxor.u32 %v2765, 2147483648
    %v2767 = vmul.f32 %v2766, 1.442695
    %v2768 = vpow.pop %v2767
    %v2769 = vadd.f32 %v2768, 1.0
    %v2770 = vrcp.pop %v2769
    %v2771 = vmul.f32 1.0, %v2770
    %2773 = vrot.lane.b32.xlu0 %v2762, 64
    %v2774 = vpop.permute.xlu0 %2773
    %v2776 = vmul.f32 %v2771, %v2774
    %2778 = vrot.lane.b32.xlu0 %v2776, 64
    %v2779 = vpop.permute.xlu0 %2778
    %v2781 = vadd.f32 %v2689, %v2779
    %v2782 = vtanh.pop %v2781
    %v2783 = vsub.f32 1.0, %v2771
    %2785 = vrot.lane.b32.xlu0 %v2782, 96
    %v2786 = vpop.permute.xlu0 %2785
    %v2788 = vmul.f32 %v2783, %v2786
    %v2789 = vmul.f32 %v2771, %v2688
    %v2790 = vadd.f32 %v2788, %v2789
    %v2791 = vld [vmem:[#allocation2 + $0x28] sm:$0x3]
    %2793 = vrot.lane.b32.xlu0 %v2790, 96
    %v2794 = vpop.permute.xlu0 %2793
    %v2795 = vsel %vm336, %v2794, 0
    %2797 = vmatprep.subr.mxu0 0.0
    %2798 = vmatpush1.msra.mxu0 %v47
    %2799 = vmatprep.subr.mxu0 0.0
    %2800 = vmatpush1.msra.mxu0 %v48
    %2801 = vmatprep.subr.mxu0 0.0
    %2802 = vmatpush1.msra.mxu0 %v49
    %2803 = vmatprep.subr.mxu0 0.0
    %2804 = vmatpush1.msra.mxu0 %v50
    %2805 = vmatprep.subr.mxu0 0.0
    %2806 = vmatpush1.msra.mxu0 0.0
    %2807 = vmatprep.subr.mxu0 0.0
    %2808 = vmatpush1.msra.mxu0 0.0
    %2809 = vmatprep.subr.mxu0 0.0
    %2810 = vmatpush1.msra.mxu0 0.0
    %2811 = vmatprep.subr.mxu0 0.0
    %2812 = vmatpush1.msra.mxu0 0.0
    %2813 = vmatprep.subr.mxu0 0.0
    %2814 = vmatpush1.msra.mxu0 0.0
    %2815 = vmatprep.subr.mxu0 0.0
    %2816 = vmatpush1.msra.mxu0 0.0
    %2817 = vmatprep.subr.mxu0 0.0
    %2818 = vmatpush1.msra.mxu0 0.0
    %2819 = vmatprep.subr.mxu0 0.0
    %2820 = vmatpush1.msra.mxu0 0.0
    %2821 = vmatprep.subr.mxu0 0.0
    %2822 = vmatpush1.msra.mxu0 0.0
    %2823 = vmatprep.subr.mxu0 0.0
    %2824 = vmatpush1.msra.mxu0 0.0
    %2825 = vmatprep.subr.mxu0 0.0
    %2826 = vmatpush1.msra.mxu0 0.0
    %2827 = vmatprep.subr.mxu0 0.0
    %2828 = vmatpush1.msra.mxu0 0.0
    %2829 = vmatprep.subr.mxu0 0.0
    %2830 = vmatpush1.msra.mxu0 0.0
    %2831 = vmatprep.subr.mxu0 0.0
    %2832 = vmatpush1.msra.mxu0 0.0
    %2833 = vmatprep.subr.mxu0 0.0
    %2834 = vmatpush1.msra.mxu0 0.0
    %2835 = vmatprep.subr.mxu0 0.0
    %2836 = vmatpush1.msra.mxu0 0.0
    %2837 = vmatprep.subr.mxu0 0.0
    %2838 = vmatpush1.msra.mxu0 0.0
    %2839 = vmatprep.subr.mxu0 0.0
    %2840 = vmatpush1.msra.mxu0 0.0
    %2841 = vmatprep.subr.mxu0 0.0
    %2842 = vmatpush1.msra.mxu0 0.0
    %2843 = vmatprep.subr.mxu0 0.0
    %2844 = vmatpush1.msra.mxu0 0.0
    %2845 = vmatprep.subr.mxu0 0.0
    %2846 = vmatpush1.msra.mxu0 0.0
    %2847 = vmatprep.subr.mxu0 0.0
    %2848 = vmatpush1.msra.mxu0 0.0
    %2849 = vmatprep.subr.mxu0 0.0
    %2850 = vmatpush1.msra.mxu0 0.0
    %2851 = vmatprep.subr.mxu0 0.0
    %2852 = vmatpush1.msra.mxu0 0.0
    %2853 = vmatprep.subr.mxu0 0.0
    %2854 = vmatpush1.msra.mxu0 0.0
    %2855 = vmatprep.subr.mxu0 0.0
    %2856 = vmatpush1.msra.mxu0 0.0
    %2857 = vmatprep.subr.mxu0 0.0
    %2858 = vmatpush1.msra.mxu0 0.0
    %2859 = vmatprep.subr.mxu0 0.0
    %2860 = vmatpush1.msra.mxu0 0.0
    %2861 = vmatprep.mubr.f32.mxu0 0.0
    %2862 = vmatmul.mubr.f32.gmra.mrb[0].mxu0 %v2795
    %v2863 = vpop.f32.mrb[0].mxu0
    %v2864 = vadd.f32 %v335, %v2863
    %v2865 = vpop.f32.mrb[0].mxu0
    %2866 = vdwg.mxu0
    %v2867 = vadd.f32 %v2791, %v2864
    %v2868 = vxor.u32 %v2867, 2147483648
    %v2869 = vmul.f32 %v2868, 1.442695
    %v2870 = vpow.pop %v2869
    %v2871 = vadd.f32 %v2870, 1.0
    %v2872 = vrcp.pop %v2871
    %v2873 = vmul.f32 1.0, %v2872
    %2875 = vrot.lane.b32.xlu0 %v2864, 64
    %v2876 = vpop.permute.xlu0 %2875
    %v2878 = vmul.f32 %v2873, %v2876
    %2880 = vrot.lane.b32.xlu0 %v2878, 64
    %v2881 = vpop.permute.xlu0 %2880
    %v2883 = vadd.f32 %v2791, %v2881
    %v2884 = vtanh.pop %v2883
    %v2885 = vsub.f32 1.0, %v2873
    %2887 = vrot.lane.b32.xlu0 %v2884, 96
    %v2888 = vpop.permute.xlu0 %2887
    %v2890 = vmul.f32 %v2885, %v2888
    %v2891 = vmul.f32 %v2873, %v2790
    %v2892 = vadd.f32 %v2890, %v2891
    %v2893 = vld [vmem:[#allocation2 + $0x2a] sm:$0x3]
    %2895 = vrot.lane.b32.xlu0 %v2892, 96
    %v2896 = vpop.permute.xlu0 %2895
    %v2897 = vsel %vm336, %v2896, 0
    %2899 = vmatprep.subr.mxu0 0.0
    %2900 = vmatpush1.msra.mxu0 %v47
    %2901 = vmatprep.subr.mxu0 0.0
    %2902 = vmatpush1.msra.mxu0 %v48
    %2903 = vmatprep.subr.mxu0 0.0
    %2904 = vmatpush1.msra.mxu0 %v49
    %2905 = vmatprep.subr.mxu0 0.0
    %2906 = vmatpush1.msra.mxu0 %v50
    %2907 = vmatprep.subr.mxu0 0.0
    %2908 = vmatpush1.msra.mxu0 0.0
    %2909 = vmatprep.subr.mxu0 0.0
    %2910 = vmatpush1.msra.mxu0 0.0
    %2911 = vmatprep.subr.mxu0 0.0
    %2912 = vmatpush1.msra.mxu0 0.0
    %2913 = vmatprep.subr.mxu0 0.0
    %2914 = vmatpush1.msra.mxu0 0.0
    %2915 = vmatprep.subr.mxu0 0.0
    %2916 = vmatpush1.msra.mxu0 0.0
    %2917 = vmatprep.subr.mxu0 0.0
    %2918 = vmatpush1.msra.mxu0 0.0
    %2919 = vmatprep.subr.mxu0 0.0
    %2920 = vmatpush1.msra.mxu0 0.0
    %2921 = vmatprep.subr.mxu0 0.0
    %2922 = vmatpush1.msra.mxu0 0.0
    %2923 = vmatprep.subr.mxu0 0.0
    %2924 = vmatpush1.msra.mxu0 0.0
    %2925 = vmatprep.subr.mxu0 0.0
    %2926 = vmatpush1.msra.mxu0 0.0
    %2927 = vmatprep.subr.mxu0 0.0
    %2928 = vmatpush1.msra.mxu0 0.0
    %2929 = vmatprep.subr.mxu0 0.0
    %2930 = vmatpush1.msra.mxu0 0.0
    %2931 = vmatprep.subr.mxu0 0.0
    %2932 = vmatpush1.msra.mxu0 0.0
    %2933 = vmatprep.subr.mxu0 0.0
    %2934 = vmatpush1.msra.mxu0 0.0
    %2935 = vmatprep.subr.mxu0 0.0
    %2936 = vmatpush1.msra.mxu0 0.0
    %2937 = vmatprep.subr.mxu0 0.0
    %2938 = vmatpush1.msra.mxu0 0.0
    %2939 = vmatprep.subr.mxu0 0.0
    %2940 = vmatpush1.msra.mxu0 0.0
    %2941 = vmatprep.subr.mxu0 0.0
    %2942 = vmatpush1.msra.mxu0 0.0
    %2943 = vmatprep.subr.mxu0 0.0
    %2944 = vmatpush1.msra.mxu0 0.0
    %2945 = vmatprep.subr.mxu0 0.0
    %2946 = vmatpush1.msra.mxu0 0.0
    %2947 = vmatprep.subr.mxu0 0.0
    %2948 = vmatpush1.msra.mxu0 0.0
    %2949 = vmatprep.subr.mxu0 0.0
    %2950 = vmatpush1.msra.mxu0 0.0
    %2951 = vmatprep.subr.mxu0 0.0
    %2952 = vmatpush1.msra.mxu0 0.0
    %2953 = vmatprep.subr.mxu0 0.0
    %2954 = vmatpush1.msra.mxu0 0.0
    %2955 = vmatprep.subr.mxu0 0.0
    %2956 = vmatpush1.msra.mxu0 0.0
    %2957 = vmatprep.subr.mxu0 0.0
    %2958 = vmatpush1.msra.mxu0 0.0
    %2959 = vmatprep.subr.mxu0 0.0
    %2960 = vmatpush1.msra.mxu0 0.0
    %2961 = vmatprep.subr.mxu0 0.0
    %2962 = vmatpush1.msra.mxu0 0.0
    %2963 = vmatprep.mubr.f32.mxu0 0.0
    %2964 = vmatmul.mubr.f32.gmra.mrb[0].mxu0 %v2897
    %v2965 = vpop.f32.mrb[0].mxu0
    %v2966 = vadd.f32 %v335, %v2965
    %v2967 = vpop.f32.mrb[0].mxu0
    %2968 = vdwg.mxu0
    %v2969 = vadd.f32 %v2893, %v2966
    %v2970 = vxor.u32 %v2969, 2147483648
    %v2971 = vmul.f32 %v2970, 1.442695
    %v2972 = vpow.pop %v2971
    %v2973 = vadd.f32 %v2972, 1.0
    %v2974 = vrcp.pop %v2973
    %v2975 = vmul.f32 1.0, %v2974
    %2977 = vrot.lane.b32.xlu0 %v2966, 64
    %v2978 = vpop.permute.xlu0 %2977
    %v2980 = vmul.f32 %v2975, %v2978
    %2982 = vrot.lane.b32.xlu0 %v2980, 64
    %v2983 = vpop.permute.xlu0 %2982
    %v2985 = vadd.f32 %v2893, %v2983
    %v2986 = vtanh.pop %v2985
    %v2987 = vsub.f32 1.0, %v2975
    %2989 = vrot.lane.b32.xlu0 %v2986, 96
    %v2990 = vpop.permute.xlu0 %2989
    %v2992 = vmul.f32 %v2987, %v2990
    %v2993 = vmul.f32 %v2975, %v2892
    %v2994 = vadd.f32 %v2992, %v2993
    %v2995 = vld [vmem:[#allocation2 + $0x2c] sm:$0x3]
    %2997 = vrot.lane.b32.xlu0 %v2994, 96
    %v2998 = vpop.permute.xlu0 %2997
    %v2999 = vsel %vm336, %v2998, 0
    %3001 = vmatprep.subr.mxu0 0.0
    %3002 = vmatpush1.msra.mxu0 %v47
    %3003 = vmatprep.subr.mxu0 0.0
    %3004 = vmatpush1.msra.mxu0 %v48
    %3005 = vmatprep.subr.mxu0 0.0
    %3006 = vmatpush1.msra.mxu0 %v49
    %3007 = vmatprep.subr.mxu0 0.0
    %3008 = vmatpush1.msra.mxu0 %v50
    %3009 = vmatprep.subr.mxu0 0.0
    %3010 = vmatpush1.msra.mxu0 0.0
    %3011 = vmatprep.subr.mxu0 0.0
    %3012 = vmatpush1.msra.mxu0 0.0
    %3013 = vmatprep.subr.mxu0 0.0
    %3014 = vmatpush1.msra.mxu0 0.0
    %3015 = vmatprep.subr.mxu0 0.0
    %3016 = vmatpush1.msra.mxu0 0.0
    %3017 = vmatprep.subr.mxu0 0.0
    %3018 = vmatpush1.msra.mxu0 0.0
    %3019 = vmatprep.subr.mxu0 0.0
    %3020 = vmatpush1.msra.mxu0 0.0
    %3021 = vmatprep.subr.mxu0 0.0
    %3022 = vmatpush1.msra.mxu0 0.0
    %3023 = vmatprep.subr.mxu0 0.0
    %3024 = vmatpush1.msra.mxu0 0.0
    %3025 = vmatprep.subr.mxu0 0.0
    %3026 = vmatpush1.msra.mxu0 0.0
    %3027 = vmatprep.subr.mxu0 0.0
    %3028 = vmatpush1.msra.mxu0 0.0
    %3029 = vmatprep.subr.mxu0 0.0
    %3030 = vmatpush1.msra.mxu0 0.0
    %3031 = vmatprep.subr.mxu0 0.0
    %3032 = vmatpush1.msra.mxu0 0.0
    %3033 = vmatprep.subr.mxu0 0.0
    %3034 = vmatpush1.msra.mxu0 0.0
    %3035 = vmatprep.subr.mxu0 0.0
    %3036 = vmatpush1.msra.mxu0 0.0
    %3037 = vmatprep.subr.mxu0 0.0
    %3038 = vmatpush1.msra.mxu0 0.0
    %3039 = vmatprep.subr.mxu0 0.0
    %3040 = vmatpush1.msra.mxu0 0.0
    %3041 = vmatprep.subr.mxu0 0.0
    %3042 = vmatpush1.msra.mxu0 0.0
    %3043 = vmatprep.subr.mxu0 0.0
    %3044 = vmatpush1.msra.mxu0 0.0
    %3045 = vmatprep.subr.mxu0 0.0
    %3046 = vmatpush1.msra.mxu0 0.0
    %3047 = vmatprep.subr.mxu0 0.0
    %3048 = vmatpush1.msra.mxu0 0.0
    %3049 = vmatprep.subr.mxu0 0.0
    %3050 = vmatpush1.msra.mxu0 0.0
    %3051 = vmatprep.subr.mxu0 0.0
    %3052 = vmatpush1.msra.mxu0 0.0
    %3053 = vmatprep.subr.mxu0 0.0
    %3054 = vmatpush1.msra.mxu0 0.0
    %3055 = vmatprep.subr.mxu0 0.0
    %3056 = vmatpush1.msra.mxu0 0.0
    %3057 = vmatprep.subr.mxu0 0.0
    %3058 = vmatpush1.msra.mxu0 0.0
    %3059 = vmatprep.subr.mxu0 0.0
    %3060 = vmatpush1.msra.mxu0 0.0
    %3061 = vmatprep.subr.mxu0 0.0
    %3062 = vmatpush1.msra.mxu0 0.0
    %3063 = vmatprep.subr.mxu0 0.0
    %3064 = vmatpush1.msra.mxu0 0.0
    %3065 = vmatprep.mubr.f32.mxu0 0.0
    %3066 = vmatmul.mubr.f32.gmra.mrb[0].mxu0 %v2999
    %v3067 = vpop.f32.mrb[0].mxu0
    %v3068 = vadd.f32 %v335, %v3067
    %v3069 = vpop.f32.mrb[0].mxu0
    %3070 = vdwg.mxu0
    %v3071 = vadd.f32 %v2995, %v3068
    %v3072 = vxor.u32 %v3071, 2147483648
    %v3073 = vmul.f32 %v3072, 1.442695
    %v3074 = vpow.pop %v3073
    %v3075 = vadd.f32 %v3074, 1.0
    %v3076 = vrcp.pop %v3075
    %v3077 = vmul.f32 1.0, %v3076
    %3079 = vrot.lane.b32.xlu0 %v3068, 64
    %v3080 = vpop.permute.xlu0 %3079
    %v3082 = vmul.f32 %v3077, %v3080
    %3084 = vrot.lane.b32.xlu0 %v3082, 64
    %v3085 = vpop.permute.xlu0 %3084
    %v3087 = vadd.f32 %v2995, %v3085
    %v3088 = vtanh.pop %v3087
    %v3089 = vsub.f32 1.0, %v3077
    %3091 = vrot.lane.b32.xlu0 %v3088, 96
    %v3092 = vpop.permute.xlu0 %3091
    %v3094 = vmul.f32 %v3089, %v3092
    %v3095 = vmul.f32 %v3077, %v2994
    %v3096 = vadd.f32 %v3094, %v3095
    %v3097 = vld [vmem:[#allocation2 + $0x2e] sm:$0x3]
    %3099 = vrot.lane.b32.xlu0 %v3096, 96
    %v3100 = vpop.permute.xlu0 %3099
    %v3101 = vsel %vm336, %v3100, 0
    %3103 = vmatprep.subr.mxu0 0.0
    %3104 = vmatpush1.msra.mxu0 %v47
    %3105 = vmatprep.subr.mxu0 0.0
    %3106 = vmatpush1.msra.mxu0 %v48
    %3107 = vmatprep.subr.mxu0 0.0
    %3108 = vmatpush1.msra.mxu0 %v49
    %3109 = vmatprep.subr.mxu0 0.0
    %3110 = vmatpush1.msra.mxu0 %v50
    %3111 = vmatprep.subr.mxu0 0.0
    %3112 = vmatpush1.msra.mxu0 0.0
    %3113 = vmatprep.subr.mxu0 0.0
    %3114 = vmatpush1.msra.mxu0 0.0
    %3115 = vmatprep.subr.mxu0 0.0
    %3116 = vmatpush1.msra.mxu0 0.0
    %3117 = vmatprep.subr.mxu0 0.0
    %3118 = vmatpush1.msra.mxu0 0.0
    %3119 = vmatprep.subr.mxu0 0.0
    %3120 = vmatpush1.msra.mxu0 0.0
    %3121 = vmatprep.subr.mxu0 0.0
    %3122 = vmatpush1.msra.mxu0 0.0
    %3123 = vmatprep.subr.mxu0 0.0
    %3124 = vmatpush1.msra.mxu0 0.0
    %3125 = vmatprep.subr.mxu0 0.0
    %3126 = vmatpush1.msra.mxu0 0.0
    %3127 = vmatprep.subr.mxu0 0.0
    %3128 = vmatpush1.msra.mxu0 0.0
    %3129 = vmatprep.subr.mxu0 0.0
    %3130 = vmatpush1.msra.mxu0 0.0
    %3131 = vmatprep.subr.mxu0 0.0
    %3132 = vmatpush1.msra.mxu0 0.0
    %3133 = vmatprep.subr.mxu0 0.0
    %3134 = vmatpush1.msra.mxu0 0.0
    %3135 = vmatprep.subr.mxu0 0.0
    %3136 = vmatpush1.msra.mxu0 0.0
    %3137 = vmatprep.subr.mxu0 0.0
    %3138 = vmatpush1.msra.mxu0 0.0
    %3139 = vmatprep.subr.mxu0 0.0
    %3140 = vmatpush1.msra.mxu0 0.0
    %3141 = vmatprep.subr.mxu0 0.0
    %3142 = vmatpush1.msra.mxu0 0.0
    %3143 = vmatprep.subr.mxu0 0.0
    %3144 = vmatpush1.msra.mxu0 0.0
    %3145 = vmatprep.subr.mxu0 0.0
    %3146 = vmatpush1.msra.mxu0 0.0
    %3147 = vmatprep.subr.mxu0 0.0
    %3148 = vmatpush1.msra.mxu0 0.0
    %3149 = vmatprep.subr.mxu0 0.0
    %3150 = vmatpush1.msra.mxu0 0.0
    %3151 = vmatprep.subr.mxu0 0.0
    %3152 = vmatpush1.msra.mxu0 0.0
    %3153 = vmatprep.subr.mxu0 0.0
    %3154 = vmatpush1.msra.mxu0 0.0
    %3155 = vmatprep.subr.mxu0 0.0
    %3156 = vmatpush1.msra.mxu0 0.0
    %3157 = vmatprep.subr.mxu0 0.0
    %3158 = vmatpush1.msra.mxu0 0.0
    %3159 = vmatprep.subr.mxu0 0.0
    %3160 = vmatpush1.msra.mxu0 0.0
    %3161 = vmatprep.subr.mxu0 0.0
    %3162 = vmatpush1.msra.mxu0 0.0
    %3163 = vmatprep.subr.mxu0 0.0
    %3164 = vmatpush1.msra.mxu0 0.0
    %3165 = vmatprep.subr.mxu0 0.0
    %3166 = vmatpush1.msra.mxu0 0.0
    %3167 = vmatprep.mubr.f32.mxu0 0.0
    %3168 = vmatmul.mubr.f32.gmra.mrb[0].mxu0 %v3101
    %v3169 = vpop.f32.mrb[0].mxu0
    %v3170 = vadd.f32 %v335, %v3169
    %v3171 = vpop.f32.mrb[0].mxu0
    %3172 = vdwg.mxu0
    %v3173 = vadd.f32 %v3097, %v3170
    %v3174 = vxor.u32 %v3173, 2147483648
    %v3175 = vmul.f32 %v3174, 1.442695
    %v3176 = vpow.pop %v3175
    %v3177 = vadd.f32 %v3176, 1.0
    %v3178 = vrcp.pop %v3177
    %v3179 = vmul.f32 1.0, %v3178
    %3181 = vrot.lane.b32.xlu0 %v3170, 64
    %v3182 = vpop.permute.xlu0 %3181
    %v3184 = vmul.f32 %v3179, %v3182
    %3186 = vrot.lane.b32.xlu0 %v3184, 64
    %v3187 = vpop.permute.xlu0 %3186
    %v3189 = vadd.f32 %v3097, %v3187
    %v3190 = vtanh.pop %v3189
    %v3191 = vsub.f32 1.0, %v3179
    %3193 = vrot.lane.b32.xlu0 %v3190, 96
    %v3194 = vpop.permute.xlu0 %3193
    %v3196 = vmul.f32 %v3191, %v3194
    %v3197 = vmul.f32 %v3179, %v3096
    %v3198 = vadd.f32 %v3196, %v3197
    %3201 = vrot.lane.b32.xlu0 %v3198, 96
    %v3202 = vpop.permute.xlu0 %3201
    %v3204 = vsel %vm1150, %v2488, %v3202
    %v3207 = vsel %vm1150, %v2590, %v3100
    %v3210 = vsel %vm1150, %v2692, %v2998
    %v3213 = vsel %vm1150, %v2794, %v2896
    %v3214 = vsel %vm1150, %v2896, %v2794
    %v3215 = vsel %vm1150, %v2998, %v2692
    %v3216 = vsel %vm1150, %v3100, %v2590
    %v3217 = vsel %vm1150, %v3202, %v2488
    %v3219 = vrot.slane %v3207, 6
    %v3222 = vrot.slane %v3210, 4
    %v3225 = vrot.slane %v3213, 2
    %v3228 = vrot.slane %v3215, 6
    %v3231 = vrot.slane %v3216, 4
    %v3234 = vrot.slane %v3217, 2
    %v3236 = vsel %vm1188, %v3204, %v3219
    %v3237 = vsel %vm1190, %v3236, %v3222
    %v3238 = vsel %vm1192, %v3237, %v3225
    %v3239 = vsel %vm1188, %v3214, %v3228
    %v3240 = vsel %vm1190, %v3239, %v3231
    %v3241 = vsel %vm1192, %v3240, %v3234
    %v3243 = vsel %vm336, %v3238, 0
    %v3246 = vsel %vm336, %v3241, 0
    %3248 = vmatprep.subr.mxu0 0.0
    %3249 = vmatpush1.msra.mxu0 %v52
    %3250 = vmatprep.subr.mxu0 0.0
    %3251 = vmatpush1.msra.mxu0 %v53
    %3252 = vmatprep.subr.mxu0 0.0
    %3253 = vmatpush1.msra.mxu0 %v54
    %3254 = vmatprep.subr.mxu0 0.0
    %3255 = vmatpush1.msra.mxu0 %v55
    %3256 = vmatprep.subr.mxu0 0.0
    %3257 = vmatpush1.msra.mxu0 0.0
    %3258 = vmatprep.subr.mxu0 0.0
    %3259 = vmatpush1.msra.mxu0 0.0
    %3260 = vmatprep.subr.mxu0 0.0
    %3261 = vmatpush1.msra.mxu0 0.0
    %3262 = vmatprep.subr.mxu0 0.0
    %3263 = vmatpush1.msra.mxu0 0.0
    %3264 = vmatprep.subr.mxu0 0.0
    %3265 = vmatpush1.msra.mxu0 0.0
    %3266 = vmatprep.subr.mxu0 0.0
    %3267 = vmatpush1.msra.mxu0 0.0
    %3268 = vmatprep.subr.mxu0 0.0
    %3269 = vmatpush1.msra.mxu0 0.0
    %3270 = vmatprep.subr.mxu0 0.0
    %3271 = vmatpush1.msra.mxu0 0.0
    %3272 = vmatprep.subr.mxu0 0.0
    %3273 = vmatpush1.msra.mxu0 0.0
    %3274 = vmatprep.subr.mxu0 0.0
    %3275 = vmatpush1.msra.mxu0 0.0
    %3276 = vmatprep.subr.mxu0 0.0
    %3277 = vmatpush1.msra.mxu0 0.0
    %3278 = vmatprep.subr.mxu0 0.0
    %3279 = vmatpush1.msra.mxu0 0.0
    %3280 = vmatprep.subr.mxu0 0.0
    %3281 = vmatpush1.msra.mxu0 0.0
    %3282 = vmatprep.subr.mxu0 0.0
    %3283 = vmatpush1.msra.mxu0 0.0
    %3284 = vmatprep.subr.mxu0 0.0
    %3285 = vmatpush1.msra.mxu0 0.0
    %3286 = vmatprep.subr.mxu0 0.0
    %3287 = vmatpush1.msra.mxu0 0.0
    %3288 = vmatprep.subr.mxu0 0.0
    %3289 = vmatpush1.msra.mxu0 0.0
    %3290 = vmatprep.subr.mxu0 0.0
    %3291 = vmatpush1.msra.mxu0 0.0
    %3292 = vmatprep.subr.mxu0 0.0
    %3293 = vmatpush1.msra.mxu0 0.0
    %3294 = vmatprep.subr.mxu0 0.0
    %3295 = vmatpush1.msra.mxu0 0.0
    %3296 = vmatprep.subr.mxu0 0.0
    %3297 = vmatpush1.msra.mxu0 0.0
    %3298 = vmatprep.subr.mxu0 0.0
    %3299 = vmatpush1.msra.mxu0 0.0
    %3300 = vmatprep.subr.mxu0 0.0
    %3301 = vmatpush1.msra.mxu0 0.0
    %3302 = vmatprep.subr.mxu0 0.0
    %3303 = vmatpush1.msra.mxu0 0.0
    %3304 = vmatprep.subr.mxu0 0.0
    %3305 = vmatpush1.msra.mxu0 0.0
    %3306 = vmatprep.subr.mxu0 0.0
    %3307 = vmatpush1.msra.mxu0 0.0
    %3308 = vmatprep.subr.mxu0 0.0
    %3309 = vmatpush1.msra.mxu0 0.0
    %3310 = vmatprep.subr.mxu0 0.0
    %3311 = vmatpush1.msra.mxu0 0.0
    %3312 = vmatprep.mubr.f32.mxu0 0.0
    %3313 = vmatmul.mubr.f32.gmra.mrb[0].mxu0 %v3243
    %v3314 = vpop.f32.mrb[0].mxu0
    %v3315 = vadd.f32 %v1200, %v3314
    %v3316 = vpop.f32.mrb[0].mxu0
    %3317 = vmatprep.mubr.f32.mxu0 0.0
    %3318 = vmatmul.mubr.f32.gmra.mrb[0].mxu0 %v3246
    %v3319 = vpop.f32.mrb[0].mxu0
    %v3320 = vadd.f32 %v1200, %v3319
    %v3321 = vpop.f32.mrb[0].mxu0
    %3322 = vdwg.mxu0
    %v3323 = vtanh.pop %v3315
    %v3324 = vtanh.pop %v3320
    %v3325 = vmul.f32 %v3323, %v1287
    %v3326 = vmul.f32 %v3324, %v1287
    %v3327 = vsel %vm336, %v3325, 0.0
    %3328 = vadd.xlane.f32.xlu0 %v3327
    %v3329 = vpop.xlane.xlu0 %3328
    %v3330 = vsel %vm336, %v3326, 0.0
    %3331 = vadd.xlane.f32.xlu0 %v3330
    %v3332 = vpop.xlane.xlu0 %3331
    %v3333 = vtanh.pop %v3329
    %v3334 = vtanh.pop %v3332
    %v3335 = vmul.f32 %v3333, 1.442695
    %v3336 = vpow.pop %v3335
    %v3337 = vmul.f32 %v3334, 1.442695
    %v3338 = vpow.pop %v3337
    %v3339 = vmul.f32 %v3336, %v3238
    %v3340 = vmul.f32 %v3338, %v3241
    %v3342 = vrot.slane %v3339, 2
    %v3344 = vadd.f32 %v3339, %v3342
    %v3346 = vrot.slane %v3336, 2
    %v3348 = vadd.f32 %v3336, %v3346
    %v3349 = vrot.slane %v3339, 4
    %v3351 = vadd.f32 %v3344, %v3349
    %v3352 = vrot.slane %v3336, 4
    %v3354 = vadd.f32 %v3348, %v3352
    %v3355 = vrot.slane %v3339, 6
    %v3357 = vadd.f32 %v3351, %v3355
    %v3358 = vrot.slane %v3336, 6
    %v3360 = vadd.f32 %v3354, %v3358
    %v3361 = vadd.f32 %v3357, %v3340
    %v3362 = vadd.f32 %v3360, %v3338
    %v3364 = vrot.slane %v3340, 2
    %v3366 = vadd.f32 %v3361, %v3364
    %v3368 = vrot.slane %v3338, 2
    %v3370 = vadd.f32 %v3362, %v3368
    %v3371 = vrot.slane %v3340, 4
    %v3373 = vadd.f32 %v3366, %v3371
    %v3374 = vrot.slane %v3338, 4
    %v3376 = vadd.f32 %v3370, %v3374
    %v3377 = vrot.slane %v3340, 6
    %v3379 = vadd.f32 %v3373, %v3377
    %v3380 = vrot.slane %v3338, 6
    %v3382 = vadd.f32 %v3376, %v3380
    %v3383 = vrcp.pop %v3382
    %v3384 = vmul.f32 1.0, %v3383
    %3386 = vset.pattern.permute.xlu0 0
    %3387 = vperm.xlu0 %3386, %v3384
    %v3388 = vpop.permute.xlu0 %3387
    %v3390 = vmul.f32 %v3379, %v3388
    %v3391 = vsel %vm1354, %v3336, %v3346
    %v3392 = vsel %vm1356, %v3391, %v3352
    %v3393 = vsel %vm1358, %v3392, %v3358
    %v3394 = vsel %vm1360, %v3393, %v3338
    %v3395 = vsel %vm1362, %v3394, %v3368
    %v3396 = vsel %vm1364, %v3395, %v3374
    %v3397 = vsel %vm1366, %v3396, %v3380
    %v3398 = vmul.f32 %v3397, %v3388
    %s3399 = scalar_lea.vmem [#allocation5], 4
    %3400 = vst.msk [vmem:[%s3399] sm:$0x3] %vm1369, %v3398
    %v3401 = vld [vmem:[#allocation2 + $0x30] sm:$0x3]
    %v3402 = vsel %vm336, %v3202, 0
    %3404 = vmatprep.subr.mxu0 0.0
    %3405 = vmatpush1.msra.mxu0 %v47
    %3406 = vmatprep.subr.mxu0 0.0
    %3407 = vmatpush1.msra.mxu0 %v48
    %3408 = vmatprep.subr.mxu0 0.0
    %3409 = vmatpush1.msra.mxu0 %v49
    %3410 = vmatprep.subr.mxu0 0.0
    %3411 = vmatpush1.msra.mxu0 %v50
    %3412 = vmatprep.subr.mxu0 0.0
    %3413 = vmatpush1.msra.mxu0 0.0
    %3414 = vmatprep.subr.mxu0 0.0
    %3415 = vmatpush1.msra.mxu0 0.0
    %3416 = vmatprep.subr.mxu0 0.0
    %3417 = vmatpush1.msra.mxu0 0.0
    %3418 = vmatprep.subr.mxu0 0.0
    %3419 = vmatpush1.msra.mxu0 0.0
    %3420 = vmatprep.subr.mxu0 0.0
    %3421 = vmatpush1.msra.mxu0 0.0
    %3422 = vmatprep.subr.mxu0 0.0
    %3423 = vmatpush1.msra.mxu0 0.0
    %3424 = vmatprep.subr.mxu0 0.0
    %3425 = vmatpush1.msra.mxu0 0.0
    %3426 = vmatprep.subr.mxu0 0.0
    %3427 = vmatpush1.msra.mxu0 0.0
    %3428 = vmatprep.subr.mxu0 0.0
    %3429 = vmatpush1.msra.mxu0 0.0
    %3430 = vmatprep.subr.mxu0 0.0
    %3431 = vmatpush1.msra.mxu0 0.0
    %3432 = vmatprep.subr.mxu0 0.0
    %3433 = vmatpush1.msra.mxu0 0.0
    %3434 = vmatprep.subr.mxu0 0.0
    %3435 = vmatpush1.msra.mxu0 0.0
    %3436 = vmatprep.subr.mxu0 0.0
    %3437 = vmatpush1.msra.mxu0 0.0
    %3438 = vmatprep.subr.mxu0 0.0
    %3439 = vmatpush1.msra.mxu0 0.0
    %3440 = vmatprep.subr.mxu0 0.0
    %3441 = vmatpush1.msra.mxu0 0.0
    %3442 = vmatprep.subr.mxu0 0.0
    %3443 = vmatpush1.msra.mxu0 0.0
    %3444 = vmatprep.subr.mxu0 0.0
    %3445 = vmatpush1.msra.mxu0 0.0
    %3446 = vmatprep.subr.mxu0 0.0
    %3447 = vmatpush1.msra.mxu0 0.0
    %3448 = vmatprep.subr.mxu0 0.0
    %3449 = vmatpush1.msra.mxu0 0.0
    %3450 = vmatprep.subr.mxu0 0.0
    %3451 = vmatpush1.msra.mxu0 0.0
    %3452 = vmatprep.subr.mxu0 0.0
    %3453 = vmatpush1.msra.mxu0 0.0
    %3454 = vmatprep.subr.mxu0 0.0
    %3455 = vmatpush1.msra.mxu0 0.0
    %3456 = vmatprep.subr.mxu0 0.0
    %3457 = vmatpush1.msra.mxu0 0.0
    %3458 = vmatprep.subr.mxu0 0.0
    %3459 = vmatpush1.msra.mxu0 0.0
    %3460 = vmatprep.subr.mxu0 0.0
    %3461 = vmatpush1.msra.mxu0 0.0
    %3462 = vmatprep.subr.mxu0 0.0
    %3463 = vmatpush1.msra.mxu0 0.0
    %3464 = vmatprep.subr.mxu0 0.0
    %3465 = vmatpush1.msra.mxu0 0.0
    %3466 = vmatprep.subr.mxu0 0.0
    %3467 = vmatpush1.msra.mxu0 0.0
    %3468 = vmatprep.mubr.f32.mxu0 0.0
    %3469 = vmatmul.mubr.f32.gmra.mrb[0].mxu0 %v3402
    %v3470 = vpop.f32.mrb[0].mxu0
    %v3471 = vadd.f32 %v335, %v3470
    %v3472 = vpop.f32.mrb[0].mxu0
    %3473 = vdwg.mxu0
    %v3474 = vadd.f32 %v3401, %v3471
    %v3475 = vxor.u32 %v3474, 2147483648
    %v3476 = vmul.f32 %v3475, 1.442695
    %v3477 = vpow.pop %v3476
    %v3478 = vadd.f32 %v3477, 1.0
    %v3479 = vrcp.pop %v3478
    %v3480 = vmul.f32 1.0, %v3479
    %3482 = vrot.lane.b32.xlu0 %v3471, 64
    %v3483 = vpop.permute.xlu0 %3482
    %v3485 = vmul.f32 %v3480, %v3483
    %3487 = vrot.lane.b32.xlu0 %v3485, 64
    %v3488 = vpop.permute.xlu0 %3487
    %v3490 = vadd.f32 %v3401, %v3488
    %v3491 = vtanh.pop %v3490
    %v3492 = vsub.f32 1.0, %v3480
    %3494 = vrot.lane.b32.xlu0 %v3491, 96
    %v3495 = vpop.permute.xlu0 %3494
    %v3497 = vmul.f32 %v3492, %v3495
    %v3498 = vmul.f32 %v3480, %v3198
    %v3499 = vadd.f32 %v3497, %v3498
    %v3500 = vld [vmem:[#allocation2 + $0x32] sm:$0x3]
    %3502 = vrot.lane.b32.xlu0 %v3499, 96
    %v3503 = vpop.permute.xlu0 %3502
    %v3504 = vsel %vm336, %v3503, 0
    %3506 = vmatprep.subr.mxu0 0.0
    %3507 = vmatpush1.msra.mxu0 %v47
    %3508 = vmatprep.subr.mxu0 0.0
    %3509 = vmatpush1.msra.mxu0 %v48
    %3510 = vmatprep.subr.mxu0 0.0
    %3511 = vmatpush1.msra.mxu0 %v49
    %3512 = vmatprep.subr.mxu0 0.0
    %3513 = vmatpush1.msra.mxu0 %v50
    %3514 = vmatprep.subr.mxu0 0.0
    %3515 = vmatpush1.msra.mxu0 0.0
    %3516 = vmatprep.subr.mxu0 0.0
    %3517 = vmatpush1.msra.mxu0 0.0
    %3518 = vmatprep.subr.mxu0 0.0
    %3519 = vmatpush1.msra.mxu0 0.0
    %3520 = vmatprep.subr.mxu0 0.0
    %3521 = vmatpush1.msra.mxu0 0.0
    %3522 = vmatprep.subr.mxu0 0.0
    %3523 = vmatpush1.msra.mxu0 0.0
    %3524 = vmatprep.subr.mxu0 0.0
    %3525 = vmatpush1.msra.mxu0 0.0
    %3526 = vmatprep.subr.mxu0 0.0
    %3527 = vmatpush1.msra.mxu0 0.0
    %3528 = vmatprep.subr.mxu0 0.0
    %3529 = vmatpush1.msra.mxu0 0.0
    %3530 = vmatprep.subr.mxu0 0.0
    %3531 = vmatpush1.msra.mxu0 0.0
    %3532 = vmatprep.subr.mxu0 0.0
    %3533 = vmatpush1.msra.mxu0 0.0
    %3534 = vmatprep.subr.mxu0 0.0
    %3535 = vmatpush1.msra.mxu0 0.0
    %3536 = vmatprep.subr.mxu0 0.0
    %3537 = vmatpush1.msra.mxu0 0.0
    %3538 = vmatprep.subr.mxu0 0.0
    %3539 = vmatpush1.msra.mxu0 0.0
    %3540 = vmatprep.subr.mxu0 0.0
    %3541 = vmatpush1.msra.mxu0 0.0
    %3542 = vmatprep.subr.mxu0 0.0
    %3543 = vmatpush1.msra.mxu0 0.0
    %3544 = vmatprep.subr.mxu0 0.0
    %3545 = vmatpush1.msra.mxu0 0.0
    %3546 = vmatprep.subr.mxu0 0.0
    %3547 = vmatpush1.msra.mxu0 0.0
    %3548 = vmatprep.subr.mxu0 0.0
    %3549 = vmatpush1.msra.mxu0 0.0
    %3550 = vmatprep.subr.mxu0 0.0
    %3551 = vmatpush1.msra.mxu0 0.0
    %3552 = vmatprep.subr.mxu0 0.0
    %3553 = vmatpush1.msra.mxu0 0.0
    %3554 = vmatprep.subr.mxu0 0.0
    %3555 = vmatpush1.msra.mxu0 0.0
    %3556 = vmatprep.subr.mxu0 0.0
    %3557 = vmatpush1.msra.mxu0 0.0
    %3558 = vmatprep.subr.mxu0 0.0
    %3559 = vmatpush1.msra.mxu0 0.0
    %3560 = vmatprep.subr.mxu0 0.0
    %3561 = vmatpush1.msra.mxu0 0.0
    %3562 = vmatprep.subr.mxu0 0.0
    %3563 = vmatpush1.msra.mxu0 0.0
    %3564 = vmatprep.subr.mxu0 0.0
    %3565 = vmatpush1.msra.mxu0 0.0
    %3566 = vmatprep.subr.mxu0 0.0
    %3567 = vmatpush1.msra.mxu0 0.0
    %3568 = vmatprep.subr.mxu0 0.0
    %3569 = vmatpush1.msra.mxu0 0.0
    %3570 = vmatprep.mubr.f32.mxu0 0.0
    %3571 = vmatmul.mubr.f32.gmra.mrb[0].mxu0 %v3504
    %v3572 = vpop.f32.mrb[0].mxu0
    %v3573 = vadd.f32 %v335, %v3572
    %v3574 = vpop.f32.mrb[0].mxu0
    %3575 = vdwg.mxu0
    %v3576 = vadd.f32 %v3500, %v3573
    %v3577 = vxor.u32 %v3576, 2147483648
    %v3578 = vmul.f32 %v3577, 1.442695
    %v3579 = vpow.pop %v3578
    %v3580 = vadd.f32 %v3579, 1.0
    %v3581 = vrcp.pop %v3580
    %v3582 = vmul.f32 1.0, %v3581
    %3584 = vrot.lane.b32.xlu0 %v3573, 64
    %v3585 = vpop.permute.xlu0 %3584
    %v3587 = vmul.f32 %v3582, %v3585
    %3589 = vrot.lane.b32.xlu0 %v3587, 64
    %v3590 = vpop.permute.xlu0 %3589
    %v3592 = vadd.f32 %v3500, %v3590
    %v3593 = vtanh.pop %v3592
    %v3594 = vsub.f32 1.0, %v3582
    %3596 = vrot.lane.b32.xlu0 %v3593, 96
    %v3597 = vpop.permute.xlu0 %3596
    %v3599 = vmul.f32 %v3594, %v3597
    %v3600 = vmul.f32 %v3582, %v3499
    %v3601 = vadd.f32 %v3599, %v3600
    %v3602 = vld [vmem:[#allocation2 + $0x34] sm:$0x3]
    %3604 = vrot.lane.b32.xlu0 %v3601, 96
    %v3605 = vpop.permute.xlu0 %3604
    %v3606 = vsel %vm336, %v3605, 0
    %3608 = vmatprep.subr.mxu0 0.0
    %3609 = vmatpush1.msra.mxu0 %v47
    %3610 = vmatprep.subr.mxu0 0.0
    %3611 = vmatpush1.msra.mxu0 %v48
    %3612 = vmatprep.subr.mxu0 0.0
    %3613 = vmatpush1.msra.mxu0 %v49
    %3614 = vmatprep.subr.mxu0 0.0
    %3615 = vmatpush1.msra.mxu0 %v50
    %3616 = vmatprep.subr.mxu0 0.0
    %3617 = vmatpush1.msra.mxu0 0.0
    %3618 = vmatprep.subr.mxu0 0.0
    %3619 = vmatpush1.msra.mxu0 0.0
    %3620 = vmatprep.subr.mxu0 0.0
    %3621 = vmatpush1.msra.mxu0 0.0
    %3622 = vmatprep.subr.mxu0 0.0
    %3623 = vmatpush1.msra.mxu0 0.0
    %3624 = vmatprep.subr.mxu0 0.0
    %3625 = vmatpush1.msra.mxu0 0.0
    %3626 = vmatprep.subr.mxu0 0.0
    %3627 = vmatpush1.msra.mxu0 0.0
    %3628 = vmatprep.subr.mxu0 0.0
    %3629 = vmatpush1.msra.mxu0 0.0
    %3630 = vmatprep.subr.mxu0 0.0
    %3631 = vmatpush1.msra.mxu0 0.0
    %3632 = vmatprep.subr.mxu0 0.0
    %3633 = vmatpush1.msra.mxu0 0.0
    %3634 = vmatprep.subr.mxu0 0.0
    %3635 = vmatpush1.msra.mxu0 0.0
    %3636 = vmatprep.subr.mxu0 0.0
    %3637 = vmatpush1.msra.mxu0 0.0
    %3638 = vmatprep.subr.mxu0 0.0
    %3639 = vmatpush1.msra.mxu0 0.0
    %3640 = vmatprep.subr.mxu0 0.0
    %3641 = vmatpush1.msra.mxu0 0.0
    %3642 = vmatprep.subr.mxu0 0.0
    %3643 = vmatpush1.msra.mxu0 0.0
    %3644 = vmatprep.subr.mxu0 0.0
    %3645 = vmatpush1.msra.mxu0 0.0
    %3646 = vmatprep.subr.mxu0 0.0
    %3647 = vmatpush1.msra.mxu0 0.0
    %3648 = vmatprep.subr.mxu0 0.0
    %3649 = vmatpush1.msra.mxu0 0.0
    %3650 = vmatprep.subr.mxu0 0.0
    %3651 = vmatpush1.msra.mxu0 0.0
    %3652 = vmatprep.subr.mxu0 0.0
    %3653 = vmatpush1.msra.mxu0 0.0
    %3654 = vmatprep.subr.mxu0 0.0
    %3655 = vmatpush1.msra.mxu0 0.0
    %3656 = vmatprep.subr.mxu0 0.0
    %3657 = vmatpush1.msra.mxu0 0.0
    %3658 = vmatprep.subr.mxu0 0.0
    %3659 = vmatpush1.msra.mxu0 0.0
    %3660 = vmatprep.subr.mxu0 0.0
    %3661 = vmatpush1.msra.mxu0 0.0
    %3662 = vmatprep.subr.mxu0 0.0
    %3663 = vmatpush1.msra.mxu0 0.0
    %3664 = vmatprep.subr.mxu0 0.0
    %3665 = vmatpush1.msra.mxu0 0.0
    %3666 = vmatprep.subr.mxu0 0.0
    %3667 = vmatpush1.msra.mxu0 0.0
    %3668 = vmatprep.subr.mxu0 0.0
    %3669 = vmatpush1.msra.mxu0 0.0
    %3670 = vmatprep.subr.mxu0 0.0
    %3671 = vmatpush1.msra.mxu0 0.0
    %3672 = vmatprep.mubr.f32.mxu0 0.0
    %3673 = vmatmul.mubr.f32.gmra.mrb[0].mxu0 %v3606
    %v3674 = vpop.f32.mrb[0].mxu0
    %v3675 = vadd.f32 %v335, %v3674
    %v3676 = vpop.f32.mrb[0].mxu0
    %3677 = vdwg.mxu0
    %v3678 = vadd.f32 %v3602, %v3675
    %v3679 = vxor.u32 %v3678, 2147483648
    %v3680 = vmul.f32 %v3679, 1.442695
    %v3681 = vpow.pop %v3680
    %v3682 = vadd.f32 %v3681, 1.0
    %v3683 = vrcp.pop %v3682
    %v3684 = vmul.f32 1.0, %v3683
    %3686 = vrot.lane.b32.xlu0 %v3675, 64
    %v3687 = vpop.permute.xlu0 %3686
    %v3689 = vmul.f32 %v3684, %v3687
    %3691 = vrot.lane.b32.xlu0 %v3689, 64
    %v3692 = vpop.permute.xlu0 %3691
    %v3694 = vadd.f32 %v3602, %v3692
    %v3695 = vtanh.pop %v3694
    %v3696 = vsub.f32 1.0, %v3684
    %3698 = vrot.lane.b32.xlu0 %v3695, 96
    %v3699 = vpop.permute.xlu0 %3698
    %v3701 = vmul.f32 %v3696, %v3699
    %v3702 = vmul.f32 %v3684, %v3601
    %v3703 = vadd.f32 %v3701, %v3702
    %v3704 = vld [vmem:[#allocation2 + $0x36] sm:$0x3]
    %3706 = vrot.lane.b32.xlu0 %v3703, 96
    %v3707 = vpop.permute.xlu0 %3706
    %v3708 = vsel %vm336, %v3707, 0
    %3710 = vmatprep.subr.mxu0 0.0
    %3711 = vmatpush1.msra.mxu0 %v47
    %3712 = vmatprep.subr.mxu0 0.0
    %3713 = vmatpush1.msra.mxu0 %v48
    %3714 = vmatprep.subr.mxu0 0.0
    %3715 = vmatpush1.msra.mxu0 %v49
    %3716 = vmatprep.subr.mxu0 0.0
    %3717 = vmatpush1.msra.mxu0 %v50
    %3718 = vmatprep.subr.mxu0 0.0
    %3719 = vmatpush1.msra.mxu0 0.0
    %3720 = vmatprep.subr.mxu0 0.0
    %3721 = vmatpush1.msra.mxu0 0.0
    %3722 = vmatprep.subr.mxu0 0.0
    %3723 = vmatpush1.msra.mxu0 0.0
    %3724 = vmatprep.subr.mxu0 0.0
    %3725 = vmatpush1.msra.mxu0 0.0
    %3726 = vmatprep.subr.mxu0 0.0
    %3727 = vmatpush1.msra.mxu0 0.0
    %3728 = vmatprep.subr.mxu0 0.0
    %3729 = vmatpush1.msra.mxu0 0.0
    %3730 = vmatprep.subr.mxu0 0.0
    %3731 = vmatpush1.msra.mxu0 0.0
    %3732 = vmatprep.subr.mxu0 0.0
    %3733 = vmatpush1.msra.mxu0 0.0
    %3734 = vmatprep.subr.mxu0 0.0
    %3735 = vmatpush1.msra.mxu0 0.0
    %3736 = vmatprep.subr.mxu0 0.0
    %3737 = vmatpush1.msra.mxu0 0.0
    %3738 = vmatprep.subr.mxu0 0.0
    %3739 = vmatpush1.msra.mxu0 0.0
    %3740 = vmatprep.subr.mxu0 0.0
    %3741 = vmatpush1.msra.mxu0 0.0
    %3742 = vmatprep.subr.mxu0 0.0
    %3743 = vmatpush1.msra.mxu0 0.0
    %3744 = vmatprep.subr.mxu0 0.0
    %3745 = vmatpush1.msra.mxu0 0.0
    %3746 = vmatprep.subr.mxu0 0.0
    %3747 = vmatpush1.msra.mxu0 0.0
    %3748 = vmatprep.subr.mxu0 0.0
    %3749 = vmatpush1.msra.mxu0 0.0
    %3750 = vmatprep.subr.mxu0 0.0
    %3751 = vmatpush1.msra.mxu0 0.0
    %3752 = vmatprep.subr.mxu0 0.0
    %3753 = vmatpush1.msra.mxu0 0.0
    %3754 = vmatprep.subr.mxu0 0.0
    %3755 = vmatpush1.msra.mxu0 0.0
    %3756 = vmatprep.subr.mxu0 0.0
    %3757 = vmatpush1.msra.mxu0 0.0
    %3758 = vmatprep.subr.mxu0 0.0
    %3759 = vmatpush1.msra.mxu0 0.0
    %3760 = vmatprep.subr.mxu0 0.0
    %3761 = vmatpush1.msra.mxu0 0.0
    %3762 = vmatprep.subr.mxu0 0.0
    %3763 = vmatpush1.msra.mxu0 0.0
    %3764 = vmatprep.subr.mxu0 0.0
    %3765 = vmatpush1.msra.mxu0 0.0
    %3766 = vmatprep.subr.mxu0 0.0
    %3767 = vmatpush1.msra.mxu0 0.0
    %3768 = vmatprep.subr.mxu0 0.0
    %3769 = vmatpush1.msra.mxu0 0.0
    %3770 = vmatprep.subr.mxu0 0.0
    %3771 = vmatpush1.msra.mxu0 0.0
    %3772 = vmatprep.subr.mxu0 0.0
    %3773 = vmatpush1.msra.mxu0 0.0
    %3774 = vmatprep.mubr.f32.mxu0 0.0
    %3775 = vmatmul.mubr.f32.gmra.mrb[0].mxu0 %v3708
    %v3776 = vpop.f32.mrb[0].mxu0
    %v3777 = vadd.f32 %v335, %v3776
    %v3778 = vpop.f32.mrb[0].mxu0
    %3779 = vdwg.mxu0
    %v3780 = vadd.f32 %v3704, %v3777
    %v3781 = vxor.u32 %v3780, 2147483648
    %v3782 = vmul.f32 %v3781, 1.442695
    %v3783 = vpow.pop %v3782
    %v3784 = vadd.f32 %v3783, 1.0
    %v3785 = vrcp.pop %v3784
    %v3786 = vmul.f32 1.0, %v3785
    %3788 = vrot.lane.b32.xlu0 %v3777, 64
    %v3789 = vpop.permute.xlu0 %3788
    %v3791 = vmul.f32 %v3786, %v3789
    %3793 = vrot.lane.b32.xlu0 %v3791, 64
    %v3794 = vpop.permute.xlu0 %3793
    %v3796 = vadd.f32 %v3704, %v3794
    %v3797 = vtanh.pop %v3796
    %v3798 = vsub.f32 1.0, %v3786
    %3800 = vrot.lane.b32.xlu0 %v3797, 96
    %v3801 = vpop.permute.xlu0 %3800
    %v3803 = vmul.f32 %v3798, %v3801
    %v3804 = vmul.f32 %v3786, %v3703
    %v3805 = vadd.f32 %v3803, %v3804
    %v3806 = vld [vmem:[#allocation2 + $0x38] sm:$0x3]
    %3808 = vrot.lane.b32.xlu0 %v3805, 96
    %v3809 = vpop.permute.xlu0 %3808
    %v3810 = vsel %vm336, %v3809, 0
    %3812 = vmatprep.subr.mxu0 0.0
    %3813 = vmatpush1.msra.mxu0 %v47
    %3814 = vmatprep.subr.mxu0 0.0
    %3815 = vmatpush1.msra.mxu0 %v48
    %3816 = vmatprep.subr.mxu0 0.0
    %3817 = vmatpush1.msra.mxu0 %v49
    %3818 = vmatprep.subr.mxu0 0.0
    %3819 = vmatpush1.msra.mxu0 %v50
    %3820 = vmatprep.subr.mxu0 0.0
    %3821 = vmatpush1.msra.mxu0 0.0
    %3822 = vmatprep.subr.mxu0 0.0
    %3823 = vmatpush1.msra.mxu0 0.0
    %3824 = vmatprep.subr.mxu0 0.0
    %3825 = vmatpush1.msra.mxu0 0.0
    %3826 = vmatprep.subr.mxu0 0.0
    %3827 = vmatpush1.msra.mxu0 0.0
    %3828 = vmatprep.subr.mxu0 0.0
    %3829 = vmatpush1.msra.mxu0 0.0
    %3830 = vmatprep.subr.mxu0 0.0
    %3831 = vmatpush1.msra.mxu0 0.0
    %3832 = vmatprep.subr.mxu0 0.0
    %3833 = vmatpush1.msra.mxu0 0.0
    %3834 = vmatprep.subr.mxu0 0.0
    %3835 = vmatpush1.msra.mxu0 0.0
    %3836 = vmatprep.subr.mxu0 0.0
    %3837 = vmatpush1.msra.mxu0 0.0
    %3838 = vmatprep.subr.mxu0 0.0
    %3839 = vmatpush1.msra.mxu0 0.0
    %3840 = vmatprep.subr.mxu0 0.0
    %3841 = vmatpush1.msra.mxu0 0.0
    %3842 = vmatprep.subr.mxu0 0.0
    %3843 = vmatpush1.msra.mxu0 0.0
    %3844 = vmatprep.subr.mxu0 0.0
    %3845 = vmatpush1.msra.mxu0 0.0
    %3846 = vmatprep.subr.mxu0 0.0
    %3847 = vmatpush1.msra.mxu0 0.0
    %3848 = vmatprep.subr.mxu0 0.0
    %3849 = vmatpush1.msra.mxu0 0.0
    %3850 = vmatprep.subr.mxu0 0.0
    %3851 = vmatpush1.msra.mxu0 0.0
    %3852 = vmatprep.subr.mxu0 0.0
    %3853 = vmatpush1.msra.mxu0 0.0
    %3854 = vmatprep.subr.mxu0 0.0
    %3855 = vmatpush1.msra.mxu0 0.0
    %3856 = vmatprep.subr.mxu0 0.0
    %3857 = vmatpush1.msra.mxu0 0.0
    %3858 = vmatprep.subr.mxu0 0.0
    %3859 = vmatpush1.msra.mxu0 0.0
    %3860 = vmatprep.subr.mxu0 0.0
    %3861 = vmatpush1.msra.mxu0 0.0
    %3862 = vmatprep.subr.mxu0 0.0
    %3863 = vmatpush1.msra.mxu0 0.0
    %3864 = vmatprep.subr.mxu0 0.0
    %3865 = vmatpush1.msra.mxu0 0.0
    %3866 = vmatprep.subr.mxu0 0.0
    %3867 = vmatpush1.msra.mxu0 0.0
    %3868 = vmatprep.subr.mxu0 0.0
    %3869 = vmatpush1.msra.mxu0 0.0
    %3870 = vmatprep.subr.mxu0 0.0
    %3871 = vmatpush1.msra.mxu0 0.0
    %3872 = vmatprep.subr.mxu0 0.0
    %3873 = vmatpush1.msra.mxu0 0.0
    %3874 = vmatprep.subr.mxu0 0.0
    %3875 = vmatpush1.msra.mxu0 0.0
    %3876 = vmatprep.mubr.f32.mxu0 0.0
    %3877 = vmatmul.mubr.f32.gmra.mrb[0].mxu0 %v3810
    %v3878 = vpop.f32.mrb[0].mxu0
    %v3879 = vadd.f32 %v335, %v3878
    %v3880 = vpop.f32.mrb[0].mxu0
    %3881 = vdwg.mxu0
    %v3882 = vadd.f32 %v3806, %v3879
    %v3883 = vxor.u32 %v3882, 2147483648
    %v3884 = vmul.f32 %v3883, 1.442695
    %v3885 = vpow.pop %v3884
    %v3886 = vadd.f32 %v3885, 1.0
    %v3887 = vrcp.pop %v3886
    %v3888 = vmul.f32 1.0, %v3887
    %3890 = vrot.lane.b32.xlu0 %v3879, 64
    %v3891 = vpop.permute.xlu0 %3890
    %v3893 = vmul.f32 %v3888, %v3891
    %3895 = vrot.lane.b32.xlu0 %v3893, 64
    %v3896 = vpop.permute.xlu0 %3895
    %v3898 = vadd.f32 %v3806, %v3896
    %v3899 = vtanh.pop %v3898
    %v3900 = vsub.f32 1.0, %v3888
    %3902 = vrot.lane.b32.xlu0 %v3899, 96
    %v3903 = vpop.permute.xlu0 %3902
    %v3905 = vmul.f32 %v3900, %v3903
    %v3906 = vmul.f32 %v3888, %v3805
    %v3907 = vadd.f32 %v3905, %v3906
    %v3908 = vld [vmem:[#allocation2 + $0x3a] sm:$0x3]
    %3910 = vrot.lane.b32.xlu0 %v3907, 96
    %v3911 = vpop.permute.xlu0 %3910
    %v3912 = vsel %vm336, %v3911, 0
    %3914 = vmatprep.subr.mxu0 0.0
    %3915 = vmatpush1.msra.mxu0 %v47
    %3916 = vmatprep.subr.mxu0 0.0
    %3917 = vmatpush1.msra.mxu0 %v48
    %3918 = vmatprep.subr.mxu0 0.0
    %3919 = vmatpush1.msra.mxu0 %v49
    %3920 = vmatprep.subr.mxu0 0.0
    %3921 = vmatpush1.msra.mxu0 %v50
    %3922 = vmatprep.subr.mxu0 0.0
    %3923 = vmatpush1.msra.mxu0 0.0
    %3924 = vmatprep.subr.mxu0 0.0
    %3925 = vmatpush1.msra.mxu0 0.0
    %3926 = vmatprep.subr.mxu0 0.0
    %3927 = vmatpush1.msra.mxu0 0.0
    %3928 = vmatprep.subr.mxu0 0.0
    %3929 = vmatpush1.msra.mxu0 0.0
    %3930 = vmatprep.subr.mxu0 0.0
    %3931 = vmatpush1.msra.mxu0 0.0
    %3932 = vmatprep.subr.mxu0 0.0
    %3933 = vmatpush1.msra.mxu0 0.0
    %3934 = vmatprep.subr.mxu0 0.0
    %3935 = vmatpush1.msra.mxu0 0.0
    %3936 = vmatprep.subr.mxu0 0.0
    %3937 = vmatpush1.msra.mxu0 0.0
    %3938 = vmatprep.subr.mxu0 0.0
    %3939 = vmatpush1.msra.mxu0 0.0
    %3940 = vmatprep.subr.mxu0 0.0
    %3941 = vmatpush1.msra.mxu0 0.0
    %3942 = vmatprep.subr.mxu0 0.0
    %3943 = vmatpush1.msra.mxu0 0.0
    %3944 = vmatprep.subr.mxu0 0.0
    %3945 = vmatpush1.msra.mxu0 0.0
    %3946 = vmatprep.subr.mxu0 0.0
    %3947 = vmatpush1.msra.mxu0 0.0
    %3948 = vmatprep.subr.mxu0 0.0
    %3949 = vmatpush1.msra.mxu0 0.0
    %3950 = vmatprep.subr.mxu0 0.0
    %3951 = vmatpush1.msra.mxu0 0.0
    %3952 = vmatprep.subr.mxu0 0.0
    %3953 = vmatpush1.msra.mxu0 0.0
    %3954 = vmatprep.subr.mxu0 0.0
    %3955 = vmatpush1.msra.mxu0 0.0
    %3956 = vmatprep.subr.mxu0 0.0
    %3957 = vmatpush1.msra.mxu0 0.0
    %3958 = vmatprep.subr.mxu0 0.0
    %3959 = vmatpush1.msra.mxu0 0.0
    %3960 = vmatprep.subr.mxu0 0.0
    %3961 = vmatpush1.msra.mxu0 0.0
    %3962 = vmatprep.subr.mxu0 0.0
    %3963 = vmatpush1.msra.mxu0 0.0
    %3964 = vmatprep.subr.mxu0 0.0
    %3965 = vmatpush1.msra.mxu0 0.0
    %3966 = vmatprep.subr.mxu0 0.0
    %3967 = vmatpush1.msra.mxu0 0.0
    %3968 = vmatprep.subr.mxu0 0.0
    %3969 = vmatpush1.msra.mxu0 0.0
    %3970 = vmatprep.subr.mxu0 0.0
    %3971 = vmatpush1.msra.mxu0 0.0
    %3972 = vmatprep.subr.mxu0 0.0
    %3973 = vmatpush1.msra.mxu0 0.0
    %3974 = vmatprep.subr.mxu0 0.0
    %3975 = vmatpush1.msra.mxu0 0.0
    %3976 = vmatprep.subr.mxu0 0.0
    %3977 = vmatpush1.msra.mxu0 0.0
    %3978 = vmatprep.mubr.f32.mxu0 0.0
    %3979 = vmatmul.mubr.f32.gmra.mrb[0].mxu0 %v3912
    %v3980 = vpop.f32.mrb[0].mxu0
    %v3981 = vadd.f32 %v335, %v3980
    %v3982 = vpop.f32.mrb[0].mxu0
    %3983 = vdwg.mxu0
    %v3984 = vadd.f32 %v3908, %v3981
    %v3985 = vxor.u32 %v3984, 2147483648
    %v3986 = vmul.f32 %v3985, 1.442695
    %v3987 = vpow.pop %v3986
    %v3988 = vadd.f32 %v3987, 1.0
    %v3989 = vrcp.pop %v3988
    %v3990 = vmul.f32 1.0, %v3989
    %3992 = vrot.lane.b32.xlu0 %v3981, 64
    %v3993 = vpop.permute.xlu0 %3992
    %v3995 = vmul.f32 %v3990, %v3993
    %3997 = vrot.lane.b32.xlu0 %v3995, 64
    %v3998 = vpop.permute.xlu0 %3997
    %v4000 = vadd.f32 %v3908, %v3998
    %v4001 = vtanh.pop %v4000
    %v4002 = vsub.f32 1.0, %v3990
    %4004 = vrot.lane.b32.xlu0 %v4001, 96
    %v4005 = vpop.permute.xlu0 %4004
    %v4007 = vmul.f32 %v4002, %v4005
    %v4008 = vmul.f32 %v3990, %v3907
    %v4009 = vadd.f32 %v4007, %v4008
    %v4010 = vld [vmem:[#allocation2 + $0x3c] sm:$0x3]
    %4012 = vrot.lane.b32.xlu0 %v4009, 96
    %v4013 = vpop.permute.xlu0 %4012
    %v4014 = vsel %vm336, %v4013, 0
    %4016 = vmatprep.subr.mxu0 0.0
    %4017 = vmatpush1.msra.mxu0 %v47
    %4018 = vmatprep.subr.mxu0 0.0
    %4019 = vmatpush1.msra.mxu0 %v48
    %4020 = vmatprep.subr.mxu0 0.0
    %4021 = vmatpush1.msra.mxu0 %v49
    %4022 = vmatprep.subr.mxu0 0.0
    %4023 = vmatpush1.msra.mxu0 %v50
    %4024 = vmatprep.subr.mxu0 0.0
    %4025 = vmatpush1.msra.mxu0 0.0
    %4026 = vmatprep.subr.mxu0 0.0
    %4027 = vmatpush1.msra.mxu0 0.0
    %4028 = vmatprep.subr.mxu0 0.0
    %4029 = vmatpush1.msra.mxu0 0.0
    %4030 = vmatprep.subr.mxu0 0.0
    %4031 = vmatpush1.msra.mxu0 0.0
    %4032 = vmatprep.subr.mxu0 0.0
    %4033 = vmatpush1.msra.mxu0 0.0
    %4034 = vmatprep.subr.mxu0 0.0
    %4035 = vmatpush1.msra.mxu0 0.0
    %4036 = vmatprep.subr.mxu0 0.0
    %4037 = vmatpush1.msra.mxu0 0.0
    %4038 = vmatprep.subr.mxu0 0.0
    %4039 = vmatpush1.msra.mxu0 0.0
    %4040 = vmatprep.subr.mxu0 0.0
    %4041 = vmatpush1.msra.mxu0 0.0
    %4042 = vmatprep.subr.mxu0 0.0
    %4043 = vmatpush1.msra.mxu0 0.0
    %4044 = vmatprep.subr.mxu0 0.0
    %4045 = vmatpush1.msra.mxu0 0.0
    %4046 = vmatprep.subr.mxu0 0.0
    %4047 = vmatpush1.msra.mxu0 0.0
    %4048 = vmatprep.subr.mxu0 0.0
    %4049 = vmatpush1.msra.mxu0 0.0
    %4050 = vmatprep.subr.mxu0 0.0
    %4051 = vmatpush1.msra.mxu0 0.0
    %4052 = vmatprep.subr.mxu0 0.0
    %4053 = vmatpush1.msra.mxu0 0.0
    %4054 = vmatprep.subr.mxu0 0.0
    %4055 = vmatpush1.msra.mxu0 0.0
    %4056 = vmatprep.subr.mxu0 0.0
    %4057 = vmatpush1.msra.mxu0 0.0
    %4058 = vmatprep.subr.mxu0 0.0
    %4059 = vmatpush1.msra.mxu0 0.0
    %4060 = vmatprep.subr.mxu0 0.0
    %4061 = vmatpush1.msra.mxu0 0.0
    %4062 = vmatprep.subr.mxu0 0.0
    %4063 = vmatpush1.msra.mxu0 0.0
    %4064 = vmatprep.subr.mxu0 0.0
    %4065 = vmatpush1.msra.mxu0 0.0
    %4066 = vmatprep.subr.mxu0 0.0
    %4067 = vmatpush1.msra.mxu0 0.0
    %4068 = vmatprep.subr.mxu0 0.0
    %4069 = vmatpush1.msra.mxu0 0.0
    %4070 = vmatprep.subr.mxu0 0.0
    %4071 = vmatpush1.msra.mxu0 0.0
    %4072 = vmatprep.subr.mxu0 0.0
    %4073 = vmatpush1.msra.mxu0 0.0
    %4074 = vmatprep.subr.mxu0 0.0
    %4075 = vmatpush1.msra.mxu0 0.0
    %4076 = vmatprep.subr.mxu0 0.0
    %4077 = vmatpush1.msra.mxu0 0.0
    %4078 = vmatprep.subr.mxu0 0.0
    %4079 = vmatpush1.msra.mxu0 0.0
    %4080 = vmatprep.mubr.f32.mxu0 0.0
    %4081 = vmatmul.mubr.f32.gmra.mrb[0].mxu0 %v4014
    %v4082 = vpop.f32.mrb[0].mxu0
    %v4083 = vadd.f32 %v335, %v4082
    %v4084 = vpop.f32.mrb[0].mxu0
    %4085 = vdwg.mxu0
    %v4086 = vadd.f32 %v4010, %v4083
    %v4087 = vxor.u32 %v4086, 2147483648
    %v4088 = vmul.f32 %v4087, 1.442695
    %v4089 = vpow.pop %v4088
    %v4090 = vadd.f32 %v4089, 1.0
    %v4091 = vrcp.pop %v4090
    %v4092 = vmul.f32 1.0, %v4091
    %4094 = vrot.lane.b32.xlu0 %v4083, 64
    %v4095 = vpop.permute.xlu0 %4094
    %v4097 = vmul.f32 %v4092, %v4095
    %4099 = vrot.lane.b32.xlu0 %v4097, 64
    %v4100 = vpop.permute.xlu0 %4099
    %v4102 = vadd.f32 %v4010, %v4100
    %v4103 = vtanh.pop %v4102
    %v4104 = vsub.f32 1.0, %v4092
    %4106 = vrot.lane.b32.xlu0 %v4103, 96
    %v4107 = vpop.permute.xlu0 %4106
    %v4109 = vmul.f32 %v4104, %v4107
    %v4110 = vmul.f32 %v4092, %v4009
    %v4111 = vadd.f32 %v4109, %v4110
    %v4112 = vld [vmem:[#allocation2 + $0x3e] sm:$0x3]
    %4114 = vrot.lane.b32.xlu0 %v4111, 96
    %v4115 = vpop.permute.xlu0 %4114
    %v4116 = vsel %vm336, %v4115, 0
    %4118 = vmatprep.subr.mxu0 0.0
    %4119 = vmatpush1.msra.mxu0 %v47
    %4120 = vmatprep.subr.mxu0 0.0
    %4121 = vmatpush1.msra.mxu0 %v48
    %4122 = vmatprep.subr.mxu0 0.0
    %4123 = vmatpush1.msra.mxu0 %v49
    %4124 = vmatprep.subr.mxu0 0.0
    %4125 = vmatpush1.msra.mxu0 %v50
    %4126 = vmatprep.subr.mxu0 0.0
    %4127 = vmatpush1.msra.mxu0 0.0
    %4128 = vmatprep.subr.mxu0 0.0
    %4129 = vmatpush1.msra.mxu0 0.0
    %4130 = vmatprep.subr.mxu0 0.0
    %4131 = vmatpush1.msra.mxu0 0.0
    %4132 = vmatprep.subr.mxu0 0.0
    %4133 = vmatpush1.msra.mxu0 0.0
    %4134 = vmatprep.subr.mxu0 0.0
    %4135 = vmatpush1.msra.mxu0 0.0
    %4136 = vmatprep.subr.mxu0 0.0
    %4137 = vmatpush1.msra.mxu0 0.0
    %4138 = vmatprep.subr.mxu0 0.0
    %4139 = vmatpush1.msra.mxu0 0.0
    %4140 = vmatprep.subr.mxu0 0.0
    %4141 = vmatpush1.msra.mxu0 0.0
    %4142 = vmatprep.subr.mxu0 0.0
    %4143 = vmatpush1.msra.mxu0 0.0
    %4144 = vmatprep.subr.mxu0 0.0
    %4145 = vmatpush1.msra.mxu0 0.0
    %4146 = vmatprep.subr.mxu0 0.0
    %4147 = vmatpush1.msra.mxu0 0.0
    %4148 = vmatprep.subr.mxu0 0.0
    %4149 = vmatpush1.msra.mxu0 0.0
    %4150 = vmatprep.subr.mxu0 0.0
    %4151 = vmatpush1.msra.mxu0 0.0
    %4152 = vmatprep.subr.mxu0 0.0
    %4153 = vmatpush1.msra.mxu0 0.0
    %4154 = vmatprep.subr.mxu0 0.0
    %4155 = vmatpush1.msra.mxu0 0.0
    %4156 = vmatprep.subr.mxu0 0.0
    %4157 = vmatpush1.msra.mxu0 0.0
    %4158 = vmatprep.subr.mxu0 0.0
    %4159 = vmatpush1.msra.mxu0 0.0
    %4160 = vmatprep.subr.mxu0 0.0
    %4161 = vmatpush1.msra.mxu0 0.0
    %4162 = vmatprep.subr.mxu0 0.0
    %4163 = vmatpush1.msra.mxu0 0.0
    %4164 = vmatprep.subr.mxu0 0.0
    %4165 = vmatpush1.msra.mxu0 0.0
    %4166 = vmatprep.subr.mxu0 0.0
    %4167 = vmatpush1.msra.mxu0 0.0
    %4168 = vmatprep.subr.mxu0 0.0
    %4169 = vmatpush1.msra.mxu0 0.0
    %4170 = vmatprep.subr.mxu0 0.0
    %4171 = vmatpush1.msra.mxu0 0.0
    %4172 = vmatprep.subr.mxu0 0.0
    %4173 = vmatpush1.msra.mxu0 0.0
    %4174 = vmatprep.subr.mxu0 0.0
    %4175 = vmatpush1.msra.mxu0 0.0
    %4176 = vmatprep.subr.mxu0 0.0
    %4177 = vmatpush1.msra.mxu0 0.0
    %4178 = vmatprep.subr.mxu0 0.0
    %4179 = vmatpush1.msra.mxu0 0.0
    %4180 = vmatprep.subr.mxu0 0.0
    %4181 = vmatpush1.msra.mxu0 0.0
    %4182 = vmatprep.mubr.f32.mxu0 0.0
    %4183 = vmatmul.mubr.f32.gmra.mrb[0].mxu0 %v4116
    %v4184 = vpop.f32.mrb[0].mxu0
    %v4185 = vadd.f32 %v335, %v4184
    %v4186 = vpop.f32.mrb[0].mxu0
    %4187 = vdwg.mxu0
    %v4188 = vadd.f32 %v4112, %v4185
    %v4189 = vxor.u32 %v4188, 2147483648
    %v4190 = vmul.f32 %v4189, 1.442695
    %v4191 = vpow.pop %v4190
    %v4192 = vadd.f32 %v4191, 1.0
    %v4193 = vrcp.pop %v4192
    %v4194 = vmul.f32 1.0, %v4193
    %4196 = vrot.lane.b32.xlu0 %v4185, 64
    %v4197 = vpop.permute.xlu0 %4196
    %v4199 = vmul.f32 %v4194, %v4197
    %4201 = vrot.lane.b32.xlu0 %v4199, 64
    %v4202 = vpop.permute.xlu0 %4201
    %v4204 = vadd.f32 %v4112, %v4202
    %v4205 = vtanh.pop %v4204
    %v4206 = vsub.f32 1.0, %v4194
    %4208 = vrot.lane.b32.xlu0 %v4205, 96
    %v4209 = vpop.permute.xlu0 %4208
    %v4211 = vmul.f32 %v4206, %v4209
    %v4212 = vmul.f32 %v4194, %v4111
    %v4213 = vadd.f32 %v4211, %v4212
    %4216 = vrot.lane.b32.xlu0 %v4213, 96
    %v4217 = vpop.permute.xlu0 %4216
    %v4219 = vsel %vm1150, %v3503, %v4217
    %v4222 = vsel %vm1150, %v3605, %v4115
    %v4225 = vsel %vm1150, %v3707, %v4013
    %v4228 = vsel %vm1150, %v3809, %v3911
    %v4229 = vsel %vm1150, %v3911, %v3809
    %v4230 = vsel %vm1150, %v4013, %v3707
    %v4231 = vsel %vm1150, %v4115, %v3605
    %v4232 = vsel %vm1150, %v4217, %v3503
    %v4234 = vrot.slane %v4222, 6
    %v4237 = vrot.slane %v4225, 4
    %v4240 = vrot.slane %v4228, 2
    %v4243 = vrot.slane %v4230, 6
    %v4246 = vrot.slane %v4231, 4
    %v4249 = vrot.slane %v4232, 2
    %v4251 = vsel %vm1188, %v4219, %v4234
    %v4252 = vsel %vm1190, %v4251, %v4237
    %v4253 = vsel %vm1192, %v4252, %v4240
    %v4254 = vsel %vm1188, %v4229, %v4243
    %v4255 = vsel %vm1190, %v4254, %v4246
    %v4256 = vsel %vm1192, %v4255, %v4249
    %v4258 = vsel %vm336, %v4253, 0
    %v4261 = vsel %vm336, %v4256, 0
    %4263 = vmatprep.subr.mxu0 0.0
    %4264 = vmatpush1.msra.mxu0 %v52
    %4265 = vmatprep.subr.mxu0 0.0
    %4266 = vmatpush1.msra.mxu0 %v53
    %4267 = vmatprep.subr.mxu0 0.0
    %4268 = vmatpush1.msra.mxu0 %v54
    %4269 = vmatprep.subr.mxu0 0.0
    %4270 = vmatpush1.msra.mxu0 %v55
    %4271 = vmatprep.subr.mxu0 0.0
    %4272 = vmatpush1.msra.mxu0 0.0
    %4273 = vmatprep.subr.mxu0 0.0
    %4274 = vmatpush1.msra.mxu0 0.0
    %4275 = vmatprep.subr.mxu0 0.0
    %4276 = vmatpush1.msra.mxu0 0.0
    %4277 = vmatprep.subr.mxu0 0.0
    %4278 = vmatpush1.msra.mxu0 0.0
    %4279 = vmatprep.subr.mxu0 0.0
    %4280 = vmatpush1.msra.mxu0 0.0
    %4281 = vmatprep.subr.mxu0 0.0
    %4282 = vmatpush1.msra.mxu0 0.0
    %4283 = vmatprep.subr.mxu0 0.0
    %4284 = vmatpush1.msra.mxu0 0.0
    %4285 = vmatprep.subr.mxu0 0.0
    %4286 = vmatpush1.msra.mxu0 0.0
    %4287 = vmatprep.subr.mxu0 0.0
    %4288 = vmatpush1.msra.mxu0 0.0
    %4289 = vmatprep.subr.mxu0 0.0
    %4290 = vmatpush1.msra.mxu0 0.0
    %4291 = vmatprep.subr.mxu0 0.0
    %4292 = vmatpush1.msra.mxu0 0.0
    %4293 = vmatprep.subr.mxu0 0.0
    %4294 = vmatpush1.msra.mxu0 0.0
    %4295 = vmatprep.subr.mxu0 0.0
    %4296 = vmatpush1.msra.mxu0 0.0
    %4297 = vmatprep.subr.mxu0 0.0
    %4298 = vmatpush1.msra.mxu0 0.0
    %4299 = vmatprep.subr.mxu0 0.0
    %4300 = vmatpush1.msra.mxu0 0.0
    %4301 = vmatprep.subr.mxu0 0.0
    %4302 = vmatpush1.msra.mxu0 0.0
    %4303 = vmatprep.subr.mxu0 0.0
    %4304 = vmatpush1.msra.mxu0 0.0
    %4305 = vmatprep.subr.mxu0 0.0
    %4306 = vmatpush1.msra.mxu0 0.0
    %4307 = vmatprep.subr.mxu0 0.0
    %4308 = vmatpush1.msra.mxu0 0.0
    %4309 = vmatprep.subr.mxu0 0.0
    %4310 = vmatpush1.msra.mxu0 0.0
    %4311 = vmatprep.subr.mxu0 0.0
    %4312 = vmatpush1.msra.mxu0 0.0
    %4313 = vmatprep.subr.mxu0 0.0
    %4314 = vmatpush1.msra.mxu0 0.0
    %4315 = vmatprep.subr.mxu0 0.0
    %4316 = vmatpush1.msra.mxu0 0.0
    %4317 = vmatprep.subr.mxu0 0.0
    %4318 = vmatpush1.msra.mxu0 0.0
    %4319 = vmatprep.subr.mxu0 0.0
    %4320 = vmatpush1.msra.mxu0 0.0
    %4321 = vmatprep.subr.mxu0 0.0
    %4322 = vmatpush1.msra.mxu0 0.0
    %4323 = vmatprep.subr.mxu0 0.0
    %4324 = vmatpush1.msra.mxu0 0.0
    %4325 = vmatprep.subr.mxu0 0.0
    %4326 = vmatpush1.msra.mxu0 0.0
    %4327 = vmatprep.mubr.f32.mxu0 0.0
    %4328 = vmatmul.mubr.f32.gmra.mrb[0].mxu0 %v4258
    %v4329 = vpop.f32.mrb[0].mxu0
    %v4330 = vadd.f32 %v1200, %v4329
    %v4331 = vpop.f32.mrb[0].mxu0
    %4332 = vmatprep.mubr.f32.mxu0 0.0
    %4333 = vmatmul.mubr.f32.gmra.mrb[0].mxu0 %v4261
    %v4334 = vpop.f32.mrb[0].mxu0
    %v4335 = vadd.f32 %v1200, %v4334
    %v4336 = vpop.f32.mrb[0].mxu0
    %4337 = vdwg.mxu0
    %v4338 = vtanh.pop %v4330
    %v4339 = vtanh.pop %v4335
    %v4340 = vmul.f32 %v4338, %v1287
    %v4341 = vmul.f32 %v4339, %v1287
    %v4342 = vsel %vm336, %v4340, 0.0
    %4343 = vadd.xlane.f32.xlu0 %v4342
    %v4344 = vpop.xlane.xlu0 %4343
    %v4345 = vsel %vm336, %v4341, 0.0
    %4346 = vadd.xlane.f32.xlu0 %v4345
    %v4347 = vpop.xlane.xlu0 %4346
    %v4348 = vtanh.pop %v4344
    %v4349 = vtanh.pop %v4347
    %v4350 = vmul.f32 %v4348, 1.442695
    %v4351 = vpow.pop %v4350
    %v4352 = vmul.f32 %v4349, 1.442695
    %v4353 = vpow.pop %v4352
    %v4354 = vmul.f32 %v4351, %v4253
    %v4355 = vmul.f32 %v4353, %v4256
    %v4357 = vrot.slane %v4354, 2
    %v4359 = vadd.f32 %v4354, %v4357
    %v4361 = vrot.slane %v4351, 2
    %v4363 = vadd.f32 %v4351, %v4361
    %v4364 = vrot.slane %v4354, 4
    %v4366 = vadd.f32 %v4359, %v4364
    %v4367 = vrot.slane %v4351, 4
    %v4369 = vadd.f32 %v4363, %v4367
    %v4370 = vrot.slane %v4354, 6
    %v4372 = vadd.f32 %v4366, %v4370
    %v4373 = vrot.slane %v4351, 6
    %v4375 = vadd.f32 %v4369, %v4373
    %v4376 = vadd.f32 %v4372, %v4355
    %v4377 = vadd.f32 %v4375, %v4353
    %v4379 = vrot.slane %v4355, 2
    %v4381 = vadd.f32 %v4376, %v4379
    %v4383 = vrot.slane %v4353, 2
    %v4385 = vadd.f32 %v4377, %v4383
    %v4386 = vrot.slane %v4355, 4
    %v4388 = vadd.f32 %v4381, %v4386
    %v4389 = vrot.slane %v4353, 4
    %v4391 = vadd.f32 %v4385, %v4389
    %v4392 = vrot.slane %v4355, 6
    %v4394 = vadd.f32 %v4388, %v4392
    %v4395 = vrot.slane %v4353, 6
    %v4397 = vadd.f32 %v4391, %v4395
    %v4398 = vrcp.pop %v4397
    %v4399 = vmul.f32 1.0, %v4398
    %4401 = vset.pattern.permute.xlu0 0
    %4402 = vperm.xlu0 %4401, %v4399
    %v4403 = vpop.permute.xlu0 %4402
    %v4405 = vmul.f32 %v4394, %v4403
    %v4406 = vsel %vm1354, %v4351, %v4361
    %v4407 = vsel %vm1356, %v4406, %v4367
    %v4408 = vsel %vm1358, %v4407, %v4373
    %v4409 = vsel %vm1360, %v4408, %v4353
    %v4410 = vsel %vm1362, %v4409, %v4383
    %v4411 = vsel %vm1364, %v4410, %v4389
    %v4412 = vsel %vm1366, %v4411, %v4395
    %v4413 = vmul.f32 %v4412, %v4403
    %s4414 = scalar_lea.vmem [#allocation5], 6
    %4415 = vst.msk [vmem:[%s4414] sm:$0x3] %vm1369, %v4413
    %v4417 = vrot.slane %v2375, 6
    %v4420 = vrot.slane %v3390, 4
    %v4423 = vrot.slane %v4405, 2
    %v4425 = vsel %vm1188, %v1353, %v4417
    %v4426 = vsel %vm1190, %v4425, %v4420
    %v4427 = vsel %vm1192, %v4426, %v4423
    %v4429 = vsel %vm336, %v4427, 0
    %4431 = vmatprep.subr.mxu0 0.0
    %4432 = vmatpush1.msra.mxu0 %v57
    %4433 = vmatprep.subr.mxu0 0.0
    %4434 = vmatpush1.msra.mxu0 %v58
    %4435 = vmatprep.subr.mxu0 0.0
    %4436 = vmatpush1.msra.mxu0 %v59
    %4437 = vmatprep.subr.mxu0 0.0
    %4438 = vmatpush1.msra.mxu0 %v60
    %4439 = vmatprep.subr.mxu0 0.0
    %4440 = vmatpush1.msra.mxu0 0.0
    %4441 = vmatprep.subr.mxu0 0.0
    %4442 = vmatpush1.msra.mxu0 0.0
    %4443 = vmatprep.subr.mxu0 0.0
    %4444 = vmatpush1.msra.mxu0 0.0
    %4445 = vmatprep.subr.mxu0 0.0
    %4446 = vmatpush1.msra.mxu0 0.0
    %4447 = vmatprep.subr.mxu0 0.0
    %4448 = vmatpush1.msra.mxu0 0.0
    %4449 = vmatprep.subr.mxu0 0.0
    %4450 = vmatpush1.msra.mxu0 0.0
    %4451 = vmatprep.subr.mxu0 0.0
    %4452 = vmatpush1.msra.mxu0 0.0
    %4453 = vmatprep.subr.mxu0 0.0
    %4454 = vmatpush1.msra.mxu0 0.0
    %4455 = vmatprep.subr.mxu0 0.0
    %4456 = vmatpush1.msra.mxu0 0.0
    %4457 = vmatprep.subr.mxu0 0.0
    %4458 = vmatpush1.msra.mxu0 0.0
    %4459 = vmatprep.subr.mxu0 0.0
    %4460 = vmatpush1.msra.mxu0 0.0
    %4461 = vmatprep.subr.mxu0 0.0
    %4462 = vmatpush1.msra.mxu0 0.0
    %4463 = vmatprep.subr.mxu0 0.0
    %4464 = vmatpush1.msra.mxu0 0.0
    %4465 = vmatprep.subr.mxu0 0.0
    %4466 = vmatpush1.msra.mxu0 0.0
    %4467 = vmatprep.subr.mxu0 0.0
    %4468 = vmatpush1.msra.mxu0 0.0
    %4469 = vmatprep.subr.mxu0 0.0
    %4470 = vmatpush1.msra.mxu0 0.0
    %4471 = vmatprep.subr.mxu0 0.0
    %4472 = vmatpush1.msra.mxu0 0.0
    %4473 = vmatprep.subr.mxu0 0.0
    %4474 = vmatpush1.msra.mxu0 0.0
    %4475 = vmatprep.subr.mxu0 0.0
    %4476 = vmatpush1.msra.mxu0 0.0
    %4477 = vmatprep.subr.mxu0 0.0
    %4478 = vmatpush1.msra.mxu0 0.0
    %4479 = vmatprep.subr.mxu0 0.0
    %4480 = vmatpush1.msra.mxu0 0.0
    %4481 = vmatprep.subr.mxu0 0.0
    %4482 = vmatpush1.msra.mxu0 0.0
    %4483 = vmatprep.subr.mxu0 0.0
    %4484 = vmatpush1.msra.mxu0 0.0
    %4485 = vmatprep.subr.mxu0 0.0
    %4486 = vmatpush1.msra.mxu0 0.0
    %4487 = vmatprep.subr.mxu0 0.0
    %4488 = vmatpush1.msra.mxu0 0.0
    %4489 = vmatprep.subr.mxu0 0.0
    %4490 = vmatpush1.msra.mxu0 0.0
    %4491 = vmatprep.subr.mxu0 0.0
    %4492 = vmatpush1.msra.mxu0 0.0
    %4493 = vmatprep.subr.mxu0 0.0
    %4494 = vmatpush1.msra.mxu0 0.0
    %4495 = vmatprep.mubr.f32.mxu0 0.0
    %4496 = vmatmul.mubr.f32.gmra.mrb[0].mxu0 %v4429
    %v4497 = vpop.f32.mrb[0].mxu0
    %v4498 = vadd.f32 0.0, %v4497
    %v4499 = vpop.f32.mrb[0].mxu0
    %4500 = vdwg.mxu0
    %4501 = vmatprep.subr.mxu0 0.0
    %4502 = vmatpush1.msra.mxu0 %v61
    %4503 = vmatprep.subr.mxu0 0.0
    %4504 = vmatpush1.msra.mxu0 %v62
    %4505 = vmatprep.subr.mxu0 0.0
    %4506 = vmatpush1.msra.mxu0 %v63
    %4507 = vmatprep.subr.mxu0 0.0
    %4508 = vmatpush1.msra.mxu0 %v64
    %4509 = vmatprep.subr.mxu0 0.0
    %4510 = vmatpush1.msra.mxu0 0.0
    %4511 = vmatprep.subr.mxu0 0.0
    %4512 = vmatpush1.msra.mxu0 0.0
    %4513 = vmatprep.subr.mxu0 0.0
    %4514 = vmatpush1.msra.mxu0 0.0
    %4515 = vmatprep.subr.mxu0 0.0
    %4516 = vmatpush1.msra.mxu0 0.0
    %4517 = vmatprep.subr.mxu0 0.0
    %4518 = vmatpush1.msra.mxu0 0.0
    %4519 = vmatprep.subr.mxu0 0.0
    %4520 = vmatpush1.msra.mxu0 0.0
    %4521 = vmatprep.subr.mxu0 0.0
    %4522 = vmatpush1.msra.mxu0 0.0
    %4523 = vmatprep.subr.mxu0 0.0
    %4524 = vmatpush1.msra.mxu0 0.0
    %4525 = vmatprep.subr.mxu0 0.0
    %4526 = vmatpush1.msra.mxu0 0.0
    %4527 = vmatprep.subr.mxu0 0.0
    %4528 = vmatpush1.msra.mxu0 0.0
    %4529 = vmatprep.subr.mxu0 0.0
    %4530 = vmatpush1.msra.mxu0 0.0
    %4531 = vmatprep.subr.mxu0 0.0
    %4532 = vmatpush1.msra.mxu0 0.0
    %4533 = vmatprep.subr.mxu0 0.0
    %4534 = vmatpush1.msra.mxu0 0.0
    %4535 = vmatprep.subr.mxu0 0.0
    %4536 = vmatpush1.msra.mxu0 0.0
    %4537 = vmatprep.subr.mxu0 0.0
    %4538 = vmatpush1.msra.mxu0 0.0
    %4539 = vmatprep.subr.mxu0 0.0
    %4540 = vmatpush1.msra.mxu0 0.0
    %4541 = vmatprep.subr.mxu0 0.0
    %4542 = vmatpush1.msra.mxu0 0.0
    %4543 = vmatprep.subr.mxu0 0.0
    %4544 = vmatpush1.msra.mxu0 0.0
    %4545 = vmatprep.subr.mxu0 0.0
    %4546 = vmatpush1.msra.mxu0 0.0
    %4547 = vmatprep.subr.mxu0 0.0
    %4548 = vmatpush1.msra.mxu0 0.0
    %4549 = vmatprep.subr.mxu0 0.0
    %4550 = vmatpush1.msra.mxu0 0.0
    %4551 = vmatprep.subr.mxu0 0.0
    %4552 = vmatpush1.msra.mxu0 0.0
    %4553 = vmatprep.subr.mxu0 0.0
    %4554 = vmatpush1.msra.mxu0 0.0
    %4555 = vmatprep.subr.mxu0 0.0
    %4556 = vmatpush1.msra.mxu0 0.0
    %4557 = vmatprep.subr.mxu0 0.0
    %4558 = vmatpush1.msra.mxu0 0.0
    %4559 = vmatprep.subr.mxu0 0.0
    %4560 = vmatpush1.msra.mxu0 0.0
    %4561 = vmatprep.subr.mxu0 0.0
    %4562 = vmatpush1.msra.mxu0 0.0
    %4563 = vmatprep.subr.mxu0 0.0
    %4564 = vmatpush1.msra.mxu0 0.0
    %4565 = vmatprep.mubr.f32.mxu0 0.0
    %4566 = vmatmul.mubr.f32.gmra.mrb[0].mxu0 %v4429
    %v4567 = vpop.f32.mrb[0].mxu0
    %v4568 = vadd.f32 0.0, %v4567
    %v4569 = vpop.f32.mrb[0].mxu0
    %4570 = vdwg.mxu0
    %v4572 = vrot.slane %v4568, 6
    %v4574 = vadd.f32 %v4498, %v4572
    %v4575 = vlaneseq
    %v4576 = vshrl.u32 %v4575, 7
    %v4577 = vsub.s32 0, %v4576
    %v4578 = vrot.slane %v65, %v4577
    %v4579 = vadd.f32 %v4574, %v4578
    %v4580 = vlaneseq
    %v4581 = vshrl.u32 %v4580, 7
    %v4582 = vsub.s32 0, %v4581
    %v4583 = vrot.slane %v70, %v4582
    %4584 = vmatprep.subr.mxu0 0.0
    %4585 = vmatpush1.msra.mxu0 %v66
    %4586 = vmatprep.subr.mxu0 0.0
    %4587 = vmatpush1.msra.mxu0 %v67
    %4588 = vmatprep.subr.mxu0 0.0
    %4589 = vmatpush1.msra.mxu0 %v68
    %4590 = vmatprep.subr.mxu0 0.0
    %4591 = vmatpush1.msra.mxu0 %v69
    %4592 = vmatprep.subr.mxu0 0.0
    %4593 = vmatpush1.msra.mxu0 0.0
    %4594 = vmatprep.subr.mxu0 0.0
    %4595 = vmatpush1.msra.mxu0 0.0
    %4596 = vmatprep.subr.mxu0 0.0
    %4597 = vmatpush1.msra.mxu0 0.0
    %4598 = vmatprep.subr.mxu0 0.0
    %4599 = vmatpush1.msra.mxu0 0.0
    %4600 = vmatprep.subr.mxu0 0.0
    %4601 = vmatpush1.msra.mxu0 0.0
    %4602 = vmatprep.subr.mxu0 0.0
    %4603 = vmatpush1.msra.mxu0 0.0
    %4604 = vmatprep.subr.mxu0 0.0
    %4605 = vmatpush1.msra.mxu0 0.0
    %4606 = vmatprep.subr.mxu0 0.0
    %4607 = vmatpush1.msra.mxu0 0.0
    %4608 = vmatprep.subr.mxu0 0.0
    %4609 = vmatpush1.msra.mxu0 0.0
    %4610 = vmatprep.subr.mxu0 0.0
    %4611 = vmatpush1.msra.mxu0 0.0
    %4612 = vmatprep.subr.mxu0 0.0
    %4613 = vmatpush1.msra.mxu0 0.0
    %4614 = vmatprep.subr.mxu0 0.0
    %4615 = vmatpush1.msra.mxu0 0.0
    %4616 = vmatprep.subr.mxu0 0.0
    %4617 = vmatpush1.msra.mxu0 0.0
    %4618 = vmatprep.subr.mxu0 0.0
    %4619 = vmatpush1.msra.mxu0 0.0
    %4620 = vmatprep.subr.mxu0 0.0
    %4621 = vmatpush1.msra.mxu0 0.0
    %4622 = vmatprep.subr.mxu0 0.0
    %4623 = vmatpush1.msra.mxu0 0.0
    %4624 = vmatprep.subr.mxu0 0.0
    %4625 = vmatpush1.msra.mxu0 0.0
    %4626 = vmatprep.subr.mxu0 0.0
    %4627 = vmatpush1.msra.mxu0 0.0
    %4628 = vmatprep.subr.mxu0 0.0
    %4629 = vmatpush1.msra.mxu0 0.0
    %4630 = vmatprep.subr.mxu0 0.0
    %4631 = vmatpush1.msra.mxu0 0.0
    %4632 = vmatprep.subr.mxu0 0.0
    %4633 = vmatpush1.msra.mxu0 0.0
    %4634 = vmatprep.subr.mxu0 0.0
    %4635 = vmatpush1.msra.mxu0 0.0
    %4636 = vmatprep.subr.mxu0 0.0
    %4637 = vmatpush1.msra.mxu0 0.0
    %4638 = vmatprep.subr.mxu0 0.0
    %4639 = vmatpush1.msra.mxu0 0.0
    %4640 = vmatprep.subr.mxu0 0.0
    %4641 = vmatpush1.msra.mxu0 0.0
    %4642 = vmatprep.subr.mxu0 0.0
    %4643 = vmatpush1.msra.mxu0 0.0
    %4644 = vmatprep.subr.mxu0 0.0
    %4645 = vmatpush1.msra.mxu0 0.0
    %4646 = vmatprep.subr.mxu0 0.0
    %4647 = vmatpush1.msra.mxu0 0.0
    %4648 = vmatprep.mubr.f32.mxu0 0.0
    %4649 = vmatmul.mubr.f32.gmra.mrb[0].mxu0 %v338
    %v4650 = vpop.f32.mrb[0].mxu0
    %v4651 = vadd.f32 %v4583, %v4650
    %v4652 = vpop.f32.mrb[0].mxu0
    %4653 = vdwg.mxu0
    %v4654 = vadd.f32 %v4579, %v4651
    %v4655 = vxor.u32 %v4654, 2147483648
    %v4656 = vmul.f32 %v4655, 1.442695
    %v4657 = vpow.pop %v4656
    %v4658 = vadd.f32 %v4657, 1.0
    %v4659 = vrcp.pop %v4658
    %v4660 = vmul.f32 1.0, %v4659
    %4662 = vrot.lane.b32.xlu0 %v4651, 64
    %v4663 = vpop.permute.xlu0 %4662
    %v4665 = vmul.f32 %v4660, %v4663
    %4667 = vrot.lane.b32.xlu0 %v4665, 64
    %v4668 = vpop.permute.xlu0 %4667
    %v4670 = vadd.f32 %v4579, %v4668
    %v4671 = vtanh.pop %v4670
    %v4672 = vsub.f32 1.0, %v4660
    %4674 = vrot.lane.b32.xlu0 %v4671, 96
    %v4675 = vpop.permute.xlu0 %4674
    %v4677 = vmul.f32 %v4672, %v4675
    %v4678 = vmul.f32 %v4660, 0.0
    %v4679 = vadd.f32 %v4677, %v4678
    %v4680 = vrot.slane %v4568, 2
    %v4682 = vadd.f32 %v4498, %v4680
    %v4683 = vadd.f32 %v4682, %v4578
    %4685 = vrot.lane.b32.xlu0 %v4679, 96
    %v4686 = vpop.permute.xlu0 %4685
    %v4687 = vsel %vm336, %v4686, 0
    %4689 = vmatprep.subr.mxu0 0.0
    %4690 = vmatpush1.msra.mxu0 %v66
    %4691 = vmatprep.subr.mxu0 0.0
    %4692 = vmatpush1.msra.mxu0 %v67
    %4693 = vmatprep.subr.mxu0 0.0
    %4694 = vmatpush1.msra.mxu0 %v68
    %4695 = vmatprep.subr.mxu0 0.0
    %4696 = vmatpush1.msra.mxu0 %v69
    %4697 = vmatprep.subr.mxu0 0.0
    %4698 = vmatpush1.msra.mxu0 0.0
    %4699 = vmatprep.subr.mxu0 0.0
    %4700 = vmatpush1.msra.mxu0 0.0
    %4701 = vmatprep.subr.mxu0 0.0
    %4702 = vmatpush1.msra.mxu0 0.0
    %4703 = vmatprep.subr.mxu0 0.0
    %4704 = vmatpush1.msra.mxu0 0.0
    %4705 = vmatprep.subr.mxu0 0.0
    %4706 = vmatpush1.msra.mxu0 0.0
    %4707 = vmatprep.subr.mxu0 0.0
    %4708 = vmatpush1.msra.mxu0 0.0
    %4709 = vmatprep.subr.mxu0 0.0
    %4710 = vmatpush1.msra.mxu0 0.0
    %4711 = vmatprep.subr.mxu0 0.0
    %4712 = vmatpush1.msra.mxu0 0.0
    %4713 = vmatprep.subr.mxu0 0.0
    %4714 = vmatpush1.msra.mxu0 0.0
    %4715 = vmatprep.subr.mxu0 0.0
    %4716 = vmatpush1.msra.mxu0 0.0
    %4717 = vmatprep.subr.mxu0 0.0
    %4718 = vmatpush1.msra.mxu0 0.0
    %4719 = vmatprep.subr.mxu0 0.0
    %4720 = vmatpush1.msra.mxu0 0.0
    %4721 = vmatprep.subr.mxu0 0.0
    %4722 = vmatpush1.msra.mxu0 0.0
    %4723 = vmatprep.subr.mxu0 0.0
    %4724 = vmatpush1.msra.mxu0 0.0
    %4725 = vmatprep.subr.mxu0 0.0
    %4726 = vmatpush1.msra.mxu0 0.0
    %4727 = vmatprep.subr.mxu0 0.0
    %4728 = vmatpush1.msra.mxu0 0.0
    %4729 = vmatprep.subr.mxu0 0.0
    %4730 = vmatpush1.msra.mxu0 0.0
    %4731 = vmatprep.subr.mxu0 0.0
    %4732 = vmatpush1.msra.mxu0 0.0
    %4733 = vmatprep.subr.mxu0 0.0
    %4734 = vmatpush1.msra.mxu0 0.0
    %4735 = vmatprep.subr.mxu0 0.0
    %4736 = vmatpush1.msra.mxu0 0.0
    %4737 = vmatprep.subr.mxu0 0.0
    %4738 = vmatpush1.msra.mxu0 0.0
    %4739 = vmatprep.subr.mxu0 0.0
    %4740 = vmatpush1.msra.mxu0 0.0
    %4741 = vmatprep.subr.mxu0 0.0
    %4742 = vmatpush1.msra.mxu0 0.0
    %4743 = vmatprep.subr.mxu0 0.0
    %4744 = vmatpush1.msra.mxu0 0.0
    %4745 = vmatprep.subr.mxu0 0.0
    %4746 = vmatpush1.msra.mxu0 0.0
    %4747 = vmatprep.subr.mxu0 0.0
    %4748 = vmatpush1.msra.mxu0 0.0
    %4749 = vmatprep.subr.mxu0 0.0
    %4750 = vmatpush1.msra.mxu0 0.0
    %4751 = vmatprep.subr.mxu0 0.0
    %4752 = vmatpush1.msra.mxu0 0.0
    %4753 = vmatprep.mubr.f32.mxu0 0.0
    %4754 = vmatmul.mubr.f32.gmra.mrb[0].mxu0 %v4687
    %v4755 = vpop.f32.mrb[0].mxu0
    %v4756 = vadd.f32 %v4583, %v4755
    %v4757 = vpop.f32.mrb[0].mxu0
    %4758 = vdwg.mxu0
    %v4760 = vrot.slane %v4756, 6
    %v4762 = vadd.f32 %v4683, %v4760
    %v4763 = vxor.u32 %v4762, 2147483648
    %v4764 = vmul.f32 %v4763, 1.442695
    %v4765 = vpow.pop %v4764
    %v4766 = vadd.f32 %v4765, 1.0
    %v4767 = vrcp.pop %v4766
    %v4768 = vmul.f32 1.0, %v4767
    %4769 = vrot.lane.b32.xlu0 %v4760, 64
    %v4770 = vpop.permute.xlu0 %4769
    %v4772 = vmul.f32 %v4768, %v4770
    %4774 = vrot.lane.b32.xlu0 %v4772, 64
    %v4775 = vpop.permute.xlu0 %4774
    %v4777 = vadd.f32 %v4683, %v4775
    %v4778 = vtanh.pop %v4777
    %v4779 = vsub.f32 1.0, %v4768
    %4781 = vrot.lane.b32.xlu0 %v4778, 96
    %v4782 = vpop.permute.xlu0 %4781
    %v4784 = vmul.f32 %v4779, %v4782
    %v4785 = vrot.slane %v4679, 6
    %v4787 = vmul.f32 %v4768, %v4785
    %v4788 = vadd.f32 %v4784, %v4787
    %v4790 = vrot.slane %v4788, 2
    %4791 = vrot.lane.b32.xlu0 %v4790, 96
    %v4792 = vpop.permute.xlu0 %4791
    %v4793 = vsel %vm336, %v4792, 0
    %4795 = vmatprep.subr.mxu0 0.0
    %4796 = vmatpush1.msra.mxu0 %v66
    %4797 = vmatprep.subr.mxu0 0.0
    %4798 = vmatpush1.msra.mxu0 %v67
    %4799 = vmatprep.subr.mxu0 0.0
    %4800 = vmatpush1.msra.mxu0 %v68
    %4801 = vmatprep.subr.mxu0 0.0
    %4802 = vmatpush1.msra.mxu0 %v69
    %4803 = vmatprep.subr.mxu0 0.0
    %4804 = vmatpush1.msra.mxu0 0.0
    %4805 = vmatprep.subr.mxu0 0.0
    %4806 = vmatpush1.msra.mxu0 0.0
    %4807 = vmatprep.subr.mxu0 0.0
    %4808 = vmatpush1.msra.mxu0 0.0
    %4809 = vmatprep.subr.mxu0 0.0
    %4810 = vmatpush1.msra.mxu0 0.0
    %4811 = vmatprep.subr.mxu0 0.0
    %4812 = vmatpush1.msra.mxu0 0.0
    %4813 = vmatprep.subr.mxu0 0.0
    %4814 = vmatpush1.msra.mxu0 0.0
    %4815 = vmatprep.subr.mxu0 0.0
    %4816 = vmatpush1.msra.mxu0 0.0
    %4817 = vmatprep.subr.mxu0 0.0
    %4818 = vmatpush1.msra.mxu0 0.0
    %4819 = vmatprep.subr.mxu0 0.0
    %4820 = vmatpush1.msra.mxu0 0.0
    %4821 = vmatprep.subr.mxu0 0.0
    %4822 = vmatpush1.msra.mxu0 0.0
    %4823 = vmatprep.subr.mxu0 0.0
    %4824 = vmatpush1.msra.mxu0 0.0
    %4825 = vmatprep.subr.mxu0 0.0
    %4826 = vmatpush1.msra.mxu0 0.0
    %4827 = vmatprep.subr.mxu0 0.0
    %4828 = vmatpush1.msra.mxu0 0.0
    %4829 = vmatprep.subr.mxu0 0.0
    %4830 = vmatpush1.msra.mxu0 0.0
    %4831 = vmatprep.subr.mxu0 0.0
    %4832 = vmatpush1.msra.mxu0 0.0
    %4833 = vmatprep.subr.mxu0 0.0
    %4834 = vmatpush1.msra.mxu0 0.0
    %4835 = vmatprep.subr.mxu0 0.0
    %4836 = vmatpush1.msra.mxu0 0.0
    %4837 = vmatprep.subr.mxu0 0.0
    %4838 = vmatpush1.msra.mxu0 0.0
    %4839 = vmatprep.subr.mxu0 0.0
    %4840 = vmatpush1.msra.mxu0 0.0
    %4841 = vmatprep.subr.mxu0 0.0
    %4842 = vmatpush1.msra.mxu0 0.0
    %4843 = vmatprep.subr.mxu0 0.0
    %4844 = vmatpush1.msra.mxu0 0.0
    %4845 = vmatprep.subr.mxu0 0.0
    %4846 = vmatpush1.msra.mxu0 0.0
    %4847 = vmatprep.subr.mxu0 0.0
    %4848 = vmatpush1.msra.mxu0 0.0
    %4849 = vmatprep.subr.mxu0 0.0
    %4850 = vmatpush1.msra.mxu0 0.0
    %4851 = vmatprep.subr.mxu0 0.0
    %4852 = vmatpush1.msra.mxu0 0.0
    %4853 = vmatprep.subr.mxu0 0.0
    %4854 = vmatpush1.msra.mxu0 0.0
    %4855 = vmatprep.subr.mxu0 0.0
    %4856 = vmatpush1.msra.mxu0 0.0
    %4857 = vmatprep.subr.mxu0 0.0
    %4858 = vmatpush1.msra.mxu0 0.0
    %4859 = vmatprep.mubr.f32.mxu0 0.0
    %4860 = vmatmul.mubr.f32.gmra.mrb[0].mxu0 %v4793
    %v4861 = vpop.f32.mrb[0].mxu0
    %v4862 = vadd.f32 %v4583, %v4861
    %v4863 = vpop.f32.mrb[0].mxu0
    %4864 = vdwg.mxu0
    %v4866 = vrot.slane %v4862, 4
    %v4868 = vadd.f32 %v4579, %v4866
    %v4869 = vxor.u32 %v4868, 2147483648
    %v4870 = vmul.f32 %v4869, 1.442695
    %v4871 = vpow.pop %v4870
    %v4872 = vadd.f32 %v4871, 1.0
    %v4873 = vrcp.pop %v4872
    %v4874 = vmul.f32 1.0, %v4873
    %4875 = vrot.lane.b32.xlu0 %v4866, 64
    %v4876 = vpop.permute.xlu0 %4875
    %v4878 = vmul.f32 %v4874, %v4876
    %4880 = vrot.lane.b32.xlu0 %v4878, 64
    %v4881 = vpop.permute.xlu0 %4880
    %v4883 = vadd.f32 %v4579, %v4881
    %v4884 = vtanh.pop %v4883
    %v4885 = vsub.f32 1.0, %v4874
    %4887 = vrot.lane.b32.xlu0 %v4884, 96
    %v4888 = vpop.permute.xlu0 %4887
    %v4890 = vmul.f32 %v4885, %v4888
    %v4891 = vrot.slane %v4788, 6
    %v4893 = vmul.f32 %v4874, %v4891
    %v4894 = vadd.f32 %v4890, %v4893
    %v4896 = vrot.slane %v4894, 4
    %4897 = vrot.lane.b32.xlu0 %v4896, 96
    %v4898 = vpop.permute.xlu0 %4897
    %v4899 = vsel %vm336, %v4898, 0
    %4901 = vmatprep.subr.mxu0 0.0
    %4902 = vmatpush1.msra.mxu0 %v66
    %4903 = vmatprep.subr.mxu0 0.0
    %4904 = vmatpush1.msra.mxu0 %v67
    %4905 = vmatprep.subr.mxu0 0.0
    %4906 = vmatpush1.msra.mxu0 %v68
    %4907 = vmatprep.subr.mxu0 0.0
    %4908 = vmatpush1.msra.mxu0 %v69
    %4909 = vmatprep.subr.mxu0 0.0
    %4910 = vmatpush1.msra.mxu0 0.0
    %4911 = vmatprep.subr.mxu0 0.0
    %4912 = vmatpush1.msra.mxu0 0.0
    %4913 = vmatprep.subr.mxu0 0.0
    %4914 = vmatpush1.msra.mxu0 0.0
    %4915 = vmatprep.subr.mxu0 0.0
    %4916 = vmatpush1.msra.mxu0 0.0
    %4917 = vmatprep.subr.mxu0 0.0
    %4918 = vmatpush1.msra.mxu0 0.0
    %4919 = vmatprep.subr.mxu0 0.0
    %4920 = vmatpush1.msra.mxu0 0.0
    %4921 = vmatprep.subr.mxu0 0.0
    %4922 = vmatpush1.msra.mxu0 0.0
    %4923 = vmatprep.subr.mxu0 0.0
    %4924 = vmatpush1.msra.mxu0 0.0
    %4925 = vmatprep.subr.mxu0 0.0
    %4926 = vmatpush1.msra.mxu0 0.0
    %4927 = vmatprep.subr.mxu0 0.0
    %4928 = vmatpush1.msra.mxu0 0.0
    %4929 = vmatprep.subr.mxu0 0.0
    %4930 = vmatpush1.msra.mxu0 0.0
    %4931 = vmatprep.subr.mxu0 0.0
    %4932 = vmatpush1.msra.mxu0 0.0
    %4933 = vmatprep.subr.mxu0 0.0
    %4934 = vmatpush1.msra.mxu0 0.0
    %4935 = vmatprep.subr.mxu0 0.0
    %4936 = vmatpush1.msra.mxu0 0.0
    %4937 = vmatprep.subr.mxu0 0.0
    %4938 = vmatpush1.msra.mxu0 0.0
    %4939 = vmatprep.subr.mxu0 0.0
    %4940 = vmatpush1.msra.mxu0 0.0
    %4941 = vmatprep.subr.mxu0 0.0
    %4942 = vmatpush1.msra.mxu0 0.0
    %4943 = vmatprep.subr.mxu0 0.0
    %4944 = vmatpush1.msra.mxu0 0.0
    %4945 = vmatprep.subr.mxu0 0.0
    %4946 = vmatpush1.msra.mxu0 0.0
    %4947 = vmatprep.subr.mxu0 0.0
    %4948 = vmatpush1.msra.mxu0 0.0
    %4949 = vmatprep.subr.mxu0 0.0
    %4950 = vmatpush1.msra.mxu0 0.0
    %4951 = vmatprep.subr.mxu0 0.0
    %4952 = vmatpush1.msra.mxu0 0.0
    %4953 = vmatprep.subr.mxu0 0.0
    %4954 = vmatpush1.msra.mxu0 0.0
    %4955 = vmatprep.subr.mxu0 0.0
    %4956 = vmatpush1.msra.mxu0 0.0
    %4957 = vmatprep.subr.mxu0 0.0
    %4958 = vmatpush1.msra.mxu0 0.0
    %4959 = vmatprep.subr.mxu0 0.0
    %4960 = vmatpush1.msra.mxu0 0.0
    %4961 = vmatprep.subr.mxu0 0.0
    %4962 = vmatpush1.msra.mxu0 0.0
    %4963 = vmatprep.subr.mxu0 0.0
    %4964 = vmatpush1.msra.mxu0 0.0
    %4965 = vmatprep.mubr.f32.mxu0 0.0
    %4966 = vmatmul.mubr.f32.gmra.mrb[0].mxu0 %v4899
    %v4967 = vpop.f32.mrb[0].mxu0
    %v4968 = vadd.f32 %v4583, %v4967
    %v4969 = vpop.f32.mrb[0].mxu0
    %4970 = vdwg.mxu0
    %v4972 = vrot.slane %v4968, 2
    %v4974 = vadd.f32 %v4683, %v4972
    %v4975 = vxor.u32 %v4974, 2147483648
    %v4976 = vmul.f32 %v4975, 1.442695
    %v4977 = vpow.pop %v4976
    %v4978 = vadd.f32 %v4977, 1.0
    %v4979 = vrcp.pop %v4978
    %v4980 = vmul.f32 1.0, %v4979
    %4981 = vrot.lane.b32.xlu0 %v4972, 64
    %v4982 = vpop.permute.xlu0 %4981
    %v4984 = vmul.f32 %v4980, %v4982
    %4986 = vrot.lane.b32.xlu0 %v4984, 64
    %v4987 = vpop.permute.xlu0 %4986
    %v4989 = vadd.f32 %v4683, %v4987
    %v4990 = vtanh.pop %v4989
    %v4991 = vsub.f32 1.0, %v4980
    %4993 = vrot.lane.b32.xlu0 %v4990, 96
    %v4994 = vpop.permute.xlu0 %4993
    %v4996 = vmul.f32 %v4991, %v4994
    %v4997 = vrot.slane %v4894, 6
    %v4999 = vmul.f32 %v4980, %v4997
    %v5000 = vadd.f32 %v4996, %v4999
    %v5003 = vrot.slane %v5000, 6
    %5004 = vrot.lane.b32.xlu0 %v5003, 96
    %v5005 = vpop.permute.xlu0 %5004
    %v5007 = vsel %vm1150, %v4686, %v5005
    %v5010 = vsel %vm1150, %v4792, %v4898
    %v5011 = vsel %vm1150, %v4898, %v4792
    %v5012 = vsel %vm1150, %v5005, %v4686
    %v5014 = vrot.slane %v5010, 6
    %v5017 = vrot.slane %v5011, 4
    %v5020 = vrot.slane %v5012, 2
    %v5022 = vsel %vm1188, %v5007, %v5014
    %v5023 = vsel %vm1190, %v5022, %v5017
    %v5024 = vsel %vm1192, %v5023, %v5020
    %v5025 = vlaneseq
    %v5026 = vshrl.u32 %v5025, 7
    %v5027 = vsub.s32 0, %v5026
    %v5028 = vrot.slane %v75, %v5027
    %v5030 = vsel %vm336, %v5024, 0
    %5032 = vmatprep.subr.mxu0 0.0
    %5033 = vmatpush1.msra.mxu0 %v71
    %5034 = vmatprep.subr.mxu0 0.0
    %5035 = vmatpush1.msra.mxu0 %v72
    %5036 = vmatprep.subr.mxu0 0.0
    %5037 = vmatpush1.msra.mxu0 %v73
    %5038 = vmatprep.subr.mxu0 0.0
    %5039 = vmatpush1.msra.mxu0 %v74
    %5040 = vmatprep.subr.mxu0 0.0
    %5041 = vmatpush1.msra.mxu0 0.0
    %5042 = vmatprep.subr.mxu0 0.0
    %5043 = vmatpush1.msra.mxu0 0.0
    %5044 = vmatprep.subr.mxu0 0.0
    %5045 = vmatpush1.msra.mxu0 0.0
    %5046 = vmatprep.subr.mxu0 0.0
    %5047 = vmatpush1.msra.mxu0 0.0
    %5048 = vmatprep.subr.mxu0 0.0
    %5049 = vmatpush1.msra.mxu0 0.0
    %5050 = vmatprep.subr.mxu0 0.0
    %5051 = vmatpush1.msra.mxu0 0.0
    %5052 = vmatprep.subr.mxu0 0.0
    %5053 = vmatpush1.msra.mxu0 0.0
    %5054 = vmatprep.subr.mxu0 0.0
    %5055 = vmatpush1.msra.mxu0 0.0
    %5056 = vmatprep.subr.mxu0 0.0
    %5057 = vmatpush1.msra.mxu0 0.0
    %5058 = vmatprep.subr.mxu0 0.0
    %5059 = vmatpush1.msra.mxu0 0.0
    %5060 = vmatprep.subr.mxu0 0.0
    %5061 = vmatpush1.msra.mxu0 0.0
    %5062 = vmatprep.subr.mxu0 0.0
    %5063 = vmatpush1.msra.mxu0 0.0
    %5064 = vmatprep.subr.mxu0 0.0
    %5065 = vmatpush1.msra.mxu0 0.0
    %5066 = vmatprep.subr.mxu0 0.0
    %5067 = vmatpush1.msra.mxu0 0.0
    %5068 = vmatprep.subr.mxu0 0.0
    %5069 = vmatpush1.msra.mxu0 0.0
    %5070 = vmatprep.subr.mxu0 0.0
    %5071 = vmatpush1.msra.mxu0 0.0
    %5072 = vmatprep.subr.mxu0 0.0
    %5073 = vmatpush1.msra.mxu0 0.0
    %5074 = vmatprep.subr.mxu0 0.0
    %5075 = vmatpush1.msra.mxu0 0.0
    %5076 = vmatprep.subr.mxu0 0.0
    %5077 = vmatpush1.msra.mxu0 0.0
    %5078 = vmatprep.subr.mxu0 0.0
    %5079 = vmatpush1.msra.mxu0 0.0
    %5080 = vmatprep.subr.mxu0 0.0
    %5081 = vmatpush1.msra.mxu0 0.0
    %5082 = vmatprep.subr.mxu0 0.0
    %5083 = vmatpush1.msra.mxu0 0.0
    %5084 = vmatprep.subr.mxu0 0.0
    %5085 = vmatpush1.msra.mxu0 0.0
    %5086 = vmatprep.subr.mxu0 0.0
    %5087 = vmatpush1.msra.mxu0 0.0
    %5088 = vmatprep.subr.mxu0 0.0
    %5089 = vmatpush1.msra.mxu0 0.0
    %5090 = vmatprep.subr.mxu0 0.0
    %5091 = vmatpush1.msra.mxu0 0.0
    %5092 = vmatprep.subr.mxu0 0.0
    %5093 = vmatpush1.msra.mxu0 0.0
    %5094 = vmatprep.subr.mxu0 0.0
    %5095 = vmatpush1.msra.mxu0 0.0
    %5096 = vmatprep.mubr.f32.mxu0 0.0
    %5097 = vmatmul.mubr.f32.gmra.mrb[0].mxu0 %v5030
    %v5098 = vpop.f32.mrb[0].mxu0
    %v5099 = vadd.f32 %v5028, %v5098
    %v5100 = vpop.f32.mrb[0].mxu0
    %5101 = vdwg.mxu0
    %v5102 = vtanh.pop %v5099
    %v5103 = vlaneseq
    %v5104 = vshrl.u32 %v5103, 7
    %v5105 = vsub.s32 1, %v5104
    %v5106 = vrot.slane %v75, %v5105
    %v5107 = vmul.f32 %v5102, %v5106
    %v5108 = vsel %vm336, %v5107, 0.0
    %5109 = vadd.xlane.f32.xlu0 %v5108
    %v5110 = vpop.xlane.xlu0 %5109
    %v5111 = vtanh.pop %v5110
    %v5112 = vmul.f32 %v5111, 1.442695
    %v5113 = vpow.pop %v5112
    %v5114 = vmul.f32 %v5113, %v5024
    %v5116 = vrot.slane %v5114, 2
    %v5118 = vadd.f32 %v5114, %v5116
    %v5120 = vrot.slane %v5113, 2
    %v5122 = vadd.f32 %v5113, %v5120
    %v5123 = vrot.slane %v5114, 4
    %v5125 = vadd.f32 %v5118, %v5123
    %v5126 = vrot.slane %v5113, 4
    %v5128 = vadd.f32 %v5122, %v5126
    %v5129 = vrot.slane %v5114, 6
    %v5131 = vadd.f32 %v5125, %v5129
    %v5132 = vrot.slane %v5113, 6
    %v5134 = vadd.f32 %v5128, %v5132
    %v5135 = vrcp.pop %v5134
    %v5136 = vmul.f32 1.0, %v5135
    %5138 = vset.pattern.permute.xlu0 0
    %5139 = vperm.xlu0 %5138, %v5136
    %v5140 = vpop.permute.xlu0 %5139
    %v5142 = vmul.f32 %v5131, %v5140
    %v5143 = vsel %vm1354, %v5113, %v5120
    %v5144 = vsel %vm1356, %v5143, %v5126
    %v5145 = vsel %vm1358, %v5144, %v5132
    %v5146 = vmul.f32 %v5145, %v5140
    %vm5147 = vcmask 25600
    %5148 = vst.msk [vmem:[#allocation7] sm:$0x3] %vm5147, %v5146
    %v5149 = vlaneseq
    %v5150 = vshrl.u32 %v5149, 7
    %v5151 = vsub.s32 0, %v5150
    %v5152 = vrot.slane %v80, %v5151
    %v5154 = vsel %vm336, %v5142, 0
    %5156 = vmatprep.subr.mxu0 0.0
    %5157 = vmatpush1.msra.mxu0 %v76
    %5158 = vmatprep.subr.mxu0 0.0
    %5159 = vmatpush1.msra.mxu0 %v77
    %5160 = vmatprep.subr.mxu0 0.0
    %5161 = vmatpush1.msra.mxu0 %v78
    %5162 = vmatprep.subr.mxu0 0.0
    %5163 = vmatpush1.msra.mxu0 %v79
    %5164 = vmatprep.subr.mxu0 0.0
    %5165 = vmatpush1.msra.mxu0 0.0
    %5166 = vmatprep.subr.mxu0 0.0
    %5167 = vmatpush1.msra.mxu0 0.0
    %5168 = vmatprep.subr.mxu0 0.0
    %5169 = vmatpush1.msra.mxu0 0.0
    %5170 = vmatprep.subr.mxu0 0.0
    %5171 = vmatpush1.msra.mxu0 0.0
    %5172 = vmatprep.subr.mxu0 0.0
    %5173 = vmatpush1.msra.mxu0 0.0
    %5174 = vmatprep.subr.mxu0 0.0
    %5175 = vmatpush1.msra.mxu0 0.0
    %5176 = vmatprep.subr.mxu0 0.0
    %5177 = vmatpush1.msra.mxu0 0.0
    %5178 = vmatprep.subr.mxu0 0.0
    %5179 = vmatpush1.msra.mxu0 0.0
    %5180 = vmatprep.subr.mxu0 0.0
    %5181 = vmatpush1.msra.mxu0 0.0
    %5182 = vmatprep.subr.mxu0 0.0
    %5183 = vmatpush1.msra.mxu0 0.0
    %5184 = vmatprep.subr.mxu0 0.0
    %5185 = vmatpush1.msra.mxu0 0.0
    %5186 = vmatprep.subr.mxu0 0.0
    %5187 = vmatpush1.msra.mxu0 0.0
    %5188 = vmatprep.subr.mxu0 0.0
    %5189 = vmatpush1.msra.mxu0 0.0
    %5190 = vmatprep.subr.mxu0 0.0
    %5191 = vmatpush1.msra.mxu0 0.0
    %5192 = vmatprep.subr.mxu0 0.0
    %5193 = vmatpush1.msra.mxu0 0.0
    %5194 = vmatprep.subr.mxu0 0.0
    %5195 = vmatpush1.msra.mxu0 0.0
    %5196 = vmatprep.subr.mxu0 0.0
    %5197 = vmatpush1.msra.mxu0 0.0
    %5198 = vmatprep.subr.mxu0 0.0
    %5199 = vmatpush1.msra.mxu0 0.0
    %5200 = vmatprep.subr.mxu0 0.0
    %5201 = vmatpush1.msra.mxu0 0.0
    %5202 = vmatprep.subr.mxu0 0.0
    %5203 = vmatpush1.msra.mxu0 0.0
    %5204 = vmatprep.subr.mxu0 0.0
    %5205 = vmatpush1.msra.mxu0 0.0
    %5206 = vmatprep.subr.mxu0 0.0
    %5207 = vmatpush1.msra.mxu0 0.0
    %5208 = vmatprep.subr.mxu0 0.0
    %5209 = vmatpush1.msra.mxu0 0.0
    %5210 = vmatprep.subr.mxu0 0.0
    %5211 = vmatpush1.msra.mxu0 0.0
    %5212 = vmatprep.subr.mxu0 0.0
    %5213 = vmatpush1.msra.mxu0 0.0
    %5214 = vmatprep.subr.mxu0 0.0
    %5215 = vmatpush1.msra.mxu0 0.0
    %5216 = vmatprep.subr.mxu0 0.0
    %5217 = vmatpush1.msra.mxu0 0.0
    %5218 = vmatprep.subr.mxu0 0.0
    %5219 = vmatpush1.msra.mxu0 0.0
    %5220 = vmatprep.mubr.f32.mxu0 0.0
    %5221 = vmatmul.mubr.f32.gmra.mrb[0].mxu0 %v5154
    %v5222 = vpop.f32.mrb[0].mxu0
    %v5223 = vadd.f32 %v5152, %v5222
    %v5224 = vpop.f32.mrb[0].mxu0
    %5225 = vdwg.mxu0
    %vm5226 = vcmask 33792
    %5227 = vst.msk [vmem:[#allocation3] sm:$0x3] %vm5226, %v5223
    // Predicated region
    $region34: #{hier_att_net_forward.1} parent=1 // pred_check
      _
    $region35: #{hier_att_net_forward.1} parent=1 // pred_check_branch
      %5229 = sbr.rel (0) target = $region37
    $region36: #{hier_att_net_forward.1} parent=1 // pred_region
      %s5231 = ssub.s32 32, 32
      %5232 = vsyncadd [#allocation4], %s5231
      %s5234 = sshll.u32 [#allocation3], 4
      %s5235 = int_to_ptr.vmem [resolvable:$true] %s5234
      %5237 = dma.vmem_to_hbm [thread:$0]  %s5235, 32, %s8, [#allocation4]
    $region37: #{hier_att_net_forward.1} parent=1 // pred_fallthru
      _
    // Predicated region
    $region38: #{hier_att_net_forward.1} parent=1 // pred_check
      _
    $region39: #{hier_att_net_forward.1} parent=1 // pred_check_branch
      %5239 = sbr.rel (0) target = $region41
    $region40: #{hier_att_net_forward.1} parent=1 // pred_region
      %s5241 = ssub.s32 128, 128
      %5242 = vsyncadd [#allocation6], %s5241
      %s5243 = sshll.u32 [#allocation5], 4
      %s5244 = int_to_ptr.vmem [resolvable:$true] %s5243
      %5249 = dma.vmem_to_hbm [thread:$0]  %s5244, 128, %s9, [#allocation6], 32, 32, 2
    $region41: #{hier_att_net_forward.1} parent=1 // pred_fallthru
      _
    // Predicated region
    $region42: #{hier_att_net_forward.1} parent=1 // pred_check
      _
    $region43: #{hier_att_net_forward.1} parent=1 // pred_check_branch
      %5251 = sbr.rel (0) target = $region45
    $region44: #{hier_att_net_forward.1} parent=1 // pred_region
      %s5253 = ssub.s32 32, 32
      %5254 = vsyncadd [#allocation6], %s5253
      %s5256 = sshll.u32 [#allocation7], 4
      %s5257 = int_to_ptr.vmem [resolvable:$true] %s5256
      %5259 = dma.vmem_to_hbm [thread:$0]  %s5257, 32, %s10, [#allocation6]
    $region45: #{hier_att_net_forward.1} parent=1 // pred_fallthru
      _
    // Predicated region
    $region46: #{hier_att_net_forward.1} parent=1 // pred_check
      _
    $region47: #{hier_att_net_forward.1} parent=1 // pred_check_branch
      %5261 = sbr.rel (0) target = $region49
    $region48: #{hier_att_net_forward.1} parent=1 // pred_region
      %5262 = dma.done [#allocation4], 32
    $region49: #{hier_att_net_forward.1} parent=1 // pred_fallthru
      _
    // Predicated region
    $region50: #{hier_att_net_forward.1} parent=1 // pred_check
      _
    $region51: #{hier_att_net_forward.1} parent=1 // pred_check_branch
      %5264 = sbr.rel (0) target = $region53
    $region52: #{hier_att_net_forward.1} parent=1 // pred_region
      %5265 = dma.done [#allocation6], 128
    $region53: #{hier_att_net_forward.1} parent=1 // pred_fallthru
      _
    // Predicated region
    $region54: #{hier_att_net_forward.1} parent=1 // pred_check
      _
    $region55: #{hier_att_net_forward.1} parent=1 // pred_check_branch
      %5267 = sbr.rel (0) target = $region57
    $region56: #{hier_att_net_forward.1} parent=1 // pred_region
      %5268 = dma.done [#allocation6], 32
    $region57: #{hier_att_net_forward.1} parent=1 // pred_fallthru
      _
    %5269 = vsyncpa [#allocation4], 1
    %5270 = vsyncpa [#allocation6], 1

</llo_original>
